<compile_context>
chip_gen: v7x
topology: tpu7x:2x2x1
jax: 0.10.0
libtpu: 0.0.40
codegen_flags: <defaults>
</compile_context>

<pallas_src>
import functools
import math

import jax
import jax.numpy as jnp
from jax.experimental import pallas as pl
from jax.experimental.pallas import tpu as pltpu

D_MODEL = 32
D_FF = 64
N_HEADS = 4
N_LAYERS = 2
EPS = 1e-6


# ----------------------------- fused Pallas kernel ------------------------- #

def _decoder_kernel(
    x_ref, mem_ref, src_bias_ref, tgt_bias_ref,
    lng_ref, lnb_ref,
    wqkv_s_ref, bqkv_s_ref, wo_s_ref, bo_s_ref,
    wq_x_ref, bq_x_ref, wkv_x_ref, bkv_x_ref, wo_x_ref, bo_x_ref,
    w1_ref, b1_ref, w2_ref, b2_ref,
    o_ref,
    *, n_layers, n_heads, batch, t_q, t_k,
):
    d = x_ref.shape[-1]
    dk = d // n_heads
    scale = 1.0 / math.sqrt(dk)

    x = x_ref[...]                 # (B*Tq, D) f32
    mem = mem_ref[...]             # (B*Tk, D) f32
    tgt_bias = tgt_bias_ref[...]   # (B, Tq, Tq) additive mask bias (0 / -1e9)
    src_bias = src_bias_ref[...]   # (B, Tq, Tk)

    def layer_norm(h, row):
        # Annotated-Transformer LayerNorm: unbiased std, eps added to std.
        g = lng_ref[row:row + 1, :]
        b = lnb_ref[row:row + 1, :]
        mean = jnp.mean(h, axis=-1, keepdims=True)
        diff = h - mean
        var = jnp.sum(diff * diff, axis=-1, keepdims=True) * (1.0 / (d - 1))
        return g * diff / (jnp.sqrt(var) + EPS) + b

    def attend(q, k, v, rows_q, rows_k, bias):
        # q: (B*rows_q, D), k/v: (B*rows_k, D), bias: (B, rows_q, rows_k).
        # Heads are static lane slices; batch is carried by a single batched
        # dot_general per head; softmax runs once per head over the whole
        # (B, rows_q, rows_k) slab with exact normalization.
        # Note: a fully-masked query row would give a uniform (garbage)
        # distribution — not reachable with the tril/ones masks used here.
        head_outs = []
        for h in range(n_heads):
            qh = q[:, h * dk:(h + 1) * dk].reshape(batch, rows_q, dk)
            kh = k[:, h * dk:(h + 1) * dk].reshape(batch, rows_k, dk)
            vh = v[:, h * dk:(h + 1) * dk].reshape(batch, rows_k, dk)
            # scores: 'bqd,bkd->bqk'
            s = jax.lax.dot_general(
                qh, kh, (((2,), (2,)), ((0,), (0,))),
                preferred_element_type=jnp.float32) * scale + bias
            s = s - jnp.max(s, axis=-1, keepdims=True)
            p = jnp.exp(s)
            p = p / jnp.sum(p, axis=-1, keepdims=True)
            # context: 'bqk,bkd->bqd'
            head_outs.append(jax.lax.dot_general(
                p, vh, (((2,), (1,)), ((0,), (0,))),
                preferred_element_type=jnp.float32))
        o = jnp.concatenate(head_outs, axis=-1)          # (B, rows_q, D)
        return o.reshape(batch * rows_q, d)

    # Encoder memory is layer-invariant: project K|V for ALL layers with one
    # lane-dense (D, n_layers*2D) matmul, then slice per layer.
    kv_all = jnp.dot(mem, wkv_x_ref[...],
                     preferred_element_type=jnp.float32) + bkv_x_ref[...]

    for l in range(n_layers):
        # --- sublayer 0: masked self-attention (pre-norm residual)
        n0 = layer_norm(x, 3 * l + 0)
        qkv = jnp.dot(n0, wqkv_s_ref[l],
                      preferred_element_type=jnp.float32) + bqkv_s_ref[l]
        a = attend(qkv[:, 0:d], qkv[:, d:2 * d], qkv[:, 2 * d:3 * d],
                   t_q, t_q, tgt_bias)
        x = x + jnp.dot(a, wo_s_ref[l],
                        preferred_element_type=jnp.float32) + bo_s_ref[l]

        # --- sublayer 1: source attention over encoder memory
        n1 = layer_norm(x, 3 * l + 1)
        q = jnp.dot(n1, wq_x_ref[l],
                    preferred_element_type=jnp.float32) + bq_x_ref[l]
        kv = kv_all[:, l * 2 * d:(l + 1) * 2 * d]
        a = attend(q, kv[:, 0:d], kv[:, d:2 * d], t_q, t_k, src_bias)
        x = x + jnp.dot(a, wo_x_ref[l],
                        preferred_element_type=jnp.float32) + bo_x_ref[l]

        # --- sublayer 2: position-wise feed-forward (hidden stays in VMEM)
        n2 = layer_norm(x, 3 * l + 2)
        hid = jnp.maximum(
            jnp.dot(n2, w1_ref[l], preferred_element_type=jnp.float32) + b1_ref[l],
            0.0)
        x = x + jnp.dot(hid, w2_ref[l],
                        preferred_element_type=jnp.float32) + b2_ref[l]

    # final LayerNorm
    o_ref[...] = layer_norm(x, 3 * n_layers).astype(o_ref.dtype)


# ----------------------------- parameter packing --------------------------- #

def pack_params(params):
    """One-time packing. Call OUTSIDE the per-step path (not re-traced/jitted)."""
    lng, lnb = [], []
    wqkv_s, bqkv_s, wo_s, bo_s = [], [], [], []
    wq_x, bq_x, wkv_x, bkv_x, wo_x, bo_x = [], [], [], [], [], []
    w1, b1, w2, b2 = [], [], [], []
    for lp in params["layers"]:
        lng += [lp["ln0_g"], lp["ln1_g"], lp["ln2_g"]]
        lnb += [lp["ln0_b"], lp["ln1_b"], lp["ln2_b"]]
        sa = lp["self_attn"]
        wqkv_s.append(jnp.concatenate([sa["wq"], sa["wk"], sa["wv"]], axis=1))
        bqkv_s.append(jnp.concatenate([sa["bq"], sa["bk"], sa["bv"]])[None, :])
        wo_s.append(sa["wo"]); bo_s.append(sa["bo"][None, :])
        xa = lp["src_attn"]
        wq_x.append(xa["wq"]); bq_x.append(xa["bq"][None, :])
        wkv_x.append(jnp.concatenate([xa["wk"], xa["wv"]], axis=1))   # (D, 2D)
        bkv_x.append(jnp.concatenate([xa["bk"], xa["bv"]]))           # (2D,)
        wo_x.append(xa["wo"]); bo_x.append(xa["bo"][None, :])
        ff = lp["ff"]
        w1.append(ff["w1"]); b1.append(ff["b1"][None, :])
        w2.append(ff["w2"]); b2.append(ff["b2"][None, :])
    lng.append(params["norm_g"])
    lnb.append(params["norm_b"])
    f32 = lambda a: jnp.asarray(a, jnp.float32)
    return dict(
        lng=f32(jnp.stack(lng)), lnb=f32(jnp.stack(lnb)),
        wqkv_s=f32(jnp.stack(wqkv_s)), bqkv_s=f32(jnp.stack(bqkv_s)),
        wo_s=f32(jnp.stack(wo_s)), bo_s=f32(jnp.stack(bo_s)),
        wq_x=f32(jnp.stack(wq_x)), bq_x=f32(jnp.stack(bq_x)),
        # Source-attn K|V weights concatenated across layers so the
        # layer-invariant `memory` projection is ONE lane-dense matmul.
        wkv_x=f32(jnp.concatenate(wkv_x, axis=1)),        # (D, L*2D)
        bkv_x=f32(jnp.concatenate(bkv_x)[None, :]),       # (1, L*2D)
        wo_x=f32(jnp.stack(wo_x)), bo_x=f32(jnp.stack(bo_x)),
        w1=f32(jnp.stack(w1)), b1=f32(jnp.stack(b1)),
        w2=f32(jnp.stack(w2)), b2=f32(jnp.stack(b2)),
    )


_PACKED_ORDER = ("lng", "lnb", "wqkv_s", "bqkv_s", "wo_s", "bo_s",
                 "wq_x", "bq_x", "wkv_x", "bkv_x", "wo_x", "bo_x",
                 "w1", "b1", "w2", "b2")


# ------------------------------- public entry ------------------------------ #

@jax.jit
def decoder(x, memory, src_mask, tgt_mask, packed):
    b, t, d = x.shape
    s = memory.shape[1]
    n_layers = packed["wqkv_s"].shape[0]

    # Additive mask biases, computed once per call (layer- and head-invariant).
    src_bias = jnp.broadcast_to(
        jnp.where(src_mask == 0, -1e9, 0.0).astype(jnp.float32), (b, t, s))
    tgt_bias = jnp.broadcast_to(
        jnp.where(tgt_mask == 0, -1e9, 0.0).astype(jnp.float32), (b, t, t))

    kernel = functools.partial(
        _decoder_kernel, n_layers=n_layers, n_heads=N_HEADS,
        batch=b, t_q=t, t_k=s)

    vmem = pl.BlockSpec(memory_space=pltpu.MemorySpace.VMEM)
    operands = (x.reshape(b * t, d).astype(jnp.float32),
                memory.reshape(b * s, d).astype(jnp.float32),
                src_bias, tgt_bias) + tuple(packed[k] for k in _PACKED_ORDER)

    out2d = pl.pallas_call(
        kernel,
        out_shape=jax.ShapeDtypeStruct((b * t, d), jnp.float32),
        in_specs=[vmem] * len(operands),
        out_specs=vmem,
        compiler_params=pltpu.CompilerParams(vmem_limit_bytes=32 * 1024 * 1024),
    )(*operands)
    return out2d.reshape(b, t, d).astype(x.dtype)


# ------------------------ pure-JAX reference (for check) ------------------- #

def _reference_decoder(x, memory, src_mask, tgt_mask, params):
    def ln(h, g, b):
        mean = jnp.mean(h, axis=-1, keepdims=True)
        diff = h - mean
        var = jnp.sum(diff * diff, axis=-1, keepdims=True) / (h.shape[-1] - 1)
        return g * diff / (jnp.sqrt(var) + EPS) + b

    def mha(qx, kx, vx, mask, p):
        b, tq, d = qx.shape
        h, dk = N_HEADS, d // N_HEADS

        def proj(z, w, bias):
            y = z @ w + bias
            return y.reshape(b, -1, h, dk).transpose(0, 2, 1, 3)

        q = proj(qx, p["wq"], p["bq"])
        k = proj(kx, p["wk"], p["bk"])
        v = proj(vx, p["wv"], p["bv"])
        sc = jnp.einsum("bhqd,bhkd->bhqk", q, k) / jnp.sqrt(jnp.float32(dk))
        sc = jnp.where(mask[:, None] == 0.0, -1e9, sc)
        a = jax.nn.softmax(sc, axis=-1)
        o = jnp.einsum("bhqk,bhkd->bhqd", a, v).transpose(0, 2, 1, 3).reshape(b, tq, d)
        return o @ p["wo"] + p["bo"]

    for lp in params["layers"]:
        n = ln(x, lp["ln0_g"], lp["ln0_b"])
        x = x + mha(n, n, n, tgt_mask, lp["self_attn"])
        n = ln(x, lp["ln1_g"], lp["ln1_b"])
        x = x + mha(n, memory, memory, src_mask, lp["src_attn"])
        n = ln(x, lp["ln2_g"], lp["ln2_b"])
        ff = lp["ff"]
        x = x + jnp.maximum(n @ ff["w1"] + ff["b1"], 0.0) @ ff["w2"] + ff["b2"]
    return ln(x, params["norm_g"], params["norm_b"])


# ----------------------------- parameter init ------------------------------ #

def init_params(key):
    def lin(k, din, dout):
        k1, k2 = jax.random.split(k)
        return (jax.random.normal(k1, (din, dout), jnp.float32) * 0.02,
                jax.random.normal(k2, (dout,), jnp.float32) * 0.02)

    keys = jax.random.split(key, 4)

    def attn_params(k):
        ks = jax.random.split(k, 4)
        wq, bq = lin(ks[0], D_MODEL, D_MODEL)
        wk, bk = lin(ks[1], D_MODEL, D_MODEL)
        wv, bv = lin(ks[2], D_MODEL, D_MODEL)
        wo, bo = lin(ks[3], D_MODEL, D_MODEL)
        return dict(wq=wq, bq=bq, wk=wk, bk=bk, wv=wv, bv=bv, wo=wo, bo=bo)

    w1, b1 = lin(keys[2], D_MODEL, D_FF)
    w2, b2 = lin(keys[3], D_FF, D_MODEL)
    layer = dict(
        ln0_g=jnp.ones((D_MODEL,), jnp.float32), ln0_b=jnp.zeros((D_MODEL,), jnp.float32),
        ln1_g=jnp.ones((D_MODEL,), jnp.float32), ln1_b=jnp.zeros((D_MODEL,), jnp.float32),
        ln2_g=jnp.ones((D_MODEL,), jnp.float32), ln2_b=jnp.zeros((D_MODEL,), jnp.float32),
        self_attn=attn_params(keys[0]),
        src_attn=attn_params(keys[1]),
        ff=dict(w1=w1, b1=b1, w2=w2, b2=b2),
    )
    # clones() deep-copies the layer N times -> identical initial weights.
    return dict(
        layers=[layer for _ in range(N_LAYERS)],
        norm_g=jnp.ones((D_MODEL,), jnp.float32),
        norm_b=jnp.zeros((D_MODEL,), jnp.float32),
    )


# ---------------------------------- main ----------------------------------- #

if __name__ == "__main__":
    key = jax.random.PRNGKey(0)
    kp, kx, km = jax.random.split(key, 3)
    B, T, S = 2, 8, 8  # batch, tgt_len, src_len

    params = init_params(kp)
    packed = pack_params(params)  # packed ONCE, outside the per-call path

    x = jax.random.normal(kx, (B, T, D_MODEL), jnp.float32)
    memory = jax.random.normal(km, (B, S, D_MODEL), jnp.float32)
    src_mask = jnp.ones((B, 1, S), jnp.float32)
    tgt_mask = jnp.broadcast_to(jnp.tril(jnp.ones((T, T), jnp.float32))[None], (B, T, T))

    out = decoder(x, memory, src_mask, tgt_mask, packed)
    jax.block_until_ready(out)
    assert out.shape == (B, T, D_MODEL) and out.dtype == jnp.float32

    # sanity check against a pure-JAX reference (softmax is exact now, so the
    # tolerance is tighter than the previous approx-reciprocal version).
    ref = _reference_decoder(x, memory, src_mask, tgt_mask, params)
    err = float(jnp.max(jnp.abs(out - ref)))
    assert jnp.allclose(out, ref, rtol=1e-2, atol=1e-2), err

    # TODO(synk): the reference passes an opaque `layer`; the standard Annotated
    # Transformer DecoderLayer (self-attn, src-attn, FFN with pre-norm residuals,
    # dropout=0) is instantiated here since no other definition was provided.
    print("KERNEL_OK")
</pallas_src>

<mosaic_0001>
module attributes {stable_mosaic.version = 11 : i64} {
  func.func @_decoder_kernel(%arg0: memref<16x32xf32, #tpu.memory_space<vmem>>, %arg1: memref<16x32xf32, #tpu.memory_space<vmem>>, %arg2: memref<2x8x8xf32, #tpu.memory_space<vmem>>, %arg3: memref<2x8x8xf32, #tpu.memory_space<vmem>>, %arg4: memref<7x32xf32, #tpu.memory_space<vmem>>, %arg5: memref<7x32xf32, #tpu.memory_space<vmem>>, %arg6: memref<2x32x96xf32, #tpu.memory_space<vmem>>, %arg7: memref<2x1x96xf32, #tpu.memory_space<vmem>>, %arg8: memref<2x32x32xf32, #tpu.memory_space<vmem>>, %arg9: memref<2x1x32xf32, #tpu.memory_space<vmem>>, %arg10: memref<2x32x32xf32, #tpu.memory_space<vmem>>, %arg11: memref<2x1x32xf32, #tpu.memory_space<vmem>>, %arg12: memref<32x128xf32, #tpu.memory_space<vmem>>, %arg13: memref<1x128xf32, #tpu.memory_space<vmem>>, %arg14: memref<2x32x32xf32, #tpu.memory_space<vmem>>, %arg15: memref<2x1x32xf32, #tpu.memory_space<vmem>>, %arg16: memref<2x32x64xf32, #tpu.memory_space<vmem>>, %arg17: memref<2x1x64xf32, #tpu.memory_space<vmem>>, %arg18: memref<2x64x32xf32, #tpu.memory_space<vmem>>, %arg19: memref<2x1x32xf32, #tpu.memory_space<vmem>>, %arg20: memref<16x32xf32, #tpu.memory_space<vmem>>) attributes {dimension_semantics = [], scalar_prefetch = 0 : i64, scratch_operands = 0 : i64, tpu.core_type = #tpu.core_type<tc>} {
    %c0 = arith.constant 0 : index
    %c0_0 = arith.constant 0 : index
    %0 = vector.load %arg0[%c0, %c0_0] : memref<16x32xf32, #tpu.memory_space<vmem>>, vector<16x32xf32>
    %c0_1 = arith.constant 0 : index
    %c0_2 = arith.constant 0 : index
    %1 = vector.load %arg1[%c0_1, %c0_2] : memref<16x32xf32, #tpu.memory_space<vmem>>, vector<16x32xf32>
    %c0_3 = arith.constant 0 : index
    %c0_4 = arith.constant 0 : index
    %c0_5 = arith.constant 0 : index
    %2 = vector.load %arg3[%c0_3, %c0_4, %c0_5] : memref<2x8x8xf32, #tpu.memory_space<vmem>>, vector<2x8x8xf32>
    %c0_6 = arith.constant 0 : index
    %c0_7 = arith.constant 0 : index
    %c0_8 = arith.constant 0 : index
    %3 = vector.load %arg2[%c0_6, %c0_7, %c0_8] : memref<2x8x8xf32, #tpu.memory_space<vmem>>, vector<2x8x8xf32>
    %c0_9 = arith.constant 0 : index
    %c0_10 = arith.constant 0 : index
    %4 = vector.load %arg12[%c0_9, %c0_10] : memref<32x128xf32, #tpu.memory_space<vmem>>, vector<32x128xf32>
    %cst = arith.constant dense<0.000000e+00> : vector<16x128xf32>
    %5 = tpu.matmul %1, %4, %cst {dimension_numbers = #tpu.dot_dimension_numbers<[1], [0], [0], [1], [0, 0, 1, 1], [], []>} : vector<16x32xf32>, vector<32x128xf32>, vector<16x128xf32> -> vector<16x128xf32>
    %c0_11 = arith.constant 0 : index
    %c0_12 = arith.constant 0 : index
    %6 = vector.load %arg13[%c0_11, %c0_12] : memref<1x128xf32, #tpu.memory_space<vmem>>, vector<1x128xf32>
    %7 = vector.broadcast %6 : vector<1x128xf32> to vector<16x128xf32>
    %8 = arith.addf %5, %7 : vector<16x128xf32>
    %c0_13 = arith.constant 0 : index
    %c0_14 = arith.constant 0 : index
    %9 = vector.load %arg4[%c0_13, %c0_14] : memref<7x32xf32, #tpu.memory_space<vmem>>, vector<1x32xf32>
    %c0_15 = arith.constant 0 : index
    %c0_16 = arith.constant 0 : index
    %10 = vector.load %arg5[%c0_15, %c0_16] : memref<7x32xf32, #tpu.memory_space<vmem>>, vector<1x32xf32>
    %cst_17 = arith.constant dense<0.000000e+00> : vector<16xf32>
    %11 = vector.multi_reduction <add>, %0, %cst_17 [1] : vector<16x32xf32> to vector<16xf32>
    %12 = vector.shape_cast %11 : vector<16xf32> to vector<16x1xf32>
    %cst_18 = arith.constant 3.200000e+01 : f32
    %13 = vector.broadcast %cst_18 : f32 to vector<16x1xf32>
    %14 = arith.divf %12, %13 : vector<16x1xf32>
    %15 = vector.broadcast %14 : vector<16x1xf32> to vector<16x32xf32>
    %16 = arith.subf %0, %15 : vector<16x32xf32>
    %17 = arith.mulf %16, %16 : vector<16x32xf32>
    %cst_19 = arith.constant dense<0.000000e+00> : vector<16xf32>
    %18 = vector.multi_reduction <add>, %17, %cst_19 [1] : vector<16x32xf32> to vector<16xf32>
    %19 = vector.shape_cast %18 : vector<16xf32> to vector<16x1xf32>
    %cst_20 = arith.constant 0.0322580636 : f32
    %20 = vector.broadcast %cst_20 : f32 to vector<16x1xf32>
    %21 = arith.mulf %19, %20 : vector<16x1xf32>
    %22 = vector.broadcast %9 : vector<1x32xf32> to vector<16x32xf32>
    %23 = arith.mulf %22, %16 : vector<16x32xf32>
    %24 = math.sqrt %21 : vector<16x1xf32>
    %cst_21 = arith.constant 9.99999997E-7 : f32
    %25 = vector.broadcast %cst_21 : f32 to vector<16x1xf32>
    %26 = arith.addf %24, %25 : vector<16x1xf32>
    %27 = vector.broadcast %26 : vector<16x1xf32> to vector<16x32xf32>
    %28 = arith.divf %23, %27 : vector<16x32xf32>
    %29 = vector.broadcast %10 : vector<1x32xf32> to vector<16x32xf32>
    %30 = arith.addf %28, %29 : vector<16x32xf32>
    %c0_22 = arith.constant 0 : index
    %c0_23 = arith.constant 0 : index
    %c0_24 = arith.constant 0 : index
    %31 = vector.load %arg6[%c0_22, %c0_23, %c0_24] : memref<2x32x96xf32, #tpu.memory_space<vmem>>, vector<1x32x96xf32>
    %32 = vector.shape_cast %31 : vector<1x32x96xf32> to vector<32x96xf32>
    %cst_25 = arith.constant dense<0.000000e+00> : vector<16x96xf32>
    %33 = tpu.matmul %30, %32, %cst_25 {dimension_numbers = #tpu.dot_dimension_numbers<[1], [0], [0], [1], [0, 0, 1, 1], [], []>} : vector<16x32xf32>, vector<32x96xf32>, vector<16x96xf32> -> vector<16x96xf32>
    %c0_26 = arith.constant 0 : index
    %c0_27 = arith.constant 0 : index
    %c0_28 = arith.constant 0 : index
    %34 = vector.load %arg7[%c0_26, %c0_27, %c0_28] : memref<2x1x96xf32, #tpu.memory_space<vmem>>, vector<1x1x96xf32>
    %35 = vector.shape_cast %34 : vector<1x1x96xf32> to vector<1x96xf32>
    %36 = vector.broadcast %35 : vector<1x96xf32> to vector<16x96xf32>
    %37 = arith.addf %33, %36 : vector<16x96xf32>
    %38 = vector.extract_strided_slice %37 {offsets = [0, 0], sizes = [16, 32], strides = [1, 1]} : vector<16x96xf32> to vector<16x32xf32>
    %39 = vector.extract_strided_slice %37 {offsets = [0, 32], sizes = [16, 32], strides = [1, 1]} : vector<16x96xf32> to vector<16x32xf32>
    %40 = vector.extract_strided_slice %37 {offsets = [0, 64], sizes = [16, 32], strides = [1, 1]} : vector<16x96xf32> to vector<16x32xf32>
    %41 = vector.extract_strided_slice %38 {offsets = [0, 0], sizes = [16, 8], strides = [1, 1]} : vector<16x32xf32> to vector<16x8xf32>
    %42 = vector.shape_cast %41 : vector<16x8xf32> to vector<2x8x8xf32>
    %43 = vector.extract_strided_slice %39 {offsets = [0, 0], sizes = [16, 8], strides = [1, 1]} : vector<16x32xf32> to vector<16x8xf32>
    %44 = vector.shape_cast %43 : vector<16x8xf32> to vector<2x8x8xf32>
    %45 = vector.extract_strided_slice %40 {offsets = [0, 0], sizes = [16, 8], strides = [1, 1]} : vector<16x32xf32> to vector<16x8xf32>
    %46 = vector.shape_cast %45 : vector<16x8xf32> to vector<2x8x8xf32>
    %cst_29 = arith.constant dense<0.000000e+00> : vector<2x8x8xf32>
    %47 = tpu.matmul %42, %44, %cst_29 {dimension_numbers = #tpu.dot_dimension_numbers<[2], [2], [1], [1], [0, 0, 0, 1, 1, 1], [0], [0]>} : vector<2x8x8xf32>, vector<2x8x8xf32>, vector<2x8x8xf32> -> vector<2x8x8xf32>
    %cst_30 = arith.constant 0.353553385 : f32
    %48 = vector.broadcast %cst_30 : f32 to vector<2x8x8xf32>
    %49 = arith.mulf %47, %48 : vector<2x8x8xf32>
    %50 = arith.addf %49, %2 : vector<2x8x8xf32>
    %cst_31 = arith.constant dense<0xFF800000> : vector<2x8xf32>
    %51 = vector.multi_reduction <maximumf>, %50, %cst_31 [2] : vector<2x8x8xf32> to vector<2x8xf32>
    %52 = vector.shape_cast %51 : vector<2x8xf32> to vector<2x8x1xf32>
    %53 = vector.broadcast %52 : vector<2x8x1xf32> to vector<2x8x8xf32>
    %54 = arith.subf %50, %53 : vector<2x8x8xf32>
    %55 = math.exp %54 : vector<2x8x8xf32>
    %cst_32 = arith.constant dense<0.000000e+00> : vector<2x8xf32>
    %56 = vector.multi_reduction <add>, %55, %cst_32 [2] : vector<2x8x8xf32> to vector<2x8xf32>
    %57 = vector.shape_cast %56 : vector<2x8xf32> to vector<2x8x1xf32>
    %58 = vector.broadcast %57 : vector<2x8x1xf32> to vector<2x8x8xf32>
    %59 = arith.divf %55, %58 : vector<2x8x8xf32>
    %cst_33 = arith.constant dense<0.000000e+00> : vector<2x8x8xf32>
    %60 = tpu.matmul %59, %46, %cst_33 {dimension_numbers = #tpu.dot_dimension_numbers<[2], [1], [1], [2], [0, 0, 0, 1, 1, 2], [0], [0]>} : vector<2x8x8xf32>, vector<2x8x8xf32>, vector<2x8x8xf32> -> vector<2x8x8xf32>
    %61 = vector.extract_strided_slice %38 {offsets = [0, 8], sizes = [16, 8], strides = [1, 1]} : vector<16x32xf32> to vector<16x8xf32>
    %62 = vector.shape_cast %61 : vector<16x8xf32> to vector<2x8x8xf32>
    %63 = vector.extract_strided_slice %39 {offsets = [0, 8], sizes = [16, 8], strides = [1, 1]} : vector<16x32xf32> to vector<16x8xf32>
    %64 = vector.shape_cast %63 : vector<16x8xf32> to vector<2x8x8xf32>
    %65 = vector.extract_strided_slice %40 {offsets = [0, 8], sizes = [16, 8], strides = [1, 1]} : vector<16x32xf32> to vector<16x8xf32>
    %66 = vector.shape_cast %65 : vector<16x8xf32> to vector<2x8x8xf32>
    %cst_34 = arith.constant dense<0.000000e+00> : vector<2x8x8xf32>
    %67 = tpu.matmul %62, %64, %cst_34 {dimension_numbers = #tpu.dot_dimension_numbers<[2], [2], [1], [1], [0, 0, 0, 1, 1, 1], [0], [0]>} : vector<2x8x8xf32>, vector<2x8x8xf32>, vector<2x8x8xf32> -> vector<2x8x8xf32>
    %cst_35 = arith.constant 0.353553385 : f32
    %68 = vector.broadcast %cst_35 : f32 to vector<2x8x8xf32>
    %69 = arith.mulf %67, %68 : vector<2x8x8xf32>
    %70 = arith.addf %69, %2 : vector<2x8x8xf32>
    %cst_36 = arith.constant dense<0xFF800000> : vector<2x8xf32>
    %71 = vector.multi_reduction <maximumf>, %70, %cst_36 [2] : vector<2x8x8xf32> to vector<2x8xf32>
    %72 = vector.shape_cast %71 : vector<2x8xf32> to vector<2x8x1xf32>
    %73 = vector.broadcast %72 : vector<2x8x1xf32> to vector<2x8x8xf32>
    %74 = arith.subf %70, %73 : vector<2x8x8xf32>
    %75 = math.exp %74 : vector<2x8x8xf32>
    %cst_37 = arith.constant dense<0.000000e+00> : vector<2x8xf32>
    %76 = vector.multi_reduction <add>, %75, %cst_37 [2] : vector<2x8x8xf32> to vector<2x8xf32>
    %77 = vector.shape_cast %76 : vector<2x8xf32> to vector<2x8x1xf32>
    %78 = vector.broadcast %77 : vector<2x8x1xf32> to vector<2x8x8xf32>
    %79 = arith.divf %75, %78 : vector<2x8x8xf32>
    %cst_38 = arith.constant dense<0.000000e+00> : vector<2x8x8xf32>
    %80 = tpu.matmul %79, %66, %cst_38 {dimension_numbers = #tpu.dot_dimension_numbers<[2], [1], [1], [2], [0, 0, 0, 1, 1, 2], [0], [0]>} : vector<2x8x8xf32>, vector<2x8x8xf32>, vector<2x8x8xf32> -> vector<2x8x8xf32>
    %81 = vector.extract_strided_slice %38 {offsets = [0, 16], sizes = [16, 8], strides = [1, 1]} : vector<16x32xf32> to vector<16x8xf32>
    %82 = vector.shape_cast %81 : vector<16x8xf32> to vector<2x8x8xf32>
    %83 = vector.extract_strided_slice %39 {offsets = [0, 16], sizes = [16, 8], strides = [1, 1]} : vector<16x32xf32> to vector<16x8xf32>
    %84 = vector.shape_cast %83 : vector<16x8xf32> to vector<2x8x8xf32>
    %85 = vector.extract_strided_slice %40 {offsets = [0, 16], sizes = [16, 8], strides = [1, 1]} : vector<16x32xf32> to vector<16x8xf32>
    %86 = vector.shape_cast %85 : vector<16x8xf32> to vector<2x8x8xf32>
    %cst_39 = arith.constant dense<0.000000e+00> : vector<2x8x8xf32>
    %87 = tpu.matmul %82, %84, %cst_39 {dimension_numbers = #tpu.dot_dimension_numbers<[2], [2], [1], [1], [0, 0, 0, 1, 1, 1], [0], [0]>} : vector<2x8x8xf32>, vector<2x8x8xf32>, vector<2x8x8xf32> -> vector<2x8x8xf32>
    %cst_40 = arith.constant 0.353553385 : f32
    %88 = vector.broadcast %cst_40 : f32 to vector<2x8x8xf32>
    %89 = arith.mulf %87, %88 : vector<2x8x8xf32>
    %90 = arith.addf %89, %2 : vector<2x8x8xf32>
    %cst_41 = arith.constant dense<0xFF800000> : vector<2x8xf32>
    %91 = vector.multi_reduction <maximumf>, %90, %cst_41 [2] : vector<2x8x8xf32> to vector<2x8xf32>
    %92 = vector.shape_cast %91 : vector<2x8xf32> to vector<2x8x1xf32>
    %93 = vector.broadcast %92 : vector<2x8x1xf32> to vector<2x8x8xf32>
    %94 = arith.subf %90, %93 : vector<2x8x8xf32>
    %95 = math.exp %94 : vector<2x8x8xf32>
    %cst_42 = arith.constant dense<0.000000e+00> : vector<2x8xf32>
    %96 = vector.multi_reduction <add>, %95, %cst_42 [2] : vector<2x8x8xf32> to vector<2x8xf32>
    %97 = vector.shape_cast %96 : vector<2x8xf32> to vector<2x8x1xf32>
    %98 = vector.broadcast %97 : vector<2x8x1xf32> to vector<2x8x8xf32>
    %99 = arith.divf %95, %98 : vector<2x8x8xf32>
    %cst_43 = arith.constant dense<0.000000e+00> : vector<2x8x8xf32>
    %100 = tpu.matmul %99, %86, %cst_43 {dimension_numbers = #tpu.dot_dimension_numbers<[2], [1], [1], [2], [0, 0, 0, 1, 1, 2], [0], [0]>} : vector<2x8x8xf32>, vector<2x8x8xf32>, vector<2x8x8xf32> -> vector<2x8x8xf32>
    %101 = vector.extract_strided_slice %38 {offsets = [0, 24], sizes = [16, 8], strides = [1, 1]} : vector<16x32xf32> to vector<16x8xf32>
    %102 = vector.shape_cast %101 : vector<16x8xf32> to vector<2x8x8xf32>
    %103 = vector.extract_strided_slice %39 {offsets = [0, 24], sizes = [16, 8], strides = [1, 1]} : vector<16x32xf32> to vector<16x8xf32>
    %104 = vector.shape_cast %103 : vector<16x8xf32> to vector<2x8x8xf32>
    %105 = vector.extract_strided_slice %40 {offsets = [0, 24], sizes = [16, 8], strides = [1, 1]} : vector<16x32xf32> to vector<16x8xf32>
    %106 = vector.shape_cast %105 : vector<16x8xf32> to vector<2x8x8xf32>
    %cst_44 = arith.constant dense<0.000000e+00> : vector<2x8x8xf32>
    %107 = tpu.matmul %102, %104, %cst_44 {dimension_numbers = #tpu.dot_dimension_numbers<[2], [2], [1], [1], [0, 0, 0, 1, 1, 1], [0], [0]>} : vector<2x8x8xf32>, vector<2x8x8xf32>, vector<2x8x8xf32> -> vector<2x8x8xf32>
    %cst_45 = arith.constant 0.353553385 : f32
    %108 = vector.broadcast %cst_45 : f32 to vector<2x8x8xf32>
    %109 = arith.mulf %107, %108 : vector<2x8x8xf32>
    %110 = arith.addf %109, %2 : vector<2x8x8xf32>
    %cst_46 = arith.constant dense<0xFF800000> : vector<2x8xf32>
    %111 = vector.multi_reduction <maximumf>, %110, %cst_46 [2] : vector<2x8x8xf32> to vector<2x8xf32>
    %112 = vector.shape_cast %111 : vector<2x8xf32> to vector<2x8x1xf32>
    %113 = vector.broadcast %112 : vector<2x8x1xf32> to vector<2x8x8xf32>
    %114 = arith.subf %110, %113 : vector<2x8x8xf32>
    %115 = math.exp %114 : vector<2x8x8xf32>
    %cst_47 = arith.constant dense<0.000000e+00> : vector<2x8xf32>
    %116 = vector.multi_reduction <add>, %115, %cst_47 [2] : vector<2x8x8xf32> to vector<2x8xf32>
    %117 = vector.shape_cast %116 : vector<2x8xf32> to vector<2x8x1xf32>
    %118 = vector.broadcast %117 : vector<2x8x1xf32> to vector<2x8x8xf32>
    %119 = arith.divf %115, %118 : vector<2x8x8xf32>
    %cst_48 = arith.constant dense<0.000000e+00> : vector<2x8x8xf32>
    %120 = tpu.matmul %119, %106, %cst_48 {dimension_numbers = #tpu.dot_dimension_numbers<[2], [1], [1], [2], [0, 0, 0, 1, 1, 2], [0], [0]>} : vector<2x8x8xf32>, vector<2x8x8xf32>, vector<2x8x8xf32> -> vector<2x8x8xf32>
    %121 = tpu.concatenate %60, %80, %100, %120 in 2 : vector<2x8x8xf32>, vector<2x8x8xf32>, vector<2x8x8xf32>, vector<2x8x8xf32> -> vector<2x8x32xf32>
    %122 = vector.shape_cast %121 : vector<2x8x32xf32> to vector<16x32xf32>
    %c0_49 = arith.constant 0 : index
    %c0_50 = arith.constant 0 : index
    %c0_51 = arith.constant 0 : index
    %123 = vector.load %arg8[%c0_49, %c0_50, %c0_51] : memref<2x32x32xf32, #tpu.memory_space<vmem>>, vector<1x32x32xf32>
    %124 = vector.shape_cast %123 : vector<1x32x32xf32> to vector<32x32xf32>
    %cst_52 = arith.constant dense<0.000000e+00> : vector<16x32xf32>
    %125 = tpu.matmul %122, %124, %cst_52 {dimension_numbers = #tpu.dot_dimension_numbers<[1], [0], [0], [1], [0, 0, 1, 1], [], []>} : vector<16x32xf32>, vector<32x32xf32>, vector<16x32xf32> -> vector<16x32xf32>
    %126 = arith.addf %0, %125 : vector<16x32xf32>
    %c0_53 = arith.constant 0 : index
    %c0_54 = arith.constant 0 : index
    %c0_55 = arith.constant 0 : index
    %127 = vector.load %arg9[%c0_53, %c0_54, %c0_55] : memref<2x1x32xf32, #tpu.memory_space<vmem>>, vector<1x1x32xf32>
    %128 = vector.shape_cast %127 : vector<1x1x32xf32> to vector<1x32xf32>
    %129 = vector.broadcast %128 : vector<1x32xf32> to vector<16x32xf32>
    %130 = arith.addf %126, %129 : vector<16x32xf32>
    %c1 = arith.constant 1 : index
    %c0_56 = arith.constant 0 : index
    %131 = vector.load %arg4[%c1, %c0_56] : memref<7x32xf32, #tpu.memory_space<vmem>>, vector<1x32xf32>
    %c1_57 = arith.constant 1 : index
    %c0_58 = arith.constant 0 : index
    %132 = vector.load %arg5[%c1_57, %c0_58] : memref<7x32xf32, #tpu.memory_space<vmem>>, vector<1x32xf32>
    %cst_59 = arith.constant dense<0.000000e+00> : vector<16xf32>
    %133 = vector.multi_reduction <add>, %130, %cst_59 [1] : vector<16x32xf32> to vector<16xf32>
    %134 = vector.shape_cast %133 : vector<16xf32> to vector<16x1xf32>
    %cst_60 = arith.constant 3.200000e+01 : f32
    %135 = vector.broadcast %cst_60 : f32 to vector<16x1xf32>
    %136 = arith.divf %134, %135 : vector<16x1xf32>
    %137 = vector.broadcast %136 : vector<16x1xf32> to vector<16x32xf32>
    %138 = arith.subf %130, %137 : vector<16x32xf32>
    %139 = arith.mulf %138, %138 : vector<16x32xf32>
    %cst_61 = arith.constant dense<0.000000e+00> : vector<16xf32>
    %140 = vector.multi_reduction <add>, %139, %cst_61 [1] : vector<16x32xf32> to vector<16xf32>
    %141 = vector.shape_cast %140 : vector<16xf32> to vector<16x1xf32>
    %cst_62 = arith.constant 0.0322580636 : f32
    %142 = vector.broadcast %cst_62 : f32 to vector<16x1xf32>
    %143 = arith.mulf %141, %142 : vector<16x1xf32>
    %144 = vector.broadcast %131 : vector<1x32xf32> to vector<16x32xf32>
    %145 = arith.mulf %144, %138 : vector<16x32xf32>
    %146 = math.sqrt %143 : vector<16x1xf32>
    %cst_63 = arith.constant 9.99999997E-7 : f32
    %147 = vector.broadcast %cst_63 : f32 to vector<16x1xf32>
    %148 = arith.addf %146, %147 : vector<16x1xf32>
    %149 = vector.broadcast %148 : vector<16x1xf32> to vector<16x32xf32>
    %150 = arith.divf %145, %149 : vector<16x32xf32>
    %151 = vector.broadcast %132 : vector<1x32xf32> to vector<16x32xf32>
    %152 = arith.addf %150, %151 : vector<16x32xf32>
    %c0_64 = arith.constant 0 : index
    %c0_65 = arith.constant 0 : index
    %c0_66 = arith.constant 0 : index
    %153 = vector.load %arg10[%c0_64, %c0_65, %c0_66] : memref<2x32x32xf32, #tpu.memory_space<vmem>>, vector<1x32x32xf32>
    %154 = vector.shape_cast %153 : vector<1x32x32xf32> to vector<32x32xf32>
    %cst_67 = arith.constant dense<0.000000e+00> : vector<16x32xf32>
    %155 = tpu.matmul %152, %154, %cst_67 {dimension_numbers = #tpu.dot_dimension_numbers<[1], [0], [0], [1], [0, 0, 1, 1], [], []>} : vector<16x32xf32>, vector<32x32xf32>, vector<16x32xf32> -> vector<16x32xf32>
    %c0_68 = arith.constant 0 : index
    %c0_69 = arith.constant 0 : index
    %c0_70 = arith.constant 0 : index
    %156 = vector.load %arg11[%c0_68, %c0_69, %c0_70] : memref<2x1x32xf32, #tpu.memory_space<vmem>>, vector<1x1x32xf32>
    %157 = vector.shape_cast %156 : vector<1x1x32xf32> to vector<1x32xf32>
    %158 = vector.broadcast %157 : vector<1x32xf32> to vector<16x32xf32>
    %159 = arith.addf %155, %158 : vector<16x32xf32>
    %160 = vector.extract_strided_slice %8 {offsets = [0, 0], sizes = [16, 64], strides = [1, 1]} : vector<16x128xf32> to vector<16x64xf32>
    %161 = vector.extract_strided_slice %160 {offsets = [0, 0], sizes = [16, 32], strides = [1, 1]} : vector<16x64xf32> to vector<16x32xf32>
    %162 = vector.extract_strided_slice %160 {offsets = [0, 32], sizes = [16, 32], strides = [1, 1]} : vector<16x64xf32> to vector<16x32xf32>
    %163 = vector.extract_strided_slice %159 {offsets = [0, 0], sizes = [16, 8], strides = [1, 1]} : vector<16x32xf32> to vector<16x8xf32>
    %164 = vector.shape_cast %163 : vector<16x8xf32> to vector<2x8x8xf32>
    %165 = vector.extract_strided_slice %161 {offsets = [0, 0], sizes = [16, 8], strides = [1, 1]} : vector<16x32xf32> to vector<16x8xf32>
    %166 = vector.shape_cast %165 : vector<16x8xf32> to vector<2x8x8xf32>
    %167 = vector.extract_strided_slice %162 {offsets = [0, 0], sizes = [16, 8], strides = [1, 1]} : vector<16x32xf32> to vector<16x8xf32>
    %168 = vector.shape_cast %167 : vector<16x8xf32> to vector<2x8x8xf32>
    %cst_71 = arith.constant dense<0.000000e+00> : vector<2x8x8xf32>
    %169 = tpu.matmul %164, %166, %cst_71 {dimension_numbers = #tpu.dot_dimension_numbers<[2], [2], [1], [1], [0, 0, 0, 1, 1, 1], [0], [0]>} : vector<2x8x8xf32>, vector<2x8x8xf32>, vector<2x8x8xf32> -> vector<2x8x8xf32>
    %cst_72 = arith.constant 0.353553385 : f32
    %170 = vector.broadcast %cst_72 : f32 to vector<2x8x8xf32>
    %171 = arith.mulf %169, %170 : vector<2x8x8xf32>
    %172 = arith.addf %171, %3 : vector<2x8x8xf32>
    %cst_73 = arith.constant dense<0xFF800000> : vector<2x8xf32>
    %173 = vector.multi_reduction <maximumf>, %172, %cst_73 [2] : vector<2x8x8xf32> to vector<2x8xf32>
    %174 = vector.shape_cast %173 : vector<2x8xf32> to vector<2x8x1xf32>
    %175 = vector.broadcast %174 : vector<2x8x1xf32> to vector<2x8x8xf32>
    %176 = arith.subf %172, %175 : vector<2x8x8xf32>
    %177 = math.exp %176 : vector<2x8x8xf32>
    %cst_74 = arith.constant dense<0.000000e+00> : vector<2x8xf32>
    %178 = vector.multi_reduction <add>, %177, %cst_74 [2] : vector<2x8x8xf32> to vector<2x8xf32>
    %179 = vector.shape_cast %178 : vector<2x8xf32> to vector<2x8x1xf32>
    %180 = vector.broadcast %179 : vector<2x8x1xf32> to vector<2x8x8xf32>
    %181 = arith.divf %177, %180 : vector<2x8x8xf32>
    %cst_75 = arith.constant dense<0.000000e+00> : vector<2x8x8xf32>
    %182 = tpu.matmul %181, %168, %cst_75 {dimension_numbers = #tpu.dot_dimension_numbers<[2], [1], [1], [2], [0, 0, 0, 1, 1, 2], [0], [0]>} : vector<2x8x8xf32>, vector<2x8x8xf32>, vector<2x8x8xf32> -> vector<2x8x8xf32>
    %183 = vector.extract_strided_slice %159 {offsets = [0, 8], sizes = [16, 8], strides = [1, 1]} : vector<16x32xf32> to vector<16x8xf32>
    %184 = vector.shape_cast %183 : vector<16x8xf32> to vector<2x8x8xf32>
    %185 = vector.extract_strided_slice %161 {offsets = [0, 8], sizes = [16, 8], strides = [1, 1]} : vector<16x32xf32> to vector<16x8xf32>
    %186 = vector.shape_cast %185 : vector<16x8xf32> to vector<2x8x8xf32>
    %187 = vector.extract_strided_slice %162 {offsets = [0, 8], sizes = [16, 8], strides = [1, 1]} : vector<16x32xf32> to vector<16x8xf32>
    %188 = vector.shape_cast %187 : vector<16x8xf32> to vector<2x8x8xf32>
    %cst_76 = arith.constant dense<0.000000e+00> : vector<2x8x8xf32>
    %189 = tpu.matmul %184, %186, %cst_76 {dimension_numbers = #tpu.dot_dimension_numbers<[2], [2], [1], [1], [0, 0, 0, 1, 1, 1], [0], [0]>} : vector<2x8x8xf32>, vector<2x8x8xf32>, vector<2x8x8xf32> -> vector<2x8x8xf32>
    %cst_77 = arith.constant 0.353553385 : f32
    %190 = vector.broadcast %cst_77 : f32 to vector<2x8x8xf32>
    %191 = arith.mulf %189, %190 : vector<2x8x8xf32>
    %192 = arith.addf %191, %3 : vector<2x8x8xf32>
    %cst_78 = arith.constant dense<0xFF800000> : vector<2x8xf32>
    %193 = vector.multi_reduction <maximumf>, %192, %cst_78 [2] : vector<2x8x8xf32> to vector<2x8xf32>
    %194 = vector.shape_cast %193 : vector<2x8xf32> to vector<2x8x1xf32>
    %195 = vector.broadcast %194 : vector<2x8x1xf32> to vector<2x8x8xf32>
    %196 = arith.subf %192, %195 : vector<2x8x8xf32>
    %197 = math.exp %196 : vector<2x8x8xf32>
    %cst_79 = arith.constant dense<0.000000e+00> : vector<2x8xf32>
    %198 = vector.multi_reduction <add>, %197, %cst_79 [2] : vector<2x8x8xf32> to vector<2x8xf32>
    %199 = vector.shape_cast %198 : vector<2x8xf32> to vector<2x8x1xf32>
    %200 = vector.broadcast %199 : vector<2x8x1xf32> to vector<2x8x8xf32>
    %201 = arith.divf %197, %200 : vector<2x8x8xf32>
    %cst_80 = arith.constant dense<0.000000e+00> : vector<2x8x8xf32>
    %202 = tpu.matmul %201, %188, %cst_80 {dimension_numbers = #tpu.dot_dimension_numbers<[2], [1], [1], [2], [0, 0, 0, 1, 1, 2], [0], [0]>} : vector<2x8x8xf32>, vector<2x8x8xf32>, vector<2x8x8xf32> -> vector<2x8x8xf32>
    %203 = vector.extract_strided_slice %159 {offsets = [0, 16], sizes = [16, 8], strides = [1, 1]} : vector<16x32xf32> to vector<16x8xf32>
    %204 = vector.shape_cast %203 : vector<16x8xf32> to vector<2x8x8xf32>
    %205 = vector.extract_strided_slice %161 {offsets = [0, 16], sizes = [16, 8], strides = [1, 1]} : vector<16x32xf32> to vector<16x8xf32>
    %206 = vector.shape_cast %205 : vector<16x8xf32> to vector<2x8x8xf32>
    %207 = vector.extract_strided_slice %162 {offsets = [0, 16], sizes = [16, 8], strides = [1, 1]} : vector<16x32xf32> to vector<16x8xf32>
    %208 = vector.shape_cast %207 : vector<16x8xf32> to vector<2x8x8xf32>
    %cst_81 = arith.constant dense<0.000000e+00> : vector<2x8x8xf32>
    %209 = tpu.matmul %204, %206, %cst_81 {dimension_numbers = #tpu.dot_dimension_numbers<[2], [2], [1], [1], [0, 0, 0, 1, 1, 1], [0], [0]>} : vector<2x8x8xf32>, vector<2x8x8xf32>, vector<2x8x8xf32> -> vector<2x8x8xf32>
    %cst_82 = arith.constant 0.353553385 : f32
    %210 = vector.broadcast %cst_82 : f32 to vector<2x8x8xf32>
    %211 = arith.mulf %209, %210 : vector<2x8x8xf32>
    %212 = arith.addf %211, %3 : vector<2x8x8xf32>
    %cst_83 = arith.constant dense<0xFF800000> : vector<2x8xf32>
    %213 = vector.multi_reduction <maximumf>, %212, %cst_83 [2] : vector<2x8x8xf32> to vector<2x8xf32>
    %214 = vector.shape_cast %213 : vector<2x8xf32> to vector<2x8x1xf32>
    %215 = vector.broadcast %214 : vector<2x8x1xf32> to vector<2x8x8xf32>
    %216 = arith.subf %212, %215 : vector<2x8x8xf32>
    %217 = math.exp %216 : vector<2x8x8xf32>
    %cst_84 = arith.constant dense<0.000000e+00> : vector<2x8xf32>
    %218 = vector.multi_reduction <add>, %217, %cst_84 [2] : vector<2x8x8xf32> to vector<2x8xf32>
    %219 = vector.shape_cast %218 : vector<2x8xf32> to vector<2x8x1xf32>
    %220 = vector.broadcast %219 : vector<2x8x1xf32> to vector<2x8x8xf32>
    %221 = arith.divf %217, %220 : vector<2x8x8xf32>
    %cst_85 = arith.constant dense<0.000000e+00> : vector<2x8x8xf32>
    %222 = tpu.matmul %221, %208, %cst_85 {dimension_numbers = #tpu.dot_dimension_numbers<[2], [1], [1], [2], [0, 0, 0, 1, 1, 2], [0], [0]>} : vector<2x8x8xf32>, vector<2x8x8xf32>, vector<2x8x8xf32> -> vector<2x8x8xf32>
    %223 = vector.extract_strided_slice %159 {offsets = [0, 24], sizes = [16, 8], strides = [1, 1]} : vector<16x32xf32> to vector<16x8xf32>
    %224 = vector.shape_cast %223 : vector<16x8xf32> to vector<2x8x8xf32>
    %225 = vector.extract_strided_slice %161 {offsets = [0, 24], sizes = [16, 8], strides = [1, 1]} : vector<16x32xf32> to vector<16x8xf32>
    %226 = vector.shape_cast %225 : vector<16x8xf32> to vector<2x8x8xf32>
    %227 = vector.extract_strided_slice %162 {offsets = [0, 24], sizes = [16, 8], strides = [1, 1]} : vector<16x32xf32> to vector<16x8xf32>
    %228 = vector.shape_cast %227 : vector<16x8xf32> to vector<2x8x8xf32>
    %cst_86 = arith.constant dense<0.000000e+00> : vector<2x8x8xf32>
    %229 = tpu.matmul %224, %226, %cst_86 {dimension_numbers = #tpu.dot_dimension_numbers<[2], [2], [1], [1], [0, 0, 0, 1, 1, 1], [0], [0]>} : vector<2x8x8xf32>, vector<2x8x8xf32>, vector<2x8x8xf32> -> vector<2x8x8xf32>
    %cst_87 = arith.constant 0.353553385 : f32
    %230 = vector.broadcast %cst_87 : f32 to vector<2x8x8xf32>
    %231 = arith.mulf %229, %230 : vector<2x8x8xf32>
    %232 = arith.addf %231, %3 : vector<2x8x8xf32>
    %cst_88 = arith.constant dense<0xFF800000> : vector<2x8xf32>
    %233 = vector.multi_reduction <maximumf>, %232, %cst_88 [2] : vector<2x8x8xf32> to vector<2x8xf32>
    %234 = vector.shape_cast %233 : vector<2x8xf32> to vector<2x8x1xf32>
    %235 = vector.broadcast %234 : vector<2x8x1xf32> to vector<2x8x8xf32>
    %236 = arith.subf %232, %235 : vector<2x8x8xf32>
    %237 = math.exp %236 : vector<2x8x8xf32>
    %cst_89 = arith.constant dense<0.000000e+00> : vector<2x8xf32>
    %238 = vector.multi_reduction <add>, %237, %cst_89 [2] : vector<2x8x8xf32> to vector<2x8xf32>
    %239 = vector.shape_cast %238 : vector<2x8xf32> to vector<2x8x1xf32>
    %240 = vector.broadcast %239 : vector<2x8x1xf32> to vector<2x8x8xf32>
    %241 = arith.divf %237, %240 : vector<2x8x8xf32>
    %cst_90 = arith.constant dense<0.000000e+00> : vector<2x8x8xf32>
    %242 = tpu.matmul %241, %228, %cst_90 {dimension_numbers = #tpu.dot_dimension_numbers<[2], [1], [1], [2], [0, 0, 0, 1, 1, 2], [0], [0]>} : vector<2x8x8xf32>, vector<2x8x8xf32>, vector<2x8x8xf32> -> vector<2x8x8xf32>
    %243 = tpu.concatenate %182, %202, %222, %242 in 2 : vector<2x8x8xf32>, vector<2x8x8xf32>, vector<2x8x8xf32>, vector<2x8x8xf32> -> vector<2x8x32xf32>
    %244 = vector.shape_cast %243 : vector<2x8x32xf32> to vector<16x32xf32>
    %c0_91 = arith.constant 0 : index
    %c0_92 = arith.constant 0 : index
    %c0_93 = arith.constant 0 : index
    %245 = vector.load %arg14[%c0_91, %c0_92, %c0_93] : memref<2x32x32xf32, #tpu.memory_space<vmem>>, vector<1x32x32xf32>
    %246 = vector.shape_cast %245 : vector<1x32x32xf32> to vector<32x32xf32>
    %cst_94 = arith.constant dense<0.000000e+00> : vector<16x32xf32>
    %247 = tpu.matmul %244, %246, %cst_94 {dimension_numbers = #tpu.dot_dimension_numbers<[1], [0], [0], [1], [0, 0, 1, 1], [], []>} : vector<16x32xf32>, vector<32x32xf32>, vector<16x32xf32> -> vector<16x32xf32>
    %248 = arith.addf %130, %247 : vector<16x32xf32>
    %c0_95 = arith.constant 0 : index
    %c0_96 = arith.constant 0 : index
    %c0_97 = arith.constant 0 : index
    %249 = vector.load %arg15[%c0_95, %c0_96, %c0_97] : memref<2x1x32xf32, #tpu.memory_space<vmem>>, vector<1x1x32xf32>
    %250 = vector.shape_cast %249 : vector<1x1x32xf32> to vector<1x32xf32>
    %251 = vector.broadcast %250 : vector<1x32xf32> to vector<16x32xf32>
    %252 = arith.addf %248, %251 : vector<16x32xf32>
    %c2 = arith.constant 2 : index
    %c0_98 = arith.constant 0 : index
    %253 = vector.load %arg4[%c2, %c0_98] : memref<7x32xf32, #tpu.memory_space<vmem>>, vector<1x32xf32>
    %c2_99 = arith.constant 2 : index
    %c0_100 = arith.constant 0 : index
    %254 = vector.load %arg5[%c2_99, %c0_100] : memref<7x32xf32, #tpu.memory_space<vmem>>, vector<1x32xf32>
    %cst_101 = arith.constant dense<0.000000e+00> : vector<16xf32>
    %255 = vector.multi_reduction <add>, %252, %cst_101 [1] : vector<16x32xf32> to vector<16xf32>
    %256 = vector.shape_cast %255 : vector<16xf32> to vector<16x1xf32>
    %cst_102 = arith.constant 3.200000e+01 : f32
    %257 = vector.broadcast %cst_102 : f32 to vector<16x1xf32>
    %258 = arith.divf %256, %257 : vector<16x1xf32>
    %259 = vector.broadcast %258 : vector<16x1xf32> to vector<16x32xf32>
    %260 = arith.subf %252, %259 : vector<16x32xf32>
    %261 = arith.mulf %260, %260 : vector<16x32xf32>
    %cst_103 = arith.constant dense<0.000000e+00> : vector<16xf32>
    %262 = vector.multi_reduction <add>, %261, %cst_103 [1] : vector<16x32xf32> to vector<16xf32>
    %263 = vector.shape_cast %262 : vector<16xf32> to vector<16x1xf32>
    %cst_104 = arith.constant 0.0322580636 : f32
    %264 = vector.broadcast %cst_104 : f32 to vector<16x1xf32>
    %265 = arith.mulf %263, %264 : vector<16x1xf32>
    %266 = vector.broadcast %253 : vector<1x32xf32> to vector<16x32xf32>
    %267 = arith.mulf %266, %260 : vector<16x32xf32>
    %268 = math.sqrt %265 : vector<16x1xf32>
    %cst_105 = arith.constant 9.99999997E-7 : f32
    %269 = vector.broadcast %cst_105 : f32 to vector<16x1xf32>
    %270 = arith.addf %268, %269 : vector<16x1xf32>
    %271 = vector.broadcast %270 : vector<16x1xf32> to vector<16x32xf32>
    %272 = arith.divf %267, %271 : vector<16x32xf32>
    %273 = vector.broadcast %254 : vector<1x32xf32> to vector<16x32xf32>
    %274 = arith.addf %272, %273 : vector<16x32xf32>
    %c0_106 = arith.constant 0 : index
    %c0_107 = arith.constant 0 : index
    %c0_108 = arith.constant 0 : index
    %275 = vector.load %arg16[%c0_106, %c0_107, %c0_108] : memref<2x32x64xf32, #tpu.memory_space<vmem>>, vector<1x32x64xf32>
    %276 = vector.shape_cast %275 : vector<1x32x64xf32> to vector<32x64xf32>
    %cst_109 = arith.constant dense<0.000000e+00> : vector<16x64xf32>
    %277 = tpu.matmul %274, %276, %cst_109 {dimension_numbers = #tpu.dot_dimension_numbers<[1], [0], [0], [1], [0, 0, 1, 1], [], []>} : vector<16x32xf32>, vector<32x64xf32>, vector<16x64xf32> -> vector<16x64xf32>
    %c0_110 = arith.constant 0 : index
    %c0_111 = arith.constant 0 : index
    %c0_112 = arith.constant 0 : index
    %278 = vector.load %arg17[%c0_110, %c0_111, %c0_112] : memref<2x1x64xf32, #tpu.memory_space<vmem>>, vector<1x1x64xf32>
    %279 = vector.shape_cast %278 : vector<1x1x64xf32> to vector<1x64xf32>
    %280 = vector.broadcast %279 : vector<1x64xf32> to vector<16x64xf32>
    %281 = arith.addf %277, %280 : vector<16x64xf32>
    %cst_113 = arith.constant 0.000000e+00 : f32
    %282 = vector.broadcast %cst_113 : f32 to vector<16x64xf32>
    %283 = arith.maximumf %281, %282 : vector<16x64xf32>
    %c0_114 = arith.constant 0 : index
    %c0_115 = arith.constant 0 : index
    %c0_116 = arith.constant 0 : index
    %284 = vector.load %arg18[%c0_114, %c0_115, %c0_116] : memref<2x64x32xf32, #tpu.memory_space<vmem>>, vector<1x64x32xf32>
    %285 = vector.shape_cast %284 : vector<1x64x32xf32> to vector<64x32xf32>
    %cst_117 = arith.constant dense<0.000000e+00> : vector<16x32xf32>
    %286 = tpu.matmul %283, %285, %cst_117 {dimension_numbers = #tpu.dot_dimension_numbers<[1], [0], [0], [1], [0, 0, 1, 1], [], []>} : vector<16x64xf32>, vector<64x32xf32>, vector<16x32xf32> -> vector<16x32xf32>
    %287 = arith.addf %252, %286 : vector<16x32xf32>
    %c0_118 = arith.constant 0 : index
    %c0_119 = arith.constant 0 : index
    %c0_120 = arith.constant 0 : index
    %288 = vector.load %arg19[%c0_118, %c0_119, %c0_120] : memref<2x1x32xf32, #tpu.memory_space<vmem>>, vector<1x1x32xf32>
    %289 = vector.shape_cast %288 : vector<1x1x32xf32> to vector<1x32xf32>
    %290 = vector.broadcast %289 : vector<1x32xf32> to vector<16x32xf32>
    %291 = arith.addf %287, %290 : vector<16x32xf32>
    %c3 = arith.constant 3 : index
    %c0_121 = arith.constant 0 : index
    %292 = vector.load %arg4[%c3, %c0_121] : memref<7x32xf32, #tpu.memory_space<vmem>>, vector<1x32xf32>
    %c3_122 = arith.constant 3 : index
    %c0_123 = arith.constant 0 : index
    %293 = vector.load %arg5[%c3_122, %c0_123] : memref<7x32xf32, #tpu.memory_space<vmem>>, vector<1x32xf32>
    %cst_124 = arith.constant dense<0.000000e+00> : vector<16xf32>
    %294 = vector.multi_reduction <add>, %291, %cst_124 [1] : vector<16x32xf32> to vector<16xf32>
    %295 = vector.shape_cast %294 : vector<16xf32> to vector<16x1xf32>
    %cst_125 = arith.constant 3.200000e+01 : f32
    %296 = vector.broadcast %cst_125 : f32 to vector<16x1xf32>
    %297 = arith.divf %295, %296 : vector<16x1xf32>
    %298 = vector.broadcast %297 : vector<16x1xf32> to vector<16x32xf32>
    %299 = arith.subf %291, %298 : vector<16x32xf32>
    %300 = arith.mulf %299, %299 : vector<16x32xf32>
    %cst_126 = arith.constant dense<0.000000e+00> : vector<16xf32>
    %301 = vector.multi_reduction <add>, %300, %cst_126 [1] : vector<16x32xf32> to vector<16xf32>
    %302 = vector.shape_cast %301 : vector<16xf32> to vector<16x1xf32>
    %cst_127 = arith.constant 0.0322580636 : f32
    %303 = vector.broadcast %cst_127 : f32 to vector<16x1xf32>
    %304 = arith.mulf %302, %303 : vector<16x1xf32>
    %305 = vector.broadcast %292 : vector<1x32xf32> to vector<16x32xf32>
    %306 = arith.mulf %305, %299 : vector<16x32xf32>
    %307 = math.sqrt %304 : vector<16x1xf32>
    %cst_128 = arith.constant 9.99999997E-7 : f32
    %308 = vector.broadcast %cst_128 : f32 to vector<16x1xf32>
    %309 = arith.addf %307, %308 : vector<16x1xf32>
    %310 = vector.broadcast %309 : vector<16x1xf32> to vector<16x32xf32>
    %311 = arith.divf %306, %310 : vector<16x32xf32>
    %312 = vector.broadcast %293 : vector<1x32xf32> to vector<16x32xf32>
    %313 = arith.addf %311, %312 : vector<16x32xf32>
    %c1_129 = arith.constant 1 : index
    %c0_130 = arith.constant 0 : index
    %c0_131 = arith.constant 0 : index
    %314 = vector.load %arg6[%c1_129, %c0_130, %c0_131] : memref<2x32x96xf32, #tpu.memory_space<vmem>>, vector<1x32x96xf32>
    %315 = vector.shape_cast %314 : vector<1x32x96xf32> to vector<32x96xf32>
    %cst_132 = arith.constant dense<0.000000e+00> : vector<16x96xf32>
    %316 = tpu.matmul %313, %315, %cst_132 {dimension_numbers = #tpu.dot_dimension_numbers<[1], [0], [0], [1], [0, 0, 1, 1], [], []>} : vector<16x32xf32>, vector<32x96xf32>, vector<16x96xf32> -> vector<16x96xf32>
    %c1_133 = arith.constant 1 : index
    %c0_134 = arith.constant 0 : index
    %c0_135 = arith.constant 0 : index
    %317 = vector.load %arg7[%c1_133, %c0_134, %c0_135] : memref<2x1x96xf32, #tpu.memory_space<vmem>>, vector<1x1x96xf32>
    %318 = vector.shape_cast %317 : vector<1x1x96xf32> to vector<1x96xf32>
    %319 = vector.broadcast %318 : vector<1x96xf32> to vector<16x96xf32>
    %320 = arith.addf %316, %319 : vector<16x96xf32>
    %321 = vector.extract_strided_slice %320 {offsets = [0, 0], sizes = [16, 32], strides = [1, 1]} : vector<16x96xf32> to vector<16x32xf32>
    %322 = vector.extract_strided_slice %320 {offsets = [0, 32], sizes = [16, 32], strides = [1, 1]} : vector<16x96xf32> to vector<16x32xf32>
    %323 = vector.extract_strided_slice %320 {offsets = [0, 64], sizes = [16, 32], strides = [1, 1]} : vector<16x96xf32> to vector<16x32xf32>
    %324 = vector.extract_strided_slice %321 {offsets = [0, 0], sizes = [16, 8], strides = [1, 1]} : vector<16x32xf32> to vector<16x8xf32>
    %325 = vector.shape_cast %324 : vector<16x8xf32> to vector<2x8x8xf32>
    %326 = vector.extract_strided_slice %322 {offsets = [0, 0], sizes = [16, 8], strides = [1, 1]} : vector<16x32xf32> to vector<16x8xf32>
    %327 = vector.shape_cast %326 : vector<16x8xf32> to vector<2x8x8xf32>
    %328 = vector.extract_strided_slice %323 {offsets = [0, 0], sizes = [16, 8], strides = [1, 1]} : vector<16x32xf32> to vector<16x8xf32>
    %329 = vector.shape_cast %328 : vector<16x8xf32> to vector<2x8x8xf32>
    %cst_136 = arith.constant dense<0.000000e+00> : vector<2x8x8xf32>
    %330 = tpu.matmul %325, %327, %cst_136 {dimension_numbers = #tpu.dot_dimension_numbers<[2], [2], [1], [1], [0, 0, 0, 1, 1, 1], [0], [0]>} : vector<2x8x8xf32>, vector<2x8x8xf32>, vector<2x8x8xf32> -> vector<2x8x8xf32>
    %cst_137 = arith.constant 0.353553385 : f32
    %331 = vector.broadcast %cst_137 : f32 to vector<2x8x8xf32>
    %332 = arith.mulf %330, %331 : vector<2x8x8xf32>
    %333 = arith.addf %332, %2 : vector<2x8x8xf32>
    %cst_138 = arith.constant dense<0xFF800000> : vector<2x8xf32>
    %334 = vector.multi_reduction <maximumf>, %333, %cst_138 [2] : vector<2x8x8xf32> to vector<2x8xf32>
    %335 = vector.shape_cast %334 : vector<2x8xf32> to vector<2x8x1xf32>
    %336 = vector.broadcast %335 : vector<2x8x1xf32> to vector<2x8x8xf32>
    %337 = arith.subf %333, %336 : vector<2x8x8xf32>
    %338 = math.exp %337 : vector<2x8x8xf32>
    %cst_139 = arith.constant dense<0.000000e+00> : vector<2x8xf32>
    %339 = vector.multi_reduction <add>, %338, %cst_139 [2] : vector<2x8x8xf32> to vector<2x8xf32>
    %340 = vector.shape_cast %339 : vector<2x8xf32> to vector<2x8x1xf32>
    %341 = vector.broadcast %340 : vector<2x8x1xf32> to vector<2x8x8xf32>
    %342 = arith.divf %338, %341 : vector<2x8x8xf32>
    %cst_140 = arith.constant dense<0.000000e+00> : vector<2x8x8xf32>
    %343 = tpu.matmul %342, %329, %cst_140 {dimension_numbers = #tpu.dot_dimension_numbers<[2], [1], [1], [2], [0, 0, 0, 1, 1, 2], [0], [0]>} : vector<2x8x8xf32>, vector<2x8x8xf32>, vector<2x8x8xf32> -> vector<2x8x8xf32>
    %344 = vector.extract_strided_slice %321 {offsets = [0, 8], sizes = [16, 8], strides = [1, 1]} : vector<16x32xf32> to vector<16x8xf32>
    %345 = vector.shape_cast %344 : vector<16x8xf32> to vector<2x8x8xf32>
    %346 = vector.extract_strided_slice %322 {offsets = [0, 8], sizes = [16, 8], strides = [1, 1]} : vector<16x32xf32> to vector<16x8xf32>
    %347 = vector.shape_cast %346 : vector<16x8xf32> to vector<2x8x8xf32>
    %348 = vector.extract_strided_slice %323 {offsets = [0, 8], sizes = [16, 8], strides = [1, 1]} : vector<16x32xf32> to vector<16x8xf32>
    %349 = vector.shape_cast %348 : vector<16x8xf32> to vector<2x8x8xf32>
    %cst_141 = arith.constant dense<0.000000e+00> : vector<2x8x8xf32>
    %350 = tpu.matmul %345, %347, %cst_141 {dimension_numbers = #tpu.dot_dimension_numbers<[2], [2], [1], [1], [0, 0, 0, 1, 1, 1], [0], [0]>} : vector<2x8x8xf32>, vector<2x8x8xf32>, vector<2x8x8xf32> -> vector<2x8x8xf32>
    %cst_142 = arith.constant 0.353553385 : f32
    %351 = vector.broadcast %cst_142 : f32 to vector<2x8x8xf32>
    %352 = arith.mulf %350, %351 : vector<2x8x8xf32>
    %353 = arith.addf %352, %2 : vector<2x8x8xf32>
    %cst_143 = arith.constant dense<0xFF800000> : vector<2x8xf32>
    %354 = vector.multi_reduction <maximumf>, %353, %cst_143 [2] : vector<2x8x8xf32> to vector<2x8xf32>
    %355 = vector.shape_cast %354 : vector<2x8xf32> to vector<2x8x1xf32>
    %356 = vector.broadcast %355 : vector<2x8x1xf32> to vector<2x8x8xf32>
    %357 = arith.subf %353, %356 : vector<2x8x8xf32>
    %358 = math.exp %357 : vector<2x8x8xf32>
    %cst_144 = arith.constant dense<0.000000e+00> : vector<2x8xf32>
    %359 = vector.multi_reduction <add>, %358, %cst_144 [2] : vector<2x8x8xf32> to vector<2x8xf32>
    %360 = vector.shape_cast %359 : vector<2x8xf32> to vector<2x8x1xf32>
    %361 = vector.broadcast %360 : vector<2x8x1xf32> to vector<2x8x8xf32>
    %362 = arith.divf %358, %361 : vector<2x8x8xf32>
    %cst_145 = arith.constant dense<0.000000e+00> : vector<2x8x8xf32>
    %363 = tpu.matmul %362, %349, %cst_145 {dimension_numbers = #tpu.dot_dimension_numbers<[2], [1], [1], [2], [0, 0, 0, 1, 1, 2], [0], [0]>} : vector<2x8x8xf32>, vector<2x8x8xf32>, vector<2x8x8xf32> -> vector<2x8x8xf32>
    %364 = vector.extract_strided_slice %321 {offsets = [0, 16], sizes = [16, 8], strides = [1, 1]} : vector<16x32xf32> to vector<16x8xf32>
    %365 = vector.shape_cast %364 : vector<16x8xf32> to vector<2x8x8xf32>
    %366 = vector.extract_strided_slice %322 {offsets = [0, 16], sizes = [16, 8], strides = [1, 1]} : vector<16x32xf32> to vector<16x8xf32>
    %367 = vector.shape_cast %366 : vector<16x8xf32> to vector<2x8x8xf32>
    %368 = vector.extract_strided_slice %323 {offsets = [0, 16], sizes = [16, 8], strides = [1, 1]} : vector<16x32xf32> to vector<16x8xf32>
    %369 = vector.shape_cast %368 : vector<16x8xf32> to vector<2x8x8xf32>
    %cst_146 = arith.constant dense<0.000000e+00> : vector<2x8x8xf32>
    %370 = tpu.matmul %365, %367, %cst_146 {dimension_numbers = #tpu.dot_dimension_numbers<[2], [2], [1], [1], [0, 0, 0, 1, 1, 1], [0], [0]>} : vector<2x8x8xf32>, vector<2x8x8xf32>, vector<2x8x8xf32> -> vector<2x8x8xf32>
    %cst_147 = arith.constant 0.353553385 : f32
    %371 = vector.broadcast %cst_147 : f32 to vector<2x8x8xf32>
    %372 = arith.mulf %370, %371 : vector<2x8x8xf32>
    %373 = arith.addf %372, %2 : vector<2x8x8xf32>
    %cst_148 = arith.constant dense<0xFF800000> : vector<2x8xf32>
    %374 = vector.multi_reduction <maximumf>, %373, %cst_148 [2] : vector<2x8x8xf32> to vector<2x8xf32>
    %375 = vector.shape_cast %374 : vector<2x8xf32> to vector<2x8x1xf32>
    %376 = vector.broadcast %375 : vector<2x8x1xf32> to vector<2x8x8xf32>
    %377 = arith.subf %373, %376 : vector<2x8x8xf32>
    %378 = math.exp %377 : vector<2x8x8xf32>
    %cst_149 = arith.constant dense<0.000000e+00> : vector<2x8xf32>
    %379 = vector.multi_reduction <add>, %378, %cst_149 [2] : vector<2x8x8xf32> to vector<2x8xf32>
    %380 = vector.shape_cast %379 : vector<2x8xf32> to vector<2x8x1xf32>
    %381 = vector.broadcast %380 : vector<2x8x1xf32> to vector<2x8x8xf32>
    %382 = arith.divf %378, %381 : vector<2x8x8xf32>
    %cst_150 = arith.constant dense<0.000000e+00> : vector<2x8x8xf32>
    %383 = tpu.matmul %382, %369, %cst_150 {dimension_numbers = #tpu.dot_dimension_numbers<[2], [1], [1], [2], [0, 0, 0, 1, 1, 2], [0], [0]>} : vector<2x8x8xf32>, vector<2x8x8xf32>, vector<2x8x8xf32> -> vector<2x8x8xf32>
    %384 = vector.extract_strided_slice %321 {offsets = [0, 24], sizes = [16, 8], strides = [1, 1]} : vector<16x32xf32> to vector<16x8xf32>
    %385 = vector.shape_cast %384 : vector<16x8xf32> to vector<2x8x8xf32>
    %386 = vector.extract_strided_slice %322 {offsets = [0, 24], sizes = [16, 8], strides = [1, 1]} : vector<16x32xf32> to vector<16x8xf32>
    %387 = vector.shape_cast %386 : vector<16x8xf32> to vector<2x8x8xf32>
    %388 = vector.extract_strided_slice %323 {offsets = [0, 24], sizes = [16, 8], strides = [1, 1]} : vector<16x32xf32> to vector<16x8xf32>
    %389 = vector.shape_cast %388 : vector<16x8xf32> to vector<2x8x8xf32>
    %cst_151 = arith.constant dense<0.000000e+00> : vector<2x8x8xf32>
    %390 = tpu.matmul %385, %387, %cst_151 {dimension_numbers = #tpu.dot_dimension_numbers<[2], [2], [1], [1], [0, 0, 0, 1, 1, 1], [0], [0]>} : vector<2x8x8xf32>, vector<2x8x8xf32>, vector<2x8x8xf32> -> vector<2x8x8xf32>
    %cst_152 = arith.constant 0.353553385 : f32
    %391 = vector.broadcast %cst_152 : f32 to vector<2x8x8xf32>
    %392 = arith.mulf %390, %391 : vector<2x8x8xf32>
    %393 = arith.addf %392, %2 : vector<2x8x8xf32>
    %cst_153 = arith.constant dense<0xFF800000> : vector<2x8xf32>
    %394 = vector.multi_reduction <maximumf>, %393, %cst_153 [2] : vector<2x8x8xf32> to vector<2x8xf32>
    %395 = vector.shape_cast %394 : vector<2x8xf32> to vector<2x8x1xf32>
    %396 = vector.broadcast %395 : vector<2x8x1xf32> to vector<2x8x8xf32>
    %397 = arith.subf %393, %396 : vector<2x8x8xf32>
    %398 = math.exp %397 : vector<2x8x8xf32>
    %cst_154 = arith.constant dense<0.000000e+00> : vector<2x8xf32>
    %399 = vector.multi_reduction <add>, %398, %cst_154 [2] : vector<2x8x8xf32> to vector<2x8xf32>
    %400 = vector.shape_cast %399 : vector<2x8xf32> to vector<2x8x1xf32>
    %401 = vector.broadcast %400 : vector<2x8x1xf32> to vector<2x8x8xf32>
    %402 = arith.divf %398, %401 : vector<2x8x8xf32>
    %cst_155 = arith.constant dense<0.000000e+00> : vector<2x8x8xf32>
    %403 = tpu.matmul %402, %389, %cst_155 {dimension_numbers = #tpu.dot_dimension_numbers<[2], [1], [1], [2], [0, 0, 0, 1, 1, 2], [0], [0]>} : vector<2x8x8xf32>, vector<2x8x8xf32>, vector<2x8x8xf32> -> vector<2x8x8xf32>
    %404 = tpu.concatenate %343, %363, %383, %403 in 2 : vector<2x8x8xf32>, vector<2x8x8xf32>, vector<2x8x8xf32>, vector<2x8x8xf32> -> vector<2x8x32xf32>
    %405 = vector.shape_cast %404 : vector<2x8x32xf32> to vector<16x32xf32>
    %c1_156 = arith.constant 1 : index
    %c0_157 = arith.constant 0 : index
    %c0_158 = arith.constant 0 : index
    %406 = vector.load %arg8[%c1_156, %c0_157, %c0_158] : memref<2x32x32xf32, #tpu.memory_space<vmem>>, vector<1x32x32xf32>
    %407 = vector.shape_cast %406 : vector<1x32x32xf32> to vector<32x32xf32>
    %cst_159 = arith.constant dense<0.000000e+00> : vector<16x32xf32>
    %408 = tpu.matmul %405, %407, %cst_159 {dimension_numbers = #tpu.dot_dimension_numbers<[1], [0], [0], [1], [0, 0, 1, 1], [], []>} : vector<16x32xf32>, vector<32x32xf32>, vector<16x32xf32> -> vector<16x32xf32>
    %409 = arith.addf %291, %408 : vector<16x32xf32>
    %c1_160 = arith.constant 1 : index
    %c0_161 = arith.constant 0 : index
    %c0_162 = arith.constant 0 : index
    %410 = vector.load %arg9[%c1_160, %c0_161, %c0_162] : memref<2x1x32xf32, #tpu.memory_space<vmem>>, vector<1x1x32xf32>
    %411 = vector.shape_cast %410 : vector<1x1x32xf32> to vector<1x32xf32>
    %412 = vector.broadcast %411 : vector<1x32xf32> to vector<16x32xf32>
    %413 = arith.addf %409, %412 : vector<16x32xf32>
    %c4 = arith.constant 4 : index
    %c0_163 = arith.constant 0 : index
    %414 = vector.load %arg4[%c4, %c0_163] : memref<7x32xf32, #tpu.memory_space<vmem>>, vector<1x32xf32>
    %c4_164 = arith.constant 4 : index
    %c0_165 = arith.constant 0 : index
    %415 = vector.load %arg5[%c4_164, %c0_165] : memref<7x32xf32, #tpu.memory_space<vmem>>, vector<1x32xf32>
    %cst_166 = arith.constant dense<0.000000e+00> : vector<16xf32>
    %416 = vector.multi_reduction <add>, %413, %cst_166 [1] : vector<16x32xf32> to vector<16xf32>
    %417 = vector.shape_cast %416 : vector<16xf32> to vector<16x1xf32>
    %cst_167 = arith.constant 3.200000e+01 : f32
    %418 = vector.broadcast %cst_167 : f32 to vector<16x1xf32>
    %419 = arith.divf %417, %418 : vector<16x1xf32>
    %420 = vector.broadcast %419 : vector<16x1xf32> to vector<16x32xf32>
    %421 = arith.subf %413, %420 : vector<16x32xf32>
    %422 = arith.mulf %421, %421 : vector<16x32xf32>
    %cst_168 = arith.constant dense<0.000000e+00> : vector<16xf32>
    %423 = vector.multi_reduction <add>, %422, %cst_168 [1] : vector<16x32xf32> to vector<16xf32>
    %424 = vector.shape_cast %423 : vector<16xf32> to vector<16x1xf32>
    %cst_169 = arith.constant 0.0322580636 : f32
    %425 = vector.broadcast %cst_169 : f32 to vector<16x1xf32>
    %426 = arith.mulf %424, %425 : vector<16x1xf32>
    %427 = vector.broadcast %414 : vector<1x32xf32> to vector<16x32xf32>
    %428 = arith.mulf %427, %421 : vector<16x32xf32>
    %429 = math.sqrt %426 : vector<16x1xf32>
    %cst_170 = arith.constant 9.99999997E-7 : f32
    %430 = vector.broadcast %cst_170 : f32 to vector<16x1xf32>
    %431 = arith.addf %429, %430 : vector<16x1xf32>
    %432 = vector.broadcast %431 : vector<16x1xf32> to vector<16x32xf32>
    %433 = arith.divf %428, %432 : vector<16x32xf32>
    %434 = vector.broadcast %415 : vector<1x32xf32> to vector<16x32xf32>
    %435 = arith.addf %433, %434 : vector<16x32xf32>
    %c1_171 = arith.constant 1 : index
    %c0_172 = arith.constant 0 : index
    %c0_173 = arith.constant 0 : index
    %436 = vector.load %arg10[%c1_171, %c0_172, %c0_173] : memref<2x32x32xf32, #tpu.memory_space<vmem>>, vector<1x32x32xf32>
    %437 = vector.shape_cast %436 : vector<1x32x32xf32> to vector<32x32xf32>
    %cst_174 = arith.constant dense<0.000000e+00> : vector<16x32xf32>
    %438 = tpu.matmul %435, %437, %cst_174 {dimension_numbers = #tpu.dot_dimension_numbers<[1], [0], [0], [1], [0, 0, 1, 1], [], []>} : vector<16x32xf32>, vector<32x32xf32>, vector<16x32xf32> -> vector<16x32xf32>
    %c1_175 = arith.constant 1 : index
    %c0_176 = arith.constant 0 : index
    %c0_177 = arith.constant 0 : index
    %439 = vector.load %arg11[%c1_175, %c0_176, %c0_177] : memref<2x1x32xf32, #tpu.memory_space<vmem>>, vector<1x1x32xf32>
    %440 = vector.shape_cast %439 : vector<1x1x32xf32> to vector<1x32xf32>
    %441 = vector.broadcast %440 : vector<1x32xf32> to vector<16x32xf32>
    %442 = arith.addf %438, %441 : vector<16x32xf32>
    %443 = vector.extract_strided_slice %8 {offsets = [0, 64], sizes = [16, 64], strides = [1, 1]} : vector<16x128xf32> to vector<16x64xf32>
    %444 = vector.extract_strided_slice %443 {offsets = [0, 0], sizes = [16, 32], strides = [1, 1]} : vector<16x64xf32> to vector<16x32xf32>
    %445 = vector.extract_strided_slice %443 {offsets = [0, 32], sizes = [16, 32], strides = [1, 1]} : vector<16x64xf32> to vector<16x32xf32>
    %446 = vector.extract_strided_slice %442 {offsets = [0, 0], sizes = [16, 8], strides = [1, 1]} : vector<16x32xf32> to vector<16x8xf32>
    %447 = vector.shape_cast %446 : vector<16x8xf32> to vector<2x8x8xf32>
    %448 = vector.extract_strided_slice %444 {offsets = [0, 0], sizes = [16, 8], strides = [1, 1]} : vector<16x32xf32> to vector<16x8xf32>
    %449 = vector.shape_cast %448 : vector<16x8xf32> to vector<2x8x8xf32>
    %450 = vector.extract_strided_slice %445 {offsets = [0, 0], sizes = [16, 8], strides = [1, 1]} : vector<16x32xf32> to vector<16x8xf32>
    %451 = vector.shape_cast %450 : vector<16x8xf32> to vector<2x8x8xf32>
    %cst_178 = arith.constant dense<0.000000e+00> : vector<2x8x8xf32>
    %452 = tpu.matmul %447, %449, %cst_178 {dimension_numbers = #tpu.dot_dimension_numbers<[2], [2], [1], [1], [0, 0, 0, 1, 1, 1], [0], [0]>} : vector<2x8x8xf32>, vector<2x8x8xf32>, vector<2x8x8xf32> -> vector<2x8x8xf32>
    %cst_179 = arith.constant 0.353553385 : f32
    %453 = vector.broadcast %cst_179 : f32 to vector<2x8x8xf32>
    %454 = arith.mulf %452, %453 : vector<2x8x8xf32>
    %455 = arith.addf %454, %3 : vector<2x8x8xf32>
    %cst_180 = arith.constant dense<0xFF800000> : vector<2x8xf32>
    %456 = vector.multi_reduction <maximumf>, %455, %cst_180 [2] : vector<2x8x8xf32> to vector<2x8xf32>
    %457 = vector.shape_cast %456 : vector<2x8xf32> to vector<2x8x1xf32>
    %458 = vector.broadcast %457 : vector<2x8x1xf32> to vector<2x8x8xf32>
    %459 = arith.subf %455, %458 : vector<2x8x8xf32>
    %460 = math.exp %459 : vector<2x8x8xf32>
    %cst_181 = arith.constant dense<0.000000e+00> : vector<2x8xf32>
    %461 = vector.multi_reduction <add>, %460, %cst_181 [2] : vector<2x8x8xf32> to vector<2x8xf32>
    %462 = vector.shape_cast %461 : vector<2x8xf32> to vector<2x8x1xf32>
    %463 = vector.broadcast %462 : vector<2x8x1xf32> to vector<2x8x8xf32>
    %464 = arith.divf %460, %463 : vector<2x8x8xf32>
    %cst_182 = arith.constant dense<0.000000e+00> : vector<2x8x8xf32>
    %465 = tpu.matmul %464, %451, %cst_182 {dimension_numbers = #tpu.dot_dimension_numbers<[2], [1], [1], [2], [0, 0, 0, 1, 1, 2], [0], [0]>} : vector<2x8x8xf32>, vector<2x8x8xf32>, vector<2x8x8xf32> -> vector<2x8x8xf32>
    %466 = vector.extract_strided_slice %442 {offsets = [0, 8], sizes = [16, 8], strides = [1, 1]} : vector<16x32xf32> to vector<16x8xf32>
    %467 = vector.shape_cast %466 : vector<16x8xf32> to vector<2x8x8xf32>
    %468 = vector.extract_strided_slice %444 {offsets = [0, 8], sizes = [16, 8], strides = [1, 1]} : vector<16x32xf32> to vector<16x8xf32>
    %469 = vector.shape_cast %468 : vector<16x8xf32> to vector<2x8x8xf32>
    %470 = vector.extract_strided_slice %445 {offsets = [0, 8], sizes = [16, 8], strides = [1, 1]} : vector<16x32xf32> to vector<16x8xf32>
    %471 = vector.shape_cast %470 : vector<16x8xf32> to vector<2x8x8xf32>
    %cst_183 = arith.constant dense<0.000000e+00> : vector<2x8x8xf32>
    %472 = tpu.matmul %467, %469, %cst_183 {dimension_numbers = #tpu.dot_dimension_numbers<[2], [2], [1], [1], [0, 0, 0, 1, 1, 1], [0], [0]>} : vector<2x8x8xf32>, vector<2x8x8xf32>, vector<2x8x8xf32> -> vector<2x8x8xf32>
    %cst_184 = arith.constant 0.353553385 : f32
    %473 = vector.broadcast %cst_184 : f32 to vector<2x8x8xf32>
    %474 = arith.mulf %472, %473 : vector<2x8x8xf32>
    %475 = arith.addf %474, %3 : vector<2x8x8xf32>
    %cst_185 = arith.constant dense<0xFF800000> : vector<2x8xf32>
    %476 = vector.multi_reduction <maximumf>, %475, %cst_185 [2] : vector<2x8x8xf32> to vector<2x8xf32>
    %477 = vector.shape_cast %476 : vector<2x8xf32> to vector<2x8x1xf32>
    %478 = vector.broadcast %477 : vector<2x8x1xf32> to vector<2x8x8xf32>
    %479 = arith.subf %475, %478 : vector<2x8x8xf32>
    %480 = math.exp %479 : vector<2x8x8xf32>
    %cst_186 = arith.constant dense<0.000000e+00> : vector<2x8xf32>
    %481 = vector.multi_reduction <add>, %480, %cst_186 [2] : vector<2x8x8xf32> to vector<2x8xf32>
    %482 = vector.shape_cast %481 : vector<2x8xf32> to vector<2x8x1xf32>
    %483 = vector.broadcast %482 : vector<2x8x1xf32> to vector<2x8x8xf32>
    %484 = arith.divf %480, %483 : vector<2x8x8xf32>
    %cst_187 = arith.constant dense<0.000000e+00> : vector<2x8x8xf32>
    %485 = tpu.matmul %484, %471, %cst_187 {dimension_numbers = #tpu.dot_dimension_numbers<[2], [1], [1], [2], [0, 0, 0, 1, 1, 2], [0], [0]>} : vector<2x8x8xf32>, vector<2x8x8xf32>, vector<2x8x8xf32> -> vector<2x8x8xf32>
    %486 = vector.extract_strided_slice %442 {offsets = [0, 16], sizes = [16, 8], strides = [1, 1]} : vector<16x32xf32> to vector<16x8xf32>
    %487 = vector.shape_cast %486 : vector<16x8xf32> to vector<2x8x8xf32>
    %488 = vector.extract_strided_slice %444 {offsets = [0, 16], sizes = [16, 8], strides = [1, 1]} : vector<16x32xf32> to vector<16x8xf32>
    %489 = vector.shape_cast %488 : vector<16x8xf32> to vector<2x8x8xf32>
    %490 = vector.extract_strided_slice %445 {offsets = [0, 16], sizes = [16, 8], strides = [1, 1]} : vector<16x32xf32> to vector<16x8xf32>
    %491 = vector.shape_cast %490 : vector<16x8xf32> to vector<2x8x8xf32>
    %cst_188 = arith.constant dense<0.000000e+00> : vector<2x8x8xf32>
    %492 = tpu.matmul %487, %489, %cst_188 {dimension_numbers = #tpu.dot_dimension_numbers<[2], [2], [1], [1], [0, 0, 0, 1, 1, 1], [0], [0]>} : vector<2x8x8xf32>, vector<2x8x8xf32>, vector<2x8x8xf32> -> vector<2x8x8xf32>
    %cst_189 = arith.constant 0.353553385 : f32
    %493 = vector.broadcast %cst_189 : f32 to vector<2x8x8xf32>
    %494 = arith.mulf %492, %493 : vector<2x8x8xf32>
    %495 = arith.addf %494, %3 : vector<2x8x8xf32>
    %cst_190 = arith.constant dense<0xFF800000> : vector<2x8xf32>
    %496 = vector.multi_reduction <maximumf>, %495, %cst_190 [2] : vector<2x8x8xf32> to vector<2x8xf32>
    %497 = vector.shape_cast %496 : vector<2x8xf32> to vector<2x8x1xf32>
    %498 = vector.broadcast %497 : vector<2x8x1xf32> to vector<2x8x8xf32>
    %499 = arith.subf %495, %498 : vector<2x8x8xf32>
    %500 = math.exp %499 : vector<2x8x8xf32>
    %cst_191 = arith.constant dense<0.000000e+00> : vector<2x8xf32>
    %501 = vector.multi_reduction <add>, %500, %cst_191 [2] : vector<2x8x8xf32> to vector<2x8xf32>
    %502 = vector.shape_cast %501 : vector<2x8xf32> to vector<2x8x1xf32>
    %503 = vector.broadcast %502 : vector<2x8x1xf32> to vector<2x8x8xf32>
    %504 = arith.divf %500, %503 : vector<2x8x8xf32>
    %cst_192 = arith.constant dense<0.000000e+00> : vector<2x8x8xf32>
    %505 = tpu.matmul %504, %491, %cst_192 {dimension_numbers = #tpu.dot_dimension_numbers<[2], [1], [1], [2], [0, 0, 0, 1, 1, 2], [0], [0]>} : vector<2x8x8xf32>, vector<2x8x8xf32>, vector<2x8x8xf32> -> vector<2x8x8xf32>
    %506 = vector.extract_strided_slice %442 {offsets = [0, 24], sizes = [16, 8], strides = [1, 1]} : vector<16x32xf32> to vector<16x8xf32>
    %507 = vector.shape_cast %506 : vector<16x8xf32> to vector<2x8x8xf32>
    %508 = vector.extract_strided_slice %444 {offsets = [0, 24], sizes = [16, 8], strides = [1, 1]} : vector<16x32xf32> to vector<16x8xf32>
    %509 = vector.shape_cast %508 : vector<16x8xf32> to vector<2x8x8xf32>
    %510 = vector.extract_strided_slice %445 {offsets = [0, 24], sizes = [16, 8], strides = [1, 1]} : vector<16x32xf32> to vector<16x8xf32>
    %511 = vector.shape_cast %510 : vector<16x8xf32> to vector<2x8x8xf32>
    %cst_193 = arith.constant dense<0.000000e+00> : vector<2x8x8xf32>
    %512 = tpu.matmul %507, %509, %cst_193 {dimension_numbers = #tpu.dot_dimension_numbers<[2], [2], [1], [1], [0, 0, 0, 1, 1, 1], [0], [0]>} : vector<2x8x8xf32>, vector<2x8x8xf32>, vector<2x8x8xf32> -> vector<2x8x8xf32>
    %cst_194 = arith.constant 0.353553385 : f32
    %513 = vector.broadcast %cst_194 : f32 to vector<2x8x8xf32>
    %514 = arith.mulf %512, %513 : vector<2x8x8xf32>
    %515 = arith.addf %514, %3 : vector<2x8x8xf32>
    %cst_195 = arith.constant dense<0xFF800000> : vector<2x8xf32>
    %516 = vector.multi_reduction <maximumf>, %515, %cst_195 [2] : vector<2x8x8xf32> to vector<2x8xf32>
    %517 = vector.shape_cast %516 : vector<2x8xf32> to vector<2x8x1xf32>
    %518 = vector.broadcast %517 : vector<2x8x1xf32> to vector<2x8x8xf32>
    %519 = arith.subf %515, %518 : vector<2x8x8xf32>
    %520 = math.exp %519 : vector<2x8x8xf32>
    %cst_196 = arith.constant dense<0.000000e+00> : vector<2x8xf32>
    %521 = vector.multi_reduction <add>, %520, %cst_196 [2] : vector<2x8x8xf32> to vector<2x8xf32>
    %522 = vector.shape_cast %521 : vector<2x8xf32> to vector<2x8x1xf32>
    %523 = vector.broadcast %522 : vector<2x8x1xf32> to vector<2x8x8xf32>
    %524 = arith.divf %520, %523 : vector<2x8x8xf32>
    %cst_197 = arith.constant dense<0.000000e+00> : vector<2x8x8xf32>
    %525 = tpu.matmul %524, %511, %cst_197 {dimension_numbers = #tpu.dot_dimension_numbers<[2], [1], [1], [2], [0, 0, 0, 1, 1, 2], [0], [0]>} : vector<2x8x8xf32>, vector<2x8x8xf32>, vector<2x8x8xf32> -> vector<2x8x8xf32>
    %526 = tpu.concatenate %465, %485, %505, %525 in 2 : vector<2x8x8xf32>, vector<2x8x8xf32>, vector<2x8x8xf32>, vector<2x8x8xf32> -> vector<2x8x32xf32>
    %527 = vector.shape_cast %526 : vector<2x8x32xf32> to vector<16x32xf32>
    %c1_198 = arith.constant 1 : index
    %c0_199 = arith.constant 0 : index
    %c0_200 = arith.constant 0 : index
    %528 = vector.load %arg14[%c1_198, %c0_199, %c0_200] : memref<2x32x32xf32, #tpu.memory_space<vmem>>, vector<1x32x32xf32>
    %529 = vector.shape_cast %528 : vector<1x32x32xf32> to vector<32x32xf32>
    %cst_201 = arith.constant dense<0.000000e+00> : vector<16x32xf32>
    %530 = tpu.matmul %527, %529, %cst_201 {dimension_numbers = #tpu.dot_dimension_numbers<[1], [0], [0], [1], [0, 0, 1, 1], [], []>} : vector<16x32xf32>, vector<32x32xf32>, vector<16x32xf32> -> vector<16x32xf32>
    %531 = arith.addf %413, %530 : vector<16x32xf32>
    %c1_202 = arith.constant 1 : index
    %c0_203 = arith.constant 0 : index
    %c0_204 = arith.constant 0 : index
    %532 = vector.load %arg15[%c1_202, %c0_203, %c0_204] : memref<2x1x32xf32, #tpu.memory_space<vmem>>, vector<1x1x32xf32>
    %533 = vector.shape_cast %532 : vector<1x1x32xf32> to vector<1x32xf32>
    %534 = vector.broadcast %533 : vector<1x32xf32> to vector<16x32xf32>
    %535 = arith.addf %531, %534 : vector<16x32xf32>
    %c5 = arith.constant 5 : index
    %c0_205 = arith.constant 0 : index
    %536 = vector.load %arg4[%c5, %c0_205] : memref<7x32xf32, #tpu.memory_space<vmem>>, vector<1x32xf32>
    %c5_206 = arith.constant 5 : index
    %c0_207 = arith.constant 0 : index
    %537 = vector.load %arg5[%c5_206, %c0_207] : memref<7x32xf32, #tpu.memory_space<vmem>>, vector<1x32xf32>
    %cst_208 = arith.constant dense<0.000000e+00> : vector<16xf32>
    %538 = vector.multi_reduction <add>, %535, %cst_208 [1] : vector<16x32xf32> to vector<16xf32>
    %539 = vector.shape_cast %538 : vector<16xf32> to vector<16x1xf32>
    %cst_209 = arith.constant 3.200000e+01 : f32
    %540 = vector.broadcast %cst_209 : f32 to vector<16x1xf32>
    %541 = arith.divf %539, %540 : vector<16x1xf32>
    %542 = vector.broadcast %541 : vector<16x1xf32> to vector<16x32xf32>
    %543 = arith.subf %535, %542 : vector<16x32xf32>
    %544 = arith.mulf %543, %543 : vector<16x32xf32>
    %cst_210 = arith.constant dense<0.000000e+00> : vector<16xf32>
    %545 = vector.multi_reduction <add>, %544, %cst_210 [1] : vector<16x32xf32> to vector<16xf32>
    %546 = vector.shape_cast %545 : vector<16xf32> to vector<16x1xf32>
    %cst_211 = arith.constant 0.0322580636 : f32
    %547 = vector.broadcast %cst_211 : f32 to vector<16x1xf32>
    %548 = arith.mulf %546, %547 : vector<16x1xf32>
    %549 = vector.broadcast %536 : vector<1x32xf32> to vector<16x32xf32>
    %550 = arith.mulf %549, %543 : vector<16x32xf32>
    %551 = math.sqrt %548 : vector<16x1xf32>
    %cst_212 = arith.constant 9.99999997E-7 : f32
    %552 = vector.broadcast %cst_212 : f32 to vector<16x1xf32>
    %553 = arith.addf %551, %552 : vector<16x1xf32>
    %554 = vector.broadcast %553 : vector<16x1xf32> to vector<16x32xf32>
    %555 = arith.divf %550, %554 : vector<16x32xf32>
    %556 = vector.broadcast %537 : vector<1x32xf32> to vector<16x32xf32>
    %557 = arith.addf %555, %556 : vector<16x32xf32>
    %c1_213 = arith.constant 1 : index
    %c0_214 = arith.constant 0 : index
    %c0_215 = arith.constant 0 : index
    %558 = vector.load %arg16[%c1_213, %c0_214, %c0_215] : memref<2x32x64xf32, #tpu.memory_space<vmem>>, vector<1x32x64xf32>
    %559 = vector.shape_cast %558 : vector<1x32x64xf32> to vector<32x64xf32>
    %cst_216 = arith.constant dense<0.000000e+00> : vector<16x64xf32>
    %560 = tpu.matmul %557, %559, %cst_216 {dimension_numbers = #tpu.dot_dimension_numbers<[1], [0], [0], [1], [0, 0, 1, 1], [], []>} : vector<16x32xf32>, vector<32x64xf32>, vector<16x64xf32> -> vector<16x64xf32>
    %c1_217 = arith.constant 1 : index
    %c0_218 = arith.constant 0 : index
    %c0_219 = arith.constant 0 : index
    %561 = vector.load %arg17[%c1_217, %c0_218, %c0_219] : memref<2x1x64xf32, #tpu.memory_space<vmem>>, vector<1x1x64xf32>
    %562 = vector.shape_cast %561 : vector<1x1x64xf32> to vector<1x64xf32>
    %563 = vector.broadcast %562 : vector<1x64xf32> to vector<16x64xf32>
    %564 = arith.addf %560, %563 : vector<16x64xf32>
    %cst_220 = arith.constant 0.000000e+00 : f32
    %565 = vector.broadcast %cst_220 : f32 to vector<16x64xf32>
    %566 = arith.maximumf %564, %565 : vector<16x64xf32>
    %c1_221 = arith.constant 1 : index
    %c0_222 = arith.constant 0 : index
    %c0_223 = arith.constant 0 : index
    %567 = vector.load %arg18[%c1_221, %c0_222, %c0_223] : memref<2x64x32xf32, #tpu.memory_space<vmem>>, vector<1x64x32xf32>
    %568 = vector.shape_cast %567 : vector<1x64x32xf32> to vector<64x32xf32>
    %cst_224 = arith.constant dense<0.000000e+00> : vector<16x32xf32>
    %569 = tpu.matmul %566, %568, %cst_224 {dimension_numbers = #tpu.dot_dimension_numbers<[1], [0], [0], [1], [0, 0, 1, 1], [], []>} : vector<16x64xf32>, vector<64x32xf32>, vector<16x32xf32> -> vector<16x32xf32>
    %570 = arith.addf %535, %569 : vector<16x32xf32>
    %c1_225 = arith.constant 1 : index
    %c0_226 = arith.constant 0 : index
    %c0_227 = arith.constant 0 : index
    %571 = vector.load %arg19[%c1_225, %c0_226, %c0_227] : memref<2x1x32xf32, #tpu.memory_space<vmem>>, vector<1x1x32xf32>
    %572 = vector.shape_cast %571 : vector<1x1x32xf32> to vector<1x32xf32>
    %573 = vector.broadcast %572 : vector<1x32xf32> to vector<16x32xf32>
    %574 = arith.addf %570, %573 : vector<16x32xf32>
    %c6 = arith.constant 6 : index
    %c0_228 = arith.constant 0 : index
    %575 = vector.load %arg4[%c6, %c0_228] : memref<7x32xf32, #tpu.memory_space<vmem>>, vector<1x32xf32>
    %c6_229 = arith.constant 6 : index
    %c0_230 = arith.constant 0 : index
    %576 = vector.load %arg5[%c6_229, %c0_230] : memref<7x32xf32, #tpu.memory_space<vmem>>, vector<1x32xf32>
    %cst_231 = arith.constant dense<0.000000e+00> : vector<16xf32>
    %577 = vector.multi_reduction <add>, %574, %cst_231 [1] : vector<16x32xf32> to vector<16xf32>
    %578 = vector.shape_cast %577 : vector<16xf32> to vector<16x1xf32>
    %cst_232 = arith.constant 3.200000e+01 : f32
    %579 = vector.broadcast %cst_232 : f32 to vector<16x1xf32>
    %580 = arith.divf %578, %579 : vector<16x1xf32>
    %581 = vector.broadcast %580 : vector<16x1xf32> to vector<16x32xf32>
    %582 = arith.subf %574, %581 : vector<16x32xf32>
    %583 = arith.mulf %582, %582 : vector<16x32xf32>
    %cst_233 = arith.constant dense<0.000000e+00> : vector<16xf32>
    %584 = vector.multi_reduction <add>, %583, %cst_233 [1] : vector<16x32xf32> to vector<16xf32>
    %585 = vector.shape_cast %584 : vector<16xf32> to vector<16x1xf32>
    %cst_234 = arith.constant 0.0322580636 : f32
    %586 = vector.broadcast %cst_234 : f32 to vector<16x1xf32>
    %587 = arith.mulf %585, %586 : vector<16x1xf32>
    %588 = vector.broadcast %575 : vector<1x32xf32> to vector<16x32xf32>
    %589 = arith.mulf %588, %582 : vector<16x32xf32>
    %590 = math.sqrt %587 : vector<16x1xf32>
    %cst_235 = arith.constant 9.99999997E-7 : f32
    %591 = vector.broadcast %cst_235 : f32 to vector<16x1xf32>
    %592 = arith.addf %590, %591 : vector<16x1xf32>
    %593 = vector.broadcast %592 : vector<16x1xf32> to vector<16x32xf32>
    %594 = arith.divf %589, %593 : vector<16x32xf32>
    %595 = vector.broadcast %576 : vector<1x32xf32> to vector<16x32xf32>
    %596 = arith.addf %594, %595 : vector<16x32xf32>
    %c0_236 = arith.constant 0 : index
    %c0_237 = arith.constant 0 : index
    %597 = vector.load %arg20[%c0_236, %c0_237] : memref<16x32xf32, #tpu.memory_space<vmem>>, vector<16x32xf32>
    tpu.vector_store %arg20[%c0_236, %c0_237], %596 {strides = array<i32>} : memref<16x32xf32, #tpu.memory_space<vmem>>, vector<16x32xf32>,
    return
  }
}

</mosaic_0001>

<llo_original>
// kernel: decoder.1
$region0: #{decoder.1}
  #allocation0 [shape = 'u32[]', space=smem, size = 0x4, offset = 0x4, fixed_abs, tag = 'smem constant byte address 0x4 - core index']
  #allocation1 [shape = 'u32[144,128]{1,0:T(1,128)}', space=vmem, size = 0x12000, scoped, tag = 'internal scratch']
  %s0 = inlined_call_operand.hbm [shape: f32[16,32], index: 0, kind: input, shape index: {}]
  %s1 = inlined_call_operand.hbm [shape: f32[16,32], index: 1, kind: input, shape index: {}]
  %s2 = inlined_call_operand.vmem [shape: f32[2,8,8], index: 2, kind: input, shape index: {}]
  %s3 = inlined_call_operand.vmem [shape: f32[2,8,8], index: 3, kind: input, shape index: {}]
  %s4 = inlined_call_operand.hbm [shape: f32[7,32], index: 4, kind: input, shape index: {}]
  %s5 = inlined_call_operand.hbm [shape: f32[7,32], index: 5, kind: input, shape index: {}]
  %s6 = inlined_call_operand.vmem [shape: f32[2,32,96], index: 6, kind: input, shape index: {}]
  %s7 = inlined_call_operand.hbm [shape: f32[2,1,96], index: 7, kind: input, shape index: {}]
  %s8 = inlined_call_operand.vmem [shape: f32[2,32,32], index: 8, kind: input, shape index: {}]
  %s9 = inlined_call_operand.hbm [shape: f32[2,1,32], index: 9, kind: input, shape index: {}]
  %s10 = inlined_call_operand.vmem [shape: f32[2,32,32], index: 10, kind: input, shape index: {}]
  %s11 = inlined_call_operand.hbm [shape: f32[2,1,32], index: 11, kind: input, shape index: {}]
  %s12 = inlined_call_operand.hbm [shape: f32[32,128], index: 12, kind: input, shape index: {}]
  %s13 = inlined_call_operand.vmem [shape: f32[1,128], index: 13, kind: input, shape index: {}]
  %s14 = inlined_call_operand.vmem [shape: f32[2,32,32], index: 14, kind: input, shape index: {}]
  %s15 = inlined_call_operand.hbm [shape: f32[2,1,32], index: 15, kind: input, shape index: {}]
  %s16 = inlined_call_operand.hbm [shape: f32[2,32,64], index: 16, kind: input, shape index: {}]
  %s17 = inlined_call_operand.hbm [shape: f32[2,1,64], index: 17, kind: input, shape index: {}]
  %s18 = inlined_call_operand.vmem [shape: f32[2,64,32], index: 18, kind: input, shape index: {}]
  %s19 = inlined_call_operand.hbm [shape: f32[2,1,32], index: 19, kind: input, shape index: {}]
  %s20 = inlined_call_operand.hbm [shape: f32[16,32], index: 20, kind: output, shape index: {}]
  %s21 = sld [smem:[#allocation0]]
  $region138: #{decoder.1} parent=0
    _
  %s23 = ssub.s32 1, %s21
  %s24 = scalar_select 0, %s23, %s21
  $region1: #{decoder.1} parent=0
    #allocation2 [shape = 'u8[8192]{0}', space=vmem, size = 0x2000, scoped, tag = 'input window, operand 0, single buffered']
    #allocation3 [shape = 's32[1]{0}', space=sflag, size = 0x4, scoped, tag = 'scoped memory for decoder.1']
    #allocation4 [shape = 's32[1]{0}', space=sflag, size = 0x4, scoped, tag = 'scoped memory for decoder.1']
    #allocation5 [shape = 'u8[8192]{0}', space=vmem, size = 0x2000, scoped, tag = 'input window, operand 1, single buffered']
    #allocation6 [shape = 's32[1]{0}', space=sflag, size = 0x4, scoped, tag = 'scoped memory for decoder.1']
    #allocation7 [shape = 'u8[4096]{0}', space=vmem, size = 0x1000, scoped, tag = 'input window, operand 4, single buffered']
    #allocation8 [shape = 'u8[4096]{0}', space=vmem, size = 0x1000, scoped, tag = 'input window, operand 5, single buffered']
    #allocation9 [shape = 's32[1]{0}', space=sflag, size = 0x4, scoped, tag = 'scoped memory for decoder.1']
    #allocation10 [shape = 'u8[1024]{0}', space=vmem, size = 0x400, scoped, tag = 'input window, operand 7, single buffered']
    #allocation11 [shape = 'u8[1024]{0}', space=vmem, size = 0x400, scoped, tag = 'input window, operand 9, single buffered']
    #allocation12 [shape = 's32[1]{0}', space=sflag, size = 0x4, scoped, tag = 'scoped memory for decoder.1']
    #allocation13 [shape = 'u8[1024]{0}', space=vmem, size = 0x400, scoped, tag = 'input window, operand 11, single buffered']
    #allocation14 [shape = 'u8[16384]{0}', space=vmem, size = 0x4000, scoped, tag = 'input window, operand 12, single buffered']
    #allocation15 [shape = 's32[1]{0}', space=sflag, size = 0x4, scoped, tag = 'scoped memory for decoder.1']
    #allocation16 [shape = 'u8[1024]{0}', space=vmem, size = 0x400, scoped, tag = 'input window, operand 15, single buffered']
    #allocation17 [shape = 'u8[32768]{0}', space=vmem, size = 0x8000, scoped, tag = 'input window, operand 16, single buffered']
    #allocation18 [shape = 's32[1]{0}', space=sflag, size = 0x4, scoped, tag = 'scoped memory for decoder.1']
    #allocation19 [shape = 'u8[1024]{0}', space=vmem, size = 0x400, scoped, tag = 'input window, operand 17, single buffered']
    #allocation20 [shape = 'u8[1024]{0}', space=vmem, size = 0x400, scoped, tag = 'input window, operand 19, single buffered']
    #allocation21 [shape = 's32[1]{0}', space=sflag, size = 0x4, scoped, tag = 'scoped memory for decoder.1']
    #allocation22 [shape = 'u8[8192]{0}', space=vmem, size = 0x2000, scoped, tag = 'output window, operand 0, single buffered']
    %25 = vsyncpa [#allocation3], 0
    %26 = vsyncpa [#allocation6], 0
    %27 = vsyncpa [#allocation9], 0
    %28 = vsyncpa [#allocation12], 0
    %29 = vsyncpa [#allocation15], 0
    %30 = vsyncpa [#allocation18], 0
    %31 = vsyncpa [#allocation21], 0
    %32 = vsyncpa [#allocation4], 0
    // Predicated region
    $region2: #{decoder.1} parent=1 // pred_check
      _
    $region3: #{decoder.1} parent=1 // pred_check_branch
      %34 = sbr.rel (0) target = $region5
    $region4: #{decoder.1} parent=1 // pred_region
      %s36 = ssub.s32 256, 256
      %37 = vsyncadd [#allocation3], %s36
      %s38 = sshll.u32 [#allocation2], 4
      %s39 = int_to_ptr.vmem [resolvable:$true] %s38
      %44 = dma.hbm_to_vmem [thread:$0]  %s0, 256, %s39, [#allocation3], 128, 128, 8
    $region5: #{decoder.1} parent=1 // pred_fallthru
      _
    // Predicated region
    $region6: #{decoder.1} parent=1 // pred_check
      _
    $region7: #{decoder.1} parent=1 // pred_check_branch
      %46 = sbr.rel (0) target = $region9
    $region8: #{decoder.1} parent=1 // pred_region
      %s48 = ssub.s32 256, 256
      %49 = vsyncadd [#allocation6], %s48
      %s50 = sshll.u32 [#allocation5], 4
      %s51 = int_to_ptr.vmem [resolvable:$true] %s50
      %56 = dma.hbm_to_vmem [thread:$0]  %s1, 256, %s51, [#allocation6], 128, 128, 8
    $region9: #{decoder.1} parent=1 // pred_fallthru
      _
    // Predicated region
    $region10: #{decoder.1} parent=1 // pred_check
      _
    $region11: #{decoder.1} parent=1 // pred_check_branch
      %58 = sbr.rel (0) target = $region13
    $region12: #{decoder.1} parent=1 // pred_region
      _
    $region13: #{decoder.1} parent=1 // pred_fallthru
      _
    // Predicated region
    $region14: #{decoder.1} parent=1 // pred_check
      _
    $region15: #{decoder.1} parent=1 // pred_check_branch
      %60 = sbr.rel (0) target = $region17
    $region16: #{decoder.1} parent=1 // pred_region
      _
    $region17: #{decoder.1} parent=1 // pred_fallthru
      _
    // Predicated region
    $region18: #{decoder.1} parent=1 // pred_check
      _
    $region19: #{decoder.1} parent=1 // pred_check_branch
      %62 = sbr.rel (0) target = $region21
    $region20: #{decoder.1} parent=1 // pred_region
      %s64 = ssub.s32 128, 128
      %65 = vsyncadd [#allocation6], %s64
      %s67 = sshll.u32 [#allocation7], 4
      %s68 = int_to_ptr.vmem [resolvable:$true] %s67
      %70 = dma.hbm_to_vmem [thread:$0]  %s4, 128, %s68, [#allocation6]
    $region21: #{decoder.1} parent=1 // pred_fallthru
      _
    // Predicated region
    $region22: #{decoder.1} parent=1 // pred_check
      _
    $region23: #{decoder.1} parent=1 // pred_check_branch
      %72 = sbr.rel (0) target = $region25
    $region24: #{decoder.1} parent=1 // pred_region
      %s74 = ssub.s32 128, 128
      %75 = vsyncadd [#allocation9], %s74
      %s77 = sshll.u32 [#allocation8], 4
      %s78 = int_to_ptr.vmem [resolvable:$true] %s77
      %80 = dma.hbm_to_vmem [thread:$0]  %s5, 128, %s78, [#allocation9]
    $region25: #{decoder.1} parent=1 // pred_fallthru
      _
    // Predicated region
    $region26: #{decoder.1} parent=1 // pred_check
      _
    $region27: #{decoder.1} parent=1 // pred_check_branch
      %82 = sbr.rel (0) target = $region29
    $region28: #{decoder.1} parent=1 // pred_region
      _
    $region29: #{decoder.1} parent=1 // pred_fallthru
      _
    // Predicated region
    $region30: #{decoder.1} parent=1 // pred_check
      _
    $region31: #{decoder.1} parent=1 // pred_check_branch
      %84 = sbr.rel (0) target = $region33
    $region32: #{decoder.1} parent=1 // pred_region
      %s86 = ssub.s32 32, 32
      %87 = vsyncadd [#allocation9], %s86
      %s88 = sshll.u32 [#allocation10], 4
      %s89 = int_to_ptr.vmem [resolvable:$true] %s88
      %94 = dma.hbm_to_vmem [thread:$0]  %s7, 32, %s89, [#allocation9], 16, 16, 1
    $region33: #{decoder.1} parent=1 // pred_fallthru
      _
    // Predicated region
    $region34: #{decoder.1} parent=1 // pred_check
      _
    $region35: #{decoder.1} parent=1 // pred_check_branch
      %96 = sbr.rel (0) target = $region37
    $region36: #{decoder.1} parent=1 // pred_region
      _
    $region37: #{decoder.1} parent=1 // pred_fallthru
      _
    // Predicated region
    $region38: #{decoder.1} parent=1 // pred_check
      _
    $region39: #{decoder.1} parent=1 // pred_check_branch
      %98 = sbr.rel (0) target = $region41
    $region40: #{decoder.1} parent=1 // pred_region
      %s100 = ssub.s32 32, 32
      %101 = vsyncadd [#allocation12], %s100
      %s102 = sshll.u32 [#allocation11], 4
      %s103 = int_to_ptr.vmem [resolvable:$true] %s102
      %108 = dma.hbm_to_vmem [thread:$0]  %s9, 32, %s103, [#allocation12], 16, 16, 1
    $region41: #{decoder.1} parent=1 // pred_fallthru
      _
    // Predicated region
    $region42: #{decoder.1} parent=1 // pred_check
      _
    $region43: #{decoder.1} parent=1 // pred_check_branch
      %110 = sbr.rel (0) target = $region45
    $region44: #{decoder.1} parent=1 // pred_region
      _
    $region45: #{decoder.1} parent=1 // pred_fallthru
      _
    // Predicated region
    $region46: #{decoder.1} parent=1 // pred_check
      _
    $region47: #{decoder.1} parent=1 // pred_check_branch
      %112 = sbr.rel (0) target = $region49
    $region48: #{decoder.1} parent=1 // pred_region
      %s114 = ssub.s32 32, 32
      %115 = vsyncadd [#allocation12], %s114
      %s116 = sshll.u32 [#allocation13], 4
      %s117 = int_to_ptr.vmem [resolvable:$true] %s116
      %122 = dma.hbm_to_vmem [thread:$0]  %s11, 32, %s117, [#allocation12], 16, 16, 1
    $region49: #{decoder.1} parent=1 // pred_fallthru
      _
    // Predicated region
    $region50: #{decoder.1} parent=1 // pred_check
      _
    $region51: #{decoder.1} parent=1 // pred_check_branch
      %124 = sbr.rel (0) target = $region53
    $region52: #{decoder.1} parent=1 // pred_region
      %s126 = ssub.s32 512, 512
      %127 = vsyncadd [#allocation15], %s126
      %s128 = sshll.u32 [#allocation14], 4
      %s129 = int_to_ptr.vmem [resolvable:$true] %s128
      %134 = dma.hbm_to_vmem [thread:$0]  %s12, 512, %s129, [#allocation15], 128, 128, 8
    $region53: #{decoder.1} parent=1 // pred_fallthru
      _
    // Predicated region
    $region54: #{decoder.1} parent=1 // pred_check
      _
    $region55: #{decoder.1} parent=1 // pred_check_branch
      %136 = sbr.rel (0) target = $region57
    $region56: #{decoder.1} parent=1 // pred_region
      _
    $region57: #{decoder.1} parent=1 // pred_fallthru
      _
    // Predicated region
    $region58: #{decoder.1} parent=1 // pred_check
      _
    $region59: #{decoder.1} parent=1 // pred_check_branch
      %138 = sbr.rel (0) target = $region61
    $region60: #{decoder.1} parent=1 // pred_region
      _
    $region61: #{decoder.1} parent=1 // pred_fallthru
      _
    // Predicated region
    $region62: #{decoder.1} parent=1 // pred_check
      _
    $region63: #{decoder.1} parent=1 // pred_check_branch
      %140 = sbr.rel (0) target = $region65
    $region64: #{decoder.1} parent=1 // pred_region
      %s142 = ssub.s32 32, 32
      %143 = vsyncadd [#allocation15], %s142
      %s144 = sshll.u32 [#allocation16], 4
      %s145 = int_to_ptr.vmem [resolvable:$true] %s144
      %150 = dma.hbm_to_vmem [thread:$0]  %s15, 32, %s145, [#allocation15], 16, 16, 1
    $region65: #{decoder.1} parent=1 // pred_fallthru
      _
    // Predicated region
    $region66: #{decoder.1} parent=1 // pred_check
      _
    $region67: #{decoder.1} parent=1 // pred_check_branch
      %152 = sbr.rel (0) target = $region69
    $region68: #{decoder.1} parent=1 // pred_region
      %s154 = ssub.s32 1024, 1024
      %155 = vsyncadd [#allocation18], %s154
      %s156 = sshll.u32 [#allocation17], 4
      %s157 = int_to_ptr.vmem [resolvable:$true] %s156
      %162 = dma.hbm_to_vmem [thread:$0]  %s16, 1024, %s157, [#allocation18], 128, 128, 8
    $region69: #{decoder.1} parent=1 // pred_fallthru
      _
    // Predicated region
    $region70: #{decoder.1} parent=1 // pred_check
      _
    $region71: #{decoder.1} parent=1 // pred_check_branch
      %164 = sbr.rel (0) target = $region73
    $region72: #{decoder.1} parent=1 // pred_region
      %s166 = ssub.s32 32, 32
      %167 = vsyncadd [#allocation18], %s166
      %s168 = sshll.u32 [#allocation19], 4
      %s169 = int_to_ptr.vmem [resolvable:$true] %s168
      %174 = dma.hbm_to_vmem [thread:$0]  %s17, 32, %s169, [#allocation18], 16, 16, 1
    $region73: #{decoder.1} parent=1 // pred_fallthru
      _
    // Predicated region
    $region74: #{decoder.1} parent=1 // pred_check
      _
    $region75: #{decoder.1} parent=1 // pred_check_branch
      %176 = sbr.rel (0) target = $region77
    $region76: #{decoder.1} parent=1 // pred_region
      _
    $region77: #{decoder.1} parent=1 // pred_fallthru
      _
    // Predicated region
    $region78: #{decoder.1} parent=1 // pred_check
      _
    $region79: #{decoder.1} parent=1 // pred_check_branch
      %178 = sbr.rel (0) target = $region81
    $region80: #{decoder.1} parent=1 // pred_region
      %s180 = ssub.s32 32, 32
      %181 = vsyncadd [#allocation21], %s180
      %s182 = sshll.u32 [#allocation20], 4
      %s183 = int_to_ptr.vmem [resolvable:$true] %s182
      %188 = dma.hbm_to_vmem [thread:$0]  %s19, 32, %s183, [#allocation21], 16, 16, 1
    $region81: #{decoder.1} parent=1 // pred_fallthru
      _
    // Predicated region
    $region82: #{decoder.1} parent=1 // pred_check
      _
    $region83: #{decoder.1} parent=1 // pred_check_branch
      %190 = sbr.rel (0) target = $region85
    $region84: #{decoder.1} parent=1 // pred_region
      %191 = dma.done [#allocation3], 256
    $region85: #{decoder.1} parent=1 // pred_fallthru
      _
    // Predicated region
    $region86: #{decoder.1} parent=1 // pred_check
      _
    $region87: #{decoder.1} parent=1 // pred_check_branch
      %193 = sbr.rel (0) target = $region89
    $region88: #{decoder.1} parent=1 // pred_region
      %194 = dma.done [#allocation6], 256
    $region89: #{decoder.1} parent=1 // pred_fallthru
      _
    // Predicated region
    $region90: #{decoder.1} parent=1 // pred_check
      _
    $region91: #{decoder.1} parent=1 // pred_check_branch
      %196 = sbr.rel (0) target = $region93
    $region92: #{decoder.1} parent=1 // pred_region
      %197 = dma.done [#allocation6], 128
    $region93: #{decoder.1} parent=1 // pred_fallthru
      _
    // Predicated region
    $region94: #{decoder.1} parent=1 // pred_check
      _
    $region95: #{decoder.1} parent=1 // pred_check_branch
      %199 = sbr.rel (0) target = $region97
    $region96: #{decoder.1} parent=1 // pred_region
      %200 = dma.done [#allocation9], 128
    $region97: #{decoder.1} parent=1 // pred_fallthru
      _
    // Predicated region
    $region98: #{decoder.1} parent=1 // pred_check
      _
    $region99: #{decoder.1} parent=1 // pred_check_branch
      %202 = sbr.rel (0) target = $region101
    $region100: #{decoder.1} parent=1 // pred_region
      %203 = dma.done [#allocation9], 32
    $region101: #{decoder.1} parent=1 // pred_fallthru
      _
    // Predicated region
    $region102: #{decoder.1} parent=1 // pred_check
      _
    $region103: #{decoder.1} parent=1 // pred_check_branch
      %205 = sbr.rel (0) target = $region105
    $region104: #{decoder.1} parent=1 // pred_region
      %206 = dma.done [#allocation12], 32
    $region105: #{decoder.1} parent=1 // pred_fallthru
      _
    // Predicated region
    $region106: #{decoder.1} parent=1 // pred_check
      _
    $region107: #{decoder.1} parent=1 // pred_check_branch
      %208 = sbr.rel (0) target = $region109
    $region108: #{decoder.1} parent=1 // pred_region
      %209 = dma.done [#allocation12], 32
    $region109: #{decoder.1} parent=1 // pred_fallthru
      _
    // Predicated region
    $region110: #{decoder.1} parent=1 // pred_check
      _
    $region111: #{decoder.1} parent=1 // pred_check_branch
      %211 = sbr.rel (0) target = $region113
    $region112: #{decoder.1} parent=1 // pred_region
      %212 = dma.done [#allocation15], 512
    $region113: #{decoder.1} parent=1 // pred_fallthru
      _
    // Predicated region
    $region114: #{decoder.1} parent=1 // pred_check
      _
    $region115: #{decoder.1} parent=1 // pred_check_branch
      %214 = sbr.rel (0) target = $region117
    $region116: #{decoder.1} parent=1 // pred_region
      %215 = dma.done [#allocation15], 32
    $region117: #{decoder.1} parent=1 // pred_fallthru
      _
    // Predicated region
    $region118: #{decoder.1} parent=1 // pred_check
      _
    $region119: #{decoder.1} parent=1 // pred_check_branch
      %217 = sbr.rel (0) target = $region121
    $region120: #{decoder.1} parent=1 // pred_region
      %218 = dma.done [#allocation18], 1024
    $region121: #{decoder.1} parent=1 // pred_fallthru
      _
    // Predicated region
    $region122: #{decoder.1} parent=1 // pred_check
      _
    $region123: #{decoder.1} parent=1 // pred_check_branch
      %220 = sbr.rel (0) target = $region125
    $region124: #{decoder.1} parent=1 // pred_region
      %221 = dma.done [#allocation18], 32
    $region125: #{decoder.1} parent=1 // pred_fallthru
      _
    // Predicated region
    $region126: #{decoder.1} parent=1 // pred_check
      _
    $region127: #{decoder.1} parent=1 // pred_check_branch
      %223 = sbr.rel (0) target = $region129
    $region128: #{decoder.1} parent=1 // pred_region
      %224 = dma.done [#allocation21], 32
    $region129: #{decoder.1} parent=1 // pred_fallthru
      _
    %v225 = vld [vmem:[#allocation2] sm:$0xff]
    %v226 = vld [vmem:[#allocation2 + $0x8] sm:$0xff]
    %v227 = vld [vmem:[#allocation5] sm:$0xff]
    %v228 = vld [vmem:[#allocation5 + $0x8] sm:$0xff]
    %v229 = vld [vmem:[%s3] sm:$0xff]
    %v230 = vld [vmem:[%s3 + $0x8] sm:$0xff]
    %v231 = vld [vmem:[%s2] sm:$0xff]
    %v232 = vld [vmem:[%s2 + $0x8] sm:$0xff]
    %v233 = vld [vmem:[#allocation14] sm:$0xff]
    %v234 = vld [vmem:[#allocation14 + $0x8] sm:$0xff]
    %v235 = vld [vmem:[#allocation14 + $0x10] sm:$0xff]
    %v236 = vld [vmem:[#allocation14 + $0x18] sm:$0xff]
    %v237 = vld [vmem:[%s13] sm:$0x1]
    %v239 = vlaneseq
    %v240 = vshrl.u32 %v239, 7
    %v241 = vsub.s32 0, %v240
    %v242 = vrot.slane %v237, %v241
    %vm244 = vcmask 261120
    %v246 = vsel %vm244, %v227, 0
    %v249 = vsel %vm244, %v228, 0
    %251 = vmatprep.subr.mxu0 0.0
    %252 = vmatpush1.msra.mxu0 %v233
    %253 = vmatprep.subr.mxu0 0.0
    %254 = vmatpush1.msra.mxu0 %v234
    %255 = vmatprep.subr.mxu0 0.0
    %256 = vmatpush1.msra.mxu0 %v235
    %257 = vmatprep.subr.mxu0 0.0
    %258 = vmatpush1.msra.mxu0 %v236
    %259 = vmatprep.subr.mxu0 0.0
    %260 = vmatpush1.msra.mxu0 0.0
    %261 = vmatprep.subr.mxu0 0.0
    %262 = vmatpush1.msra.mxu0 0.0
    %263 = vmatprep.subr.mxu0 0.0
    %264 = vmatpush1.msra.mxu0 0.0
    %265 = vmatprep.subr.mxu0 0.0
    %266 = vmatpush1.msra.mxu0 0.0
    %267 = vmatprep.subr.mxu0 0.0
    %268 = vmatpush1.msra.mxu0 0.0
    %269 = vmatprep.subr.mxu0 0.0
    %270 = vmatpush1.msra.mxu0 0.0
    %271 = vmatprep.subr.mxu0 0.0
    %272 = vmatpush1.msra.mxu0 0.0
    %273 = vmatprep.subr.mxu0 0.0
    %274 = vmatpush1.msra.mxu0 0.0
    %275 = vmatprep.subr.mxu0 0.0
    %276 = vmatpush1.msra.mxu0 0.0
    %277 = vmatprep.subr.mxu0 0.0
    %278 = vmatpush1.msra.mxu0 0.0
    %279 = vmatprep.subr.mxu0 0.0
    %280 = vmatpush1.msra.mxu0 0.0
    %281 = vmatprep.subr.mxu0 0.0
    %282 = vmatpush1.msra.mxu0 0.0
    %283 = vmatprep.subr.mxu0 0.0
    %284 = vmatpush1.msra.mxu0 0.0
    %285 = vmatprep.subr.mxu0 0.0
    %286 = vmatpush1.msra.mxu0 0.0
    %287 = vmatprep.subr.mxu0 0.0
    %288 = vmatpush1.msra.mxu0 0.0
    %289 = vmatprep.subr.mxu0 0.0
    %290 = vmatpush1.msra.mxu0 0.0
    %291 = vmatprep.subr.mxu0 0.0
    %292 = vmatpush1.msra.mxu0 0.0
    %293 = vmatprep.subr.mxu0 0.0
    %294 = vmatpush1.msra.mxu0 0.0
    %295 = vmatprep.subr.mxu0 0.0
    %296 = vmatpush1.msra.mxu0 0.0
    %297 = vmatprep.subr.mxu0 0.0
    %298 = vmatpush1.msra.mxu0 0.0
    %299 = vmatprep.subr.mxu0 0.0
    %300 = vmatpush1.msra.mxu0 0.0
    %301 = vmatprep.subr.mxu0 0.0
    %302 = vmatpush1.msra.mxu0 0.0
    %303 = vmatprep.subr.mxu0 0.0
    %304 = vmatpush1.msra.mxu0 0.0
    %305 = vmatprep.subr.mxu0 0.0
    %306 = vmatpush1.msra.mxu0 0.0
    %307 = vmatprep.subr.mxu0 0.0
    %308 = vmatpush1.msra.mxu0 0.0
    %309 = vmatprep.subr.mxu0 0.0
    %310 = vmatpush1.msra.mxu0 0.0
    %311 = vmatprep.subr.mxu0 0.0
    %312 = vmatpush1.msra.mxu0 0.0
    %313 = vmatprep.subr.mxu0 0.0
    %314 = vmatpush1.msra.mxu0 0.0
    %315 = vmatprep.mubr.f32.mxu0 0.0
    %316 = vmatmul.mubr.f32.gmra.mrb[0].mxu0 %v246
    %v317 = vpop.f32.mrb[0].mxu0
    %v318 = vadd.f32 %v242, %v317
    %v319 = vpop.f32.mrb[0].mxu0
    %320 = vmatprep.mubr.f32.mxu0 0.0
    %321 = vmatmul.mubr.f32.gmra.mrb[0].mxu0 %v249
    %v322 = vpop.f32.mrb[0].mxu0
    %v323 = vadd.f32 %v242, %v322
    %v324 = vpop.f32.mrb[0].mxu0
    %325 = vdwg.mxu0
    %v326 = vld [vmem:[#allocation7] sm:$0x1]
    %v327 = vld [vmem:[#allocation8] sm:$0x1]
    %v328 = vsel %vm244, %v225, 0.0
    %329 = vadd.xlane.f32.xlu0 %v328
    %v330 = vpop.xlane.xlu0 %329
    %v331 = vsel %vm244, %v226, 0.0
    %332 = vadd.xlane.f32.xlu0 %v331
    %v333 = vpop.xlane.xlu0 %332
    %v334 = vrcp.pop 32.0
    %v335 = vmul.f32 %v330, %v334
    %v336 = vmul.f32 %v333, %v334
    %v337 = vsub.f32 %v225, %v335
    %v338 = vsub.f32 %v226, %v336
    %v339 = vmul.f32 %v337, %v337
    %v340 = vmul.f32 %v338, %v338
    %v341 = vsel %vm244, %v339, 0.0
    %342 = vadd.xlane.f32.xlu0 %v341
    %v343 = vpop.xlane.xlu0 %342
    %v344 = vsel %vm244, %v340, 0.0
    %345 = vadd.xlane.f32.xlu0 %v344
    %v346 = vpop.xlane.xlu0 %345
    %v347 = vmul.f32 %v343, 0.032258064
    %v348 = vmul.f32 %v346, 0.032258064
    %v349 = vlaneseq
    %v350 = vshrl.u32 %v349, 7
    %v351 = vsub.s32 0, %v350
    %v352 = vrot.slane %v326, %v351
    %v353 = vmul.f32 %v352, %v337
    %v354 = vmul.f32 %v352, %v338
    %v355 = vrsqrt.pop %v347
    %v356 = vmul.f32 %v347, %v355
    %vm357 = vcmp.eq.f32.partialorder %v347, inf
    %v358 = vsel %vm357, %v347, %v356
    %vm359 = vcmp.eq.f32.partialorder %v347, 0.0
    %v360 = vand.u32 %v347, 2147483648
    %v361 = vsel %vm359, %v360, %v358
    %v362 = vrsqrt.pop %v348
    %v363 = vmul.f32 %v348, %v362
    %vm364 = vcmp.eq.f32.partialorder %v348, inf
    %v365 = vsel %vm364, %v348, %v363
    %vm366 = vcmp.eq.f32.partialorder %v348, 0.0
    %v367 = vand.u32 %v348, 2147483648
    %v368 = vsel %vm366, %v367, %v365
    %v369 = vadd.f32 %v361, 1e-06
    %v370 = vadd.f32 %v368, 1e-06
    %v371 = vrcp.pop %v369
    %v372 = vmul.f32 %v353, %v371
    %v373 = vrcp.pop %v370
    %v374 = vmul.f32 %v354, %v373
    %v375 = vlaneseq
    %v376 = vshrl.u32 %v375, 7
    %v377 = vsub.s32 0, %v376
    %v378 = vrot.slane %v327, %v377
    %v379 = vadd.f32 %v372, %v378
    %v380 = vadd.f32 %v374, %v378
    %v381 = vld [vmem:[%s6] sm:$0xff]
    %v382 = vld [vmem:[%s6 + $0x8] sm:$0xff]
    %v383 = vld [vmem:[%s6 + $0x10] sm:$0xff]
    %v384 = vld [vmem:[%s6 + $0x18] sm:$0xff]
    %v385 = vld [vmem:[#allocation10] sm:$0x1]
    %v387 = vlaneseq
    %v388 = vshrl.u32 %v387, 7
    %v389 = vsub.s32 0, %v388
    %v390 = vrot.slane %v385, %v389
    %v393 = vsel %vm244, %v379, 0
    %v396 = vsel %vm244, %v380, 0
    %398 = vmatprep.subr.mxu0 0.0
    %399 = vmatpush1.msra.mxu0 %v381
    %400 = vmatprep.subr.mxu0 0.0
    %401 = vmatpush1.msra.mxu0 %v382
    %402 = vmatprep.subr.mxu0 0.0
    %403 = vmatpush1.msra.mxu0 %v383
    %404 = vmatprep.subr.mxu0 0.0
    %405 = vmatpush1.msra.mxu0 %v384
    %406 = vmatprep.subr.mxu0 0.0
    %407 = vmatpush1.msra.mxu0 0.0
    %408 = vmatprep.subr.mxu0 0.0
    %409 = vmatpush1.msra.mxu0 0.0
    %410 = vmatprep.subr.mxu0 0.0
    %411 = vmatpush1.msra.mxu0 0.0
    %412 = vmatprep.subr.mxu0 0.0
    %413 = vmatpush1.msra.mxu0 0.0
    %414 = vmatprep.subr.mxu0 0.0
    %415 = vmatpush1.msra.mxu0 0.0
    %416 = vmatprep.subr.mxu0 0.0
    %417 = vmatpush1.msra.mxu0 0.0
    %418 = vmatprep.subr.mxu0 0.0
    %419 = vmatpush1.msra.mxu0 0.0
    %420 = vmatprep.subr.mxu0 0.0
    %421 = vmatpush1.msra.mxu0 0.0
    %422 = vmatprep.subr.mxu0 0.0
    %423 = vmatpush1.msra.mxu0 0.0
    %424 = vmatprep.subr.mxu0 0.0
    %425 = vmatpush1.msra.mxu0 0.0
    %426 = vmatprep.subr.mxu0 0.0
    %427 = vmatpush1.msra.mxu0 0.0
    %428 = vmatprep.subr.mxu0 0.0
    %429 = vmatpush1.msra.mxu0 0.0
    %430 = vmatprep.subr.mxu0 0.0
    %431 = vmatpush1.msra.mxu0 0.0
    %432 = vmatprep.subr.mxu0 0.0
    %433 = vmatpush1.msra.mxu0 0.0
    %434 = vmatprep.subr.mxu0 0.0
    %435 = vmatpush1.msra.mxu0 0.0
    %436 = vmatprep.subr.mxu0 0.0
    %437 = vmatpush1.msra.mxu0 0.0
    %438 = vmatprep.subr.mxu0 0.0
    %439 = vmatpush1.msra.mxu0 0.0
    %440 = vmatprep.subr.mxu0 0.0
    %441 = vmatpush1.msra.mxu0 0.0
    %442 = vmatprep.subr.mxu0 0.0
    %443 = vmatpush1.msra.mxu0 0.0
    %444 = vmatprep.subr.mxu0 0.0
    %445 = vmatpush1.msra.mxu0 0.0
    %446 = vmatprep.subr.mxu0 0.0
    %447 = vmatpush1.msra.mxu0 0.0
    %448 = vmatprep.subr.mxu0 0.0
    %449 = vmatpush1.msra.mxu0 0.0
    %450 = vmatprep.subr.mxu0 0.0
    %451 = vmatpush1.msra.mxu0 0.0
    %452 = vmatprep.subr.mxu0 0.0
    %453 = vmatpush1.msra.mxu0 0.0
    %454 = vmatprep.subr.mxu0 0.0
    %455 = vmatpush1.msra.mxu0 0.0
    %456 = vmatprep.subr.mxu0 0.0
    %457 = vmatpush1.msra.mxu0 0.0
    %458 = vmatprep.subr.mxu0 0.0
    %459 = vmatpush1.msra.mxu0 0.0
    %460 = vmatprep.subr.mxu0 0.0
    %461 = vmatpush1.msra.mxu0 0.0
    %462 = vmatprep.mubr.f32.mxu0 0.0
    %463 = vmatmul.mubr.f32.gmra.mrb[0].mxu0 %v393
    %v464 = vpop.f32.mrb[0].mxu0
    %v465 = vadd.f32 %v390, %v464
    %v466 = vpop.f32.mrb[0].mxu0
    %467 = vmatprep.mubr.f32.mxu0 0.0
    %468 = vmatmul.mubr.f32.gmra.mrb[0].mxu0 %v396
    %v469 = vpop.f32.mrb[0].mxu0
    %v470 = vadd.f32 %v390, %v469
    %v471 = vpop.f32.mrb[0].mxu0
    %472 = vdwg.mxu0
    %474 = vrot.lane.b32.xlu0 %v465, 96
    %v475 = vpop.permute.xlu0 %474
    %vm476 = vcmask 64512
    %v477 = vsel %vm476, %v465, 0
    %v479 = vsel %vm476, %v475, 0
    %481 = vmatprep.subr.mxu0 0.0
    %482 = vmatpush1.xpose.msra.mxu0 %v479
    %483 = vmatprep.subr.mxu0 0.0
    %484 = vmatpush1.xpose.msra.mxu0 0.0
    %485 = vmatprep.subr.mxu0 0.0
    %486 = vmatpush1.xpose.msra.mxu0 0.0
    %487 = vmatprep.subr.mxu0 0.0
    %488 = vmatpush1.xpose.msra.mxu0 0.0
    %489 = vmatprep.subr.mxu0 0.0
    %490 = vmatpush1.xpose.msra.mxu0 0.0
    %491 = vmatprep.subr.mxu0 0.0
    %492 = vmatpush1.xpose.msra.mxu0 0.0
    %493 = vmatprep.subr.mxu0 0.0
    %494 = vmatpush1.xpose.msra.mxu0 0.0
    %495 = vmatprep.subr.mxu0 0.0
    %496 = vmatpush1.xpose.msra.mxu0 0.0
    %497 = vmatprep.subr.mxu0 0.0
    %498 = vmatpush1.xpose.msra.mxu0 0.0
    %499 = vmatprep.subr.mxu0 0.0
    %500 = vmatpush1.xpose.msra.mxu0 0.0
    %501 = vmatprep.subr.mxu0 0.0
    %502 = vmatpush1.xpose.msra.mxu0 0.0
    %503 = vmatprep.subr.mxu0 0.0
    %504 = vmatpush1.xpose.msra.mxu0 0.0
    %505 = vmatprep.subr.mxu0 0.0
    %506 = vmatpush1.xpose.msra.mxu0 0.0
    %507 = vmatprep.subr.mxu0 0.0
    %508 = vmatpush1.xpose.msra.mxu0 0.0
    %509 = vmatprep.subr.mxu0 0.0
    %510 = vmatpush1.xpose.msra.mxu0 0.0
    %511 = vmatprep.subr.mxu0 0.0
    %512 = vmatpush1.xpose.msra.mxu0 0.0
    %513 = vmatprep.subr.mxu0 0.0
    %514 = vmatpush1.xpose.msra.mxu0 0.0
    %515 = vmatprep.subr.mxu0 0.0
    %516 = vmatpush1.xpose.msra.mxu0 0.0
    %517 = vmatprep.subr.mxu0 0.0
    %518 = vmatpush1.xpose.msra.mxu0 0.0
    %519 = vmatprep.subr.mxu0 0.0
    %520 = vmatpush1.xpose.msra.mxu0 0.0
    %521 = vmatprep.subr.mxu0 0.0
    %522 = vmatpush1.xpose.msra.mxu0 0.0
    %523 = vmatprep.subr.mxu0 0.0
    %524 = vmatpush1.xpose.msra.mxu0 0.0
    %525 = vmatprep.subr.mxu0 0.0
    %526 = vmatpush1.xpose.msra.mxu0 0.0
    %527 = vmatprep.subr.mxu0 0.0
    %528 = vmatpush1.xpose.msra.mxu0 0.0
    %529 = vmatprep.subr.mxu0 0.0
    %530 = vmatpush1.xpose.msra.mxu0 0.0
    %531 = vmatprep.subr.mxu0 0.0
    %532 = vmatpush1.xpose.msra.mxu0 0.0
    %533 = vmatprep.subr.mxu0 0.0
    %534 = vmatpush1.xpose.msra.mxu0 0.0
    %535 = vmatprep.subr.mxu0 0.0
    %536 = vmatpush1.xpose.msra.mxu0 0.0
    %537 = vmatprep.subr.mxu0 0.0
    %538 = vmatpush1.xpose.msra.mxu0 0.0
    %539 = vmatprep.subr.mxu0 0.0
    %540 = vmatpush1.xpose.msra.mxu0 0.0
    %541 = vmatprep.subr.mxu0 0.0
    %542 = vmatpush1.xpose.msra.mxu0 0.0
    %543 = vmatprep.subr.mxu0 0.0
    %544 = vmatpush1.xpose.msra.mxu0 0.0
    %545 = vmatprep.mubr.f32.mxu0 0.0
    %546 = vmatmul.mubr.f32.gmra.mrb[0].mxu0 %v477
    %v547 = vpop.f32.mrb[0].mxu0
    %v548 = vadd.f32 0.0, %v547
    %v549 = vpop.f32.mrb[0].mxu0
    %550 = vdwg.mxu0
    %552 = vrot.lane.b32.xlu0 %v470, 96
    %v553 = vpop.permute.xlu0 %552
    %v554 = vsel %vm476, %v470, 0
    %v556 = vsel %vm476, %v553, 0
    %558 = vmatprep.subr.mxu0 0.0
    %559 = vmatpush1.xpose.msra.mxu0 %v556
    %560 = vmatprep.subr.mxu0 0.0
    %561 = vmatpush1.xpose.msra.mxu0 0.0
    %562 = vmatprep.subr.mxu0 0.0
    %563 = vmatpush1.xpose.msra.mxu0 0.0
    %564 = vmatprep.subr.mxu0 0.0
    %565 = vmatpush1.xpose.msra.mxu0 0.0
    %566 = vmatprep.subr.mxu0 0.0
    %567 = vmatpush1.xpose.msra.mxu0 0.0
    %568 = vmatprep.subr.mxu0 0.0
    %569 = vmatpush1.xpose.msra.mxu0 0.0
    %570 = vmatprep.subr.mxu0 0.0
    %571 = vmatpush1.xpose.msra.mxu0 0.0
    %572 = vmatprep.subr.mxu0 0.0
    %573 = vmatpush1.xpose.msra.mxu0 0.0
    %574 = vmatprep.subr.mxu0 0.0
    %575 = vmatpush1.xpose.msra.mxu0 0.0
    %576 = vmatprep.subr.mxu0 0.0
    %577 = vmatpush1.xpose.msra.mxu0 0.0
    %578 = vmatprep.subr.mxu0 0.0
    %579 = vmatpush1.xpose.msra.mxu0 0.0
    %580 = vmatprep.subr.mxu0 0.0
    %581 = vmatpush1.xpose.msra.mxu0 0.0
    %582 = vmatprep.subr.mxu0 0.0
    %583 = vmatpush1.xpose.msra.mxu0 0.0
    %584 = vmatprep.subr.mxu0 0.0
    %585 = vmatpush1.xpose.msra.mxu0 0.0
    %586 = vmatprep.subr.mxu0 0.0
    %587 = vmatpush1.xpose.msra.mxu0 0.0
    %588 = vmatprep.subr.mxu0 0.0
    %589 = vmatpush1.xpose.msra.mxu0 0.0
    %590 = vmatprep.subr.mxu0 0.0
    %591 = vmatpush1.xpose.msra.mxu0 0.0
    %592 = vmatprep.subr.mxu0 0.0
    %593 = vmatpush1.xpose.msra.mxu0 0.0
    %594 = vmatprep.subr.mxu0 0.0
    %595 = vmatpush1.xpose.msra.mxu0 0.0
    %596 = vmatprep.subr.mxu0 0.0
    %597 = vmatpush1.xpose.msra.mxu0 0.0
    %598 = vmatprep.subr.mxu0 0.0
    %599 = vmatpush1.xpose.msra.mxu0 0.0
    %600 = vmatprep.subr.mxu0 0.0
    %601 = vmatpush1.xpose.msra.mxu0 0.0
    %602 = vmatprep.subr.mxu0 0.0
    %603 = vmatpush1.xpose.msra.mxu0 0.0
    %604 = vmatprep.subr.mxu0 0.0
    %605 = vmatpush1.xpose.msra.mxu0 0.0
    %606 = vmatprep.subr.mxu0 0.0
    %607 = vmatpush1.xpose.msra.mxu0 0.0
    %608 = vmatprep.subr.mxu0 0.0
    %609 = vmatpush1.xpose.msra.mxu0 0.0
    %610 = vmatprep.subr.mxu0 0.0
    %611 = vmatpush1.xpose.msra.mxu0 0.0
    %612 = vmatprep.subr.mxu0 0.0
    %613 = vmatpush1.xpose.msra.mxu0 0.0
    %614 = vmatprep.subr.mxu0 0.0
    %615 = vmatpush1.xpose.msra.mxu0 0.0
    %616 = vmatprep.subr.mxu0 0.0
    %617 = vmatpush1.xpose.msra.mxu0 0.0
    %618 = vmatprep.subr.mxu0 0.0
    %619 = vmatpush1.xpose.msra.mxu0 0.0
    %620 = vmatprep.subr.mxu0 0.0
    %621 = vmatpush1.xpose.msra.mxu0 0.0
    %622 = vmatprep.mubr.f32.mxu0 0.0
    %623 = vmatmul.mubr.f32.gmra.mrb[0].mxu0 %v554
    %v624 = vpop.f32.mrb[0].mxu0
    %v625 = vadd.f32 0.0, %v624
    %v626 = vpop.f32.mrb[0].mxu0
    %627 = vdwg.mxu0
    %v628 = vmul.f32 %v548, 0.35355338
    %v629 = vmul.f32 %v625, 0.35355338
    %v630 = vadd.f32 %v628, %v229
    %v631 = vadd.f32 %v629, %v230
    %v632 = vsel %vm476, %v630, -inf
    %633 = vmax.xlane.f32.xlu0 %v632
    %v634 = vpop.xlane.xlu0 %633
    %v635 = vsel %vm476, %v631, -inf
    %636 = vmax.xlane.f32.xlu0 %v635
    %v637 = vpop.xlane.xlu0 %636
    %v638 = vsub.f32 %v630, %v634
    %v639 = vsub.f32 %v631, %v637
    %v640 = vmul.f32 %v638, 1.442695
    %v641 = vpow.pop %v640
    %v642 = vmul.f32 %v639, 1.442695
    %v643 = vpow.pop %v642
    %v644 = vsel %vm476, %v641, 0.0
    %645 = vadd.xlane.f32.xlu0 %v644
    %v646 = vpop.xlane.xlu0 %645
    %v647 = vsel %vm476, %v643, 0.0
    %648 = vadd.xlane.f32.xlu0 %v647
    %v649 = vpop.xlane.xlu0 %648
    %v650 = vrcp.pop %v646
    %v651 = vmul.f32 %v641, %v650
    %v652 = vrcp.pop %v649
    %v653 = vmul.f32 %v643, %v652
    %654 = vrot.lane.b32.xlu0 %v465, 64
    %v655 = vpop.permute.xlu0 %654
    %v658 = vsel %vm476, %v651, 0
    %660 = vmatprep.subr.mxu0 0.0
    %661 = vmatpush1.msra.mxu0 %v655
    %662 = vmatprep.subr.mxu0 0.0
    %663 = vmatpush1.msra.mxu0 0.0
    %664 = vmatprep.subr.mxu0 0.0
    %665 = vmatpush1.msra.mxu0 0.0
    %666 = vmatprep.subr.mxu0 0.0
    %667 = vmatpush1.msra.mxu0 0.0
    %668 = vmatprep.subr.mxu0 0.0
    %669 = vmatpush1.msra.mxu0 0.0
    %670 = vmatprep.subr.mxu0 0.0
    %671 = vmatpush1.msra.mxu0 0.0
    %672 = vmatprep.subr.mxu0 0.0
    %673 = vmatpush1.msra.mxu0 0.0
    %674 = vmatprep.subr.mxu0 0.0
    %675 = vmatpush1.msra.mxu0 0.0
    %676 = vmatprep.subr.mxu0 0.0
    %677 = vmatpush1.msra.mxu0 0.0
    %678 = vmatprep.subr.mxu0 0.0
    %679 = vmatpush1.msra.mxu0 0.0
    %680 = vmatprep.subr.mxu0 0.0
    %681 = vmatpush1.msra.mxu0 0.0
    %682 = vmatprep.subr.mxu0 0.0
    %683 = vmatpush1.msra.mxu0 0.0
    %684 = vmatprep.subr.mxu0 0.0
    %685 = vmatpush1.msra.mxu0 0.0
    %686 = vmatprep.subr.mxu0 0.0
    %687 = vmatpush1.msra.mxu0 0.0
    %688 = vmatprep.subr.mxu0 0.0
    %689 = vmatpush1.msra.mxu0 0.0
    %690 = vmatprep.subr.mxu0 0.0
    %691 = vmatpush1.msra.mxu0 0.0
    %692 = vmatprep.subr.mxu0 0.0
    %693 = vmatpush1.msra.mxu0 0.0
    %694 = vmatprep.subr.mxu0 0.0
    %695 = vmatpush1.msra.mxu0 0.0
    %696 = vmatprep.subr.mxu0 0.0
    %697 = vmatpush1.msra.mxu0 0.0
    %698 = vmatprep.subr.mxu0 0.0
    %699 = vmatpush1.msra.mxu0 0.0
    %700 = vmatprep.subr.mxu0 0.0
    %701 = vmatpush1.msra.mxu0 0.0
    %702 = vmatprep.subr.mxu0 0.0
    %703 = vmatpush1.msra.mxu0 0.0
    %704 = vmatprep.subr.mxu0 0.0
    %705 = vmatpush1.msra.mxu0 0.0
    %706 = vmatprep.subr.mxu0 0.0
    %707 = vmatpush1.msra.mxu0 0.0
    %708 = vmatprep.subr.mxu0 0.0
    %709 = vmatpush1.msra.mxu0 0.0
    %710 = vmatprep.subr.mxu0 0.0
    %711 = vmatpush1.msra.mxu0 0.0
    %712 = vmatprep.subr.mxu0 0.0
    %713 = vmatpush1.msra.mxu0 0.0
    %714 = vmatprep.subr.mxu0 0.0
    %715 = vmatpush1.msra.mxu0 0.0
    %716 = vmatprep.subr.mxu0 0.0
    %717 = vmatpush1.msra.mxu0 0.0
    %718 = vmatprep.subr.mxu0 0.0
    %719 = vmatpush1.msra.mxu0 0.0
    %720 = vmatprep.subr.mxu0 0.0
    %721 = vmatpush1.msra.mxu0 0.0
    %722 = vmatprep.subr.mxu0 0.0
    %723 = vmatpush1.msra.mxu0 0.0
    %724 = vmatprep.mubr.f32.mxu0 0.0
    %725 = vmatmul.mubr.f32.gmra.mrb[0].mxu0 %v658
    %v726 = vpop.f32.mrb[0].mxu0
    %v727 = vadd.f32 0.0, %v726
    %v728 = vpop.f32.mrb[0].mxu0
    %729 = vdwg.mxu0
    %730 = vrot.lane.b32.xlu0 %v470, 64
    %v731 = vpop.permute.xlu0 %730
    %v734 = vsel %vm476, %v653, 0
    %736 = vmatprep.subr.mxu0 0.0
    %737 = vmatpush1.msra.mxu0 %v731
    %738 = vmatprep.subr.mxu0 0.0
    %739 = vmatpush1.msra.mxu0 0.0
    %740 = vmatprep.subr.mxu0 0.0
    %741 = vmatpush1.msra.mxu0 0.0
    %742 = vmatprep.subr.mxu0 0.0
    %743 = vmatpush1.msra.mxu0 0.0
    %744 = vmatprep.subr.mxu0 0.0
    %745 = vmatpush1.msra.mxu0 0.0
    %746 = vmatprep.subr.mxu0 0.0
    %747 = vmatpush1.msra.mxu0 0.0
    %748 = vmatprep.subr.mxu0 0.0
    %749 = vmatpush1.msra.mxu0 0.0
    %750 = vmatprep.subr.mxu0 0.0
    %751 = vmatpush1.msra.mxu0 0.0
    %752 = vmatprep.subr.mxu0 0.0
    %753 = vmatpush1.msra.mxu0 0.0
    %754 = vmatprep.subr.mxu0 0.0
    %755 = vmatpush1.msra.mxu0 0.0
    %756 = vmatprep.subr.mxu0 0.0
    %757 = vmatpush1.msra.mxu0 0.0
    %758 = vmatprep.subr.mxu0 0.0
    %759 = vmatpush1.msra.mxu0 0.0
    %760 = vmatprep.subr.mxu0 0.0
    %761 = vmatpush1.msra.mxu0 0.0
    %762 = vmatprep.subr.mxu0 0.0
    %763 = vmatpush1.msra.mxu0 0.0
    %764 = vmatprep.subr.mxu0 0.0
    %765 = vmatpush1.msra.mxu0 0.0
    %766 = vmatprep.subr.mxu0 0.0
    %767 = vmatpush1.msra.mxu0 0.0
    %768 = vmatprep.subr.mxu0 0.0
    %769 = vmatpush1.msra.mxu0 0.0
    %770 = vmatprep.subr.mxu0 0.0
    %771 = vmatpush1.msra.mxu0 0.0
    %772 = vmatprep.subr.mxu0 0.0
    %773 = vmatpush1.msra.mxu0 0.0
    %774 = vmatprep.subr.mxu0 0.0
    %775 = vmatpush1.msra.mxu0 0.0
    %776 = vmatprep.subr.mxu0 0.0
    %777 = vmatpush1.msra.mxu0 0.0
    %778 = vmatprep.subr.mxu0 0.0
    %779 = vmatpush1.msra.mxu0 0.0
    %780 = vmatprep.subr.mxu0 0.0
    %781 = vmatpush1.msra.mxu0 0.0
    %782 = vmatprep.subr.mxu0 0.0
    %783 = vmatpush1.msra.mxu0 0.0
    %784 = vmatprep.subr.mxu0 0.0
    %785 = vmatpush1.msra.mxu0 0.0
    %786 = vmatprep.subr.mxu0 0.0
    %787 = vmatpush1.msra.mxu0 0.0
    %788 = vmatprep.subr.mxu0 0.0
    %789 = vmatpush1.msra.mxu0 0.0
    %790 = vmatprep.subr.mxu0 0.0
    %791 = vmatpush1.msra.mxu0 0.0
    %792 = vmatprep.subr.mxu0 0.0
    %793 = vmatpush1.msra.mxu0 0.0
    %794 = vmatprep.subr.mxu0 0.0
    %795 = vmatpush1.msra.mxu0 0.0
    %796 = vmatprep.subr.mxu0 0.0
    %797 = vmatpush1.msra.mxu0 0.0
    %798 = vmatprep.subr.mxu0 0.0
    %799 = vmatpush1.msra.mxu0 0.0
    %800 = vmatprep.mubr.f32.mxu0 0.0
    %801 = vmatmul.mubr.f32.gmra.mrb[0].mxu0 %v734
    %v802 = vpop.f32.mrb[0].mxu0
    %v803 = vadd.f32 0.0, %v802
    %v804 = vpop.f32.mrb[0].mxu0
    %805 = vdwg.mxu0
    %806 = vrot.lane.b32.xlu0 %v465, 120
    %v807 = vpop.permute.xlu0 %806
    %808 = vrot.lane.b32.xlu0 %v465, 88
    %v809 = vpop.permute.xlu0 %808
    %v810 = vsel %vm476, %v807, 0
    %v812 = vsel %vm476, %v809, 0
    %814 = vmatprep.subr.mxu0 0.0
    %815 = vmatpush1.xpose.msra.mxu0 %v812
    %816 = vmatprep.subr.mxu0 0.0
    %817 = vmatpush1.xpose.msra.mxu0 0.0
    %818 = vmatprep.subr.mxu0 0.0
    %819 = vmatpush1.xpose.msra.mxu0 0.0
    %820 = vmatprep.subr.mxu0 0.0
    %821 = vmatpush1.xpose.msra.mxu0 0.0
    %822 = vmatprep.subr.mxu0 0.0
    %823 = vmatpush1.xpose.msra.mxu0 0.0
    %824 = vmatprep.subr.mxu0 0.0
    %825 = vmatpush1.xpose.msra.mxu0 0.0
    %826 = vmatprep.subr.mxu0 0.0
    %827 = vmatpush1.xpose.msra.mxu0 0.0
    %828 = vmatprep.subr.mxu0 0.0
    %829 = vmatpush1.xpose.msra.mxu0 0.0
    %830 = vmatprep.subr.mxu0 0.0
    %831 = vmatpush1.xpose.msra.mxu0 0.0
    %832 = vmatprep.subr.mxu0 0.0
    %833 = vmatpush1.xpose.msra.mxu0 0.0
    %834 = vmatprep.subr.mxu0 0.0
    %835 = vmatpush1.xpose.msra.mxu0 0.0
    %836 = vmatprep.subr.mxu0 0.0
    %837 = vmatpush1.xpose.msra.mxu0 0.0
    %838 = vmatprep.subr.mxu0 0.0
    %839 = vmatpush1.xpose.msra.mxu0 0.0
    %840 = vmatprep.subr.mxu0 0.0
    %841 = vmatpush1.xpose.msra.mxu0 0.0
    %842 = vmatprep.subr.mxu0 0.0
    %843 = vmatpush1.xpose.msra.mxu0 0.0
    %844 = vmatprep.subr.mxu0 0.0
    %845 = vmatpush1.xpose.msra.mxu0 0.0
    %846 = vmatprep.subr.mxu0 0.0
    %847 = vmatpush1.xpose.msra.mxu0 0.0
    %848 = vmatprep.subr.mxu0 0.0
    %849 = vmatpush1.xpose.msra.mxu0 0.0
    %850 = vmatprep.subr.mxu0 0.0
    %851 = vmatpush1.xpose.msra.mxu0 0.0
    %852 = vmatprep.subr.mxu0 0.0
    %853 = vmatpush1.xpose.msra.mxu0 0.0
    %854 = vmatprep.subr.mxu0 0.0
    %855 = vmatpush1.xpose.msra.mxu0 0.0
    %856 = vmatprep.subr.mxu0 0.0
    %857 = vmatpush1.xpose.msra.mxu0 0.0
    %858 = vmatprep.subr.mxu0 0.0
    %859 = vmatpush1.xpose.msra.mxu0 0.0
    %860 = vmatprep.subr.mxu0 0.0
    %861 = vmatpush1.xpose.msra.mxu0 0.0
    %862 = vmatprep.subr.mxu0 0.0
    %863 = vmatpush1.xpose.msra.mxu0 0.0
    %864 = vmatprep.subr.mxu0 0.0
    %865 = vmatpush1.xpose.msra.mxu0 0.0
    %866 = vmatprep.subr.mxu0 0.0
    %867 = vmatpush1.xpose.msra.mxu0 0.0
    %868 = vmatprep.subr.mxu0 0.0
    %869 = vmatpush1.xpose.msra.mxu0 0.0
    %870 = vmatprep.subr.mxu0 0.0
    %871 = vmatpush1.xpose.msra.mxu0 0.0
    %872 = vmatprep.subr.mxu0 0.0
    %873 = vmatpush1.xpose.msra.mxu0 0.0
    %874 = vmatprep.subr.mxu0 0.0
    %875 = vmatpush1.xpose.msra.mxu0 0.0
    %876 = vmatprep.subr.mxu0 0.0
    %877 = vmatpush1.xpose.msra.mxu0 0.0
    %878 = vmatprep.mubr.f32.mxu0 0.0
    %879 = vmatmul.mubr.f32.gmra.mrb[0].mxu0 %v810
    %v880 = vpop.f32.mrb[0].mxu0
    %v881 = vadd.f32 0.0, %v880
    %v882 = vpop.f32.mrb[0].mxu0
    %883 = vdwg.mxu0
    %884 = vrot.lane.b32.xlu0 %v470, 120
    %v885 = vpop.permute.xlu0 %884
    %886 = vrot.lane.b32.xlu0 %v470, 88
    %v887 = vpop.permute.xlu0 %886
    %v888 = vsel %vm476, %v885, 0
    %v890 = vsel %vm476, %v887, 0
    %892 = vmatprep.subr.mxu0 0.0
    %893 = vmatpush1.xpose.msra.mxu0 %v890
    %894 = vmatprep.subr.mxu0 0.0
    %895 = vmatpush1.xpose.msra.mxu0 0.0
    %896 = vmatprep.subr.mxu0 0.0
    %897 = vmatpush1.xpose.msra.mxu0 0.0
    %898 = vmatprep.subr.mxu0 0.0
    %899 = vmatpush1.xpose.msra.mxu0 0.0
    %900 = vmatprep.subr.mxu0 0.0
    %901 = vmatpush1.xpose.msra.mxu0 0.0
    %902 = vmatprep.subr.mxu0 0.0
    %903 = vmatpush1.xpose.msra.mxu0 0.0
    %904 = vmatprep.subr.mxu0 0.0
    %905 = vmatpush1.xpose.msra.mxu0 0.0
    %906 = vmatprep.subr.mxu0 0.0
    %907 = vmatpush1.xpose.msra.mxu0 0.0
    %908 = vmatprep.subr.mxu0 0.0
    %909 = vmatpush1.xpose.msra.mxu0 0.0
    %910 = vmatprep.subr.mxu0 0.0
    %911 = vmatpush1.xpose.msra.mxu0 0.0
    %912 = vmatprep.subr.mxu0 0.0
    %913 = vmatpush1.xpose.msra.mxu0 0.0
    %914 = vmatprep.subr.mxu0 0.0
    %915 = vmatpush1.xpose.msra.mxu0 0.0
    %916 = vmatprep.subr.mxu0 0.0
    %917 = vmatpush1.xpose.msra.mxu0 0.0
    %918 = vmatprep.subr.mxu0 0.0
    %919 = vmatpush1.xpose.msra.mxu0 0.0
    %920 = vmatprep.subr.mxu0 0.0
    %921 = vmatpush1.xpose.msra.mxu0 0.0
    %922 = vmatprep.subr.mxu0 0.0
    %923 = vmatpush1.xpose.msra.mxu0 0.0
    %924 = vmatprep.subr.mxu0 0.0
    %925 = vmatpush1.xpose.msra.mxu0 0.0
    %926 = vmatprep.subr.mxu0 0.0
    %927 = vmatpush1.xpose.msra.mxu0 0.0
    %928 = vmatprep.subr.mxu0 0.0
    %929 = vmatpush1.xpose.msra.mxu0 0.0
    %930 = vmatprep.subr.mxu0 0.0
    %931 = vmatpush1.xpose.msra.mxu0 0.0
    %932 = vmatprep.subr.mxu0 0.0
    %933 = vmatpush1.xpose.msra.mxu0 0.0
    %934 = vmatprep.subr.mxu0 0.0
    %935 = vmatpush1.xpose.msra.mxu0 0.0
    %936 = vmatprep.subr.mxu0 0.0
    %937 = vmatpush1.xpose.msra.mxu0 0.0
    %938 = vmatprep.subr.mxu0 0.0
    %939 = vmatpush1.xpose.msra.mxu0 0.0
    %940 = vmatprep.subr.mxu0 0.0
    %941 = vmatpush1.xpose.msra.mxu0 0.0
    %942 = vmatprep.subr.mxu0 0.0
    %943 = vmatpush1.xpose.msra.mxu0 0.0
    %944 = vmatprep.subr.mxu0 0.0
    %945 = vmatpush1.xpose.msra.mxu0 0.0
    %946 = vmatprep.subr.mxu0 0.0
    %947 = vmatpush1.xpose.msra.mxu0 0.0
    %948 = vmatprep.subr.mxu0 0.0
    %949 = vmatpush1.xpose.msra.mxu0 0.0
    %950 = vmatprep.subr.mxu0 0.0
    %951 = vmatpush1.xpose.msra.mxu0 0.0
    %952 = vmatprep.subr.mxu0 0.0
    %953 = vmatpush1.xpose.msra.mxu0 0.0
    %954 = vmatprep.subr.mxu0 0.0
    %955 = vmatpush1.xpose.msra.mxu0 0.0
    %956 = vmatprep.mubr.f32.mxu0 0.0
    %957 = vmatmul.mubr.f32.gmra.mrb[0].mxu0 %v888
    %v958 = vpop.f32.mrb[0].mxu0
    %v959 = vadd.f32 0.0, %v958
    %v960 = vpop.f32.mrb[0].mxu0
    %961 = vdwg.mxu0
    %v962 = vmul.f32 %v881, 0.35355338
    %v963 = vmul.f32 %v959, 0.35355338
    %v964 = vadd.f32 %v962, %v229
    %v965 = vadd.f32 %v963, %v230
    %v966 = vsel %vm476, %v964, -inf
    %967 = vmax.xlane.f32.xlu0 %v966
    %v968 = vpop.xlane.xlu0 %967
    %v969 = vsel %vm476, %v965, -inf
    %970 = vmax.xlane.f32.xlu0 %v969
    %v971 = vpop.xlane.xlu0 %970
    %v972 = vsub.f32 %v964, %v968
    %v973 = vsub.f32 %v965, %v971
    %v974 = vmul.f32 %v972, 1.442695
    %v975 = vpow.pop %v974
    %v976 = vmul.f32 %v973, 1.442695
    %v977 = vpow.pop %v976
    %v978 = vsel %vm476, %v975, 0.0
    %979 = vadd.xlane.f32.xlu0 %v978
    %v980 = vpop.xlane.xlu0 %979
    %v981 = vsel %vm476, %v977, 0.0
    %982 = vadd.xlane.f32.xlu0 %v981
    %v983 = vpop.xlane.xlu0 %982
    %v984 = vrcp.pop %v980
    %v985 = vmul.f32 %v975, %v984
    %v986 = vrcp.pop %v983
    %v987 = vmul.f32 %v977, %v986
    %988 = vrot.lane.b32.xlu0 %v465, 56
    %v989 = vpop.permute.xlu0 %988
    %v992 = vsel %vm476, %v985, 0
    %994 = vmatprep.subr.mxu0 0.0
    %995 = vmatpush1.msra.mxu0 %v989
    %996 = vmatprep.subr.mxu0 0.0
    %997 = vmatpush1.msra.mxu0 0.0
    %998 = vmatprep.subr.mxu0 0.0
    %999 = vmatpush1.msra.mxu0 0.0
    %1000 = vmatprep.subr.mxu0 0.0
    %1001 = vmatpush1.msra.mxu0 0.0
    %1002 = vmatprep.subr.mxu0 0.0
    %1003 = vmatpush1.msra.mxu0 0.0
    %1004 = vmatprep.subr.mxu0 0.0
    %1005 = vmatpush1.msra.mxu0 0.0
    %1006 = vmatprep.subr.mxu0 0.0
    %1007 = vmatpush1.msra.mxu0 0.0
    %1008 = vmatprep.subr.mxu0 0.0
    %1009 = vmatpush1.msra.mxu0 0.0
    %1010 = vmatprep.subr.mxu0 0.0
    %1011 = vmatpush1.msra.mxu0 0.0
    %1012 = vmatprep.subr.mxu0 0.0
    %1013 = vmatpush1.msra.mxu0 0.0
    %1014 = vmatprep.subr.mxu0 0.0
    %1015 = vmatpush1.msra.mxu0 0.0
    %1016 = vmatprep.subr.mxu0 0.0
    %1017 = vmatpush1.msra.mxu0 0.0
    %1018 = vmatprep.subr.mxu0 0.0
    %1019 = vmatpush1.msra.mxu0 0.0
    %1020 = vmatprep.subr.mxu0 0.0
    %1021 = vmatpush1.msra.mxu0 0.0
    %1022 = vmatprep.subr.mxu0 0.0
    %1023 = vmatpush1.msra.mxu0 0.0
    %1024 = vmatprep.subr.mxu0 0.0
    %1025 = vmatpush1.msra.mxu0 0.0
    %1026 = vmatprep.subr.mxu0 0.0
    %1027 = vmatpush1.msra.mxu0 0.0
    %1028 = vmatprep.subr.mxu0 0.0
    %1029 = vmatpush1.msra.mxu0 0.0
    %1030 = vmatprep.subr.mxu0 0.0
    %1031 = vmatpush1.msra.mxu0 0.0
    %1032 = vmatprep.subr.mxu0 0.0
    %1033 = vmatpush1.msra.mxu0 0.0
    %1034 = vmatprep.subr.mxu0 0.0
    %1035 = vmatpush1.msra.mxu0 0.0
    %1036 = vmatprep.subr.mxu0 0.0
    %1037 = vmatpush1.msra.mxu0 0.0
    %1038 = vmatprep.subr.mxu0 0.0
    %1039 = vmatpush1.msra.mxu0 0.0
    %1040 = vmatprep.subr.mxu0 0.0
    %1041 = vmatpush1.msra.mxu0 0.0
    %1042 = vmatprep.subr.mxu0 0.0
    %1043 = vmatpush1.msra.mxu0 0.0
    %1044 = vmatprep.subr.mxu0 0.0
    %1045 = vmatpush1.msra.mxu0 0.0
    %1046 = vmatprep.subr.mxu0 0.0
    %1047 = vmatpush1.msra.mxu0 0.0
    %1048 = vmatprep.subr.mxu0 0.0
    %1049 = vmatpush1.msra.mxu0 0.0
    %1050 = vmatprep.subr.mxu0 0.0
    %1051 = vmatpush1.msra.mxu0 0.0
    %1052 = vmatprep.subr.mxu0 0.0
    %1053 = vmatpush1.msra.mxu0 0.0
    %1054 = vmatprep.subr.mxu0 0.0
    %1055 = vmatpush1.msra.mxu0 0.0
    %1056 = vmatprep.subr.mxu0 0.0
    %1057 = vmatpush1.msra.mxu0 0.0
    %1058 = vmatprep.mubr.f32.mxu0 0.0
    %1059 = vmatmul.mubr.f32.gmra.mrb[0].mxu0 %v992
    %v1060 = vpop.f32.mrb[0].mxu0
    %v1061 = vadd.f32 0.0, %v1060
    %v1062 = vpop.f32.mrb[0].mxu0
    %1063 = vdwg.mxu0
    %1064 = vrot.lane.b32.xlu0 %v470, 56
    %v1065 = vpop.permute.xlu0 %1064
    %v1068 = vsel %vm476, %v987, 0
    %1070 = vmatprep.subr.mxu0 0.0
    %1071 = vmatpush1.msra.mxu0 %v1065
    %1072 = vmatprep.subr.mxu0 0.0
    %1073 = vmatpush1.msra.mxu0 0.0
    %1074 = vmatprep.subr.mxu0 0.0
    %1075 = vmatpush1.msra.mxu0 0.0
    %1076 = vmatprep.subr.mxu0 0.0
    %1077 = vmatpush1.msra.mxu0 0.0
    %1078 = vmatprep.subr.mxu0 0.0
    %1079 = vmatpush1.msra.mxu0 0.0
    %1080 = vmatprep.subr.mxu0 0.0
    %1081 = vmatpush1.msra.mxu0 0.0
    %1082 = vmatprep.subr.mxu0 0.0
    %1083 = vmatpush1.msra.mxu0 0.0
    %1084 = vmatprep.subr.mxu0 0.0
    %1085 = vmatpush1.msra.mxu0 0.0
    %1086 = vmatprep.subr.mxu0 0.0
    %1087 = vmatpush1.msra.mxu0 0.0
    %1088 = vmatprep.subr.mxu0 0.0
    %1089 = vmatpush1.msra.mxu0 0.0
    %1090 = vmatprep.subr.mxu0 0.0
    %1091 = vmatpush1.msra.mxu0 0.0
    %1092 = vmatprep.subr.mxu0 0.0
    %1093 = vmatpush1.msra.mxu0 0.0
    %1094 = vmatprep.subr.mxu0 0.0
    %1095 = vmatpush1.msra.mxu0 0.0
    %1096 = vmatprep.subr.mxu0 0.0
    %1097 = vmatpush1.msra.mxu0 0.0
    %1098 = vmatprep.subr.mxu0 0.0
    %1099 = vmatpush1.msra.mxu0 0.0
    %1100 = vmatprep.subr.mxu0 0.0
    %1101 = vmatpush1.msra.mxu0 0.0
    %1102 = vmatprep.subr.mxu0 0.0
    %1103 = vmatpush1.msra.mxu0 0.0
    %1104 = vmatprep.subr.mxu0 0.0
    %1105 = vmatpush1.msra.mxu0 0.0
    %1106 = vmatprep.subr.mxu0 0.0
    %1107 = vmatpush1.msra.mxu0 0.0
    %1108 = vmatprep.subr.mxu0 0.0
    %1109 = vmatpush1.msra.mxu0 0.0
    %1110 = vmatprep.subr.mxu0 0.0
    %1111 = vmatpush1.msra.mxu0 0.0
    %1112 = vmatprep.subr.mxu0 0.0
    %1113 = vmatpush1.msra.mxu0 0.0
    %1114 = vmatprep.subr.mxu0 0.0
    %1115 = vmatpush1.msra.mxu0 0.0
    %1116 = vmatprep.subr.mxu0 0.0
    %1117 = vmatpush1.msra.mxu0 0.0
    %1118 = vmatprep.subr.mxu0 0.0
    %1119 = vmatpush1.msra.mxu0 0.0
    %1120 = vmatprep.subr.mxu0 0.0
    %1121 = vmatpush1.msra.mxu0 0.0
    %1122 = vmatprep.subr.mxu0 0.0
    %1123 = vmatpush1.msra.mxu0 0.0
    %1124 = vmatprep.subr.mxu0 0.0
    %1125 = vmatpush1.msra.mxu0 0.0
    %1126 = vmatprep.subr.mxu0 0.0
    %1127 = vmatpush1.msra.mxu0 0.0
    %1128 = vmatprep.subr.mxu0 0.0
    %1129 = vmatpush1.msra.mxu0 0.0
    %1130 = vmatprep.subr.mxu0 0.0
    %1131 = vmatpush1.msra.mxu0 0.0
    %1132 = vmatprep.subr.mxu0 0.0
    %1133 = vmatpush1.msra.mxu0 0.0
    %1134 = vmatprep.mubr.f32.mxu0 0.0
    %1135 = vmatmul.mubr.f32.gmra.mrb[0].mxu0 %v1068
    %v1136 = vpop.f32.mrb[0].mxu0
    %v1137 = vadd.f32 0.0, %v1136
    %v1138 = vpop.f32.mrb[0].mxu0
    %1139 = vdwg.mxu0
    %1140 = vrot.lane.b32.xlu0 %v465, 112
    %v1141 = vpop.permute.xlu0 %1140
    %1142 = vrot.lane.b32.xlu0 %v465, 80
    %v1143 = vpop.permute.xlu0 %1142
    %v1144 = vsel %vm476, %v1141, 0
    %v1146 = vsel %vm476, %v1143, 0
    %1148 = vmatprep.subr.mxu0 0.0
    %1149 = vmatpush1.xpose.msra.mxu0 %v1146
    %1150 = vmatprep.subr.mxu0 0.0
    %1151 = vmatpush1.xpose.msra.mxu0 0.0
    %1152 = vmatprep.subr.mxu0 0.0
    %1153 = vmatpush1.xpose.msra.mxu0 0.0
    %1154 = vmatprep.subr.mxu0 0.0
    %1155 = vmatpush1.xpose.msra.mxu0 0.0
    %1156 = vmatprep.subr.mxu0 0.0
    %1157 = vmatpush1.xpose.msra.mxu0 0.0
    %1158 = vmatprep.subr.mxu0 0.0
    %1159 = vmatpush1.xpose.msra.mxu0 0.0
    %1160 = vmatprep.subr.mxu0 0.0
    %1161 = vmatpush1.xpose.msra.mxu0 0.0
    %1162 = vmatprep.subr.mxu0 0.0
    %1163 = vmatpush1.xpose.msra.mxu0 0.0
    %1164 = vmatprep.subr.mxu0 0.0
    %1165 = vmatpush1.xpose.msra.mxu0 0.0
    %1166 = vmatprep.subr.mxu0 0.0
    %1167 = vmatpush1.xpose.msra.mxu0 0.0
    %1168 = vmatprep.subr.mxu0 0.0
    %1169 = vmatpush1.xpose.msra.mxu0 0.0
    %1170 = vmatprep.subr.mxu0 0.0
    %1171 = vmatpush1.xpose.msra.mxu0 0.0
    %1172 = vmatprep.subr.mxu0 0.0
    %1173 = vmatpush1.xpose.msra.mxu0 0.0
    %1174 = vmatprep.subr.mxu0 0.0
    %1175 = vmatpush1.xpose.msra.mxu0 0.0
    %1176 = vmatprep.subr.mxu0 0.0
    %1177 = vmatpush1.xpose.msra.mxu0 0.0
    %1178 = vmatprep.subr.mxu0 0.0
    %1179 = vmatpush1.xpose.msra.mxu0 0.0
    %1180 = vmatprep.subr.mxu0 0.0
    %1181 = vmatpush1.xpose.msra.mxu0 0.0
    %1182 = vmatprep.subr.mxu0 0.0
    %1183 = vmatpush1.xpose.msra.mxu0 0.0
    %1184 = vmatprep.subr.mxu0 0.0
    %1185 = vmatpush1.xpose.msra.mxu0 0.0
    %1186 = vmatprep.subr.mxu0 0.0
    %1187 = vmatpush1.xpose.msra.mxu0 0.0
    %1188 = vmatprep.subr.mxu0 0.0
    %1189 = vmatpush1.xpose.msra.mxu0 0.0
    %1190 = vmatprep.subr.mxu0 0.0
    %1191 = vmatpush1.xpose.msra.mxu0 0.0
    %1192 = vmatprep.subr.mxu0 0.0
    %1193 = vmatpush1.xpose.msra.mxu0 0.0
    %1194 = vmatprep.subr.mxu0 0.0
    %1195 = vmatpush1.xpose.msra.mxu0 0.0
    %1196 = vmatprep.subr.mxu0 0.0
    %1197 = vmatpush1.xpose.msra.mxu0 0.0
    %1198 = vmatprep.subr.mxu0 0.0
    %1199 = vmatpush1.xpose.msra.mxu0 0.0
    %1200 = vmatprep.subr.mxu0 0.0
    %1201 = vmatpush1.xpose.msra.mxu0 0.0
    %1202 = vmatprep.subr.mxu0 0.0
    %1203 = vmatpush1.xpose.msra.mxu0 0.0
    %1204 = vmatprep.subr.mxu0 0.0
    %1205 = vmatpush1.xpose.msra.mxu0 0.0
    %1206 = vmatprep.subr.mxu0 0.0
    %1207 = vmatpush1.xpose.msra.mxu0 0.0
    %1208 = vmatprep.subr.mxu0 0.0
    %1209 = vmatpush1.xpose.msra.mxu0 0.0
    %1210 = vmatprep.subr.mxu0 0.0
    %1211 = vmatpush1.xpose.msra.mxu0 0.0
    %1212 = vmatprep.mubr.f32.mxu0 0.0
    %1213 = vmatmul.mubr.f32.gmra.mrb[0].mxu0 %v1144
    %v1214 = vpop.f32.mrb[0].mxu0
    %v1215 = vadd.f32 0.0, %v1214
    %v1216 = vpop.f32.mrb[0].mxu0
    %1217 = vdwg.mxu0
    %1218 = vrot.lane.b32.xlu0 %v470, 112
    %v1219 = vpop.permute.xlu0 %1218
    %1220 = vrot.lane.b32.xlu0 %v470, 80
    %v1221 = vpop.permute.xlu0 %1220
    %v1222 = vsel %vm476, %v1219, 0
    %v1224 = vsel %vm476, %v1221, 0
    %1226 = vmatprep.subr.mxu0 0.0
    %1227 = vmatpush1.xpose.msra.mxu0 %v1224
    %1228 = vmatprep.subr.mxu0 0.0
    %1229 = vmatpush1.xpose.msra.mxu0 0.0
    %1230 = vmatprep.subr.mxu0 0.0
    %1231 = vmatpush1.xpose.msra.mxu0 0.0
    %1232 = vmatprep.subr.mxu0 0.0
    %1233 = vmatpush1.xpose.msra.mxu0 0.0
    %1234 = vmatprep.subr.mxu0 0.0
    %1235 = vmatpush1.xpose.msra.mxu0 0.0
    %1236 = vmatprep.subr.mxu0 0.0
    %1237 = vmatpush1.xpose.msra.mxu0 0.0
    %1238 = vmatprep.subr.mxu0 0.0
    %1239 = vmatpush1.xpose.msra.mxu0 0.0
    %1240 = vmatprep.subr.mxu0 0.0
    %1241 = vmatpush1.xpose.msra.mxu0 0.0
    %1242 = vmatprep.subr.mxu0 0.0
    %1243 = vmatpush1.xpose.msra.mxu0 0.0
    %1244 = vmatprep.subr.mxu0 0.0
    %1245 = vmatpush1.xpose.msra.mxu0 0.0
    %1246 = vmatprep.subr.mxu0 0.0
    %1247 = vmatpush1.xpose.msra.mxu0 0.0
    %1248 = vmatprep.subr.mxu0 0.0
    %1249 = vmatpush1.xpose.msra.mxu0 0.0
    %1250 = vmatprep.subr.mxu0 0.0
    %1251 = vmatpush1.xpose.msra.mxu0 0.0
    %1252 = vmatprep.subr.mxu0 0.0
    %1253 = vmatpush1.xpose.msra.mxu0 0.0
    %1254 = vmatprep.subr.mxu0 0.0
    %1255 = vmatpush1.xpose.msra.mxu0 0.0
    %1256 = vmatprep.subr.mxu0 0.0
    %1257 = vmatpush1.xpose.msra.mxu0 0.0
    %1258 = vmatprep.subr.mxu0 0.0
    %1259 = vmatpush1.xpose.msra.mxu0 0.0
    %1260 = vmatprep.subr.mxu0 0.0
    %1261 = vmatpush1.xpose.msra.mxu0 0.0
    %1262 = vmatprep.subr.mxu0 0.0
    %1263 = vmatpush1.xpose.msra.mxu0 0.0
    %1264 = vmatprep.subr.mxu0 0.0
    %1265 = vmatpush1.xpose.msra.mxu0 0.0
    %1266 = vmatprep.subr.mxu0 0.0
    %1267 = vmatpush1.xpose.msra.mxu0 0.0
    %1268 = vmatprep.subr.mxu0 0.0
    %1269 = vmatpush1.xpose.msra.mxu0 0.0
    %1270 = vmatprep.subr.mxu0 0.0
    %1271 = vmatpush1.xpose.msra.mxu0 0.0
    %1272 = vmatprep.subr.mxu0 0.0
    %1273 = vmatpush1.xpose.msra.mxu0 0.0
    %1274 = vmatprep.subr.mxu0 0.0
    %1275 = vmatpush1.xpose.msra.mxu0 0.0
    %1276 = vmatprep.subr.mxu0 0.0
    %1277 = vmatpush1.xpose.msra.mxu0 0.0
    %1278 = vmatprep.subr.mxu0 0.0
    %1279 = vmatpush1.xpose.msra.mxu0 0.0
    %1280 = vmatprep.subr.mxu0 0.0
    %1281 = vmatpush1.xpose.msra.mxu0 0.0
    %1282 = vmatprep.subr.mxu0 0.0
    %1283 = vmatpush1.xpose.msra.mxu0 0.0
    %1284 = vmatprep.subr.mxu0 0.0
    %1285 = vmatpush1.xpose.msra.mxu0 0.0
    %1286 = vmatprep.subr.mxu0 0.0
    %1287 = vmatpush1.xpose.msra.mxu0 0.0
    %1288 = vmatprep.subr.mxu0 0.0
    %1289 = vmatpush1.xpose.msra.mxu0 0.0
    %1290 = vmatprep.mubr.f32.mxu0 0.0
    %1291 = vmatmul.mubr.f32.gmra.mrb[0].mxu0 %v1222
    %v1292 = vpop.f32.mrb[0].mxu0
    %v1293 = vadd.f32 0.0, %v1292
    %v1294 = vpop.f32.mrb[0].mxu0
    %1295 = vdwg.mxu0
    %v1296 = vmul.f32 %v1215, 0.35355338
    %v1297 = vmul.f32 %v1293, 0.35355338
    %v1298 = vadd.f32 %v1296, %v229
    %v1299 = vadd.f32 %v1297, %v230
    %v1300 = vsel %vm476, %v1298, -inf
    %1301 = vmax.xlane.f32.xlu0 %v1300
    %v1302 = vpop.xlane.xlu0 %1301
    %v1303 = vsel %vm476, %v1299, -inf
    %1304 = vmax.xlane.f32.xlu0 %v1303
    %v1305 = vpop.xlane.xlu0 %1304
    %v1306 = vsub.f32 %v1298, %v1302
    %v1307 = vsub.f32 %v1299, %v1305
    %v1308 = vmul.f32 %v1306, 1.442695
    %v1309 = vpow.pop %v1308
    %v1310 = vmul.f32 %v1307, 1.442695
    %v1311 = vpow.pop %v1310
    %v1312 = vsel %vm476, %v1309, 0.0
    %1313 = vadd.xlane.f32.xlu0 %v1312
    %v1314 = vpop.xlane.xlu0 %1313
    %v1315 = vsel %vm476, %v1311, 0.0
    %1316 = vadd.xlane.f32.xlu0 %v1315
    %v1317 = vpop.xlane.xlu0 %1316
    %v1318 = vrcp.pop %v1314
    %v1319 = vmul.f32 %v1309, %v1318
    %v1320 = vrcp.pop %v1317
    %v1321 = vmul.f32 %v1311, %v1320
    %1322 = vrot.lane.b32.xlu0 %v465, 48
    %v1323 = vpop.permute.xlu0 %1322
    %v1326 = vsel %vm476, %v1319, 0
    %1328 = vmatprep.subr.mxu0 0.0
    %1329 = vmatpush1.msra.mxu0 %v1323
    %1330 = vmatprep.subr.mxu0 0.0
    %1331 = vmatpush1.msra.mxu0 0.0
    %1332 = vmatprep.subr.mxu0 0.0
    %1333 = vmatpush1.msra.mxu0 0.0
    %1334 = vmatprep.subr.mxu0 0.0
    %1335 = vmatpush1.msra.mxu0 0.0
    %1336 = vmatprep.subr.mxu0 0.0
    %1337 = vmatpush1.msra.mxu0 0.0
    %1338 = vmatprep.subr.mxu0 0.0
    %1339 = vmatpush1.msra.mxu0 0.0
    %1340 = vmatprep.subr.mxu0 0.0
    %1341 = vmatpush1.msra.mxu0 0.0
    %1342 = vmatprep.subr.mxu0 0.0
    %1343 = vmatpush1.msra.mxu0 0.0
    %1344 = vmatprep.subr.mxu0 0.0
    %1345 = vmatpush1.msra.mxu0 0.0
    %1346 = vmatprep.subr.mxu0 0.0
    %1347 = vmatpush1.msra.mxu0 0.0
    %1348 = vmatprep.subr.mxu0 0.0
    %1349 = vmatpush1.msra.mxu0 0.0
    %1350 = vmatprep.subr.mxu0 0.0
    %1351 = vmatpush1.msra.mxu0 0.0
    %1352 = vmatprep.subr.mxu0 0.0
    %1353 = vmatpush1.msra.mxu0 0.0
    %1354 = vmatprep.subr.mxu0 0.0
    %1355 = vmatpush1.msra.mxu0 0.0
    %1356 = vmatprep.subr.mxu0 0.0
    %1357 = vmatpush1.msra.mxu0 0.0
    %1358 = vmatprep.subr.mxu0 0.0
    %1359 = vmatpush1.msra.mxu0 0.0
    %1360 = vmatprep.subr.mxu0 0.0
    %1361 = vmatpush1.msra.mxu0 0.0
    %1362 = vmatprep.subr.mxu0 0.0
    %1363 = vmatpush1.msra.mxu0 0.0
    %1364 = vmatprep.subr.mxu0 0.0
    %1365 = vmatpush1.msra.mxu0 0.0
    %1366 = vmatprep.subr.mxu0 0.0
    %1367 = vmatpush1.msra.mxu0 0.0
    %1368 = vmatprep.subr.mxu0 0.0
    %1369 = vmatpush1.msra.mxu0 0.0
    %1370 = vmatprep.subr.mxu0 0.0
    %1371 = vmatpush1.msra.mxu0 0.0
    %1372 = vmatprep.subr.mxu0 0.0
    %1373 = vmatpush1.msra.mxu0 0.0
    %1374 = vmatprep.subr.mxu0 0.0
    %1375 = vmatpush1.msra.mxu0 0.0
    %1376 = vmatprep.subr.mxu0 0.0
    %1377 = vmatpush1.msra.mxu0 0.0
    %1378 = vmatprep.subr.mxu0 0.0
    %1379 = vmatpush1.msra.mxu0 0.0
    %1380 = vmatprep.subr.mxu0 0.0
    %1381 = vmatpush1.msra.mxu0 0.0
    %1382 = vmatprep.subr.mxu0 0.0
    %1383 = vmatpush1.msra.mxu0 0.0
    %1384 = vmatprep.subr.mxu0 0.0
    %1385 = vmatpush1.msra.mxu0 0.0
    %1386 = vmatprep.subr.mxu0 0.0
    %1387 = vmatpush1.msra.mxu0 0.0
    %1388 = vmatprep.subr.mxu0 0.0
    %1389 = vmatpush1.msra.mxu0 0.0
    %1390 = vmatprep.subr.mxu0 0.0
    %1391 = vmatpush1.msra.mxu0 0.0
    %1392 = vmatprep.mubr.f32.mxu0 0.0
    %1393 = vmatmul.mubr.f32.gmra.mrb[0].mxu0 %v1326
    %v1394 = vpop.f32.mrb[0].mxu0
    %v1395 = vadd.f32 0.0, %v1394
    %v1396 = vpop.f32.mrb[0].mxu0
    %1397 = vdwg.mxu0
    %1398 = vrot.lane.b32.xlu0 %v470, 48
    %v1399 = vpop.permute.xlu0 %1398
    %v1402 = vsel %vm476, %v1321, 0
    %1404 = vmatprep.subr.mxu0 0.0
    %1405 = vmatpush1.msra.mxu0 %v1399
    %1406 = vmatprep.subr.mxu0 0.0
    %1407 = vmatpush1.msra.mxu0 0.0
    %1408 = vmatprep.subr.mxu0 0.0
    %1409 = vmatpush1.msra.mxu0 0.0
    %1410 = vmatprep.subr.mxu0 0.0
    %1411 = vmatpush1.msra.mxu0 0.0
    %1412 = vmatprep.subr.mxu0 0.0
    %1413 = vmatpush1.msra.mxu0 0.0
    %1414 = vmatprep.subr.mxu0 0.0
    %1415 = vmatpush1.msra.mxu0 0.0
    %1416 = vmatprep.subr.mxu0 0.0
    %1417 = vmatpush1.msra.mxu0 0.0
    %1418 = vmatprep.subr.mxu0 0.0
    %1419 = vmatpush1.msra.mxu0 0.0
    %1420 = vmatprep.subr.mxu0 0.0
    %1421 = vmatpush1.msra.mxu0 0.0
    %1422 = vmatprep.subr.mxu0 0.0
    %1423 = vmatpush1.msra.mxu0 0.0
    %1424 = vmatprep.subr.mxu0 0.0
    %1425 = vmatpush1.msra.mxu0 0.0
    %1426 = vmatprep.subr.mxu0 0.0
    %1427 = vmatpush1.msra.mxu0 0.0
    %1428 = vmatprep.subr.mxu0 0.0
    %1429 = vmatpush1.msra.mxu0 0.0
    %1430 = vmatprep.subr.mxu0 0.0
    %1431 = vmatpush1.msra.mxu0 0.0
    %1432 = vmatprep.subr.mxu0 0.0
    %1433 = vmatpush1.msra.mxu0 0.0
    %1434 = vmatprep.subr.mxu0 0.0
    %1435 = vmatpush1.msra.mxu0 0.0
    %1436 = vmatprep.subr.mxu0 0.0
    %1437 = vmatpush1.msra.mxu0 0.0
    %1438 = vmatprep.subr.mxu0 0.0
    %1439 = vmatpush1.msra.mxu0 0.0
    %1440 = vmatprep.subr.mxu0 0.0
    %1441 = vmatpush1.msra.mxu0 0.0
    %1442 = vmatprep.subr.mxu0 0.0
    %1443 = vmatpush1.msra.mxu0 0.0
    %1444 = vmatprep.subr.mxu0 0.0
    %1445 = vmatpush1.msra.mxu0 0.0
    %1446 = vmatprep.subr.mxu0 0.0
    %1447 = vmatpush1.msra.mxu0 0.0
    %1448 = vmatprep.subr.mxu0 0.0
    %1449 = vmatpush1.msra.mxu0 0.0
    %1450 = vmatprep.subr.mxu0 0.0
    %1451 = vmatpush1.msra.mxu0 0.0
    %1452 = vmatprep.subr.mxu0 0.0
    %1453 = vmatpush1.msra.mxu0 0.0
    %1454 = vmatprep.subr.mxu0 0.0
    %1455 = vmatpush1.msra.mxu0 0.0
    %1456 = vmatprep.subr.mxu0 0.0
    %1457 = vmatpush1.msra.mxu0 0.0
    %1458 = vmatprep.subr.mxu0 0.0
    %1459 = vmatpush1.msra.mxu0 0.0
    %1460 = vmatprep.subr.mxu0 0.0
    %1461 = vmatpush1.msra.mxu0 0.0
    %1462 = vmatprep.subr.mxu0 0.0
    %1463 = vmatpush1.msra.mxu0 0.0
    %1464 = vmatprep.subr.mxu0 0.0
    %1465 = vmatpush1.msra.mxu0 0.0
    %1466 = vmatprep.subr.mxu0 0.0
    %1467 = vmatpush1.msra.mxu0 0.0
    %1468 = vmatprep.mubr.f32.mxu0 0.0
    %1469 = vmatmul.mubr.f32.gmra.mrb[0].mxu0 %v1402
    %v1470 = vpop.f32.mrb[0].mxu0
    %v1471 = vadd.f32 0.0, %v1470
    %v1472 = vpop.f32.mrb[0].mxu0
    %1473 = vdwg.mxu0
    %1474 = vrot.lane.b32.xlu0 %v465, 104
    %v1475 = vpop.permute.xlu0 %1474
    %1476 = vrot.lane.b32.xlu0 %v465, 72
    %v1477 = vpop.permute.xlu0 %1476
    %v1478 = vsel %vm476, %v1475, 0
    %v1480 = vsel %vm476, %v1477, 0
    %1482 = vmatprep.subr.mxu0 0.0
    %1483 = vmatpush1.xpose.msra.mxu0 %v1480
    %1484 = vmatprep.subr.mxu0 0.0
    %1485 = vmatpush1.xpose.msra.mxu0 0.0
    %1486 = vmatprep.subr.mxu0 0.0
    %1487 = vmatpush1.xpose.msra.mxu0 0.0
    %1488 = vmatprep.subr.mxu0 0.0
    %1489 = vmatpush1.xpose.msra.mxu0 0.0
    %1490 = vmatprep.subr.mxu0 0.0
    %1491 = vmatpush1.xpose.msra.mxu0 0.0
    %1492 = vmatprep.subr.mxu0 0.0
    %1493 = vmatpush1.xpose.msra.mxu0 0.0
    %1494 = vmatprep.subr.mxu0 0.0
    %1495 = vmatpush1.xpose.msra.mxu0 0.0
    %1496 = vmatprep.subr.mxu0 0.0
    %1497 = vmatpush1.xpose.msra.mxu0 0.0
    %1498 = vmatprep.subr.mxu0 0.0
    %1499 = vmatpush1.xpose.msra.mxu0 0.0
    %1500 = vmatprep.subr.mxu0 0.0
    %1501 = vmatpush1.xpose.msra.mxu0 0.0
    %1502 = vmatprep.subr.mxu0 0.0
    %1503 = vmatpush1.xpose.msra.mxu0 0.0
    %1504 = vmatprep.subr.mxu0 0.0
    %1505 = vmatpush1.xpose.msra.mxu0 0.0
    %1506 = vmatprep.subr.mxu0 0.0
    %1507 = vmatpush1.xpose.msra.mxu0 0.0
    %1508 = vmatprep.subr.mxu0 0.0
    %1509 = vmatpush1.xpose.msra.mxu0 0.0
    %1510 = vmatprep.subr.mxu0 0.0
    %1511 = vmatpush1.xpose.msra.mxu0 0.0
    %1512 = vmatprep.subr.mxu0 0.0
    %1513 = vmatpush1.xpose.msra.mxu0 0.0
    %1514 = vmatprep.subr.mxu0 0.0
    %1515 = vmatpush1.xpose.msra.mxu0 0.0
    %1516 = vmatprep.subr.mxu0 0.0
    %1517 = vmatpush1.xpose.msra.mxu0 0.0
    %1518 = vmatprep.subr.mxu0 0.0
    %1519 = vmatpush1.xpose.msra.mxu0 0.0
    %1520 = vmatprep.subr.mxu0 0.0
    %1521 = vmatpush1.xpose.msra.mxu0 0.0
    %1522 = vmatprep.subr.mxu0 0.0
    %1523 = vmatpush1.xpose.msra.mxu0 0.0
    %1524 = vmatprep.subr.mxu0 0.0
    %1525 = vmatpush1.xpose.msra.mxu0 0.0
    %1526 = vmatprep.subr.mxu0 0.0
    %1527 = vmatpush1.xpose.msra.mxu0 0.0
    %1528 = vmatprep.subr.mxu0 0.0
    %1529 = vmatpush1.xpose.msra.mxu0 0.0
    %1530 = vmatprep.subr.mxu0 0.0
    %1531 = vmatpush1.xpose.msra.mxu0 0.0
    %1532 = vmatprep.subr.mxu0 0.0
    %1533 = vmatpush1.xpose.msra.mxu0 0.0
    %1534 = vmatprep.subr.mxu0 0.0
    %1535 = vmatpush1.xpose.msra.mxu0 0.0
    %1536 = vmatprep.subr.mxu0 0.0
    %1537 = vmatpush1.xpose.msra.mxu0 0.0
    %1538 = vmatprep.subr.mxu0 0.0
    %1539 = vmatpush1.xpose.msra.mxu0 0.0
    %1540 = vmatprep.subr.mxu0 0.0
    %1541 = vmatpush1.xpose.msra.mxu0 0.0
    %1542 = vmatprep.subr.mxu0 0.0
    %1543 = vmatpush1.xpose.msra.mxu0 0.0
    %1544 = vmatprep.subr.mxu0 0.0
    %1545 = vmatpush1.xpose.msra.mxu0 0.0
    %1546 = vmatprep.mubr.f32.mxu0 0.0
    %1547 = vmatmul.mubr.f32.gmra.mrb[0].mxu0 %v1478
    %v1548 = vpop.f32.mrb[0].mxu0
    %v1549 = vadd.f32 0.0, %v1548
    %v1550 = vpop.f32.mrb[0].mxu0
    %1551 = vdwg.mxu0
    %1552 = vrot.lane.b32.xlu0 %v470, 104
    %v1553 = vpop.permute.xlu0 %1552
    %1554 = vrot.lane.b32.xlu0 %v470, 72
    %v1555 = vpop.permute.xlu0 %1554
    %v1556 = vsel %vm476, %v1553, 0
    %v1558 = vsel %vm476, %v1555, 0
    %1560 = vmatprep.subr.mxu0 0.0
    %1561 = vmatpush1.xpose.msra.mxu0 %v1558
    %1562 = vmatprep.subr.mxu0 0.0
    %1563 = vmatpush1.xpose.msra.mxu0 0.0
    %1564 = vmatprep.subr.mxu0 0.0
    %1565 = vmatpush1.xpose.msra.mxu0 0.0
    %1566 = vmatprep.subr.mxu0 0.0
    %1567 = vmatpush1.xpose.msra.mxu0 0.0
    %1568 = vmatprep.subr.mxu0 0.0
    %1569 = vmatpush1.xpose.msra.mxu0 0.0
    %1570 = vmatprep.subr.mxu0 0.0
    %1571 = vmatpush1.xpose.msra.mxu0 0.0
    %1572 = vmatprep.subr.mxu0 0.0
    %1573 = vmatpush1.xpose.msra.mxu0 0.0
    %1574 = vmatprep.subr.mxu0 0.0
    %1575 = vmatpush1.xpose.msra.mxu0 0.0
    %1576 = vmatprep.subr.mxu0 0.0
    %1577 = vmatpush1.xpose.msra.mxu0 0.0
    %1578 = vmatprep.subr.mxu0 0.0
    %1579 = vmatpush1.xpose.msra.mxu0 0.0
    %1580 = vmatprep.subr.mxu0 0.0
    %1581 = vmatpush1.xpose.msra.mxu0 0.0
    %1582 = vmatprep.subr.mxu0 0.0
    %1583 = vmatpush1.xpose.msra.mxu0 0.0
    %1584 = vmatprep.subr.mxu0 0.0
    %1585 = vmatpush1.xpose.msra.mxu0 0.0
    %1586 = vmatprep.subr.mxu0 0.0
    %1587 = vmatpush1.xpose.msra.mxu0 0.0
    %1588 = vmatprep.subr.mxu0 0.0
    %1589 = vmatpush1.xpose.msra.mxu0 0.0
    %1590 = vmatprep.subr.mxu0 0.0
    %1591 = vmatpush1.xpose.msra.mxu0 0.0
    %1592 = vmatprep.subr.mxu0 0.0
    %1593 = vmatpush1.xpose.msra.mxu0 0.0
    %1594 = vmatprep.subr.mxu0 0.0
    %1595 = vmatpush1.xpose.msra.mxu0 0.0
    %1596 = vmatprep.subr.mxu0 0.0
    %1597 = vmatpush1.xpose.msra.mxu0 0.0
    %1598 = vmatprep.subr.mxu0 0.0
    %1599 = vmatpush1.xpose.msra.mxu0 0.0
    %1600 = vmatprep.subr.mxu0 0.0
    %1601 = vmatpush1.xpose.msra.mxu0 0.0
    %1602 = vmatprep.subr.mxu0 0.0
    %1603 = vmatpush1.xpose.msra.mxu0 0.0
    %1604 = vmatprep.subr.mxu0 0.0
    %1605 = vmatpush1.xpose.msra.mxu0 0.0
    %1606 = vmatprep.subr.mxu0 0.0
    %1607 = vmatpush1.xpose.msra.mxu0 0.0
    %1608 = vmatprep.subr.mxu0 0.0
    %1609 = vmatpush1.xpose.msra.mxu0 0.0
    %1610 = vmatprep.subr.mxu0 0.0
    %1611 = vmatpush1.xpose.msra.mxu0 0.0
    %1612 = vmatprep.subr.mxu0 0.0
    %1613 = vmatpush1.xpose.msra.mxu0 0.0
    %1614 = vmatprep.subr.mxu0 0.0
    %1615 = vmatpush1.xpose.msra.mxu0 0.0
    %1616 = vmatprep.subr.mxu0 0.0
    %1617 = vmatpush1.xpose.msra.mxu0 0.0
    %1618 = vmatprep.subr.mxu0 0.0
    %1619 = vmatpush1.xpose.msra.mxu0 0.0
    %1620 = vmatprep.subr.mxu0 0.0
    %1621 = vmatpush1.xpose.msra.mxu0 0.0
    %1622 = vmatprep.subr.mxu0 0.0
    %1623 = vmatpush1.xpose.msra.mxu0 0.0
    %1624 = vmatprep.mubr.f32.mxu0 0.0
    %1625 = vmatmul.mubr.f32.gmra.mrb[0].mxu0 %v1556
    %v1626 = vpop.f32.mrb[0].mxu0
    %v1627 = vadd.f32 0.0, %v1626
    %v1628 = vpop.f32.mrb[0].mxu0
    %1629 = vdwg.mxu0
    %v1630 = vmul.f32 %v1549, 0.35355338
    %v1631 = vmul.f32 %v1627, 0.35355338
    %v1632 = vadd.f32 %v1630, %v229
    %v1633 = vadd.f32 %v1631, %v230
    %v1634 = vsel %vm476, %v1632, -inf
    %1635 = vmax.xlane.f32.xlu0 %v1634
    %v1636 = vpop.xlane.xlu0 %1635
    %v1637 = vsel %vm476, %v1633, -inf
    %1638 = vmax.xlane.f32.xlu0 %v1637
    %v1639 = vpop.xlane.xlu0 %1638
    %v1640 = vsub.f32 %v1632, %v1636
    %v1641 = vsub.f32 %v1633, %v1639
    %v1642 = vmul.f32 %v1640, 1.442695
    %v1643 = vpow.pop %v1642
    %v1644 = vmul.f32 %v1641, 1.442695
    %v1645 = vpow.pop %v1644
    %v1646 = vsel %vm476, %v1643, 0.0
    %1647 = vadd.xlane.f32.xlu0 %v1646
    %v1648 = vpop.xlane.xlu0 %1647
    %v1649 = vsel %vm476, %v1645, 0.0
    %1650 = vadd.xlane.f32.xlu0 %v1649
    %v1651 = vpop.xlane.xlu0 %1650
    %v1652 = vrcp.pop %v1648
    %v1653 = vmul.f32 %v1643, %v1652
    %v1654 = vrcp.pop %v1651
    %v1655 = vmul.f32 %v1645, %v1654
    %1656 = vrot.lane.b32.xlu0 %v465, 40
    %v1657 = vpop.permute.xlu0 %1656
    %v1660 = vsel %vm476, %v1653, 0
    %1662 = vmatprep.subr.mxu0 0.0
    %1663 = vmatpush1.msra.mxu0 %v1657
    %1664 = vmatprep.subr.mxu0 0.0
    %1665 = vmatpush1.msra.mxu0 0.0
    %1666 = vmatprep.subr.mxu0 0.0
    %1667 = vmatpush1.msra.mxu0 0.0
    %1668 = vmatprep.subr.mxu0 0.0
    %1669 = vmatpush1.msra.mxu0 0.0
    %1670 = vmatprep.subr.mxu0 0.0
    %1671 = vmatpush1.msra.mxu0 0.0
    %1672 = vmatprep.subr.mxu0 0.0
    %1673 = vmatpush1.msra.mxu0 0.0
    %1674 = vmatprep.subr.mxu0 0.0
    %1675 = vmatpush1.msra.mxu0 0.0
    %1676 = vmatprep.subr.mxu0 0.0
    %1677 = vmatpush1.msra.mxu0 0.0
    %1678 = vmatprep.subr.mxu0 0.0
    %1679 = vmatpush1.msra.mxu0 0.0
    %1680 = vmatprep.subr.mxu0 0.0
    %1681 = vmatpush1.msra.mxu0 0.0
    %1682 = vmatprep.subr.mxu0 0.0
    %1683 = vmatpush1.msra.mxu0 0.0
    %1684 = vmatprep.subr.mxu0 0.0
    %1685 = vmatpush1.msra.mxu0 0.0
    %1686 = vmatprep.subr.mxu0 0.0
    %1687 = vmatpush1.msra.mxu0 0.0
    %1688 = vmatprep.subr.mxu0 0.0
    %1689 = vmatpush1.msra.mxu0 0.0
    %1690 = vmatprep.subr.mxu0 0.0
    %1691 = vmatpush1.msra.mxu0 0.0
    %1692 = vmatprep.subr.mxu0 0.0
    %1693 = vmatpush1.msra.mxu0 0.0
    %1694 = vmatprep.subr.mxu0 0.0
    %1695 = vmatpush1.msra.mxu0 0.0
    %1696 = vmatprep.subr.mxu0 0.0
    %1697 = vmatpush1.msra.mxu0 0.0
    %1698 = vmatprep.subr.mxu0 0.0
    %1699 = vmatpush1.msra.mxu0 0.0
    %1700 = vmatprep.subr.mxu0 0.0
    %1701 = vmatpush1.msra.mxu0 0.0
    %1702 = vmatprep.subr.mxu0 0.0
    %1703 = vmatpush1.msra.mxu0 0.0
    %1704 = vmatprep.subr.mxu0 0.0
    %1705 = vmatpush1.msra.mxu0 0.0
    %1706 = vmatprep.subr.mxu0 0.0
    %1707 = vmatpush1.msra.mxu0 0.0
    %1708 = vmatprep.subr.mxu0 0.0
    %1709 = vmatpush1.msra.mxu0 0.0
    %1710 = vmatprep.subr.mxu0 0.0
    %1711 = vmatpush1.msra.mxu0 0.0
    %1712 = vmatprep.subr.mxu0 0.0
    %1713 = vmatpush1.msra.mxu0 0.0
    %1714 = vmatprep.subr.mxu0 0.0
    %1715 = vmatpush1.msra.mxu0 0.0
    %1716 = vmatprep.subr.mxu0 0.0
    %1717 = vmatpush1.msra.mxu0 0.0
    %1718 = vmatprep.subr.mxu0 0.0
    %1719 = vmatpush1.msra.mxu0 0.0
    %1720 = vmatprep.subr.mxu0 0.0
    %1721 = vmatpush1.msra.mxu0 0.0
    %1722 = vmatprep.subr.mxu0 0.0
    %1723 = vmatpush1.msra.mxu0 0.0
    %1724 = vmatprep.subr.mxu0 0.0
    %1725 = vmatpush1.msra.mxu0 0.0
    %1726 = vmatprep.mubr.f32.mxu0 0.0
    %1727 = vmatmul.mubr.f32.gmra.mrb[0].mxu0 %v1660
    %v1728 = vpop.f32.mrb[0].mxu0
    %v1729 = vadd.f32 0.0, %v1728
    %v1730 = vpop.f32.mrb[0].mxu0
    %1731 = vdwg.mxu0
    %1732 = vrot.lane.b32.xlu0 %v470, 40
    %v1733 = vpop.permute.xlu0 %1732
    %v1736 = vsel %vm476, %v1655, 0
    %1738 = vmatprep.subr.mxu0 0.0
    %1739 = vmatpush1.msra.mxu0 %v1733
    %1740 = vmatprep.subr.mxu0 0.0
    %1741 = vmatpush1.msra.mxu0 0.0
    %1742 = vmatprep.subr.mxu0 0.0
    %1743 = vmatpush1.msra.mxu0 0.0
    %1744 = vmatprep.subr.mxu0 0.0
    %1745 = vmatpush1.msra.mxu0 0.0
    %1746 = vmatprep.subr.mxu0 0.0
    %1747 = vmatpush1.msra.mxu0 0.0
    %1748 = vmatprep.subr.mxu0 0.0
    %1749 = vmatpush1.msra.mxu0 0.0
    %1750 = vmatprep.subr.mxu0 0.0
    %1751 = vmatpush1.msra.mxu0 0.0
    %1752 = vmatprep.subr.mxu0 0.0
    %1753 = vmatpush1.msra.mxu0 0.0
    %1754 = vmatprep.subr.mxu0 0.0
    %1755 = vmatpush1.msra.mxu0 0.0
    %1756 = vmatprep.subr.mxu0 0.0
    %1757 = vmatpush1.msra.mxu0 0.0
    %1758 = vmatprep.subr.mxu0 0.0
    %1759 = vmatpush1.msra.mxu0 0.0
    %1760 = vmatprep.subr.mxu0 0.0
    %1761 = vmatpush1.msra.mxu0 0.0
    %1762 = vmatprep.subr.mxu0 0.0
    %1763 = vmatpush1.msra.mxu0 0.0
    %1764 = vmatprep.subr.mxu0 0.0
    %1765 = vmatpush1.msra.mxu0 0.0
    %1766 = vmatprep.subr.mxu0 0.0
    %1767 = vmatpush1.msra.mxu0 0.0
    %1768 = vmatprep.subr.mxu0 0.0
    %1769 = vmatpush1.msra.mxu0 0.0
    %1770 = vmatprep.subr.mxu0 0.0
    %1771 = vmatpush1.msra.mxu0 0.0
    %1772 = vmatprep.subr.mxu0 0.0
    %1773 = vmatpush1.msra.mxu0 0.0
    %1774 = vmatprep.subr.mxu0 0.0
    %1775 = vmatpush1.msra.mxu0 0.0
    %1776 = vmatprep.subr.mxu0 0.0
    %1777 = vmatpush1.msra.mxu0 0.0
    %1778 = vmatprep.subr.mxu0 0.0
    %1779 = vmatpush1.msra.mxu0 0.0
    %1780 = vmatprep.subr.mxu0 0.0
    %1781 = vmatpush1.msra.mxu0 0.0
    %1782 = vmatprep.subr.mxu0 0.0
    %1783 = vmatpush1.msra.mxu0 0.0
    %1784 = vmatprep.subr.mxu0 0.0
    %1785 = vmatpush1.msra.mxu0 0.0
    %1786 = vmatprep.subr.mxu0 0.0
    %1787 = vmatpush1.msra.mxu0 0.0
    %1788 = vmatprep.subr.mxu0 0.0
    %1789 = vmatpush1.msra.mxu0 0.0
    %1790 = vmatprep.subr.mxu0 0.0
    %1791 = vmatpush1.msra.mxu0 0.0
    %1792 = vmatprep.subr.mxu0 0.0
    %1793 = vmatpush1.msra.mxu0 0.0
    %1794 = vmatprep.subr.mxu0 0.0
    %1795 = vmatpush1.msra.mxu0 0.0
    %1796 = vmatprep.subr.mxu0 0.0
    %1797 = vmatpush1.msra.mxu0 0.0
    %1798 = vmatprep.subr.mxu0 0.0
    %1799 = vmatpush1.msra.mxu0 0.0
    %1800 = vmatprep.subr.mxu0 0.0
    %1801 = vmatpush1.msra.mxu0 0.0
    %1802 = vmatprep.mubr.f32.mxu0 0.0
    %1803 = vmatmul.mubr.f32.gmra.mrb[0].mxu0 %v1736
    %v1804 = vpop.f32.mrb[0].mxu0
    %v1805 = vadd.f32 0.0, %v1804
    %v1806 = vpop.f32.mrb[0].mxu0
    %1807 = vdwg.mxu0
    %1810 = vrot.lane.b32.xlu0 %v1061, 8
    %v1811 = vpop.permute.xlu0 %1810
    %1812 = vrot.lane.b32.xlu0 %v1137, 8
    %v1813 = vpop.permute.xlu0 %1812
    %1818 = vrot.lane.b32.xlu0 %v1395, 16
    %v1819 = vpop.permute.xlu0 %1818
    %1820 = vrot.lane.b32.xlu0 %v1471, 16
    %v1821 = vpop.permute.xlu0 %1820
    %1826 = vrot.lane.b32.xlu0 %v1729, 24
    %v1827 = vpop.permute.xlu0 %1826
    %1828 = vrot.lane.b32.xlu0 %v1805, 24
    %v1829 = vpop.permute.xlu0 %1828
    %v1832 = vsel %vm476, %v727, %v1811
    %v1833 = vsel %vm476, %v803, %v1813
    %vm1834 = vcmask 130048
    %v1835 = vsel %vm1834, %v1832, %v1819
    %v1836 = vsel %vm1834, %v1833, %v1821
    %vm1837 = vcmask 195584
    %v1838 = vsel %vm1837, %v1835, %v1827
    %v1839 = vsel %vm1837, %v1836, %v1829
    %v1840 = vld [vmem:[%s8] sm:$0xff]
    %v1841 = vld [vmem:[%s8 + $0x8] sm:$0xff]
    %v1842 = vld [vmem:[%s8 + $0x10] sm:$0xff]
    %v1843 = vld [vmem:[%s8 + $0x18] sm:$0xff]
    %v1845 = vsel %vm244, %v1838, 0
    %v1848 = vsel %vm244, %v1839, 0
    %1850 = vmatprep.subr.mxu0 0.0
    %1851 = vmatpush1.msra.mxu0 %v1840
    %1852 = vmatprep.subr.mxu0 0.0
    %1853 = vmatpush1.msra.mxu0 %v1841
    %1854 = vmatprep.subr.mxu0 0.0
    %1855 = vmatpush1.msra.mxu0 %v1842
    %1856 = vmatprep.subr.mxu0 0.0
    %1857 = vmatpush1.msra.mxu0 %v1843
    %1858 = vmatprep.subr.mxu0 0.0
    %1859 = vmatpush1.msra.mxu0 0.0
    %1860 = vmatprep.subr.mxu0 0.0
    %1861 = vmatpush1.msra.mxu0 0.0
    %1862 = vmatprep.subr.mxu0 0.0
    %1863 = vmatpush1.msra.mxu0 0.0
    %1864 = vmatprep.subr.mxu0 0.0
    %1865 = vmatpush1.msra.mxu0 0.0
    %1866 = vmatprep.subr.mxu0 0.0
    %1867 = vmatpush1.msra.mxu0 0.0
    %1868 = vmatprep.subr.mxu0 0.0
    %1869 = vmatpush1.msra.mxu0 0.0
    %1870 = vmatprep.subr.mxu0 0.0
    %1871 = vmatpush1.msra.mxu0 0.0
    %1872 = vmatprep.subr.mxu0 0.0
    %1873 = vmatpush1.msra.mxu0 0.0
    %1874 = vmatprep.subr.mxu0 0.0
    %1875 = vmatpush1.msra.mxu0 0.0
    %1876 = vmatprep.subr.mxu0 0.0
    %1877 = vmatpush1.msra.mxu0 0.0
    %1878 = vmatprep.subr.mxu0 0.0
    %1879 = vmatpush1.msra.mxu0 0.0
    %1880 = vmatprep.subr.mxu0 0.0
    %1881 = vmatpush1.msra.mxu0 0.0
    %1882 = vmatprep.subr.mxu0 0.0
    %1883 = vmatpush1.msra.mxu0 0.0
    %1884 = vmatprep.subr.mxu0 0.0
    %1885 = vmatpush1.msra.mxu0 0.0
    %1886 = vmatprep.subr.mxu0 0.0
    %1887 = vmatpush1.msra.mxu0 0.0
    %1888 = vmatprep.subr.mxu0 0.0
    %1889 = vmatpush1.msra.mxu0 0.0
    %1890 = vmatprep.subr.mxu0 0.0
    %1891 = vmatpush1.msra.mxu0 0.0
    %1892 = vmatprep.subr.mxu0 0.0
    %1893 = vmatpush1.msra.mxu0 0.0
    %1894 = vmatprep.subr.mxu0 0.0
    %1895 = vmatpush1.msra.mxu0 0.0
    %1896 = vmatprep.subr.mxu0 0.0
    %1897 = vmatpush1.msra.mxu0 0.0
    %1898 = vmatprep.subr.mxu0 0.0
    %1899 = vmatpush1.msra.mxu0 0.0
    %1900 = vmatprep.subr.mxu0 0.0
    %1901 = vmatpush1.msra.mxu0 0.0
    %1902 = vmatprep.subr.mxu0 0.0
    %1903 = vmatpush1.msra.mxu0 0.0
    %1904 = vmatprep.subr.mxu0 0.0
    %1905 = vmatpush1.msra.mxu0 0.0
    %1906 = vmatprep.subr.mxu0 0.0
    %1907 = vmatpush1.msra.mxu0 0.0
    %1908 = vmatprep.subr.mxu0 0.0
    %1909 = vmatpush1.msra.mxu0 0.0
    %1910 = vmatprep.subr.mxu0 0.0
    %1911 = vmatpush1.msra.mxu0 0.0
    %1912 = vmatprep.subr.mxu0 0.0
    %1913 = vmatpush1.msra.mxu0 0.0
    %1914 = vmatprep.mubr.f32.mxu0 0.0
    %1915 = vmatmul.mubr.f32.gmra.mrb[0].mxu0 %v1845
    %v1916 = vpop.f32.mrb[0].mxu0
    %v1917 = vadd.f32 0.0, %v1916
    %v1918 = vpop.f32.mrb[0].mxu0
    %1919 = vmatprep.mubr.f32.mxu0 0.0
    %1920 = vmatmul.mubr.f32.gmra.mrb[0].mxu0 %v1848
    %v1921 = vpop.f32.mrb[0].mxu0
    %v1922 = vadd.f32 0.0, %v1921
    %v1923 = vpop.f32.mrb[0].mxu0
    %1924 = vdwg.mxu0
    %v1925 = vadd.f32 %v225, %v1917
    %v1926 = vadd.f32 %v226, %v1922
    %v1927 = vld [vmem:[#allocation11] sm:$0x1]
    %v1929 = vlaneseq
    %v1930 = vshrl.u32 %v1929, 7
    %v1931 = vsub.s32 0, %v1930
    %v1932 = vrot.slane %v1927, %v1931
    %v1934 = vadd.f32 %v1925, %v1932
    %v1935 = vadd.f32 %v1926, %v1932
    %v1936 = vld [vmem:[#allocation7 + $0x1] sm:$0x1]
    %v1937 = vld [vmem:[#allocation8 + $0x1] sm:$0x1]
    %v1938 = vsel %vm244, %v1934, 0.0
    %1939 = vadd.xlane.f32.xlu0 %v1938
    %v1940 = vpop.xlane.xlu0 %1939
    %v1941 = vsel %vm244, %v1935, 0.0
    %1942 = vadd.xlane.f32.xlu0 %v1941
    %v1943 = vpop.xlane.xlu0 %1942
    %v1944 = vmul.f32 %v1940, %v334
    %v1945 = vmul.f32 %v1943, %v334
    %v1946 = vsub.f32 %v1934, %v1944
    %v1947 = vsub.f32 %v1935, %v1945
    %v1948 = vmul.f32 %v1946, %v1946
    %v1949 = vmul.f32 %v1947, %v1947
    %v1950 = vsel %vm244, %v1948, 0.0
    %1951 = vadd.xlane.f32.xlu0 %v1950
    %v1952 = vpop.xlane.xlu0 %1951
    %v1953 = vsel %vm244, %v1949, 0.0
    %1954 = vadd.xlane.f32.xlu0 %v1953
    %v1955 = vpop.xlane.xlu0 %1954
    %v1956 = vmul.f32 %v1952, 0.032258064
    %v1957 = vmul.f32 %v1955, 0.032258064
    %v1958 = vlaneseq
    %v1959 = vshrl.u32 %v1958, 7
    %v1960 = vsub.s32 0, %v1959
    %v1961 = vrot.slane %v1936, %v1960
    %v1962 = vmul.f32 %v1961, %v1946
    %v1963 = vmul.f32 %v1961, %v1947
    %v1964 = vrsqrt.pop %v1956
    %v1965 = vmul.f32 %v1956, %v1964
    %vm1966 = vcmp.eq.f32.partialorder %v1956, inf
    %v1967 = vsel %vm1966, %v1956, %v1965
    %vm1968 = vcmp.eq.f32.partialorder %v1956, 0.0
    %v1969 = vand.u32 %v1956, 2147483648
    %v1970 = vsel %vm1968, %v1969, %v1967
    %v1971 = vrsqrt.pop %v1957
    %v1972 = vmul.f32 %v1957, %v1971
    %vm1973 = vcmp.eq.f32.partialorder %v1957, inf
    %v1974 = vsel %vm1973, %v1957, %v1972
    %vm1975 = vcmp.eq.f32.partialorder %v1957, 0.0
    %v1976 = vand.u32 %v1957, 2147483648
    %v1977 = vsel %vm1975, %v1976, %v1974
    %v1978 = vadd.f32 %v1970, 1e-06
    %v1979 = vadd.f32 %v1977, 1e-06
    %v1980 = vrcp.pop %v1978
    %v1981 = vmul.f32 %v1962, %v1980
    %v1982 = vrcp.pop %v1979
    %v1983 = vmul.f32 %v1963, %v1982
    %v1984 = vlaneseq
    %v1985 = vshrl.u32 %v1984, 7
    %v1986 = vsub.s32 0, %v1985
    %v1987 = vrot.slane %v1937, %v1986
    %v1988 = vadd.f32 %v1981, %v1987
    %v1989 = vadd.f32 %v1983, %v1987
    %v1990 = vld [vmem:[%s10] sm:$0xff]
    %v1991 = vld [vmem:[%s10 + $0x8] sm:$0xff]
    %v1992 = vld [vmem:[%s10 + $0x10] sm:$0xff]
    %v1993 = vld [vmem:[%s10 + $0x18] sm:$0xff]
    %v1994 = vld [vmem:[#allocation13] sm:$0x1]
    %v1996 = vlaneseq
    %v1997 = vshrl.u32 %v1996, 7
    %v1998 = vsub.s32 0, %v1997
    %v1999 = vrot.slane %v1994, %v1998
    %v2002 = vsel %vm244, %v1988, 0
    %v2005 = vsel %vm244, %v1989, 0
    %2007 = vmatprep.subr.mxu0 0.0
    %2008 = vmatpush1.msra.mxu0 %v1990
    %2009 = vmatprep.subr.mxu0 0.0
    %2010 = vmatpush1.msra.mxu0 %v1991
    %2011 = vmatprep.subr.mxu0 0.0
    %2012 = vmatpush1.msra.mxu0 %v1992
    %2013 = vmatprep.subr.mxu0 0.0
    %2014 = vmatpush1.msra.mxu0 %v1993
    %2015 = vmatprep.subr.mxu0 0.0
    %2016 = vmatpush1.msra.mxu0 0.0
    %2017 = vmatprep.subr.mxu0 0.0
    %2018 = vmatpush1.msra.mxu0 0.0
    %2019 = vmatprep.subr.mxu0 0.0
    %2020 = vmatpush1.msra.mxu0 0.0
    %2021 = vmatprep.subr.mxu0 0.0
    %2022 = vmatpush1.msra.mxu0 0.0
    %2023 = vmatprep.subr.mxu0 0.0
    %2024 = vmatpush1.msra.mxu0 0.0
    %2025 = vmatprep.subr.mxu0 0.0
    %2026 = vmatpush1.msra.mxu0 0.0
    %2027 = vmatprep.subr.mxu0 0.0
    %2028 = vmatpush1.msra.mxu0 0.0
    %2029 = vmatprep.subr.mxu0 0.0
    %2030 = vmatpush1.msra.mxu0 0.0
    %2031 = vmatprep.subr.mxu0 0.0
    %2032 = vmatpush1.msra.mxu0 0.0
    %2033 = vmatprep.subr.mxu0 0.0
    %2034 = vmatpush1.msra.mxu0 0.0
    %2035 = vmatprep.subr.mxu0 0.0
    %2036 = vmatpush1.msra.mxu0 0.0
    %2037 = vmatprep.subr.mxu0 0.0
    %2038 = vmatpush1.msra.mxu0 0.0
    %2039 = vmatprep.subr.mxu0 0.0
    %2040 = vmatpush1.msra.mxu0 0.0
    %2041 = vmatprep.subr.mxu0 0.0
    %2042 = vmatpush1.msra.mxu0 0.0
    %2043 = vmatprep.subr.mxu0 0.0
    %2044 = vmatpush1.msra.mxu0 0.0
    %2045 = vmatprep.subr.mxu0 0.0
    %2046 = vmatpush1.msra.mxu0 0.0
    %2047 = vmatprep.subr.mxu0 0.0
    %2048 = vmatpush1.msra.mxu0 0.0
    %2049 = vmatprep.subr.mxu0 0.0
    %2050 = vmatpush1.msra.mxu0 0.0
    %2051 = vmatprep.subr.mxu0 0.0
    %2052 = vmatpush1.msra.mxu0 0.0
    %2053 = vmatprep.subr.mxu0 0.0
    %2054 = vmatpush1.msra.mxu0 0.0
    %2055 = vmatprep.subr.mxu0 0.0
    %2056 = vmatpush1.msra.mxu0 0.0
    %2057 = vmatprep.subr.mxu0 0.0
    %2058 = vmatpush1.msra.mxu0 0.0
    %2059 = vmatprep.subr.mxu0 0.0
    %2060 = vmatpush1.msra.mxu0 0.0
    %2061 = vmatprep.subr.mxu0 0.0
    %2062 = vmatpush1.msra.mxu0 0.0
    %2063 = vmatprep.subr.mxu0 0.0
    %2064 = vmatpush1.msra.mxu0 0.0
    %2065 = vmatprep.subr.mxu0 0.0
    %2066 = vmatpush1.msra.mxu0 0.0
    %2067 = vmatprep.subr.mxu0 0.0
    %2068 = vmatpush1.msra.mxu0 0.0
    %2069 = vmatprep.subr.mxu0 0.0
    %2070 = vmatpush1.msra.mxu0 0.0
    %2071 = vmatprep.mubr.f32.mxu0 0.0
    %2072 = vmatmul.mubr.f32.gmra.mrb[0].mxu0 %v2002
    %v2073 = vpop.f32.mrb[0].mxu0
    %v2074 = vadd.f32 %v1999, %v2073
    %v2075 = vpop.f32.mrb[0].mxu0
    %2076 = vmatprep.mubr.f32.mxu0 0.0
    %2077 = vmatmul.mubr.f32.gmra.mrb[0].mxu0 %v2005
    %v2078 = vpop.f32.mrb[0].mxu0
    %v2079 = vadd.f32 %v1999, %v2078
    %v2080 = vpop.f32.mrb[0].mxu0
    %2081 = vdwg.mxu0
    %v2083 = vsel %vm476, %v2074, 0
    %v2086 = vsel %vm476, %v318, 0
    %2088 = vmatprep.subr.mxu0 0.0
    %2089 = vmatpush1.xpose.msra.mxu0 %v2086
    %2090 = vmatprep.subr.mxu0 0.0
    %2091 = vmatpush1.xpose.msra.mxu0 0.0
    %2092 = vmatprep.subr.mxu0 0.0
    %2093 = vmatpush1.xpose.msra.mxu0 0.0
    %2094 = vmatprep.subr.mxu0 0.0
    %2095 = vmatpush1.xpose.msra.mxu0 0.0
    %2096 = vmatprep.subr.mxu0 0.0
    %2097 = vmatpush1.xpose.msra.mxu0 0.0
    %2098 = vmatprep.subr.mxu0 0.0
    %2099 = vmatpush1.xpose.msra.mxu0 0.0
    %2100 = vmatprep.subr.mxu0 0.0
    %2101 = vmatpush1.xpose.msra.mxu0 0.0
    %2102 = vmatprep.subr.mxu0 0.0
    %2103 = vmatpush1.xpose.msra.mxu0 0.0
    %2104 = vmatprep.subr.mxu0 0.0
    %2105 = vmatpush1.xpose.msra.mxu0 0.0
    %2106 = vmatprep.subr.mxu0 0.0
    %2107 = vmatpush1.xpose.msra.mxu0 0.0
    %2108 = vmatprep.subr.mxu0 0.0
    %2109 = vmatpush1.xpose.msra.mxu0 0.0
    %2110 = vmatprep.subr.mxu0 0.0
    %2111 = vmatpush1.xpose.msra.mxu0 0.0
    %2112 = vmatprep.subr.mxu0 0.0
    %2113 = vmatpush1.xpose.msra.mxu0 0.0
    %2114 = vmatprep.subr.mxu0 0.0
    %2115 = vmatpush1.xpose.msra.mxu0 0.0
    %2116 = vmatprep.subr.mxu0 0.0
    %2117 = vmatpush1.xpose.msra.mxu0 0.0
    %2118 = vmatprep.subr.mxu0 0.0
    %2119 = vmatpush1.xpose.msra.mxu0 0.0
    %2120 = vmatprep.subr.mxu0 0.0
    %2121 = vmatpush1.xpose.msra.mxu0 0.0
    %2122 = vmatprep.subr.mxu0 0.0
    %2123 = vmatpush1.xpose.msra.mxu0 0.0
    %2124 = vmatprep.subr.mxu0 0.0
    %2125 = vmatpush1.xpose.msra.mxu0 0.0
    %2126 = vmatprep.subr.mxu0 0.0
    %2127 = vmatpush1.xpose.msra.mxu0 0.0
    %2128 = vmatprep.subr.mxu0 0.0
    %2129 = vmatpush1.xpose.msra.mxu0 0.0
    %2130 = vmatprep.subr.mxu0 0.0
    %2131 = vmatpush1.xpose.msra.mxu0 0.0
    %2132 = vmatprep.subr.mxu0 0.0
    %2133 = vmatpush1.xpose.msra.mxu0 0.0
    %2134 = vmatprep.subr.mxu0 0.0
    %2135 = vmatpush1.xpose.msra.mxu0 0.0
    %2136 = vmatprep.subr.mxu0 0.0
    %2137 = vmatpush1.xpose.msra.mxu0 0.0
    %2138 = vmatprep.subr.mxu0 0.0
    %2139 = vmatpush1.xpose.msra.mxu0 0.0
    %2140 = vmatprep.subr.mxu0 0.0
    %2141 = vmatpush1.xpose.msra.mxu0 0.0
    %2142 = vmatprep.subr.mxu0 0.0
    %2143 = vmatpush1.xpose.msra.mxu0 0.0
    %2144 = vmatprep.subr.mxu0 0.0
    %2145 = vmatpush1.xpose.msra.mxu0 0.0
    %2146 = vmatprep.subr.mxu0 0.0
    %2147 = vmatpush1.xpose.msra.mxu0 0.0
    %2148 = vmatprep.subr.mxu0 0.0
    %2149 = vmatpush1.xpose.msra.mxu0 0.0
    %2150 = vmatprep.subr.mxu0 0.0
    %2151 = vmatpush1.xpose.msra.mxu0 0.0
    %2152 = vmatprep.mubr.f32.mxu0 0.0
    %2153 = vmatmul.mubr.f32.gmra.mrb[0].mxu0 %v2083
    %v2154 = vpop.f32.mrb[0].mxu0
    %v2155 = vadd.f32 0.0, %v2154
    %v2156 = vpop.f32.mrb[0].mxu0
    %2157 = vdwg.mxu0
    %v2159 = vsel %vm476, %v2079, 0
    %v2162 = vsel %vm476, %v323, 0
    %2164 = vmatprep.subr.mxu0 0.0
    %2165 = vmatpush1.xpose.msra.mxu0 %v2162
    %2166 = vmatprep.subr.mxu0 0.0
    %2167 = vmatpush1.xpose.msra.mxu0 0.0
    %2168 = vmatprep.subr.mxu0 0.0
    %2169 = vmatpush1.xpose.msra.mxu0 0.0
    %2170 = vmatprep.subr.mxu0 0.0
    %2171 = vmatpush1.xpose.msra.mxu0 0.0
    %2172 = vmatprep.subr.mxu0 0.0
    %2173 = vmatpush1.xpose.msra.mxu0 0.0
    %2174 = vmatprep.subr.mxu0 0.0
    %2175 = vmatpush1.xpose.msra.mxu0 0.0
    %2176 = vmatprep.subr.mxu0 0.0
    %2177 = vmatpush1.xpose.msra.mxu0 0.0
    %2178 = vmatprep.subr.mxu0 0.0
    %2179 = vmatpush1.xpose.msra.mxu0 0.0
    %2180 = vmatprep.subr.mxu0 0.0
    %2181 = vmatpush1.xpose.msra.mxu0 0.0
    %2182 = vmatprep.subr.mxu0 0.0
    %2183 = vmatpush1.xpose.msra.mxu0 0.0
    %2184 = vmatprep.subr.mxu0 0.0
    %2185 = vmatpush1.xpose.msra.mxu0 0.0
    %2186 = vmatprep.subr.mxu0 0.0
    %2187 = vmatpush1.xpose.msra.mxu0 0.0
    %2188 = vmatprep.subr.mxu0 0.0
    %2189 = vmatpush1.xpose.msra.mxu0 0.0
    %2190 = vmatprep.subr.mxu0 0.0
    %2191 = vmatpush1.xpose.msra.mxu0 0.0
    %2192 = vmatprep.subr.mxu0 0.0
    %2193 = vmatpush1.xpose.msra.mxu0 0.0
    %2194 = vmatprep.subr.mxu0 0.0
    %2195 = vmatpush1.xpose.msra.mxu0 0.0
    %2196 = vmatprep.subr.mxu0 0.0
    %2197 = vmatpush1.xpose.msra.mxu0 0.0
    %2198 = vmatprep.subr.mxu0 0.0
    %2199 = vmatpush1.xpose.msra.mxu0 0.0
    %2200 = vmatprep.subr.mxu0 0.0
    %2201 = vmatpush1.xpose.msra.mxu0 0.0
    %2202 = vmatprep.subr.mxu0 0.0
    %2203 = vmatpush1.xpose.msra.mxu0 0.0
    %2204 = vmatprep.subr.mxu0 0.0
    %2205 = vmatpush1.xpose.msra.mxu0 0.0
    %2206 = vmatprep.subr.mxu0 0.0
    %2207 = vmatpush1.xpose.msra.mxu0 0.0
    %2208 = vmatprep.subr.mxu0 0.0
    %2209 = vmatpush1.xpose.msra.mxu0 0.0
    %2210 = vmatprep.subr.mxu0 0.0
    %2211 = vmatpush1.xpose.msra.mxu0 0.0
    %2212 = vmatprep.subr.mxu0 0.0
    %2213 = vmatpush1.xpose.msra.mxu0 0.0
    %2214 = vmatprep.subr.mxu0 0.0
    %2215 = vmatpush1.xpose.msra.mxu0 0.0
    %2216 = vmatprep.subr.mxu0 0.0
    %2217 = vmatpush1.xpose.msra.mxu0 0.0
    %2218 = vmatprep.subr.mxu0 0.0
    %2219 = vmatpush1.xpose.msra.mxu0 0.0
    %2220 = vmatprep.subr.mxu0 0.0
    %2221 = vmatpush1.xpose.msra.mxu0 0.0
    %2222 = vmatprep.subr.mxu0 0.0
    %2223 = vmatpush1.xpose.msra.mxu0 0.0
    %2224 = vmatprep.subr.mxu0 0.0
    %2225 = vmatpush1.xpose.msra.mxu0 0.0
    %2226 = vmatprep.subr.mxu0 0.0
    %2227 = vmatpush1.xpose.msra.mxu0 0.0
    %2228 = vmatprep.mubr.f32.mxu0 0.0
    %2229 = vmatmul.mubr.f32.gmra.mrb[0].mxu0 %v2159
    %v2230 = vpop.f32.mrb[0].mxu0
    %v2231 = vadd.f32 0.0, %v2230
    %v2232 = vpop.f32.mrb[0].mxu0
    %2233 = vdwg.mxu0
    %v2234 = vmul.f32 %v2155, 0.35355338
    %v2235 = vmul.f32 %v2231, 0.35355338
    %v2236 = vadd.f32 %v2234, %v231
    %v2237 = vadd.f32 %v2235, %v232
    %v2238 = vsel %vm476, %v2236, -inf
    %2239 = vmax.xlane.f32.xlu0 %v2238
    %v2240 = vpop.xlane.xlu0 %2239
    %v2241 = vsel %vm476, %v2237, -inf
    %2242 = vmax.xlane.f32.xlu0 %v2241
    %v2243 = vpop.xlane.xlu0 %2242
    %v2244 = vsub.f32 %v2236, %v2240
    %v2245 = vsub.f32 %v2237, %v2243
    %v2246 = vmul.f32 %v2244, 1.442695
    %v2247 = vpow.pop %v2246
    %v2248 = vmul.f32 %v2245, 1.442695
    %v2249 = vpow.pop %v2248
    %v2250 = vsel %vm476, %v2247, 0.0
    %2251 = vadd.xlane.f32.xlu0 %v2250
    %v2252 = vpop.xlane.xlu0 %2251
    %v2253 = vsel %vm476, %v2249, 0.0
    %2254 = vadd.xlane.f32.xlu0 %v2253
    %v2255 = vpop.xlane.xlu0 %2254
    %v2256 = vrcp.pop %v2252
    %v2257 = vmul.f32 %v2247, %v2256
    %v2258 = vrcp.pop %v2255
    %v2259 = vmul.f32 %v2249, %v2258
    %2260 = vrot.lane.b32.xlu0 %v318, 96
    %v2261 = vpop.permute.xlu0 %2260
    %v2264 = vsel %vm476, %v2257, 0
    %2266 = vmatprep.subr.mxu0 0.0
    %2267 = vmatpush1.msra.mxu0 %v2261
    %2268 = vmatprep.subr.mxu0 0.0
    %2269 = vmatpush1.msra.mxu0 0.0
    %2270 = vmatprep.subr.mxu0 0.0
    %2271 = vmatpush1.msra.mxu0 0.0
    %2272 = vmatprep.subr.mxu0 0.0
    %2273 = vmatpush1.msra.mxu0 0.0
    %2274 = vmatprep.subr.mxu0 0.0
    %2275 = vmatpush1.msra.mxu0 0.0
    %2276 = vmatprep.subr.mxu0 0.0
    %2277 = vmatpush1.msra.mxu0 0.0
    %2278 = vmatprep.subr.mxu0 0.0
    %2279 = vmatpush1.msra.mxu0 0.0
    %2280 = vmatprep.subr.mxu0 0.0
    %2281 = vmatpush1.msra.mxu0 0.0
    %2282 = vmatprep.subr.mxu0 0.0
    %2283 = vmatpush1.msra.mxu0 0.0
    %2284 = vmatprep.subr.mxu0 0.0
    %2285 = vmatpush1.msra.mxu0 0.0
    %2286 = vmatprep.subr.mxu0 0.0
    %2287 = vmatpush1.msra.mxu0 0.0
    %2288 = vmatprep.subr.mxu0 0.0
    %2289 = vmatpush1.msra.mxu0 0.0
    %2290 = vmatprep.subr.mxu0 0.0
    %2291 = vmatpush1.msra.mxu0 0.0
    %2292 = vmatprep.subr.mxu0 0.0
    %2293 = vmatpush1.msra.mxu0 0.0
    %2294 = vmatprep.subr.mxu0 0.0
    %2295 = vmatpush1.msra.mxu0 0.0
    %2296 = vmatprep.subr.mxu0 0.0
    %2297 = vmatpush1.msra.mxu0 0.0
    %2298 = vmatprep.subr.mxu0 0.0
    %2299 = vmatpush1.msra.mxu0 0.0
    %2300 = vmatprep.subr.mxu0 0.0
    %2301 = vmatpush1.msra.mxu0 0.0
    %2302 = vmatprep.subr.mxu0 0.0
    %2303 = vmatpush1.msra.mxu0 0.0
    %2304 = vmatprep.subr.mxu0 0.0
    %2305 = vmatpush1.msra.mxu0 0.0
    %2306 = vmatprep.subr.mxu0 0.0
    %2307 = vmatpush1.msra.mxu0 0.0
    %2308 = vmatprep.subr.mxu0 0.0
    %2309 = vmatpush1.msra.mxu0 0.0
    %2310 = vmatprep.subr.mxu0 0.0
    %2311 = vmatpush1.msra.mxu0 0.0
    %2312 = vmatprep.subr.mxu0 0.0
    %2313 = vmatpush1.msra.mxu0 0.0
    %2314 = vmatprep.subr.mxu0 0.0
    %2315 = vmatpush1.msra.mxu0 0.0
    %2316 = vmatprep.subr.mxu0 0.0
    %2317 = vmatpush1.msra.mxu0 0.0
    %2318 = vmatprep.subr.mxu0 0.0
    %2319 = vmatpush1.msra.mxu0 0.0
    %2320 = vmatprep.subr.mxu0 0.0
    %2321 = vmatpush1.msra.mxu0 0.0
    %2322 = vmatprep.subr.mxu0 0.0
    %2323 = vmatpush1.msra.mxu0 0.0
    %2324 = vmatprep.subr.mxu0 0.0
    %2325 = vmatpush1.msra.mxu0 0.0
    %2326 = vmatprep.subr.mxu0 0.0
    %2327 = vmatpush1.msra.mxu0 0.0
    %2328 = vmatprep.subr.mxu0 0.0
    %2329 = vmatpush1.msra.mxu0 0.0
    %2330 = vmatprep.mubr.f32.mxu0 0.0
    %2331 = vmatmul.mubr.f32.gmra.mrb[0].mxu0 %v2264
    %v2332 = vpop.f32.mrb[0].mxu0
    %v2333 = vadd.f32 0.0, %v2332
    %v2334 = vpop.f32.mrb[0].mxu0
    %2335 = vdwg.mxu0
    %2336 = vrot.lane.b32.xlu0 %v323, 96
    %v2337 = vpop.permute.xlu0 %2336
    %v2340 = vsel %vm476, %v2259, 0
    %2342 = vmatprep.subr.mxu0 0.0
    %2343 = vmatpush1.msra.mxu0 %v2337
    %2344 = vmatprep.subr.mxu0 0.0
    %2345 = vmatpush1.msra.mxu0 0.0
    %2346 = vmatprep.subr.mxu0 0.0
    %2347 = vmatpush1.msra.mxu0 0.0
    %2348 = vmatprep.subr.mxu0 0.0
    %2349 = vmatpush1.msra.mxu0 0.0
    %2350 = vmatprep.subr.mxu0 0.0
    %2351 = vmatpush1.msra.mxu0 0.0
    %2352 = vmatprep.subr.mxu0 0.0
    %2353 = vmatpush1.msra.mxu0 0.0
    %2354 = vmatprep.subr.mxu0 0.0
    %2355 = vmatpush1.msra.mxu0 0.0
    %2356 = vmatprep.subr.mxu0 0.0
    %2357 = vmatpush1.msra.mxu0 0.0
    %2358 = vmatprep.subr.mxu0 0.0
    %2359 = vmatpush1.msra.mxu0 0.0
    %2360 = vmatprep.subr.mxu0 0.0
    %2361 = vmatpush1.msra.mxu0 0.0
    %2362 = vmatprep.subr.mxu0 0.0
    %2363 = vmatpush1.msra.mxu0 0.0
    %2364 = vmatprep.subr.mxu0 0.0
    %2365 = vmatpush1.msra.mxu0 0.0
    %2366 = vmatprep.subr.mxu0 0.0
    %2367 = vmatpush1.msra.mxu0 0.0
    %2368 = vmatprep.subr.mxu0 0.0
    %2369 = vmatpush1.msra.mxu0 0.0
    %2370 = vmatprep.subr.mxu0 0.0
    %2371 = vmatpush1.msra.mxu0 0.0
    %2372 = vmatprep.subr.mxu0 0.0
    %2373 = vmatpush1.msra.mxu0 0.0
    %2374 = vmatprep.subr.mxu0 0.0
    %2375 = vmatpush1.msra.mxu0 0.0
    %2376 = vmatprep.subr.mxu0 0.0
    %2377 = vmatpush1.msra.mxu0 0.0
    %2378 = vmatprep.subr.mxu0 0.0
    %2379 = vmatpush1.msra.mxu0 0.0
    %2380 = vmatprep.subr.mxu0 0.0
    %2381 = vmatpush1.msra.mxu0 0.0
    %2382 = vmatprep.subr.mxu0 0.0
    %2383 = vmatpush1.msra.mxu0 0.0
    %2384 = vmatprep.subr.mxu0 0.0
    %2385 = vmatpush1.msra.mxu0 0.0
    %2386 = vmatprep.subr.mxu0 0.0
    %2387 = vmatpush1.msra.mxu0 0.0
    %2388 = vmatprep.subr.mxu0 0.0
    %2389 = vmatpush1.msra.mxu0 0.0
    %2390 = vmatprep.subr.mxu0 0.0
    %2391 = vmatpush1.msra.mxu0 0.0
    %2392 = vmatprep.subr.mxu0 0.0
    %2393 = vmatpush1.msra.mxu0 0.0
    %2394 = vmatprep.subr.mxu0 0.0
    %2395 = vmatpush1.msra.mxu0 0.0
    %2396 = vmatprep.subr.mxu0 0.0
    %2397 = vmatpush1.msra.mxu0 0.0
    %2398 = vmatprep.subr.mxu0 0.0
    %2399 = vmatpush1.msra.mxu0 0.0
    %2400 = vmatprep.subr.mxu0 0.0
    %2401 = vmatpush1.msra.mxu0 0.0
    %2402 = vmatprep.subr.mxu0 0.0
    %2403 = vmatpush1.msra.mxu0 0.0
    %2404 = vmatprep.subr.mxu0 0.0
    %2405 = vmatpush1.msra.mxu0 0.0
    %2406 = vmatprep.mubr.f32.mxu0 0.0
    %2407 = vmatmul.mubr.f32.gmra.mrb[0].mxu0 %v2340
    %v2408 = vpop.f32.mrb[0].mxu0
    %v2409 = vadd.f32 0.0, %v2408
    %v2410 = vpop.f32.mrb[0].mxu0
    %2411 = vdwg.mxu0
    %2412 = vrot.lane.b32.xlu0 %v2074, 120
    %v2413 = vpop.permute.xlu0 %2412
    %2414 = vrot.lane.b32.xlu0 %v318, 120
    %v2415 = vpop.permute.xlu0 %2414
    %v2416 = vsel %vm476, %v2413, 0
    %v2418 = vsel %vm476, %v2415, 0
    %2420 = vmatprep.subr.mxu0 0.0
    %2421 = vmatpush1.xpose.msra.mxu0 %v2418
    %2422 = vmatprep.subr.mxu0 0.0
    %2423 = vmatpush1.xpose.msra.mxu0 0.0
    %2424 = vmatprep.subr.mxu0 0.0
    %2425 = vmatpush1.xpose.msra.mxu0 0.0
    %2426 = vmatprep.subr.mxu0 0.0
    %2427 = vmatpush1.xpose.msra.mxu0 0.0
    %2428 = vmatprep.subr.mxu0 0.0
    %2429 = vmatpush1.xpose.msra.mxu0 0.0
    %2430 = vmatprep.subr.mxu0 0.0
    %2431 = vmatpush1.xpose.msra.mxu0 0.0
    %2432 = vmatprep.subr.mxu0 0.0
    %2433 = vmatpush1.xpose.msra.mxu0 0.0
    %2434 = vmatprep.subr.mxu0 0.0
    %2435 = vmatpush1.xpose.msra.mxu0 0.0
    %2436 = vmatprep.subr.mxu0 0.0
    %2437 = vmatpush1.xpose.msra.mxu0 0.0
    %2438 = vmatprep.subr.mxu0 0.0
    %2439 = vmatpush1.xpose.msra.mxu0 0.0
    %2440 = vmatprep.subr.mxu0 0.0
    %2441 = vmatpush1.xpose.msra.mxu0 0.0
    %2442 = vmatprep.subr.mxu0 0.0
    %2443 = vmatpush1.xpose.msra.mxu0 0.0
    %2444 = vmatprep.subr.mxu0 0.0
    %2445 = vmatpush1.xpose.msra.mxu0 0.0
    %2446 = vmatprep.subr.mxu0 0.0
    %2447 = vmatpush1.xpose.msra.mxu0 0.0
    %2448 = vmatprep.subr.mxu0 0.0
    %2449 = vmatpush1.xpose.msra.mxu0 0.0
    %2450 = vmatprep.subr.mxu0 0.0
    %2451 = vmatpush1.xpose.msra.mxu0 0.0
    %2452 = vmatprep.subr.mxu0 0.0
    %2453 = vmatpush1.xpose.msra.mxu0 0.0
    %2454 = vmatprep.subr.mxu0 0.0
    %2455 = vmatpush1.xpose.msra.mxu0 0.0
    %2456 = vmatprep.subr.mxu0 0.0
    %2457 = vmatpush1.xpose.msra.mxu0 0.0
    %2458 = vmatprep.subr.mxu0 0.0
    %2459 = vmatpush1.xpose.msra.mxu0 0.0
    %2460 = vmatprep.subr.mxu0 0.0
    %2461 = vmatpush1.xpose.msra.mxu0 0.0
    %2462 = vmatprep.subr.mxu0 0.0
    %2463 = vmatpush1.xpose.msra.mxu0 0.0
    %2464 = vmatprep.subr.mxu0 0.0
    %2465 = vmatpush1.xpose.msra.mxu0 0.0
    %2466 = vmatprep.subr.mxu0 0.0
    %2467 = vmatpush1.xpose.msra.mxu0 0.0
    %2468 = vmatprep.subr.mxu0 0.0
    %2469 = vmatpush1.xpose.msra.mxu0 0.0
    %2470 = vmatprep.subr.mxu0 0.0
    %2471 = vmatpush1.xpose.msra.mxu0 0.0
    %2472 = vmatprep.subr.mxu0 0.0
    %2473 = vmatpush1.xpose.msra.mxu0 0.0
    %2474 = vmatprep.subr.mxu0 0.0
    %2475 = vmatpush1.xpose.msra.mxu0 0.0
    %2476 = vmatprep.subr.mxu0 0.0
    %2477 = vmatpush1.xpose.msra.mxu0 0.0
    %2478 = vmatprep.subr.mxu0 0.0
    %2479 = vmatpush1.xpose.msra.mxu0 0.0
    %2480 = vmatprep.subr.mxu0 0.0
    %2481 = vmatpush1.xpose.msra.mxu0 0.0
    %2482 = vmatprep.subr.mxu0 0.0
    %2483 = vmatpush1.xpose.msra.mxu0 0.0
    %2484 = vmatprep.mubr.f32.mxu0 0.0
    %2485 = vmatmul.mubr.f32.gmra.mrb[0].mxu0 %v2416
    %v2486 = vpop.f32.mrb[0].mxu0
    %v2487 = vadd.f32 0.0, %v2486
    %v2488 = vpop.f32.mrb[0].mxu0
    %2489 = vdwg.mxu0
    %2490 = vrot.lane.b32.xlu0 %v2079, 120
    %v2491 = vpop.permute.xlu0 %2490
    %2492 = vrot.lane.b32.xlu0 %v323, 120
    %v2493 = vpop.permute.xlu0 %2492
    %v2494 = vsel %vm476, %v2491, 0
    %v2496 = vsel %vm476, %v2493, 0
    %2498 = vmatprep.subr.mxu0 0.0
    %2499 = vmatpush1.xpose.msra.mxu0 %v2496
    %2500 = vmatprep.subr.mxu0 0.0
    %2501 = vmatpush1.xpose.msra.mxu0 0.0
    %2502 = vmatprep.subr.mxu0 0.0
    %2503 = vmatpush1.xpose.msra.mxu0 0.0
    %2504 = vmatprep.subr.mxu0 0.0
    %2505 = vmatpush1.xpose.msra.mxu0 0.0
    %2506 = vmatprep.subr.mxu0 0.0
    %2507 = vmatpush1.xpose.msra.mxu0 0.0
    %2508 = vmatprep.subr.mxu0 0.0
    %2509 = vmatpush1.xpose.msra.mxu0 0.0
    %2510 = vmatprep.subr.mxu0 0.0
    %2511 = vmatpush1.xpose.msra.mxu0 0.0
    %2512 = vmatprep.subr.mxu0 0.0
    %2513 = vmatpush1.xpose.msra.mxu0 0.0
    %2514 = vmatprep.subr.mxu0 0.0
    %2515 = vmatpush1.xpose.msra.mxu0 0.0
    %2516 = vmatprep.subr.mxu0 0.0
    %2517 = vmatpush1.xpose.msra.mxu0 0.0
    %2518 = vmatprep.subr.mxu0 0.0
    %2519 = vmatpush1.xpose.msra.mxu0 0.0
    %2520 = vmatprep.subr.mxu0 0.0
    %2521 = vmatpush1.xpose.msra.mxu0 0.0
    %2522 = vmatprep.subr.mxu0 0.0
    %2523 = vmatpush1.xpose.msra.mxu0 0.0
    %2524 = vmatprep.subr.mxu0 0.0
    %2525 = vmatpush1.xpose.msra.mxu0 0.0
    %2526 = vmatprep.subr.mxu0 0.0
    %2527 = vmatpush1.xpose.msra.mxu0 0.0
    %2528 = vmatprep.subr.mxu0 0.0
    %2529 = vmatpush1.xpose.msra.mxu0 0.0
    %2530 = vmatprep.subr.mxu0 0.0
    %2531 = vmatpush1.xpose.msra.mxu0 0.0
    %2532 = vmatprep.subr.mxu0 0.0
    %2533 = vmatpush1.xpose.msra.mxu0 0.0
    %2534 = vmatprep.subr.mxu0 0.0
    %2535 = vmatpush1.xpose.msra.mxu0 0.0
    %2536 = vmatprep.subr.mxu0 0.0
    %2537 = vmatpush1.xpose.msra.mxu0 0.0
    %2538 = vmatprep.subr.mxu0 0.0
    %2539 = vmatpush1.xpose.msra.mxu0 0.0
    %2540 = vmatprep.subr.mxu0 0.0
    %2541 = vmatpush1.xpose.msra.mxu0 0.0
    %2542 = vmatprep.subr.mxu0 0.0
    %2543 = vmatpush1.xpose.msra.mxu0 0.0
    %2544 = vmatprep.subr.mxu0 0.0
    %2545 = vmatpush1.xpose.msra.mxu0 0.0
    %2546 = vmatprep.subr.mxu0 0.0
    %2547 = vmatpush1.xpose.msra.mxu0 0.0
    %2548 = vmatprep.subr.mxu0 0.0
    %2549 = vmatpush1.xpose.msra.mxu0 0.0
    %2550 = vmatprep.subr.mxu0 0.0
    %2551 = vmatpush1.xpose.msra.mxu0 0.0
    %2552 = vmatprep.subr.mxu0 0.0
    %2553 = vmatpush1.xpose.msra.mxu0 0.0
    %2554 = vmatprep.subr.mxu0 0.0
    %2555 = vmatpush1.xpose.msra.mxu0 0.0
    %2556 = vmatprep.subr.mxu0 0.0
    %2557 = vmatpush1.xpose.msra.mxu0 0.0
    %2558 = vmatprep.subr.mxu0 0.0
    %2559 = vmatpush1.xpose.msra.mxu0 0.0
    %2560 = vmatprep.subr.mxu0 0.0
    %2561 = vmatpush1.xpose.msra.mxu0 0.0
    %2562 = vmatprep.mubr.f32.mxu0 0.0
    %2563 = vmatmul.mubr.f32.gmra.mrb[0].mxu0 %v2494
    %v2564 = vpop.f32.mrb[0].mxu0
    %v2565 = vadd.f32 0.0, %v2564
    %v2566 = vpop.f32.mrb[0].mxu0
    %2567 = vdwg.mxu0
    %v2568 = vmul.f32 %v2487, 0.35355338
    %v2569 = vmul.f32 %v2565, 0.35355338
    %v2570 = vadd.f32 %v2568, %v231
    %v2571 = vadd.f32 %v2569, %v232
    %v2572 = vsel %vm476, %v2570, -inf
    %2573 = vmax.xlane.f32.xlu0 %v2572
    %v2574 = vpop.xlane.xlu0 %2573
    %v2575 = vsel %vm476, %v2571, -inf
    %2576 = vmax.xlane.f32.xlu0 %v2575
    %v2577 = vpop.xlane.xlu0 %2576
    %v2578 = vsub.f32 %v2570, %v2574
    %v2579 = vsub.f32 %v2571, %v2577
    %v2580 = vmul.f32 %v2578, 1.442695
    %v2581 = vpow.pop %v2580
    %v2582 = vmul.f32 %v2579, 1.442695
    %v2583 = vpow.pop %v2582
    %v2584 = vsel %vm476, %v2581, 0.0
    %2585 = vadd.xlane.f32.xlu0 %v2584
    %v2586 = vpop.xlane.xlu0 %2585
    %v2587 = vsel %vm476, %v2583, 0.0
    %2588 = vadd.xlane.f32.xlu0 %v2587
    %v2589 = vpop.xlane.xlu0 %2588
    %v2590 = vrcp.pop %v2586
    %v2591 = vmul.f32 %v2581, %v2590
    %v2592 = vrcp.pop %v2589
    %v2593 = vmul.f32 %v2583, %v2592
    %2594 = vrot.lane.b32.xlu0 %v318, 88
    %v2595 = vpop.permute.xlu0 %2594
    %v2598 = vsel %vm476, %v2591, 0
    %2600 = vmatprep.subr.mxu0 0.0
    %2601 = vmatpush1.msra.mxu0 %v2595
    %2602 = vmatprep.subr.mxu0 0.0
    %2603 = vmatpush1.msra.mxu0 0.0
    %2604 = vmatprep.subr.mxu0 0.0
    %2605 = vmatpush1.msra.mxu0 0.0
    %2606 = vmatprep.subr.mxu0 0.0
    %2607 = vmatpush1.msra.mxu0 0.0
    %2608 = vmatprep.subr.mxu0 0.0
    %2609 = vmatpush1.msra.mxu0 0.0
    %2610 = vmatprep.subr.mxu0 0.0
    %2611 = vmatpush1.msra.mxu0 0.0
    %2612 = vmatprep.subr.mxu0 0.0
    %2613 = vmatpush1.msra.mxu0 0.0
    %2614 = vmatprep.subr.mxu0 0.0
    %2615 = vmatpush1.msra.mxu0 0.0
    %2616 = vmatprep.subr.mxu0 0.0
    %2617 = vmatpush1.msra.mxu0 0.0
    %2618 = vmatprep.subr.mxu0 0.0
    %2619 = vmatpush1.msra.mxu0 0.0
    %2620 = vmatprep.subr.mxu0 0.0
    %2621 = vmatpush1.msra.mxu0 0.0
    %2622 = vmatprep.subr.mxu0 0.0
    %2623 = vmatpush1.msra.mxu0 0.0
    %2624 = vmatprep.subr.mxu0 0.0
    %2625 = vmatpush1.msra.mxu0 0.0
    %2626 = vmatprep.subr.mxu0 0.0
    %2627 = vmatpush1.msra.mxu0 0.0
    %2628 = vmatprep.subr.mxu0 0.0
    %2629 = vmatpush1.msra.mxu0 0.0
    %2630 = vmatprep.subr.mxu0 0.0
    %2631 = vmatpush1.msra.mxu0 0.0
    %2632 = vmatprep.subr.mxu0 0.0
    %2633 = vmatpush1.msra.mxu0 0.0
    %2634 = vmatprep.subr.mxu0 0.0
    %2635 = vmatpush1.msra.mxu0 0.0
    %2636 = vmatprep.subr.mxu0 0.0
    %2637 = vmatpush1.msra.mxu0 0.0
    %2638 = vmatprep.subr.mxu0 0.0
    %2639 = vmatpush1.msra.mxu0 0.0
    %2640 = vmatprep.subr.mxu0 0.0
    %2641 = vmatpush1.msra.mxu0 0.0
    %2642 = vmatprep.subr.mxu0 0.0
    %2643 = vmatpush1.msra.mxu0 0.0
    %2644 = vmatprep.subr.mxu0 0.0
    %2645 = vmatpush1.msra.mxu0 0.0
    %2646 = vmatprep.subr.mxu0 0.0
    %2647 = vmatpush1.msra.mxu0 0.0
    %2648 = vmatprep.subr.mxu0 0.0
    %2649 = vmatpush1.msra.mxu0 0.0
    %2650 = vmatprep.subr.mxu0 0.0
    %2651 = vmatpush1.msra.mxu0 0.0
    %2652 = vmatprep.subr.mxu0 0.0
    %2653 = vmatpush1.msra.mxu0 0.0
    %2654 = vmatprep.subr.mxu0 0.0
    %2655 = vmatpush1.msra.mxu0 0.0
    %2656 = vmatprep.subr.mxu0 0.0
    %2657 = vmatpush1.msra.mxu0 0.0
    %2658 = vmatprep.subr.mxu0 0.0
    %2659 = vmatpush1.msra.mxu0 0.0
    %2660 = vmatprep.subr.mxu0 0.0
    %2661 = vmatpush1.msra.mxu0 0.0
    %2662 = vmatprep.subr.mxu0 0.0
    %2663 = vmatpush1.msra.mxu0 0.0
    %2664 = vmatprep.mubr.f32.mxu0 0.0
    %2665 = vmatmul.mubr.f32.gmra.mrb[0].mxu0 %v2598
    %v2666 = vpop.f32.mrb[0].mxu0
    %v2667 = vadd.f32 0.0, %v2666
    %v2668 = vpop.f32.mrb[0].mxu0
    %2669 = vdwg.mxu0
    %2670 = vrot.lane.b32.xlu0 %v323, 88
    %v2671 = vpop.permute.xlu0 %2670
    %v2674 = vsel %vm476, %v2593, 0
    %2676 = vmatprep.subr.mxu0 0.0
    %2677 = vmatpush1.msra.mxu0 %v2671
    %2678 = vmatprep.subr.mxu0 0.0
    %2679 = vmatpush1.msra.mxu0 0.0
    %2680 = vmatprep.subr.mxu0 0.0
    %2681 = vmatpush1.msra.mxu0 0.0
    %2682 = vmatprep.subr.mxu0 0.0
    %2683 = vmatpush1.msra.mxu0 0.0
    %2684 = vmatprep.subr.mxu0 0.0
    %2685 = vmatpush1.msra.mxu0 0.0
    %2686 = vmatprep.subr.mxu0 0.0
    %2687 = vmatpush1.msra.mxu0 0.0
    %2688 = vmatprep.subr.mxu0 0.0
    %2689 = vmatpush1.msra.mxu0 0.0
    %2690 = vmatprep.subr.mxu0 0.0
    %2691 = vmatpush1.msra.mxu0 0.0
    %2692 = vmatprep.subr.mxu0 0.0
    %2693 = vmatpush1.msra.mxu0 0.0
    %2694 = vmatprep.subr.mxu0 0.0
    %2695 = vmatpush1.msra.mxu0 0.0
    %2696 = vmatprep.subr.mxu0 0.0
    %2697 = vmatpush1.msra.mxu0 0.0
    %2698 = vmatprep.subr.mxu0 0.0
    %2699 = vmatpush1.msra.mxu0 0.0
    %2700 = vmatprep.subr.mxu0 0.0
    %2701 = vmatpush1.msra.mxu0 0.0
    %2702 = vmatprep.subr.mxu0 0.0
    %2703 = vmatpush1.msra.mxu0 0.0
    %2704 = vmatprep.subr.mxu0 0.0
    %2705 = vmatpush1.msra.mxu0 0.0
    %2706 = vmatprep.subr.mxu0 0.0
    %2707 = vmatpush1.msra.mxu0 0.0
    %2708 = vmatprep.subr.mxu0 0.0
    %2709 = vmatpush1.msra.mxu0 0.0
    %2710 = vmatprep.subr.mxu0 0.0
    %2711 = vmatpush1.msra.mxu0 0.0
    %2712 = vmatprep.subr.mxu0 0.0
    %2713 = vmatpush1.msra.mxu0 0.0
    %2714 = vmatprep.subr.mxu0 0.0
    %2715 = vmatpush1.msra.mxu0 0.0
    %2716 = vmatprep.subr.mxu0 0.0
    %2717 = vmatpush1.msra.mxu0 0.0
    %2718 = vmatprep.subr.mxu0 0.0
    %2719 = vmatpush1.msra.mxu0 0.0
    %2720 = vmatprep.subr.mxu0 0.0
    %2721 = vmatpush1.msra.mxu0 0.0
    %2722 = vmatprep.subr.mxu0 0.0
    %2723 = vmatpush1.msra.mxu0 0.0
    %2724 = vmatprep.subr.mxu0 0.0
    %2725 = vmatpush1.msra.mxu0 0.0
    %2726 = vmatprep.subr.mxu0 0.0
    %2727 = vmatpush1.msra.mxu0 0.0
    %2728 = vmatprep.subr.mxu0 0.0
    %2729 = vmatpush1.msra.mxu0 0.0
    %2730 = vmatprep.subr.mxu0 0.0
    %2731 = vmatpush1.msra.mxu0 0.0
    %2732 = vmatprep.subr.mxu0 0.0
    %2733 = vmatpush1.msra.mxu0 0.0
    %2734 = vmatprep.subr.mxu0 0.0
    %2735 = vmatpush1.msra.mxu0 0.0
    %2736 = vmatprep.subr.mxu0 0.0
    %2737 = vmatpush1.msra.mxu0 0.0
    %2738 = vmatprep.subr.mxu0 0.0
    %2739 = vmatpush1.msra.mxu0 0.0
    %2740 = vmatprep.mubr.f32.mxu0 0.0
    %2741 = vmatmul.mubr.f32.gmra.mrb[0].mxu0 %v2674
    %v2742 = vpop.f32.mrb[0].mxu0
    %v2743 = vadd.f32 0.0, %v2742
    %v2744 = vpop.f32.mrb[0].mxu0
    %2745 = vdwg.mxu0
    %2746 = vrot.lane.b32.xlu0 %v2074, 112
    %v2747 = vpop.permute.xlu0 %2746
    %2748 = vrot.lane.b32.xlu0 %v318, 112
    %v2749 = vpop.permute.xlu0 %2748
    %v2750 = vsel %vm476, %v2747, 0
    %v2752 = vsel %vm476, %v2749, 0
    %2754 = vmatprep.subr.mxu0 0.0
    %2755 = vmatpush1.xpose.msra.mxu0 %v2752
    %2756 = vmatprep.subr.mxu0 0.0
    %2757 = vmatpush1.xpose.msra.mxu0 0.0
    %2758 = vmatprep.subr.mxu0 0.0
    %2759 = vmatpush1.xpose.msra.mxu0 0.0
    %2760 = vmatprep.subr.mxu0 0.0
    %2761 = vmatpush1.xpose.msra.mxu0 0.0
    %2762 = vmatprep.subr.mxu0 0.0
    %2763 = vmatpush1.xpose.msra.mxu0 0.0
    %2764 = vmatprep.subr.mxu0 0.0
    %2765 = vmatpush1.xpose.msra.mxu0 0.0
    %2766 = vmatprep.subr.mxu0 0.0
    %2767 = vmatpush1.xpose.msra.mxu0 0.0
    %2768 = vmatprep.subr.mxu0 0.0
    %2769 = vmatpush1.xpose.msra.mxu0 0.0
    %2770 = vmatprep.subr.mxu0 0.0
    %2771 = vmatpush1.xpose.msra.mxu0 0.0
    %2772 = vmatprep.subr.mxu0 0.0
    %2773 = vmatpush1.xpose.msra.mxu0 0.0
    %2774 = vmatprep.subr.mxu0 0.0
    %2775 = vmatpush1.xpose.msra.mxu0 0.0
    %2776 = vmatprep.subr.mxu0 0.0
    %2777 = vmatpush1.xpose.msra.mxu0 0.0
    %2778 = vmatprep.subr.mxu0 0.0
    %2779 = vmatpush1.xpose.msra.mxu0 0.0
    %2780 = vmatprep.subr.mxu0 0.0
    %2781 = vmatpush1.xpose.msra.mxu0 0.0
    %2782 = vmatprep.subr.mxu0 0.0
    %2783 = vmatpush1.xpose.msra.mxu0 0.0
    %2784 = vmatprep.subr.mxu0 0.0
    %2785 = vmatpush1.xpose.msra.mxu0 0.0
    %2786 = vmatprep.subr.mxu0 0.0
    %2787 = vmatpush1.xpose.msra.mxu0 0.0
    %2788 = vmatprep.subr.mxu0 0.0
    %2789 = vmatpush1.xpose.msra.mxu0 0.0
    %2790 = vmatprep.subr.mxu0 0.0
    %2791 = vmatpush1.xpose.msra.mxu0 0.0
    %2792 = vmatprep.subr.mxu0 0.0
    %2793 = vmatpush1.xpose.msra.mxu0 0.0
    %2794 = vmatprep.subr.mxu0 0.0
    %2795 = vmatpush1.xpose.msra.mxu0 0.0
    %2796 = vmatprep.subr.mxu0 0.0
    %2797 = vmatpush1.xpose.msra.mxu0 0.0
    %2798 = vmatprep.subr.mxu0 0.0
    %2799 = vmatpush1.xpose.msra.mxu0 0.0
    %2800 = vmatprep.subr.mxu0 0.0
    %2801 = vmatpush1.xpose.msra.mxu0 0.0
    %2802 = vmatprep.subr.mxu0 0.0
    %2803 = vmatpush1.xpose.msra.mxu0 0.0
    %2804 = vmatprep.subr.mxu0 0.0
    %2805 = vmatpush1.xpose.msra.mxu0 0.0
    %2806 = vmatprep.subr.mxu0 0.0
    %2807 = vmatpush1.xpose.msra.mxu0 0.0
    %2808 = vmatprep.subr.mxu0 0.0
    %2809 = vmatpush1.xpose.msra.mxu0 0.0
    %2810 = vmatprep.subr.mxu0 0.0
    %2811 = vmatpush1.xpose.msra.mxu0 0.0
    %2812 = vmatprep.subr.mxu0 0.0
    %2813 = vmatpush1.xpose.msra.mxu0 0.0
    %2814 = vmatprep.subr.mxu0 0.0
    %2815 = vmatpush1.xpose.msra.mxu0 0.0
    %2816 = vmatprep.subr.mxu0 0.0
    %2817 = vmatpush1.xpose.msra.mxu0 0.0
    %2818 = vmatprep.mubr.f32.mxu0 0.0
    %2819 = vmatmul.mubr.f32.gmra.mrb[0].mxu0 %v2750
    %v2820 = vpop.f32.mrb[0].mxu0
    %v2821 = vadd.f32 0.0, %v2820
    %v2822 = vpop.f32.mrb[0].mxu0
    %2823 = vdwg.mxu0
    %2824 = vrot.lane.b32.xlu0 %v2079, 112
    %v2825 = vpop.permute.xlu0 %2824
    %2826 = vrot.lane.b32.xlu0 %v323, 112
    %v2827 = vpop.permute.xlu0 %2826
    %v2828 = vsel %vm476, %v2825, 0
    %v2830 = vsel %vm476, %v2827, 0
    %2832 = vmatprep.subr.mxu0 0.0
    %2833 = vmatpush1.xpose.msra.mxu0 %v2830
    %2834 = vmatprep.subr.mxu0 0.0
    %2835 = vmatpush1.xpose.msra.mxu0 0.0
    %2836 = vmatprep.subr.mxu0 0.0
    %2837 = vmatpush1.xpose.msra.mxu0 0.0
    %2838 = vmatprep.subr.mxu0 0.0
    %2839 = vmatpush1.xpose.msra.mxu0 0.0
    %2840 = vmatprep.subr.mxu0 0.0
    %2841 = vmatpush1.xpose.msra.mxu0 0.0
    %2842 = vmatprep.subr.mxu0 0.0
    %2843 = vmatpush1.xpose.msra.mxu0 0.0
    %2844 = vmatprep.subr.mxu0 0.0
    %2845 = vmatpush1.xpose.msra.mxu0 0.0
    %2846 = vmatprep.subr.mxu0 0.0
    %2847 = vmatpush1.xpose.msra.mxu0 0.0
    %2848 = vmatprep.subr.mxu0 0.0
    %2849 = vmatpush1.xpose.msra.mxu0 0.0
    %2850 = vmatprep.subr.mxu0 0.0
    %2851 = vmatpush1.xpose.msra.mxu0 0.0
    %2852 = vmatprep.subr.mxu0 0.0
    %2853 = vmatpush1.xpose.msra.mxu0 0.0
    %2854 = vmatprep.subr.mxu0 0.0
    %2855 = vmatpush1.xpose.msra.mxu0 0.0
    %2856 = vmatprep.subr.mxu0 0.0
    %2857 = vmatpush1.xpose.msra.mxu0 0.0
    %2858 = vmatprep.subr.mxu0 0.0
    %2859 = vmatpush1.xpose.msra.mxu0 0.0
    %2860 = vmatprep.subr.mxu0 0.0
    %2861 = vmatpush1.xpose.msra.mxu0 0.0
    %2862 = vmatprep.subr.mxu0 0.0
    %2863 = vmatpush1.xpose.msra.mxu0 0.0
    %2864 = vmatprep.subr.mxu0 0.0
    %2865 = vmatpush1.xpose.msra.mxu0 0.0
    %2866 = vmatprep.subr.mxu0 0.0
    %2867 = vmatpush1.xpose.msra.mxu0 0.0
    %2868 = vmatprep.subr.mxu0 0.0
    %2869 = vmatpush1.xpose.msra.mxu0 0.0
    %2870 = vmatprep.subr.mxu0 0.0
    %2871 = vmatpush1.xpose.msra.mxu0 0.0
    %2872 = vmatprep.subr.mxu0 0.0
    %2873 = vmatpush1.xpose.msra.mxu0 0.0
    %2874 = vmatprep.subr.mxu0 0.0
    %2875 = vmatpush1.xpose.msra.mxu0 0.0
    %2876 = vmatprep.subr.mxu0 0.0
    %2877 = vmatpush1.xpose.msra.mxu0 0.0
    %2878 = vmatprep.subr.mxu0 0.0
    %2879 = vmatpush1.xpose.msra.mxu0 0.0
    %2880 = vmatprep.subr.mxu0 0.0
    %2881 = vmatpush1.xpose.msra.mxu0 0.0
    %2882 = vmatprep.subr.mxu0 0.0
    %2883 = vmatpush1.xpose.msra.mxu0 0.0
    %2884 = vmatprep.subr.mxu0 0.0
    %2885 = vmatpush1.xpose.msra.mxu0 0.0
    %2886 = vmatprep.subr.mxu0 0.0
    %2887 = vmatpush1.xpose.msra.mxu0 0.0
    %2888 = vmatprep.subr.mxu0 0.0
    %2889 = vmatpush1.xpose.msra.mxu0 0.0
    %2890 = vmatprep.subr.mxu0 0.0
    %2891 = vmatpush1.xpose.msra.mxu0 0.0
    %2892 = vmatprep.subr.mxu0 0.0
    %2893 = vmatpush1.xpose.msra.mxu0 0.0
    %2894 = vmatprep.subr.mxu0 0.0
    %2895 = vmatpush1.xpose.msra.mxu0 0.0
    %2896 = vmatprep.mubr.f32.mxu0 0.0
    %2897 = vmatmul.mubr.f32.gmra.mrb[0].mxu0 %v2828
    %v2898 = vpop.f32.mrb[0].mxu0
    %v2899 = vadd.f32 0.0, %v2898
    %v2900 = vpop.f32.mrb[0].mxu0
    %2901 = vdwg.mxu0
    %v2902 = vmul.f32 %v2821, 0.35355338
    %v2903 = vmul.f32 %v2899, 0.35355338
    %v2904 = vadd.f32 %v2902, %v231
    %v2905 = vadd.f32 %v2903, %v232
    %v2906 = vsel %vm476, %v2904, -inf
    %2907 = vmax.xlane.f32.xlu0 %v2906
    %v2908 = vpop.xlane.xlu0 %2907
    %v2909 = vsel %vm476, %v2905, -inf
    %2910 = vmax.xlane.f32.xlu0 %v2909
    %v2911 = vpop.xlane.xlu0 %2910
    %v2912 = vsub.f32 %v2904, %v2908
    %v2913 = vsub.f32 %v2905, %v2911
    %v2914 = vmul.f32 %v2912, 1.442695
    %v2915 = vpow.pop %v2914
    %v2916 = vmul.f32 %v2913, 1.442695
    %v2917 = vpow.pop %v2916
    %v2918 = vsel %vm476, %v2915, 0.0
    %2919 = vadd.xlane.f32.xlu0 %v2918
    %v2920 = vpop.xlane.xlu0 %2919
    %v2921 = vsel %vm476, %v2917, 0.0
    %2922 = vadd.xlane.f32.xlu0 %v2921
    %v2923 = vpop.xlane.xlu0 %2922
    %v2924 = vrcp.pop %v2920
    %v2925 = vmul.f32 %v2915, %v2924
    %v2926 = vrcp.pop %v2923
    %v2927 = vmul.f32 %v2917, %v2926
    %2928 = vrot.lane.b32.xlu0 %v318, 80
    %v2929 = vpop.permute.xlu0 %2928
    %v2932 = vsel %vm476, %v2925, 0
    %2934 = vmatprep.subr.mxu0 0.0
    %2935 = vmatpush1.msra.mxu0 %v2929
    %2936 = vmatprep.subr.mxu0 0.0
    %2937 = vmatpush1.msra.mxu0 0.0
    %2938 = vmatprep.subr.mxu0 0.0
    %2939 = vmatpush1.msra.mxu0 0.0
    %2940 = vmatprep.subr.mxu0 0.0
    %2941 = vmatpush1.msra.mxu0 0.0
    %2942 = vmatprep.subr.mxu0 0.0
    %2943 = vmatpush1.msra.mxu0 0.0
    %2944 = vmatprep.subr.mxu0 0.0
    %2945 = vmatpush1.msra.mxu0 0.0
    %2946 = vmatprep.subr.mxu0 0.0
    %2947 = vmatpush1.msra.mxu0 0.0
    %2948 = vmatprep.subr.mxu0 0.0
    %2949 = vmatpush1.msra.mxu0 0.0
    %2950 = vmatprep.subr.mxu0 0.0
    %2951 = vmatpush1.msra.mxu0 0.0
    %2952 = vmatprep.subr.mxu0 0.0
    %2953 = vmatpush1.msra.mxu0 0.0
    %2954 = vmatprep.subr.mxu0 0.0
    %2955 = vmatpush1.msra.mxu0 0.0
    %2956 = vmatprep.subr.mxu0 0.0
    %2957 = vmatpush1.msra.mxu0 0.0
    %2958 = vmatprep.subr.mxu0 0.0
    %2959 = vmatpush1.msra.mxu0 0.0
    %2960 = vmatprep.subr.mxu0 0.0
    %2961 = vmatpush1.msra.mxu0 0.0
    %2962 = vmatprep.subr.mxu0 0.0
    %2963 = vmatpush1.msra.mxu0 0.0
    %2964 = vmatprep.subr.mxu0 0.0
    %2965 = vmatpush1.msra.mxu0 0.0
    %2966 = vmatprep.subr.mxu0 0.0
    %2967 = vmatpush1.msra.mxu0 0.0
    %2968 = vmatprep.subr.mxu0 0.0
    %2969 = vmatpush1.msra.mxu0 0.0
    %2970 = vmatprep.subr.mxu0 0.0
    %2971 = vmatpush1.msra.mxu0 0.0
    %2972 = vmatprep.subr.mxu0 0.0
    %2973 = vmatpush1.msra.mxu0 0.0
    %2974 = vmatprep.subr.mxu0 0.0
    %2975 = vmatpush1.msra.mxu0 0.0
    %2976 = vmatprep.subr.mxu0 0.0
    %2977 = vmatpush1.msra.mxu0 0.0
    %2978 = vmatprep.subr.mxu0 0.0
    %2979 = vmatpush1.msra.mxu0 0.0
    %2980 = vmatprep.subr.mxu0 0.0
    %2981 = vmatpush1.msra.mxu0 0.0
    %2982 = vmatprep.subr.mxu0 0.0
    %2983 = vmatpush1.msra.mxu0 0.0
    %2984 = vmatprep.subr.mxu0 0.0
    %2985 = vmatpush1.msra.mxu0 0.0
    %2986 = vmatprep.subr.mxu0 0.0
    %2987 = vmatpush1.msra.mxu0 0.0
    %2988 = vmatprep.subr.mxu0 0.0
    %2989 = vmatpush1.msra.mxu0 0.0
    %2990 = vmatprep.subr.mxu0 0.0
    %2991 = vmatpush1.msra.mxu0 0.0
    %2992 = vmatprep.subr.mxu0 0.0
    %2993 = vmatpush1.msra.mxu0 0.0
    %2994 = vmatprep.subr.mxu0 0.0
    %2995 = vmatpush1.msra.mxu0 0.0
    %2996 = vmatprep.subr.mxu0 0.0
    %2997 = vmatpush1.msra.mxu0 0.0
    %2998 = vmatprep.mubr.f32.mxu0 0.0
    %2999 = vmatmul.mubr.f32.gmra.mrb[0].mxu0 %v2932
    %v3000 = vpop.f32.mrb[0].mxu0
    %v3001 = vadd.f32 0.0, %v3000
    %v3002 = vpop.f32.mrb[0].mxu0
    %3003 = vdwg.mxu0
    %3004 = vrot.lane.b32.xlu0 %v323, 80
    %v3005 = vpop.permute.xlu0 %3004
    %v3008 = vsel %vm476, %v2927, 0
    %3010 = vmatprep.subr.mxu0 0.0
    %3011 = vmatpush1.msra.mxu0 %v3005
    %3012 = vmatprep.subr.mxu0 0.0
    %3013 = vmatpush1.msra.mxu0 0.0
    %3014 = vmatprep.subr.mxu0 0.0
    %3015 = vmatpush1.msra.mxu0 0.0
    %3016 = vmatprep.subr.mxu0 0.0
    %3017 = vmatpush1.msra.mxu0 0.0
    %3018 = vmatprep.subr.mxu0 0.0
    %3019 = vmatpush1.msra.mxu0 0.0
    %3020 = vmatprep.subr.mxu0 0.0
    %3021 = vmatpush1.msra.mxu0 0.0
    %3022 = vmatprep.subr.mxu0 0.0
    %3023 = vmatpush1.msra.mxu0 0.0
    %3024 = vmatprep.subr.mxu0 0.0
    %3025 = vmatpush1.msra.mxu0 0.0
    %3026 = vmatprep.subr.mxu0 0.0
    %3027 = vmatpush1.msra.mxu0 0.0
    %3028 = vmatprep.subr.mxu0 0.0
    %3029 = vmatpush1.msra.mxu0 0.0
    %3030 = vmatprep.subr.mxu0 0.0
    %3031 = vmatpush1.msra.mxu0 0.0
    %3032 = vmatprep.subr.mxu0 0.0
    %3033 = vmatpush1.msra.mxu0 0.0
    %3034 = vmatprep.subr.mxu0 0.0
    %3035 = vmatpush1.msra.mxu0 0.0
    %3036 = vmatprep.subr.mxu0 0.0
    %3037 = vmatpush1.msra.mxu0 0.0
    %3038 = vmatprep.subr.mxu0 0.0
    %3039 = vmatpush1.msra.mxu0 0.0
    %3040 = vmatprep.subr.mxu0 0.0
    %3041 = vmatpush1.msra.mxu0 0.0
    %3042 = vmatprep.subr.mxu0 0.0
    %3043 = vmatpush1.msra.mxu0 0.0
    %3044 = vmatprep.subr.mxu0 0.0
    %3045 = vmatpush1.msra.mxu0 0.0
    %3046 = vmatprep.subr.mxu0 0.0
    %3047 = vmatpush1.msra.mxu0 0.0
    %3048 = vmatprep.subr.mxu0 0.0
    %3049 = vmatpush1.msra.mxu0 0.0
    %3050 = vmatprep.subr.mxu0 0.0
    %3051 = vmatpush1.msra.mxu0 0.0
    %3052 = vmatprep.subr.mxu0 0.0
    %3053 = vmatpush1.msra.mxu0 0.0
    %3054 = vmatprep.subr.mxu0 0.0
    %3055 = vmatpush1.msra.mxu0 0.0
    %3056 = vmatprep.subr.mxu0 0.0
    %3057 = vmatpush1.msra.mxu0 0.0
    %3058 = vmatprep.subr.mxu0 0.0
    %3059 = vmatpush1.msra.mxu0 0.0
    %3060 = vmatprep.subr.mxu0 0.0
    %3061 = vmatpush1.msra.mxu0 0.0
    %3062 = vmatprep.subr.mxu0 0.0
    %3063 = vmatpush1.msra.mxu0 0.0
    %3064 = vmatprep.subr.mxu0 0.0
    %3065 = vmatpush1.msra.mxu0 0.0
    %3066 = vmatprep.subr.mxu0 0.0
    %3067 = vmatpush1.msra.mxu0 0.0
    %3068 = vmatprep.subr.mxu0 0.0
    %3069 = vmatpush1.msra.mxu0 0.0
    %3070 = vmatprep.subr.mxu0 0.0
    %3071 = vmatpush1.msra.mxu0 0.0
    %3072 = vmatprep.subr.mxu0 0.0
    %3073 = vmatpush1.msra.mxu0 0.0
    %3074 = vmatprep.mubr.f32.mxu0 0.0
    %3075 = vmatmul.mubr.f32.gmra.mrb[0].mxu0 %v3008
    %v3076 = vpop.f32.mrb[0].mxu0
    %v3077 = vadd.f32 0.0, %v3076
    %v3078 = vpop.f32.mrb[0].mxu0
    %3079 = vdwg.mxu0
    %3080 = vrot.lane.b32.xlu0 %v2074, 104
    %v3081 = vpop.permute.xlu0 %3080
    %3082 = vrot.lane.b32.xlu0 %v318, 104
    %v3083 = vpop.permute.xlu0 %3082
    %v3084 = vsel %vm476, %v3081, 0
    %v3086 = vsel %vm476, %v3083, 0
    %3088 = vmatprep.subr.mxu0 0.0
    %3089 = vmatpush1.xpose.msra.mxu0 %v3086
    %3090 = vmatprep.subr.mxu0 0.0
    %3091 = vmatpush1.xpose.msra.mxu0 0.0
    %3092 = vmatprep.subr.mxu0 0.0
    %3093 = vmatpush1.xpose.msra.mxu0 0.0
    %3094 = vmatprep.subr.mxu0 0.0
    %3095 = vmatpush1.xpose.msra.mxu0 0.0
    %3096 = vmatprep.subr.mxu0 0.0
    %3097 = vmatpush1.xpose.msra.mxu0 0.0
    %3098 = vmatprep.subr.mxu0 0.0
    %3099 = vmatpush1.xpose.msra.mxu0 0.0
    %3100 = vmatprep.subr.mxu0 0.0
    %3101 = vmatpush1.xpose.msra.mxu0 0.0
    %3102 = vmatprep.subr.mxu0 0.0
    %3103 = vmatpush1.xpose.msra.mxu0 0.0
    %3104 = vmatprep.subr.mxu0 0.0
    %3105 = vmatpush1.xpose.msra.mxu0 0.0
    %3106 = vmatprep.subr.mxu0 0.0
    %3107 = vmatpush1.xpose.msra.mxu0 0.0
    %3108 = vmatprep.subr.mxu0 0.0
    %3109 = vmatpush1.xpose.msra.mxu0 0.0
    %3110 = vmatprep.subr.mxu0 0.0
    %3111 = vmatpush1.xpose.msra.mxu0 0.0
    %3112 = vmatprep.subr.mxu0 0.0
    %3113 = vmatpush1.xpose.msra.mxu0 0.0
    %3114 = vmatprep.subr.mxu0 0.0
    %3115 = vmatpush1.xpose.msra.mxu0 0.0
    %3116 = vmatprep.subr.mxu0 0.0
    %3117 = vmatpush1.xpose.msra.mxu0 0.0
    %3118 = vmatprep.subr.mxu0 0.0
    %3119 = vmatpush1.xpose.msra.mxu0 0.0
    %3120 = vmatprep.subr.mxu0 0.0
    %3121 = vmatpush1.xpose.msra.mxu0 0.0
    %3122 = vmatprep.subr.mxu0 0.0
    %3123 = vmatpush1.xpose.msra.mxu0 0.0
    %3124 = vmatprep.subr.mxu0 0.0
    %3125 = vmatpush1.xpose.msra.mxu0 0.0
    %3126 = vmatprep.subr.mxu0 0.0
    %3127 = vmatpush1.xpose.msra.mxu0 0.0
    %3128 = vmatprep.subr.mxu0 0.0
    %3129 = vmatpush1.xpose.msra.mxu0 0.0
    %3130 = vmatprep.subr.mxu0 0.0
    %3131 = vmatpush1.xpose.msra.mxu0 0.0
    %3132 = vmatprep.subr.mxu0 0.0
    %3133 = vmatpush1.xpose.msra.mxu0 0.0
    %3134 = vmatprep.subr.mxu0 0.0
    %3135 = vmatpush1.xpose.msra.mxu0 0.0
    %3136 = vmatprep.subr.mxu0 0.0
    %3137 = vmatpush1.xpose.msra.mxu0 0.0
    %3138 = vmatprep.subr.mxu0 0.0
    %3139 = vmatpush1.xpose.msra.mxu0 0.0
    %3140 = vmatprep.subr.mxu0 0.0
    %3141 = vmatpush1.xpose.msra.mxu0 0.0
    %3142 = vmatprep.subr.mxu0 0.0
    %3143 = vmatpush1.xpose.msra.mxu0 0.0
    %3144 = vmatprep.subr.mxu0 0.0
    %3145 = vmatpush1.xpose.msra.mxu0 0.0
    %3146 = vmatprep.subr.mxu0 0.0
    %3147 = vmatpush1.xpose.msra.mxu0 0.0
    %3148 = vmatprep.subr.mxu0 0.0
    %3149 = vmatpush1.xpose.msra.mxu0 0.0
    %3150 = vmatprep.subr.mxu0 0.0
    %3151 = vmatpush1.xpose.msra.mxu0 0.0
    %3152 = vmatprep.mubr.f32.mxu0 0.0
    %3153 = vmatmul.mubr.f32.gmra.mrb[0].mxu0 %v3084
    %v3154 = vpop.f32.mrb[0].mxu0
    %v3155 = vadd.f32 0.0, %v3154
    %v3156 = vpop.f32.mrb[0].mxu0
    %3157 = vdwg.mxu0
    %3158 = vrot.lane.b32.xlu0 %v2079, 104
    %v3159 = vpop.permute.xlu0 %3158
    %3160 = vrot.lane.b32.xlu0 %v323, 104
    %v3161 = vpop.permute.xlu0 %3160
    %v3162 = vsel %vm476, %v3159, 0
    %v3164 = vsel %vm476, %v3161, 0
    %3166 = vmatprep.subr.mxu0 0.0
    %3167 = vmatpush1.xpose.msra.mxu0 %v3164
    %3168 = vmatprep.subr.mxu0 0.0
    %3169 = vmatpush1.xpose.msra.mxu0 0.0
    %3170 = vmatprep.subr.mxu0 0.0
    %3171 = vmatpush1.xpose.msra.mxu0 0.0
    %3172 = vmatprep.subr.mxu0 0.0
    %3173 = vmatpush1.xpose.msra.mxu0 0.0
    %3174 = vmatprep.subr.mxu0 0.0
    %3175 = vmatpush1.xpose.msra.mxu0 0.0
    %3176 = vmatprep.subr.mxu0 0.0
    %3177 = vmatpush1.xpose.msra.mxu0 0.0
    %3178 = vmatprep.subr.mxu0 0.0
    %3179 = vmatpush1.xpose.msra.mxu0 0.0
    %3180 = vmatprep.subr.mxu0 0.0
    %3181 = vmatpush1.xpose.msra.mxu0 0.0
    %3182 = vmatprep.subr.mxu0 0.0
    %3183 = vmatpush1.xpose.msra.mxu0 0.0
    %3184 = vmatprep.subr.mxu0 0.0
    %3185 = vmatpush1.xpose.msra.mxu0 0.0
    %3186 = vmatprep.subr.mxu0 0.0
    %3187 = vmatpush1.xpose.msra.mxu0 0.0
    %3188 = vmatprep.subr.mxu0 0.0
    %3189 = vmatpush1.xpose.msra.mxu0 0.0
    %3190 = vmatprep.subr.mxu0 0.0
    %3191 = vmatpush1.xpose.msra.mxu0 0.0
    %3192 = vmatprep.subr.mxu0 0.0
    %3193 = vmatpush1.xpose.msra.mxu0 0.0
    %3194 = vmatprep.subr.mxu0 0.0
    %3195 = vmatpush1.xpose.msra.mxu0 0.0
    %3196 = vmatprep.subr.mxu0 0.0
    %3197 = vmatpush1.xpose.msra.mxu0 0.0
    %3198 = vmatprep.subr.mxu0 0.0
    %3199 = vmatpush1.xpose.msra.mxu0 0.0
    %3200 = vmatprep.subr.mxu0 0.0
    %3201 = vmatpush1.xpose.msra.mxu0 0.0
    %3202 = vmatprep.subr.mxu0 0.0
    %3203 = vmatpush1.xpose.msra.mxu0 0.0
    %3204 = vmatprep.subr.mxu0 0.0
    %3205 = vmatpush1.xpose.msra.mxu0 0.0
    %3206 = vmatprep.subr.mxu0 0.0
    %3207 = vmatpush1.xpose.msra.mxu0 0.0
    %3208 = vmatprep.subr.mxu0 0.0
    %3209 = vmatpush1.xpose.msra.mxu0 0.0
    %3210 = vmatprep.subr.mxu0 0.0
    %3211 = vmatpush1.xpose.msra.mxu0 0.0
    %3212 = vmatprep.subr.mxu0 0.0
    %3213 = vmatpush1.xpose.msra.mxu0 0.0
    %3214 = vmatprep.subr.mxu0 0.0
    %3215 = vmatpush1.xpose.msra.mxu0 0.0
    %3216 = vmatprep.subr.mxu0 0.0
    %3217 = vmatpush1.xpose.msra.mxu0 0.0
    %3218 = vmatprep.subr.mxu0 0.0
    %3219 = vmatpush1.xpose.msra.mxu0 0.0
    %3220 = vmatprep.subr.mxu0 0.0
    %3221 = vmatpush1.xpose.msra.mxu0 0.0
    %3222 = vmatprep.subr.mxu0 0.0
    %3223 = vmatpush1.xpose.msra.mxu0 0.0
    %3224 = vmatprep.subr.mxu0 0.0
    %3225 = vmatpush1.xpose.msra.mxu0 0.0
    %3226 = vmatprep.subr.mxu0 0.0
    %3227 = vmatpush1.xpose.msra.mxu0 0.0
    %3228 = vmatprep.subr.mxu0 0.0
    %3229 = vmatpush1.xpose.msra.mxu0 0.0
    %3230 = vmatprep.mubr.f32.mxu0 0.0
    %3231 = vmatmul.mubr.f32.gmra.mrb[0].mxu0 %v3162
    %v3232 = vpop.f32.mrb[0].mxu0
    %v3233 = vadd.f32 0.0, %v3232
    %v3234 = vpop.f32.mrb[0].mxu0
    %3235 = vdwg.mxu0
    %v3236 = vmul.f32 %v3155, 0.35355338
    %v3237 = vmul.f32 %v3233, 0.35355338
    %v3238 = vadd.f32 %v3236, %v231
    %v3239 = vadd.f32 %v3237, %v232
    %v3240 = vsel %vm476, %v3238, -inf
    %3241 = vmax.xlane.f32.xlu0 %v3240
    %v3242 = vpop.xlane.xlu0 %3241
    %v3243 = vsel %vm476, %v3239, -inf
    %3244 = vmax.xlane.f32.xlu0 %v3243
    %v3245 = vpop.xlane.xlu0 %3244
    %v3246 = vsub.f32 %v3238, %v3242
    %v3247 = vsub.f32 %v3239, %v3245
    %v3248 = vmul.f32 %v3246, 1.442695
    %v3249 = vpow.pop %v3248
    %v3250 = vmul.f32 %v3247, 1.442695
    %v3251 = vpow.pop %v3250
    %v3252 = vsel %vm476, %v3249, 0.0
    %3253 = vadd.xlane.f32.xlu0 %v3252
    %v3254 = vpop.xlane.xlu0 %3253
    %v3255 = vsel %vm476, %v3251, 0.0
    %3256 = vadd.xlane.f32.xlu0 %v3255
    %v3257 = vpop.xlane.xlu0 %3256
    %v3258 = vrcp.pop %v3254
    %v3259 = vmul.f32 %v3249, %v3258
    %v3260 = vrcp.pop %v3257
    %v3261 = vmul.f32 %v3251, %v3260
    %3262 = vrot.lane.b32.xlu0 %v318, 72
    %v3263 = vpop.permute.xlu0 %3262
    %v3266 = vsel %vm476, %v3259, 0
    %3268 = vmatprep.subr.mxu0 0.0
    %3269 = vmatpush1.msra.mxu0 %v3263
    %3270 = vmatprep.subr.mxu0 0.0
    %3271 = vmatpush1.msra.mxu0 0.0
    %3272 = vmatprep.subr.mxu0 0.0
    %3273 = vmatpush1.msra.mxu0 0.0
    %3274 = vmatprep.subr.mxu0 0.0
    %3275 = vmatpush1.msra.mxu0 0.0
    %3276 = vmatprep.subr.mxu0 0.0
    %3277 = vmatpush1.msra.mxu0 0.0
    %3278 = vmatprep.subr.mxu0 0.0
    %3279 = vmatpush1.msra.mxu0 0.0
    %3280 = vmatprep.subr.mxu0 0.0
    %3281 = vmatpush1.msra.mxu0 0.0
    %3282 = vmatprep.subr.mxu0 0.0
    %3283 = vmatpush1.msra.mxu0 0.0
    %3284 = vmatprep.subr.mxu0 0.0
    %3285 = vmatpush1.msra.mxu0 0.0
    %3286 = vmatprep.subr.mxu0 0.0
    %3287 = vmatpush1.msra.mxu0 0.0
    %3288 = vmatprep.subr.mxu0 0.0
    %3289 = vmatpush1.msra.mxu0 0.0
    %3290 = vmatprep.subr.mxu0 0.0
    %3291 = vmatpush1.msra.mxu0 0.0
    %3292 = vmatprep.subr.mxu0 0.0
    %3293 = vmatpush1.msra.mxu0 0.0
    %3294 = vmatprep.subr.mxu0 0.0
    %3295 = vmatpush1.msra.mxu0 0.0
    %3296 = vmatprep.subr.mxu0 0.0
    %3297 = vmatpush1.msra.mxu0 0.0
    %3298 = vmatprep.subr.mxu0 0.0
    %3299 = vmatpush1.msra.mxu0 0.0
    %3300 = vmatprep.subr.mxu0 0.0
    %3301 = vmatpush1.msra.mxu0 0.0
    %3302 = vmatprep.subr.mxu0 0.0
    %3303 = vmatpush1.msra.mxu0 0.0
    %3304 = vmatprep.subr.mxu0 0.0
    %3305 = vmatpush1.msra.mxu0 0.0
    %3306 = vmatprep.subr.mxu0 0.0
    %3307 = vmatpush1.msra.mxu0 0.0
    %3308 = vmatprep.subr.mxu0 0.0
    %3309 = vmatpush1.msra.mxu0 0.0
    %3310 = vmatprep.subr.mxu0 0.0
    %3311 = vmatpush1.msra.mxu0 0.0
    %3312 = vmatprep.subr.mxu0 0.0
    %3313 = vmatpush1.msra.mxu0 0.0
    %3314 = vmatprep.subr.mxu0 0.0
    %3315 = vmatpush1.msra.mxu0 0.0
    %3316 = vmatprep.subr.mxu0 0.0
    %3317 = vmatpush1.msra.mxu0 0.0
    %3318 = vmatprep.subr.mxu0 0.0
    %3319 = vmatpush1.msra.mxu0 0.0
    %3320 = vmatprep.subr.mxu0 0.0
    %3321 = vmatpush1.msra.mxu0 0.0
    %3322 = vmatprep.subr.mxu0 0.0
    %3323 = vmatpush1.msra.mxu0 0.0
    %3324 = vmatprep.subr.mxu0 0.0
    %3325 = vmatpush1.msra.mxu0 0.0
    %3326 = vmatprep.subr.mxu0 0.0
    %3327 = vmatpush1.msra.mxu0 0.0
    %3328 = vmatprep.subr.mxu0 0.0
    %3329 = vmatpush1.msra.mxu0 0.0
    %3330 = vmatprep.subr.mxu0 0.0
    %3331 = vmatpush1.msra.mxu0 0.0
    %3332 = vmatprep.mubr.f32.mxu0 0.0
    %3333 = vmatmul.mubr.f32.gmra.mrb[0].mxu0 %v3266
    %v3334 = vpop.f32.mrb[0].mxu0
    %v3335 = vadd.f32 0.0, %v3334
    %v3336 = vpop.f32.mrb[0].mxu0
    %3337 = vdwg.mxu0
    %3338 = vrot.lane.b32.xlu0 %v323, 72
    %v3339 = vpop.permute.xlu0 %3338
    %v3342 = vsel %vm476, %v3261, 0
    %3344 = vmatprep.subr.mxu0 0.0
    %3345 = vmatpush1.msra.mxu0 %v3339
    %3346 = vmatprep.subr.mxu0 0.0
    %3347 = vmatpush1.msra.mxu0 0.0
    %3348 = vmatprep.subr.mxu0 0.0
    %3349 = vmatpush1.msra.mxu0 0.0
    %3350 = vmatprep.subr.mxu0 0.0
    %3351 = vmatpush1.msra.mxu0 0.0
    %3352 = vmatprep.subr.mxu0 0.0
    %3353 = vmatpush1.msra.mxu0 0.0
    %3354 = vmatprep.subr.mxu0 0.0
    %3355 = vmatpush1.msra.mxu0 0.0
    %3356 = vmatprep.subr.mxu0 0.0
    %3357 = vmatpush1.msra.mxu0 0.0
    %3358 = vmatprep.subr.mxu0 0.0
    %3359 = vmatpush1.msra.mxu0 0.0
    %3360 = vmatprep.subr.mxu0 0.0
    %3361 = vmatpush1.msra.mxu0 0.0
    %3362 = vmatprep.subr.mxu0 0.0
    %3363 = vmatpush1.msra.mxu0 0.0
    %3364 = vmatprep.subr.mxu0 0.0
    %3365 = vmatpush1.msra.mxu0 0.0
    %3366 = vmatprep.subr.mxu0 0.0
    %3367 = vmatpush1.msra.mxu0 0.0
    %3368 = vmatprep.subr.mxu0 0.0
    %3369 = vmatpush1.msra.mxu0 0.0
    %3370 = vmatprep.subr.mxu0 0.0
    %3371 = vmatpush1.msra.mxu0 0.0
    %3372 = vmatprep.subr.mxu0 0.0
    %3373 = vmatpush1.msra.mxu0 0.0
    %3374 = vmatprep.subr.mxu0 0.0
    %3375 = vmatpush1.msra.mxu0 0.0
    %3376 = vmatprep.subr.mxu0 0.0
    %3377 = vmatpush1.msra.mxu0 0.0
    %3378 = vmatprep.subr.mxu0 0.0
    %3379 = vmatpush1.msra.mxu0 0.0
    %3380 = vmatprep.subr.mxu0 0.0
    %3381 = vmatpush1.msra.mxu0 0.0
    %3382 = vmatprep.subr.mxu0 0.0
    %3383 = vmatpush1.msra.mxu0 0.0
    %3384 = vmatprep.subr.mxu0 0.0
    %3385 = vmatpush1.msra.mxu0 0.0
    %3386 = vmatprep.subr.mxu0 0.0
    %3387 = vmatpush1.msra.mxu0 0.0
    %3388 = vmatprep.subr.mxu0 0.0
    %3389 = vmatpush1.msra.mxu0 0.0
    %3390 = vmatprep.subr.mxu0 0.0
    %3391 = vmatpush1.msra.mxu0 0.0
    %3392 = vmatprep.subr.mxu0 0.0
    %3393 = vmatpush1.msra.mxu0 0.0
    %3394 = vmatprep.subr.mxu0 0.0
    %3395 = vmatpush1.msra.mxu0 0.0
    %3396 = vmatprep.subr.mxu0 0.0
    %3397 = vmatpush1.msra.mxu0 0.0
    %3398 = vmatprep.subr.mxu0 0.0
    %3399 = vmatpush1.msra.mxu0 0.0
    %3400 = vmatprep.subr.mxu0 0.0
    %3401 = vmatpush1.msra.mxu0 0.0
    %3402 = vmatprep.subr.mxu0 0.0
    %3403 = vmatpush1.msra.mxu0 0.0
    %3404 = vmatprep.subr.mxu0 0.0
    %3405 = vmatpush1.msra.mxu0 0.0
    %3406 = vmatprep.subr.mxu0 0.0
    %3407 = vmatpush1.msra.mxu0 0.0
    %3408 = vmatprep.mubr.f32.mxu0 0.0
    %3409 = vmatmul.mubr.f32.gmra.mrb[0].mxu0 %v3342
    %v3410 = vpop.f32.mrb[0].mxu0
    %v3411 = vadd.f32 0.0, %v3410
    %v3412 = vpop.f32.mrb[0].mxu0
    %3413 = vdwg.mxu0
    %3416 = vrot.lane.b32.xlu0 %v2667, 8
    %v3417 = vpop.permute.xlu0 %3416
    %3418 = vrot.lane.b32.xlu0 %v2743, 8
    %v3419 = vpop.permute.xlu0 %3418
    %3424 = vrot.lane.b32.xlu0 %v3001, 16
    %v3425 = vpop.permute.xlu0 %3424
    %3426 = vrot.lane.b32.xlu0 %v3077, 16
    %v3427 = vpop.permute.xlu0 %3426
    %3432 = vrot.lane.b32.xlu0 %v3335, 24
    %v3433 = vpop.permute.xlu0 %3432
    %3434 = vrot.lane.b32.xlu0 %v3411, 24
    %v3435 = vpop.permute.xlu0 %3434
    %v3438 = vsel %vm476, %v2333, %v3417
    %v3439 = vsel %vm476, %v2409, %v3419
    %v3440 = vsel %vm1834, %v3438, %v3425
    %v3441 = vsel %vm1834, %v3439, %v3427
    %v3442 = vsel %vm1837, %v3440, %v3433
    %v3443 = vsel %vm1837, %v3441, %v3435
    %v3444 = vld [vmem:[%s14] sm:$0xff]
    %v3445 = vld [vmem:[%s14 + $0x8] sm:$0xff]
    %v3446 = vld [vmem:[%s14 + $0x10] sm:$0xff]
    %v3447 = vld [vmem:[%s14 + $0x18] sm:$0xff]
    %v3449 = vsel %vm244, %v3442, 0
    %v3452 = vsel %vm244, %v3443, 0
    %3454 = vmatprep.subr.mxu0 0.0
    %3455 = vmatpush1.msra.mxu0 %v3444
    %3456 = vmatprep.subr.mxu0 0.0
    %3457 = vmatpush1.msra.mxu0 %v3445
    %3458 = vmatprep.subr.mxu0 0.0
    %3459 = vmatpush1.msra.mxu0 %v3446
    %3460 = vmatprep.subr.mxu0 0.0
    %3461 = vmatpush1.msra.mxu0 %v3447
    %3462 = vmatprep.subr.mxu0 0.0
    %3463 = vmatpush1.msra.mxu0 0.0
    %3464 = vmatprep.subr.mxu0 0.0
    %3465 = vmatpush1.msra.mxu0 0.0
    %3466 = vmatprep.subr.mxu0 0.0
    %3467 = vmatpush1.msra.mxu0 0.0
    %3468 = vmatprep.subr.mxu0 0.0
    %3469 = vmatpush1.msra.mxu0 0.0
    %3470 = vmatprep.subr.mxu0 0.0
    %3471 = vmatpush1.msra.mxu0 0.0
    %3472 = vmatprep.subr.mxu0 0.0
    %3473 = vmatpush1.msra.mxu0 0.0
    %3474 = vmatprep.subr.mxu0 0.0
    %3475 = vmatpush1.msra.mxu0 0.0
    %3476 = vmatprep.subr.mxu0 0.0
    %3477 = vmatpush1.msra.mxu0 0.0
    %3478 = vmatprep.subr.mxu0 0.0
    %3479 = vmatpush1.msra.mxu0 0.0
    %3480 = vmatprep.subr.mxu0 0.0
    %3481 = vmatpush1.msra.mxu0 0.0
    %3482 = vmatprep.subr.mxu0 0.0
    %3483 = vmatpush1.msra.mxu0 0.0
    %3484 = vmatprep.subr.mxu0 0.0
    %3485 = vmatpush1.msra.mxu0 0.0
    %3486 = vmatprep.subr.mxu0 0.0
    %3487 = vmatpush1.msra.mxu0 0.0
    %3488 = vmatprep.subr.mxu0 0.0
    %3489 = vmatpush1.msra.mxu0 0.0
    %3490 = vmatprep.subr.mxu0 0.0
    %3491 = vmatpush1.msra.mxu0 0.0
    %3492 = vmatprep.subr.mxu0 0.0
    %3493 = vmatpush1.msra.mxu0 0.0
    %3494 = vmatprep.subr.mxu0 0.0
    %3495 = vmatpush1.msra.mxu0 0.0
    %3496 = vmatprep.subr.mxu0 0.0
    %3497 = vmatpush1.msra.mxu0 0.0
    %3498 = vmatprep.subr.mxu0 0.0
    %3499 = vmatpush1.msra.mxu0 0.0
    %3500 = vmatprep.subr.mxu0 0.0
    %3501 = vmatpush1.msra.mxu0 0.0
    %3502 = vmatprep.subr.mxu0 0.0
    %3503 = vmatpush1.msra.mxu0 0.0
    %3504 = vmatprep.subr.mxu0 0.0
    %3505 = vmatpush1.msra.mxu0 0.0
    %3506 = vmatprep.subr.mxu0 0.0
    %3507 = vmatpush1.msra.mxu0 0.0
    %3508 = vmatprep.subr.mxu0 0.0
    %3509 = vmatpush1.msra.mxu0 0.0
    %3510 = vmatprep.subr.mxu0 0.0
    %3511 = vmatpush1.msra.mxu0 0.0
    %3512 = vmatprep.subr.mxu0 0.0
    %3513 = vmatpush1.msra.mxu0 0.0
    %3514 = vmatprep.subr.mxu0 0.0
    %3515 = vmatpush1.msra.mxu0 0.0
    %3516 = vmatprep.subr.mxu0 0.0
    %3517 = vmatpush1.msra.mxu0 0.0
    %3518 = vmatprep.mubr.f32.mxu0 0.0
    %3519 = vmatmul.mubr.f32.gmra.mrb[0].mxu0 %v3449
    %v3520 = vpop.f32.mrb[0].mxu0
    %v3521 = vadd.f32 0.0, %v3520
    %v3522 = vpop.f32.mrb[0].mxu0
    %3523 = vmatprep.mubr.f32.mxu0 0.0
    %3524 = vmatmul.mubr.f32.gmra.mrb[0].mxu0 %v3452
    %v3525 = vpop.f32.mrb[0].mxu0
    %v3526 = vadd.f32 0.0, %v3525
    %v3527 = vpop.f32.mrb[0].mxu0
    %3528 = vdwg.mxu0
    %v3529 = vadd.f32 %v1934, %v3521
    %v3530 = vadd.f32 %v1935, %v3526
    %v3531 = vld [vmem:[#allocation16] sm:$0x1]
    %v3533 = vlaneseq
    %v3534 = vshrl.u32 %v3533, 7
    %v3535 = vsub.s32 0, %v3534
    %v3536 = vrot.slane %v3531, %v3535
    %v3538 = vadd.f32 %v3529, %v3536
    %v3539 = vadd.f32 %v3530, %v3536
    %v3540 = vld [vmem:[#allocation7 + $0x2] sm:$0x1]
    %v3541 = vld [vmem:[#allocation8 + $0x2] sm:$0x1]
    %v3542 = vsel %vm244, %v3538, 0.0
    %3543 = vadd.xlane.f32.xlu0 %v3542
    %v3544 = vpop.xlane.xlu0 %3543
    %v3545 = vsel %vm244, %v3539, 0.0
    %3546 = vadd.xlane.f32.xlu0 %v3545
    %v3547 = vpop.xlane.xlu0 %3546
    %v3548 = vmul.f32 %v3544, %v334
    %v3549 = vmul.f32 %v3547, %v334
    %v3550 = vsub.f32 %v3538, %v3548
    %v3551 = vsub.f32 %v3539, %v3549
    %v3552 = vmul.f32 %v3550, %v3550
    %v3553 = vmul.f32 %v3551, %v3551
    %v3554 = vsel %vm244, %v3552, 0.0
    %3555 = vadd.xlane.f32.xlu0 %v3554
    %v3556 = vpop.xlane.xlu0 %3555
    %v3557 = vsel %vm244, %v3553, 0.0
    %3558 = vadd.xlane.f32.xlu0 %v3557
    %v3559 = vpop.xlane.xlu0 %3558
    %v3560 = vmul.f32 %v3556, 0.032258064
    %v3561 = vmul.f32 %v3559, 0.032258064
    %v3562 = vlaneseq
    %v3563 = vshrl.u32 %v3562, 7
    %v3564 = vsub.s32 0, %v3563
    %v3565 = vrot.slane %v3540, %v3564
    %v3566 = vmul.f32 %v3565, %v3550
    %v3567 = vmul.f32 %v3565, %v3551
    %v3568 = vrsqrt.pop %v3560
    %v3569 = vmul.f32 %v3560, %v3568
    %vm3570 = vcmp.eq.f32.partialorder %v3560, inf
    %v3571 = vsel %vm3570, %v3560, %v3569
    %vm3572 = vcmp.eq.f32.partialorder %v3560, 0.0
    %v3573 = vand.u32 %v3560, 2147483648
    %v3574 = vsel %vm3572, %v3573, %v3571
    %v3575 = vrsqrt.pop %v3561
    %v3576 = vmul.f32 %v3561, %v3575
    %vm3577 = vcmp.eq.f32.partialorder %v3561, inf
    %v3578 = vsel %vm3577, %v3561, %v3576
    %vm3579 = vcmp.eq.f32.partialorder %v3561, 0.0
    %v3580 = vand.u32 %v3561, 2147483648
    %v3581 = vsel %vm3579, %v3580, %v3578
    %v3582 = vadd.f32 %v3574, 1e-06
    %v3583 = vadd.f32 %v3581, 1e-06
    %v3584 = vrcp.pop %v3582
    %v3585 = vmul.f32 %v3566, %v3584
    %v3586 = vrcp.pop %v3583
    %v3587 = vmul.f32 %v3567, %v3586
    %v3588 = vlaneseq
    %v3589 = vshrl.u32 %v3588, 7
    %v3590 = vsub.s32 0, %v3589
    %v3591 = vrot.slane %v3541, %v3590
    %v3592 = vadd.f32 %v3585, %v3591
    %v3593 = vadd.f32 %v3587, %v3591
    %v3594 = vld [vmem:[#allocation17] sm:$0xff]
    %v3595 = vld [vmem:[#allocation17 + $0x8] sm:$0xff]
    %v3596 = vld [vmem:[#allocation17 + $0x10] sm:$0xff]
    %v3597 = vld [vmem:[#allocation17 + $0x18] sm:$0xff]
    %v3598 = vld [vmem:[#allocation19] sm:$0x1]
    %v3600 = vlaneseq
    %v3601 = vshrl.u32 %v3600, 7
    %v3602 = vsub.s32 0, %v3601
    %v3603 = vrot.slane %v3598, %v3602
    %v3606 = vsel %vm244, %v3592, 0
    %v3609 = vsel %vm244, %v3593, 0
    %3611 = vmatprep.subr.mxu0 0.0
    %3612 = vmatpush1.msra.mxu0 %v3594
    %3613 = vmatprep.subr.mxu0 0.0
    %3614 = vmatpush1.msra.mxu0 %v3595
    %3615 = vmatprep.subr.mxu0 0.0
    %3616 = vmatpush1.msra.mxu0 %v3596
    %3617 = vmatprep.subr.mxu0 0.0
    %3618 = vmatpush1.msra.mxu0 %v3597
    %3619 = vmatprep.subr.mxu0 0.0
    %3620 = vmatpush1.msra.mxu0 0.0
    %3621 = vmatprep.subr.mxu0 0.0
    %3622 = vmatpush1.msra.mxu0 0.0
    %3623 = vmatprep.subr.mxu0 0.0
    %3624 = vmatpush1.msra.mxu0 0.0
    %3625 = vmatprep.subr.mxu0 0.0
    %3626 = vmatpush1.msra.mxu0 0.0
    %3627 = vmatprep.subr.mxu0 0.0
    %3628 = vmatpush1.msra.mxu0 0.0
    %3629 = vmatprep.subr.mxu0 0.0
    %3630 = vmatpush1.msra.mxu0 0.0
    %3631 = vmatprep.subr.mxu0 0.0
    %3632 = vmatpush1.msra.mxu0 0.0
    %3633 = vmatprep.subr.mxu0 0.0
    %3634 = vmatpush1.msra.mxu0 0.0
    %3635 = vmatprep.subr.mxu0 0.0
    %3636 = vmatpush1.msra.mxu0 0.0
    %3637 = vmatprep.subr.mxu0 0.0
    %3638 = vmatpush1.msra.mxu0 0.0
    %3639 = vmatprep.subr.mxu0 0.0
    %3640 = vmatpush1.msra.mxu0 0.0
    %3641 = vmatprep.subr.mxu0 0.0
    %3642 = vmatpush1.msra.mxu0 0.0
    %3643 = vmatprep.subr.mxu0 0.0
    %3644 = vmatpush1.msra.mxu0 0.0
    %3645 = vmatprep.subr.mxu0 0.0
    %3646 = vmatpush1.msra.mxu0 0.0
    %3647 = vmatprep.subr.mxu0 0.0
    %3648 = vmatpush1.msra.mxu0 0.0
    %3649 = vmatprep.subr.mxu0 0.0
    %3650 = vmatpush1.msra.mxu0 0.0
    %3651 = vmatprep.subr.mxu0 0.0
    %3652 = vmatpush1.msra.mxu0 0.0
    %3653 = vmatprep.subr.mxu0 0.0
    %3654 = vmatpush1.msra.mxu0 0.0
    %3655 = vmatprep.subr.mxu0 0.0
    %3656 = vmatpush1.msra.mxu0 0.0
    %3657 = vmatprep.subr.mxu0 0.0
    %3658 = vmatpush1.msra.mxu0 0.0
    %3659 = vmatprep.subr.mxu0 0.0
    %3660 = vmatpush1.msra.mxu0 0.0
    %3661 = vmatprep.subr.mxu0 0.0
    %3662 = vmatpush1.msra.mxu0 0.0
    %3663 = vmatprep.subr.mxu0 0.0
    %3664 = vmatpush1.msra.mxu0 0.0
    %3665 = vmatprep.subr.mxu0 0.0
    %3666 = vmatpush1.msra.mxu0 0.0
    %3667 = vmatprep.subr.mxu0 0.0
    %3668 = vmatpush1.msra.mxu0 0.0
    %3669 = vmatprep.subr.mxu0 0.0
    %3670 = vmatpush1.msra.mxu0 0.0
    %3671 = vmatprep.subr.mxu0 0.0
    %3672 = vmatpush1.msra.mxu0 0.0
    %3673 = vmatprep.subr.mxu0 0.0
    %3674 = vmatpush1.msra.mxu0 0.0
    %3675 = vmatprep.mubr.f32.mxu0 0.0
    %3676 = vmatmul.mubr.f32.gmra.mrb[0].mxu0 %v3606
    %v3677 = vpop.f32.mrb[0].mxu0
    %v3678 = vadd.f32 %v3603, %v3677
    %v3679 = vpop.f32.mrb[0].mxu0
    %3680 = vmatprep.mubr.f32.mxu0 0.0
    %3681 = vmatmul.mubr.f32.gmra.mrb[0].mxu0 %v3609
    %v3682 = vpop.f32.mrb[0].mxu0
    %v3683 = vadd.f32 %v3603, %v3682
    %v3684 = vpop.f32.mrb[0].mxu0
    %3685 = vdwg.mxu0
    %v3686 = vmax.f32 %v3678, 0.0
    %v3687 = vmax.f32 %v3683, 0.0
    %v3688 = vld [vmem:[%s18] sm:$0xff]
    %v3689 = vld [vmem:[%s18 + $0x8] sm:$0xff]
    %v3690 = vld [vmem:[%s18 + $0x10] sm:$0xff]
    %v3691 = vld [vmem:[%s18 + $0x18] sm:$0xff]
    %v3692 = vld [vmem:[%s18 + $0x20] sm:$0xff]
    %v3693 = vld [vmem:[%s18 + $0x28] sm:$0xff]
    %v3694 = vld [vmem:[%s18 + $0x30] sm:$0xff]
    %v3695 = vld [vmem:[%s18 + $0x38] sm:$0xff]
    %vm3696 = vcmask 523264
    %v3698 = vsel %vm3696, %v3686, 0
    %v3701 = vsel %vm3696, %v3687, 0
    %3703 = vmatprep.subr.mxu0 0.0
    %3704 = vmatpush1.msra.mxu0 %v3688
    %3705 = vmatprep.subr.mxu0 0.0
    %3706 = vmatpush1.msra.mxu0 %v3689
    %3707 = vmatprep.subr.mxu0 0.0
    %3708 = vmatpush1.msra.mxu0 %v3690
    %3709 = vmatprep.subr.mxu0 0.0
    %3710 = vmatpush1.msra.mxu0 %v3691
    %3711 = vmatprep.subr.mxu0 0.0
    %3712 = vmatpush1.msra.mxu0 %v3692
    %3713 = vmatprep.subr.mxu0 0.0
    %3714 = vmatpush1.msra.mxu0 %v3693
    %3715 = vmatprep.subr.mxu0 0.0
    %3716 = vmatpush1.msra.mxu0 %v3694
    %3717 = vmatprep.subr.mxu0 0.0
    %3718 = vmatpush1.msra.mxu0 %v3695
    %3719 = vmatprep.subr.mxu0 0.0
    %3720 = vmatpush1.msra.mxu0 0.0
    %3721 = vmatprep.subr.mxu0 0.0
    %3722 = vmatpush1.msra.mxu0 0.0
    %3723 = vmatprep.subr.mxu0 0.0
    %3724 = vmatpush1.msra.mxu0 0.0
    %3725 = vmatprep.subr.mxu0 0.0
    %3726 = vmatpush1.msra.mxu0 0.0
    %3727 = vmatprep.subr.mxu0 0.0
    %3728 = vmatpush1.msra.mxu0 0.0
    %3729 = vmatprep.subr.mxu0 0.0
    %3730 = vmatpush1.msra.mxu0 0.0
    %3731 = vmatprep.subr.mxu0 0.0
    %3732 = vmatpush1.msra.mxu0 0.0
    %3733 = vmatprep.subr.mxu0 0.0
    %3734 = vmatpush1.msra.mxu0 0.0
    %3735 = vmatprep.subr.mxu0 0.0
    %3736 = vmatpush1.msra.mxu0 0.0
    %3737 = vmatprep.subr.mxu0 0.0
    %3738 = vmatpush1.msra.mxu0 0.0
    %3739 = vmatprep.subr.mxu0 0.0
    %3740 = vmatpush1.msra.mxu0 0.0
    %3741 = vmatprep.subr.mxu0 0.0
    %3742 = vmatpush1.msra.mxu0 0.0
    %3743 = vmatprep.subr.mxu0 0.0
    %3744 = vmatpush1.msra.mxu0 0.0
    %3745 = vmatprep.subr.mxu0 0.0
    %3746 = vmatpush1.msra.mxu0 0.0
    %3747 = vmatprep.subr.mxu0 0.0
    %3748 = vmatpush1.msra.mxu0 0.0
    %3749 = vmatprep.subr.mxu0 0.0
    %3750 = vmatpush1.msra.mxu0 0.0
    %3751 = vmatprep.subr.mxu0 0.0
    %3752 = vmatpush1.msra.mxu0 0.0
    %3753 = vmatprep.subr.mxu0 0.0
    %3754 = vmatpush1.msra.mxu0 0.0
    %3755 = vmatprep.subr.mxu0 0.0
    %3756 = vmatpush1.msra.mxu0 0.0
    %3757 = vmatprep.subr.mxu0 0.0
    %3758 = vmatpush1.msra.mxu0 0.0
    %3759 = vmatprep.subr.mxu0 0.0
    %3760 = vmatpush1.msra.mxu0 0.0
    %3761 = vmatprep.subr.mxu0 0.0
    %3762 = vmatpush1.msra.mxu0 0.0
    %3763 = vmatprep.subr.mxu0 0.0
    %3764 = vmatpush1.msra.mxu0 0.0
    %3765 = vmatprep.subr.mxu0 0.0
    %3766 = vmatpush1.msra.mxu0 0.0
    %3767 = vmatprep.mubr.f32.mxu0 0.0
    %3768 = vmatmul.mubr.f32.gmra.mrb[0].mxu0 %v3698
    %v3769 = vpop.f32.mrb[0].mxu0
    %v3770 = vadd.f32 0.0, %v3769
    %v3771 = vpop.f32.mrb[0].mxu0
    %3772 = vmatprep.mubr.f32.mxu0 0.0
    %3773 = vmatmul.mubr.f32.gmra.mrb[0].mxu0 %v3701
    %v3774 = vpop.f32.mrb[0].mxu0
    %v3775 = vadd.f32 0.0, %v3774
    %v3776 = vpop.f32.mrb[0].mxu0
    %3777 = vdwg.mxu0
    %v3778 = vadd.f32 %v3538, %v3770
    %v3779 = vadd.f32 %v3539, %v3775
    %v3780 = vld [vmem:[#allocation20] sm:$0x1]
    %v3782 = vlaneseq
    %v3783 = vshrl.u32 %v3782, 7
    %v3784 = vsub.s32 0, %v3783
    %v3785 = vrot.slane %v3780, %v3784
    %v3787 = vadd.f32 %v3778, %v3785
    %v3788 = vadd.f32 %v3779, %v3785
    %v3789 = vld [vmem:[#allocation7 + $0x3] sm:$0x1]
    %v3790 = vld [vmem:[#allocation8 + $0x3] sm:$0x1]
    %v3791 = vsel %vm244, %v3787, 0.0
    %3792 = vadd.xlane.f32.xlu0 %v3791
    %v3793 = vpop.xlane.xlu0 %3792
    %v3794 = vsel %vm244, %v3788, 0.0
    %3795 = vadd.xlane.f32.xlu0 %v3794
    %v3796 = vpop.xlane.xlu0 %3795
    %v3797 = vmul.f32 %v3793, %v334
    %v3798 = vmul.f32 %v3796, %v334
    %v3799 = vsub.f32 %v3787, %v3797
    %v3800 = vsub.f32 %v3788, %v3798
    %v3801 = vmul.f32 %v3799, %v3799
    %v3802 = vmul.f32 %v3800, %v3800
    %v3803 = vsel %vm244, %v3801, 0.0
    %3804 = vadd.xlane.f32.xlu0 %v3803
    %v3805 = vpop.xlane.xlu0 %3804
    %v3806 = vsel %vm244, %v3802, 0.0
    %3807 = vadd.xlane.f32.xlu0 %v3806
    %v3808 = vpop.xlane.xlu0 %3807
    %v3809 = vmul.f32 %v3805, 0.032258064
    %v3810 = vmul.f32 %v3808, 0.032258064
    %v3811 = vlaneseq
    %v3812 = vshrl.u32 %v3811, 7
    %v3813 = vsub.s32 0, %v3812
    %v3814 = vrot.slane %v3789, %v3813
    %v3815 = vmul.f32 %v3814, %v3799
    %v3816 = vmul.f32 %v3814, %v3800
    %v3817 = vrsqrt.pop %v3809
    %v3818 = vmul.f32 %v3809, %v3817
    %vm3819 = vcmp.eq.f32.partialorder %v3809, inf
    %v3820 = vsel %vm3819, %v3809, %v3818
    %vm3821 = vcmp.eq.f32.partialorder %v3809, 0.0
    %v3822 = vand.u32 %v3809, 2147483648
    %v3823 = vsel %vm3821, %v3822, %v3820
    %v3824 = vrsqrt.pop %v3810
    %v3825 = vmul.f32 %v3810, %v3824
    %vm3826 = vcmp.eq.f32.partialorder %v3810, inf
    %v3827 = vsel %vm3826, %v3810, %v3825
    %vm3828 = vcmp.eq.f32.partialorder %v3810, 0.0
    %v3829 = vand.u32 %v3810, 2147483648
    %v3830 = vsel %vm3828, %v3829, %v3827
    %v3831 = vadd.f32 %v3823, 1e-06
    %v3832 = vadd.f32 %v3830, 1e-06
    %v3833 = vrcp.pop %v3831
    %v3834 = vmul.f32 %v3815, %v3833
    %v3835 = vrcp.pop %v3832
    %v3836 = vmul.f32 %v3816, %v3835
    %v3837 = vlaneseq
    %v3838 = vshrl.u32 %v3837, 7
    %v3839 = vsub.s32 0, %v3838
    %v3840 = vrot.slane %v3790, %v3839
    %v3841 = vadd.f32 %v3834, %v3840
    %v3842 = vadd.f32 %v3836, %v3840
    %s3843 = scalar_lea.vmem %s6, 32
    %v3844 = vld [vmem:[%s3843] sm:$0xff]
    %v3845 = vld [vmem:[%s3843 + $0x8] sm:$0xff]
    %v3846 = vld [vmem:[%s3843 + $0x10] sm:$0xff]
    %v3847 = vld [vmem:[%s3843 + $0x18] sm:$0xff]
    %s3848 = scalar_lea.vmem [#allocation10], 1
    %v3849 = vld [vmem:[%s3848] sm:$0x1]
    %v3851 = vlaneseq
    %v3852 = vshrl.u32 %v3851, 7
    %v3853 = vsub.s32 0, %v3852
    %v3854 = vrot.slane %v3849, %v3853
    %v3857 = vsel %vm244, %v3841, 0
    %v3860 = vsel %vm244, %v3842, 0
    %3862 = vmatprep.subr.mxu0 0.0
    %3863 = vmatpush1.msra.mxu0 %v3844
    %3864 = vmatprep.subr.mxu0 0.0
    %3865 = vmatpush1.msra.mxu0 %v3845
    %3866 = vmatprep.subr.mxu0 0.0
    %3867 = vmatpush1.msra.mxu0 %v3846
    %3868 = vmatprep.subr.mxu0 0.0
    %3869 = vmatpush1.msra.mxu0 %v3847
    %3870 = vmatprep.subr.mxu0 0.0
    %3871 = vmatpush1.msra.mxu0 0.0
    %3872 = vmatprep.subr.mxu0 0.0
    %3873 = vmatpush1.msra.mxu0 0.0
    %3874 = vmatprep.subr.mxu0 0.0
    %3875 = vmatpush1.msra.mxu0 0.0
    %3876 = vmatprep.subr.mxu0 0.0
    %3877 = vmatpush1.msra.mxu0 0.0
    %3878 = vmatprep.subr.mxu0 0.0
    %3879 = vmatpush1.msra.mxu0 0.0
    %3880 = vmatprep.subr.mxu0 0.0
    %3881 = vmatpush1.msra.mxu0 0.0
    %3882 = vmatprep.subr.mxu0 0.0
    %3883 = vmatpush1.msra.mxu0 0.0
    %3884 = vmatprep.subr.mxu0 0.0
    %3885 = vmatpush1.msra.mxu0 0.0
    %3886 = vmatprep.subr.mxu0 0.0
    %3887 = vmatpush1.msra.mxu0 0.0
    %3888 = vmatprep.subr.mxu0 0.0
    %3889 = vmatpush1.msra.mxu0 0.0
    %3890 = vmatprep.subr.mxu0 0.0
    %3891 = vmatpush1.msra.mxu0 0.0
    %3892 = vmatprep.subr.mxu0 0.0
    %3893 = vmatpush1.msra.mxu0 0.0
    %3894 = vmatprep.subr.mxu0 0.0
    %3895 = vmatpush1.msra.mxu0 0.0
    %3896 = vmatprep.subr.mxu0 0.0
    %3897 = vmatpush1.msra.mxu0 0.0
    %3898 = vmatprep.subr.mxu0 0.0
    %3899 = vmatpush1.msra.mxu0 0.0
    %3900 = vmatprep.subr.mxu0 0.0
    %3901 = vmatpush1.msra.mxu0 0.0
    %3902 = vmatprep.subr.mxu0 0.0
    %3903 = vmatpush1.msra.mxu0 0.0
    %3904 = vmatprep.subr.mxu0 0.0
    %3905 = vmatpush1.msra.mxu0 0.0
    %3906 = vmatprep.subr.mxu0 0.0
    %3907 = vmatpush1.msra.mxu0 0.0
    %3908 = vmatprep.subr.mxu0 0.0
    %3909 = vmatpush1.msra.mxu0 0.0
    %3910 = vmatprep.subr.mxu0 0.0
    %3911 = vmatpush1.msra.mxu0 0.0
    %3912 = vmatprep.subr.mxu0 0.0
    %3913 = vmatpush1.msra.mxu0 0.0
    %3914 = vmatprep.subr.mxu0 0.0
    %3915 = vmatpush1.msra.mxu0 0.0
    %3916 = vmatprep.subr.mxu0 0.0
    %3917 = vmatpush1.msra.mxu0 0.0
    %3918 = vmatprep.subr.mxu0 0.0
    %3919 = vmatpush1.msra.mxu0 0.0
    %3920 = vmatprep.subr.mxu0 0.0
    %3921 = vmatpush1.msra.mxu0 0.0
    %3922 = vmatprep.subr.mxu0 0.0
    %3923 = vmatpush1.msra.mxu0 0.0
    %3924 = vmatprep.subr.mxu0 0.0
    %3925 = vmatpush1.msra.mxu0 0.0
    %3926 = vmatprep.mubr.f32.mxu0 0.0
    %3927 = vmatmul.mubr.f32.gmra.mrb[0].mxu0 %v3857
    %v3928 = vpop.f32.mrb[0].mxu0
    %v3929 = vadd.f32 %v3854, %v3928
    %v3930 = vpop.f32.mrb[0].mxu0
    %3931 = vmatprep.mubr.f32.mxu0 0.0
    %3932 = vmatmul.mubr.f32.gmra.mrb[0].mxu0 %v3860
    %v3933 = vpop.f32.mrb[0].mxu0
    %v3934 = vadd.f32 %v3854, %v3933
    %v3935 = vpop.f32.mrb[0].mxu0
    %3936 = vdwg.mxu0
    %3938 = vrot.lane.b32.xlu0 %v3929, 96
    %v3939 = vpop.permute.xlu0 %3938
    %v3940 = vsel %vm476, %v3929, 0
    %v3942 = vsel %vm476, %v3939, 0
    %3944 = vmatprep.subr.mxu0 0.0
    %3945 = vmatpush1.xpose.msra.mxu0 %v3942
    %3946 = vmatprep.subr.mxu0 0.0
    %3947 = vmatpush1.xpose.msra.mxu0 0.0
    %3948 = vmatprep.subr.mxu0 0.0
    %3949 = vmatpush1.xpose.msra.mxu0 0.0
    %3950 = vmatprep.subr.mxu0 0.0
    %3951 = vmatpush1.xpose.msra.mxu0 0.0
    %3952 = vmatprep.subr.mxu0 0.0
    %3953 = vmatpush1.xpose.msra.mxu0 0.0
    %3954 = vmatprep.subr.mxu0 0.0
    %3955 = vmatpush1.xpose.msra.mxu0 0.0
    %3956 = vmatprep.subr.mxu0 0.0
    %3957 = vmatpush1.xpose.msra.mxu0 0.0
    %3958 = vmatprep.subr.mxu0 0.0
    %3959 = vmatpush1.xpose.msra.mxu0 0.0
    %3960 = vmatprep.subr.mxu0 0.0
    %3961 = vmatpush1.xpose.msra.mxu0 0.0
    %3962 = vmatprep.subr.mxu0 0.0
    %3963 = vmatpush1.xpose.msra.mxu0 0.0
    %3964 = vmatprep.subr.mxu0 0.0
    %3965 = vmatpush1.xpose.msra.mxu0 0.0
    %3966 = vmatprep.subr.mxu0 0.0
    %3967 = vmatpush1.xpose.msra.mxu0 0.0
    %3968 = vmatprep.subr.mxu0 0.0
    %3969 = vmatpush1.xpose.msra.mxu0 0.0
    %3970 = vmatprep.subr.mxu0 0.0
    %3971 = vmatpush1.xpose.msra.mxu0 0.0
    %3972 = vmatprep.subr.mxu0 0.0
    %3973 = vmatpush1.xpose.msra.mxu0 0.0
    %3974 = vmatprep.subr.mxu0 0.0
    %3975 = vmatpush1.xpose.msra.mxu0 0.0
    %3976 = vmatprep.subr.mxu0 0.0
    %3977 = vmatpush1.xpose.msra.mxu0 0.0
    %3978 = vmatprep.subr.mxu0 0.0
    %3979 = vmatpush1.xpose.msra.mxu0 0.0
    %3980 = vmatprep.subr.mxu0 0.0
    %3981 = vmatpush1.xpose.msra.mxu0 0.0
    %3982 = vmatprep.subr.mxu0 0.0
    %3983 = vmatpush1.xpose.msra.mxu0 0.0
    %3984 = vmatprep.subr.mxu0 0.0
    %3985 = vmatpush1.xpose.msra.mxu0 0.0
    %3986 = vmatprep.subr.mxu0 0.0
    %3987 = vmatpush1.xpose.msra.mxu0 0.0
    %3988 = vmatprep.subr.mxu0 0.0
    %3989 = vmatpush1.xpose.msra.mxu0 0.0
    %3990 = vmatprep.subr.mxu0 0.0
    %3991 = vmatpush1.xpose.msra.mxu0 0.0
    %3992 = vmatprep.subr.mxu0 0.0
    %3993 = vmatpush1.xpose.msra.mxu0 0.0
    %3994 = vmatprep.subr.mxu0 0.0
    %3995 = vmatpush1.xpose.msra.mxu0 0.0
    %3996 = vmatprep.subr.mxu0 0.0
    %3997 = vmatpush1.xpose.msra.mxu0 0.0
    %3998 = vmatprep.subr.mxu0 0.0
    %3999 = vmatpush1.xpose.msra.mxu0 0.0
    %4000 = vmatprep.subr.mxu0 0.0
    %4001 = vmatpush1.xpose.msra.mxu0 0.0
    %4002 = vmatprep.subr.mxu0 0.0
    %4003 = vmatpush1.xpose.msra.mxu0 0.0
    %4004 = vmatprep.subr.mxu0 0.0
    %4005 = vmatpush1.xpose.msra.mxu0 0.0
    %4006 = vmatprep.subr.mxu0 0.0
    %4007 = vmatpush1.xpose.msra.mxu0 0.0
    %4008 = vmatprep.mubr.f32.mxu0 0.0
    %4009 = vmatmul.mubr.f32.gmra.mrb[0].mxu0 %v3940
    %v4010 = vpop.f32.mrb[0].mxu0
    %v4011 = vadd.f32 0.0, %v4010
    %v4012 = vpop.f32.mrb[0].mxu0
    %4013 = vdwg.mxu0
    %4015 = vrot.lane.b32.xlu0 %v3934, 96
    %v4016 = vpop.permute.xlu0 %4015
    %v4017 = vsel %vm476, %v3934, 0
    %v4019 = vsel %vm476, %v4016, 0
    %4021 = vmatprep.subr.mxu0 0.0
    %4022 = vmatpush1.xpose.msra.mxu0 %v4019
    %4023 = vmatprep.subr.mxu0 0.0
    %4024 = vmatpush1.xpose.msra.mxu0 0.0
    %4025 = vmatprep.subr.mxu0 0.0
    %4026 = vmatpush1.xpose.msra.mxu0 0.0
    %4027 = vmatprep.subr.mxu0 0.0
    %4028 = vmatpush1.xpose.msra.mxu0 0.0
    %4029 = vmatprep.subr.mxu0 0.0
    %4030 = vmatpush1.xpose.msra.mxu0 0.0
    %4031 = vmatprep.subr.mxu0 0.0
    %4032 = vmatpush1.xpose.msra.mxu0 0.0
    %4033 = vmatprep.subr.mxu0 0.0
    %4034 = vmatpush1.xpose.msra.mxu0 0.0
    %4035 = vmatprep.subr.mxu0 0.0
    %4036 = vmatpush1.xpose.msra.mxu0 0.0
    %4037 = vmatprep.subr.mxu0 0.0
    %4038 = vmatpush1.xpose.msra.mxu0 0.0
    %4039 = vmatprep.subr.mxu0 0.0
    %4040 = vmatpush1.xpose.msra.mxu0 0.0
    %4041 = vmatprep.subr.mxu0 0.0
    %4042 = vmatpush1.xpose.msra.mxu0 0.0
    %4043 = vmatprep.subr.mxu0 0.0
    %4044 = vmatpush1.xpose.msra.mxu0 0.0
    %4045 = vmatprep.subr.mxu0 0.0
    %4046 = vmatpush1.xpose.msra.mxu0 0.0
    %4047 = vmatprep.subr.mxu0 0.0
    %4048 = vmatpush1.xpose.msra.mxu0 0.0
    %4049 = vmatprep.subr.mxu0 0.0
    %4050 = vmatpush1.xpose.msra.mxu0 0.0
    %4051 = vmatprep.subr.mxu0 0.0
    %4052 = vmatpush1.xpose.msra.mxu0 0.0
    %4053 = vmatprep.subr.mxu0 0.0
    %4054 = vmatpush1.xpose.msra.mxu0 0.0
    %4055 = vmatprep.subr.mxu0 0.0
    %4056 = vmatpush1.xpose.msra.mxu0 0.0
    %4057 = vmatprep.subr.mxu0 0.0
    %4058 = vmatpush1.xpose.msra.mxu0 0.0
    %4059 = vmatprep.subr.mxu0 0.0
    %4060 = vmatpush1.xpose.msra.mxu0 0.0
    %4061 = vmatprep.subr.mxu0 0.0
    %4062 = vmatpush1.xpose.msra.mxu0 0.0
    %4063 = vmatprep.subr.mxu0 0.0
    %4064 = vmatpush1.xpose.msra.mxu0 0.0
    %4065 = vmatprep.subr.mxu0 0.0
    %4066 = vmatpush1.xpose.msra.mxu0 0.0
    %4067 = vmatprep.subr.mxu0 0.0
    %4068 = vmatpush1.xpose.msra.mxu0 0.0
    %4069 = vmatprep.subr.mxu0 0.0
    %4070 = vmatpush1.xpose.msra.mxu0 0.0
    %4071 = vmatprep.subr.mxu0 0.0
    %4072 = vmatpush1.xpose.msra.mxu0 0.0
    %4073 = vmatprep.subr.mxu0 0.0
    %4074 = vmatpush1.xpose.msra.mxu0 0.0
    %4075 = vmatprep.subr.mxu0 0.0
    %4076 = vmatpush1.xpose.msra.mxu0 0.0
    %4077 = vmatprep.subr.mxu0 0.0
    %4078 = vmatpush1.xpose.msra.mxu0 0.0
    %4079 = vmatprep.subr.mxu0 0.0
    %4080 = vmatpush1.xpose.msra.mxu0 0.0
    %4081 = vmatprep.subr.mxu0 0.0
    %4082 = vmatpush1.xpose.msra.mxu0 0.0
    %4083 = vmatprep.subr.mxu0 0.0
    %4084 = vmatpush1.xpose.msra.mxu0 0.0
    %4085 = vmatprep.mubr.f32.mxu0 0.0
    %4086 = vmatmul.mubr.f32.gmra.mrb[0].mxu0 %v4017
    %v4087 = vpop.f32.mrb[0].mxu0
    %v4088 = vadd.f32 0.0, %v4087
    %v4089 = vpop.f32.mrb[0].mxu0
    %4090 = vdwg.mxu0
    %v4091 = vmul.f32 %v4011, 0.35355338
    %v4092 = vmul.f32 %v4088, 0.35355338
    %v4093 = vadd.f32 %v4091, %v229
    %v4094 = vadd.f32 %v4092, %v230
    %v4095 = vsel %vm476, %v4093, -inf
    %4096 = vmax.xlane.f32.xlu0 %v4095
    %v4097 = vpop.xlane.xlu0 %4096
    %v4098 = vsel %vm476, %v4094, -inf
    %4099 = vmax.xlane.f32.xlu0 %v4098
    %v4100 = vpop.xlane.xlu0 %4099
    %v4101 = vsub.f32 %v4093, %v4097
    %v4102 = vsub.f32 %v4094, %v4100
    %v4103 = vmul.f32 %v4101, 1.442695
    %v4104 = vpow.pop %v4103
    %v4105 = vmul.f32 %v4102, 1.442695
    %v4106 = vpow.pop %v4105
    %v4107 = vsel %vm476, %v4104, 0.0
    %4108 = vadd.xlane.f32.xlu0 %v4107
    %v4109 = vpop.xlane.xlu0 %4108
    %v4110 = vsel %vm476, %v4106, 0.0
    %4111 = vadd.xlane.f32.xlu0 %v4110
    %v4112 = vpop.xlane.xlu0 %4111
    %v4113 = vrcp.pop %v4109
    %v4114 = vmul.f32 %v4104, %v4113
    %v4115 = vrcp.pop %v4112
    %v4116 = vmul.f32 %v4106, %v4115
    %4117 = vrot.lane.b32.xlu0 %v3929, 64
    %v4118 = vpop.permute.xlu0 %4117
    %v4121 = vsel %vm476, %v4114, 0
    %4123 = vmatprep.subr.mxu0 0.0
    %4124 = vmatpush1.msra.mxu0 %v4118
    %4125 = vmatprep.subr.mxu0 0.0
    %4126 = vmatpush1.msra.mxu0 0.0
    %4127 = vmatprep.subr.mxu0 0.0
    %4128 = vmatpush1.msra.mxu0 0.0
    %4129 = vmatprep.subr.mxu0 0.0
    %4130 = vmatpush1.msra.mxu0 0.0
    %4131 = vmatprep.subr.mxu0 0.0
    %4132 = vmatpush1.msra.mxu0 0.0
    %4133 = vmatprep.subr.mxu0 0.0
    %4134 = vmatpush1.msra.mxu0 0.0
    %4135 = vmatprep.subr.mxu0 0.0
    %4136 = vmatpush1.msra.mxu0 0.0
    %4137 = vmatprep.subr.mxu0 0.0
    %4138 = vmatpush1.msra.mxu0 0.0
    %4139 = vmatprep.subr.mxu0 0.0
    %4140 = vmatpush1.msra.mxu0 0.0
    %4141 = vmatprep.subr.mxu0 0.0
    %4142 = vmatpush1.msra.mxu0 0.0
    %4143 = vmatprep.subr.mxu0 0.0
    %4144 = vmatpush1.msra.mxu0 0.0
    %4145 = vmatprep.subr.mxu0 0.0
    %4146 = vmatpush1.msra.mxu0 0.0
    %4147 = vmatprep.subr.mxu0 0.0
    %4148 = vmatpush1.msra.mxu0 0.0
    %4149 = vmatprep.subr.mxu0 0.0
    %4150 = vmatpush1.msra.mxu0 0.0
    %4151 = vmatprep.subr.mxu0 0.0
    %4152 = vmatpush1.msra.mxu0 0.0
    %4153 = vmatprep.subr.mxu0 0.0
    %4154 = vmatpush1.msra.mxu0 0.0
    %4155 = vmatprep.subr.mxu0 0.0
    %4156 = vmatpush1.msra.mxu0 0.0
    %4157 = vmatprep.subr.mxu0 0.0
    %4158 = vmatpush1.msra.mxu0 0.0
    %4159 = vmatprep.subr.mxu0 0.0
    %4160 = vmatpush1.msra.mxu0 0.0
    %4161 = vmatprep.subr.mxu0 0.0
    %4162 = vmatpush1.msra.mxu0 0.0
    %4163 = vmatprep.subr.mxu0 0.0
    %4164 = vmatpush1.msra.mxu0 0.0
    %4165 = vmatprep.subr.mxu0 0.0
    %4166 = vmatpush1.msra.mxu0 0.0
    %4167 = vmatprep.subr.mxu0 0.0
    %4168 = vmatpush1.msra.mxu0 0.0
    %4169 = vmatprep.subr.mxu0 0.0
    %4170 = vmatpush1.msra.mxu0 0.0
    %4171 = vmatprep.subr.mxu0 0.0
    %4172 = vmatpush1.msra.mxu0 0.0
    %4173 = vmatprep.subr.mxu0 0.0
    %4174 = vmatpush1.msra.mxu0 0.0
    %4175 = vmatprep.subr.mxu0 0.0
    %4176 = vmatpush1.msra.mxu0 0.0
    %4177 = vmatprep.subr.mxu0 0.0
    %4178 = vmatpush1.msra.mxu0 0.0
    %4179 = vmatprep.subr.mxu0 0.0
    %4180 = vmatpush1.msra.mxu0 0.0
    %4181 = vmatprep.subr.mxu0 0.0
    %4182 = vmatpush1.msra.mxu0 0.0
    %4183 = vmatprep.subr.mxu0 0.0
    %4184 = vmatpush1.msra.mxu0 0.0
    %4185 = vmatprep.subr.mxu0 0.0
    %4186 = vmatpush1.msra.mxu0 0.0
    %4187 = vmatprep.mubr.f32.mxu0 0.0
    %4188 = vmatmul.mubr.f32.gmra.mrb[0].mxu0 %v4121
    %v4189 = vpop.f32.mrb[0].mxu0
    %v4190 = vadd.f32 0.0, %v4189
    %v4191 = vpop.f32.mrb[0].mxu0
    %4192 = vdwg.mxu0
    %4193 = vrot.lane.b32.xlu0 %v3934, 64
    %v4194 = vpop.permute.xlu0 %4193
    %v4197 = vsel %vm476, %v4116, 0
    %4199 = vmatprep.subr.mxu0 0.0
    %4200 = vmatpush1.msra.mxu0 %v4194
    %4201 = vmatprep.subr.mxu0 0.0
    %4202 = vmatpush1.msra.mxu0 0.0
    %4203 = vmatprep.subr.mxu0 0.0
    %4204 = vmatpush1.msra.mxu0 0.0
    %4205 = vmatprep.subr.mxu0 0.0
    %4206 = vmatpush1.msra.mxu0 0.0
    %4207 = vmatprep.subr.mxu0 0.0
    %4208 = vmatpush1.msra.mxu0 0.0
    %4209 = vmatprep.subr.mxu0 0.0
    %4210 = vmatpush1.msra.mxu0 0.0
    %4211 = vmatprep.subr.mxu0 0.0
    %4212 = vmatpush1.msra.mxu0 0.0
    %4213 = vmatprep.subr.mxu0 0.0
    %4214 = vmatpush1.msra.mxu0 0.0
    %4215 = vmatprep.subr.mxu0 0.0
    %4216 = vmatpush1.msra.mxu0 0.0
    %4217 = vmatprep.subr.mxu0 0.0
    %4218 = vmatpush1.msra.mxu0 0.0
    %4219 = vmatprep.subr.mxu0 0.0
    %4220 = vmatpush1.msra.mxu0 0.0
    %4221 = vmatprep.subr.mxu0 0.0
    %4222 = vmatpush1.msra.mxu0 0.0
    %4223 = vmatprep.subr.mxu0 0.0
    %4224 = vmatpush1.msra.mxu0 0.0
    %4225 = vmatprep.subr.mxu0 0.0
    %4226 = vmatpush1.msra.mxu0 0.0
    %4227 = vmatprep.subr.mxu0 0.0
    %4228 = vmatpush1.msra.mxu0 0.0
    %4229 = vmatprep.subr.mxu0 0.0
    %4230 = vmatpush1.msra.mxu0 0.0
    %4231 = vmatprep.subr.mxu0 0.0
    %4232 = vmatpush1.msra.mxu0 0.0
    %4233 = vmatprep.subr.mxu0 0.0
    %4234 = vmatpush1.msra.mxu0 0.0
    %4235 = vmatprep.subr.mxu0 0.0
    %4236 = vmatpush1.msra.mxu0 0.0
    %4237 = vmatprep.subr.mxu0 0.0
    %4238 = vmatpush1.msra.mxu0 0.0
    %4239 = vmatprep.subr.mxu0 0.0
    %4240 = vmatpush1.msra.mxu0 0.0
    %4241 = vmatprep.subr.mxu0 0.0
    %4242 = vmatpush1.msra.mxu0 0.0
    %4243 = vmatprep.subr.mxu0 0.0
    %4244 = vmatpush1.msra.mxu0 0.0
    %4245 = vmatprep.subr.mxu0 0.0
    %4246 = vmatpush1.msra.mxu0 0.0
    %4247 = vmatprep.subr.mxu0 0.0
    %4248 = vmatpush1.msra.mxu0 0.0
    %4249 = vmatprep.subr.mxu0 0.0
    %4250 = vmatpush1.msra.mxu0 0.0
    %4251 = vmatprep.subr.mxu0 0.0
    %4252 = vmatpush1.msra.mxu0 0.0
    %4253 = vmatprep.subr.mxu0 0.0
    %4254 = vmatpush1.msra.mxu0 0.0
    %4255 = vmatprep.subr.mxu0 0.0
    %4256 = vmatpush1.msra.mxu0 0.0
    %4257 = vmatprep.subr.mxu0 0.0
    %4258 = vmatpush1.msra.mxu0 0.0
    %4259 = vmatprep.subr.mxu0 0.0
    %4260 = vmatpush1.msra.mxu0 0.0
    %4261 = vmatprep.subr.mxu0 0.0
    %4262 = vmatpush1.msra.mxu0 0.0
    %4263 = vmatprep.mubr.f32.mxu0 0.0
    %4264 = vmatmul.mubr.f32.gmra.mrb[0].mxu0 %v4197
    %v4265 = vpop.f32.mrb[0].mxu0
    %v4266 = vadd.f32 0.0, %v4265
    %v4267 = vpop.f32.mrb[0].mxu0
    %4268 = vdwg.mxu0
    %4269 = vrot.lane.b32.xlu0 %v3929, 120
    %v4270 = vpop.permute.xlu0 %4269
    %4271 = vrot.lane.b32.xlu0 %v3929, 88
    %v4272 = vpop.permute.xlu0 %4271
    %v4273 = vsel %vm476, %v4270, 0
    %v4275 = vsel %vm476, %v4272, 0
    %4277 = vmatprep.subr.mxu0 0.0
    %4278 = vmatpush1.xpose.msra.mxu0 %v4275
    %4279 = vmatprep.subr.mxu0 0.0
    %4280 = vmatpush1.xpose.msra.mxu0 0.0
    %4281 = vmatprep.subr.mxu0 0.0
    %4282 = vmatpush1.xpose.msra.mxu0 0.0
    %4283 = vmatprep.subr.mxu0 0.0
    %4284 = vmatpush1.xpose.msra.mxu0 0.0
    %4285 = vmatprep.subr.mxu0 0.0
    %4286 = vmatpush1.xpose.msra.mxu0 0.0
    %4287 = vmatprep.subr.mxu0 0.0
    %4288 = vmatpush1.xpose.msra.mxu0 0.0
    %4289 = vmatprep.subr.mxu0 0.0
    %4290 = vmatpush1.xpose.msra.mxu0 0.0
    %4291 = vmatprep.subr.mxu0 0.0
    %4292 = vmatpush1.xpose.msra.mxu0 0.0
    %4293 = vmatprep.subr.mxu0 0.0
    %4294 = vmatpush1.xpose.msra.mxu0 0.0
    %4295 = vmatprep.subr.mxu0 0.0
    %4296 = vmatpush1.xpose.msra.mxu0 0.0
    %4297 = vmatprep.subr.mxu0 0.0
    %4298 = vmatpush1.xpose.msra.mxu0 0.0
    %4299 = vmatprep.subr.mxu0 0.0
    %4300 = vmatpush1.xpose.msra.mxu0 0.0
    %4301 = vmatprep.subr.mxu0 0.0
    %4302 = vmatpush1.xpose.msra.mxu0 0.0
    %4303 = vmatprep.subr.mxu0 0.0
    %4304 = vmatpush1.xpose.msra.mxu0 0.0
    %4305 = vmatprep.subr.mxu0 0.0
    %4306 = vmatpush1.xpose.msra.mxu0 0.0
    %4307 = vmatprep.subr.mxu0 0.0
    %4308 = vmatpush1.xpose.msra.mxu0 0.0
    %4309 = vmatprep.subr.mxu0 0.0
    %4310 = vmatpush1.xpose.msra.mxu0 0.0
    %4311 = vmatprep.subr.mxu0 0.0
    %4312 = vmatpush1.xpose.msra.mxu0 0.0
    %4313 = vmatprep.subr.mxu0 0.0
    %4314 = vmatpush1.xpose.msra.mxu0 0.0
    %4315 = vmatprep.subr.mxu0 0.0
    %4316 = vmatpush1.xpose.msra.mxu0 0.0
    %4317 = vmatprep.subr.mxu0 0.0
    %4318 = vmatpush1.xpose.msra.mxu0 0.0
    %4319 = vmatprep.subr.mxu0 0.0
    %4320 = vmatpush1.xpose.msra.mxu0 0.0
    %4321 = vmatprep.subr.mxu0 0.0
    %4322 = vmatpush1.xpose.msra.mxu0 0.0
    %4323 = vmatprep.subr.mxu0 0.0
    %4324 = vmatpush1.xpose.msra.mxu0 0.0
    %4325 = vmatprep.subr.mxu0 0.0
    %4326 = vmatpush1.xpose.msra.mxu0 0.0
    %4327 = vmatprep.subr.mxu0 0.0
    %4328 = vmatpush1.xpose.msra.mxu0 0.0
    %4329 = vmatprep.subr.mxu0 0.0
    %4330 = vmatpush1.xpose.msra.mxu0 0.0
    %4331 = vmatprep.subr.mxu0 0.0
    %4332 = vmatpush1.xpose.msra.mxu0 0.0
    %4333 = vmatprep.subr.mxu0 0.0
    %4334 = vmatpush1.xpose.msra.mxu0 0.0
    %4335 = vmatprep.subr.mxu0 0.0
    %4336 = vmatpush1.xpose.msra.mxu0 0.0
    %4337 = vmatprep.subr.mxu0 0.0
    %4338 = vmatpush1.xpose.msra.mxu0 0.0
    %4339 = vmatprep.subr.mxu0 0.0
    %4340 = vmatpush1.xpose.msra.mxu0 0.0
    %4341 = vmatprep.mubr.f32.mxu0 0.0
    %4342 = vmatmul.mubr.f32.gmra.mrb[0].mxu0 %v4273
    %v4343 = vpop.f32.mrb[0].mxu0
    %v4344 = vadd.f32 0.0, %v4343
    %v4345 = vpop.f32.mrb[0].mxu0
    %4346 = vdwg.mxu0
    %4347 = vrot.lane.b32.xlu0 %v3934, 120
    %v4348 = vpop.permute.xlu0 %4347
    %4349 = vrot.lane.b32.xlu0 %v3934, 88
    %v4350 = vpop.permute.xlu0 %4349
    %v4351 = vsel %vm476, %v4348, 0
    %v4353 = vsel %vm476, %v4350, 0
    %4355 = vmatprep.subr.mxu0 0.0
    %4356 = vmatpush1.xpose.msra.mxu0 %v4353
    %4357 = vmatprep.subr.mxu0 0.0
    %4358 = vmatpush1.xpose.msra.mxu0 0.0
    %4359 = vmatprep.subr.mxu0 0.0
    %4360 = vmatpush1.xpose.msra.mxu0 0.0
    %4361 = vmatprep.subr.mxu0 0.0
    %4362 = vmatpush1.xpose.msra.mxu0 0.0
    %4363 = vmatprep.subr.mxu0 0.0
    %4364 = vmatpush1.xpose.msra.mxu0 0.0
    %4365 = vmatprep.subr.mxu0 0.0
    %4366 = vmatpush1.xpose.msra.mxu0 0.0
    %4367 = vmatprep.subr.mxu0 0.0
    %4368 = vmatpush1.xpose.msra.mxu0 0.0
    %4369 = vmatprep.subr.mxu0 0.0
    %4370 = vmatpush1.xpose.msra.mxu0 0.0
    %4371 = vmatprep.subr.mxu0 0.0
    %4372 = vmatpush1.xpose.msra.mxu0 0.0
    %4373 = vmatprep.subr.mxu0 0.0
    %4374 = vmatpush1.xpose.msra.mxu0 0.0
    %4375 = vmatprep.subr.mxu0 0.0
    %4376 = vmatpush1.xpose.msra.mxu0 0.0
    %4377 = vmatprep.subr.mxu0 0.0
    %4378 = vmatpush1.xpose.msra.mxu0 0.0
    %4379 = vmatprep.subr.mxu0 0.0
    %4380 = vmatpush1.xpose.msra.mxu0 0.0
    %4381 = vmatprep.subr.mxu0 0.0
    %4382 = vmatpush1.xpose.msra.mxu0 0.0
    %4383 = vmatprep.subr.mxu0 0.0
    %4384 = vmatpush1.xpose.msra.mxu0 0.0
    %4385 = vmatprep.subr.mxu0 0.0
    %4386 = vmatpush1.xpose.msra.mxu0 0.0
    %4387 = vmatprep.subr.mxu0 0.0
    %4388 = vmatpush1.xpose.msra.mxu0 0.0
    %4389 = vmatprep.subr.mxu0 0.0
    %4390 = vmatpush1.xpose.msra.mxu0 0.0
    %4391 = vmatprep.subr.mxu0 0.0
    %4392 = vmatpush1.xpose.msra.mxu0 0.0
    %4393 = vmatprep.subr.mxu0 0.0
    %4394 = vmatpush1.xpose.msra.mxu0 0.0
    %4395 = vmatprep.subr.mxu0 0.0
    %4396 = vmatpush1.xpose.msra.mxu0 0.0
    %4397 = vmatprep.subr.mxu0 0.0
    %4398 = vmatpush1.xpose.msra.mxu0 0.0
    %4399 = vmatprep.subr.mxu0 0.0
    %4400 = vmatpush1.xpose.msra.mxu0 0.0
    %4401 = vmatprep.subr.mxu0 0.0
    %4402 = vmatpush1.xpose.msra.mxu0 0.0
    %4403 = vmatprep.subr.mxu0 0.0
    %4404 = vmatpush1.xpose.msra.mxu0 0.0
    %4405 = vmatprep.subr.mxu0 0.0
    %4406 = vmatpush1.xpose.msra.mxu0 0.0
    %4407 = vmatprep.subr.mxu0 0.0
    %4408 = vmatpush1.xpose.msra.mxu0 0.0
    %4409 = vmatprep.subr.mxu0 0.0
    %4410 = vmatpush1.xpose.msra.mxu0 0.0
    %4411 = vmatprep.subr.mxu0 0.0
    %4412 = vmatpush1.xpose.msra.mxu0 0.0
    %4413 = vmatprep.subr.mxu0 0.0
    %4414 = vmatpush1.xpose.msra.mxu0 0.0
    %4415 = vmatprep.subr.mxu0 0.0
    %4416 = vmatpush1.xpose.msra.mxu0 0.0
    %4417 = vmatprep.subr.mxu0 0.0
    %4418 = vmatpush1.xpose.msra.mxu0 0.0
    %4419 = vmatprep.mubr.f32.mxu0 0.0
    %4420 = vmatmul.mubr.f32.gmra.mrb[0].mxu0 %v4351
    %v4421 = vpop.f32.mrb[0].mxu0
    %v4422 = vadd.f32 0.0, %v4421
    %v4423 = vpop.f32.mrb[0].mxu0
    %4424 = vdwg.mxu0
    %v4425 = vmul.f32 %v4344, 0.35355338
    %v4426 = vmul.f32 %v4422, 0.35355338
    %v4427 = vadd.f32 %v4425, %v229
    %v4428 = vadd.f32 %v4426, %v230
    %v4429 = vsel %vm476, %v4427, -inf
    %4430 = vmax.xlane.f32.xlu0 %v4429
    %v4431 = vpop.xlane.xlu0 %4430
    %v4432 = vsel %vm476, %v4428, -inf
    %4433 = vmax.xlane.f32.xlu0 %v4432
    %v4434 = vpop.xlane.xlu0 %4433
    %v4435 = vsub.f32 %v4427, %v4431
    %v4436 = vsub.f32 %v4428, %v4434
    %v4437 = vmul.f32 %v4435, 1.442695
    %v4438 = vpow.pop %v4437
    %v4439 = vmul.f32 %v4436, 1.442695
    %v4440 = vpow.pop %v4439
    %v4441 = vsel %vm476, %v4438, 0.0
    %4442 = vadd.xlane.f32.xlu0 %v4441
    %v4443 = vpop.xlane.xlu0 %4442
    %v4444 = vsel %vm476, %v4440, 0.0
    %4445 = vadd.xlane.f32.xlu0 %v4444
    %v4446 = vpop.xlane.xlu0 %4445
    %v4447 = vrcp.pop %v4443
    %v4448 = vmul.f32 %v4438, %v4447
    %v4449 = vrcp.pop %v4446
    %v4450 = vmul.f32 %v4440, %v4449
    %4451 = vrot.lane.b32.xlu0 %v3929, 56
    %v4452 = vpop.permute.xlu0 %4451
    %v4455 = vsel %vm476, %v4448, 0
    %4457 = vmatprep.subr.mxu0 0.0
    %4458 = vmatpush1.msra.mxu0 %v4452
    %4459 = vmatprep.subr.mxu0 0.0
    %4460 = vmatpush1.msra.mxu0 0.0
    %4461 = vmatprep.subr.mxu0 0.0
    %4462 = vmatpush1.msra.mxu0 0.0
    %4463 = vmatprep.subr.mxu0 0.0
    %4464 = vmatpush1.msra.mxu0 0.0
    %4465 = vmatprep.subr.mxu0 0.0
    %4466 = vmatpush1.msra.mxu0 0.0
    %4467 = vmatprep.subr.mxu0 0.0
    %4468 = vmatpush1.msra.mxu0 0.0
    %4469 = vmatprep.subr.mxu0 0.0
    %4470 = vmatpush1.msra.mxu0 0.0
    %4471 = vmatprep.subr.mxu0 0.0
    %4472 = vmatpush1.msra.mxu0 0.0
    %4473 = vmatprep.subr.mxu0 0.0
    %4474 = vmatpush1.msra.mxu0 0.0
    %4475 = vmatprep.subr.mxu0 0.0
    %4476 = vmatpush1.msra.mxu0 0.0
    %4477 = vmatprep.subr.mxu0 0.0
    %4478 = vmatpush1.msra.mxu0 0.0
    %4479 = vmatprep.subr.mxu0 0.0
    %4480 = vmatpush1.msra.mxu0 0.0
    %4481 = vmatprep.subr.mxu0 0.0
    %4482 = vmatpush1.msra.mxu0 0.0
    %4483 = vmatprep.subr.mxu0 0.0
    %4484 = vmatpush1.msra.mxu0 0.0
    %4485 = vmatprep.subr.mxu0 0.0
    %4486 = vmatpush1.msra.mxu0 0.0
    %4487 = vmatprep.subr.mxu0 0.0
    %4488 = vmatpush1.msra.mxu0 0.0
    %4489 = vmatprep.subr.mxu0 0.0
    %4490 = vmatpush1.msra.mxu0 0.0
    %4491 = vmatprep.subr.mxu0 0.0
    %4492 = vmatpush1.msra.mxu0 0.0
    %4493 = vmatprep.subr.mxu0 0.0
    %4494 = vmatpush1.msra.mxu0 0.0
    %4495 = vmatprep.subr.mxu0 0.0
    %4496 = vmatpush1.msra.mxu0 0.0
    %4497 = vmatprep.subr.mxu0 0.0
    %4498 = vmatpush1.msra.mxu0 0.0
    %4499 = vmatprep.subr.mxu0 0.0
    %4500 = vmatpush1.msra.mxu0 0.0
    %4501 = vmatprep.subr.mxu0 0.0
    %4502 = vmatpush1.msra.mxu0 0.0
    %4503 = vmatprep.subr.mxu0 0.0
    %4504 = vmatpush1.msra.mxu0 0.0
    %4505 = vmatprep.subr.mxu0 0.0
    %4506 = vmatpush1.msra.mxu0 0.0
    %4507 = vmatprep.subr.mxu0 0.0
    %4508 = vmatpush1.msra.mxu0 0.0
    %4509 = vmatprep.subr.mxu0 0.0
    %4510 = vmatpush1.msra.mxu0 0.0
    %4511 = vmatprep.subr.mxu0 0.0
    %4512 = vmatpush1.msra.mxu0 0.0
    %4513 = vmatprep.subr.mxu0 0.0
    %4514 = vmatpush1.msra.mxu0 0.0
    %4515 = vmatprep.subr.mxu0 0.0
    %4516 = vmatpush1.msra.mxu0 0.0
    %4517 = vmatprep.subr.mxu0 0.0
    %4518 = vmatpush1.msra.mxu0 0.0
    %4519 = vmatprep.subr.mxu0 0.0
    %4520 = vmatpush1.msra.mxu0 0.0
    %4521 = vmatprep.mubr.f32.mxu0 0.0
    %4522 = vmatmul.mubr.f32.gmra.mrb[0].mxu0 %v4455
    %v4523 = vpop.f32.mrb[0].mxu0
    %v4524 = vadd.f32 0.0, %v4523
    %v4525 = vpop.f32.mrb[0].mxu0
    %4526 = vdwg.mxu0
    %4527 = vrot.lane.b32.xlu0 %v3934, 56
    %v4528 = vpop.permute.xlu0 %4527
    %v4531 = vsel %vm476, %v4450, 0
    %4533 = vmatprep.subr.mxu0 0.0
    %4534 = vmatpush1.msra.mxu0 %v4528
    %4535 = vmatprep.subr.mxu0 0.0
    %4536 = vmatpush1.msra.mxu0 0.0
    %4537 = vmatprep.subr.mxu0 0.0
    %4538 = vmatpush1.msra.mxu0 0.0
    %4539 = vmatprep.subr.mxu0 0.0
    %4540 = vmatpush1.msra.mxu0 0.0
    %4541 = vmatprep.subr.mxu0 0.0
    %4542 = vmatpush1.msra.mxu0 0.0
    %4543 = vmatprep.subr.mxu0 0.0
    %4544 = vmatpush1.msra.mxu0 0.0
    %4545 = vmatprep.subr.mxu0 0.0
    %4546 = vmatpush1.msra.mxu0 0.0
    %4547 = vmatprep.subr.mxu0 0.0
    %4548 = vmatpush1.msra.mxu0 0.0
    %4549 = vmatprep.subr.mxu0 0.0
    %4550 = vmatpush1.msra.mxu0 0.0
    %4551 = vmatprep.subr.mxu0 0.0
    %4552 = vmatpush1.msra.mxu0 0.0
    %4553 = vmatprep.subr.mxu0 0.0
    %4554 = vmatpush1.msra.mxu0 0.0
    %4555 = vmatprep.subr.mxu0 0.0
    %4556 = vmatpush1.msra.mxu0 0.0
    %4557 = vmatprep.subr.mxu0 0.0
    %4558 = vmatpush1.msra.mxu0 0.0
    %4559 = vmatprep.subr.mxu0 0.0
    %4560 = vmatpush1.msra.mxu0 0.0
    %4561 = vmatprep.subr.mxu0 0.0
    %4562 = vmatpush1.msra.mxu0 0.0
    %4563 = vmatprep.subr.mxu0 0.0
    %4564 = vmatpush1.msra.mxu0 0.0
    %4565 = vmatprep.subr.mxu0 0.0
    %4566 = vmatpush1.msra.mxu0 0.0
    %4567 = vmatprep.subr.mxu0 0.0
    %4568 = vmatpush1.msra.mxu0 0.0
    %4569 = vmatprep.subr.mxu0 0.0
    %4570 = vmatpush1.msra.mxu0 0.0
    %4571 = vmatprep.subr.mxu0 0.0
    %4572 = vmatpush1.msra.mxu0 0.0
    %4573 = vmatprep.subr.mxu0 0.0
    %4574 = vmatpush1.msra.mxu0 0.0
    %4575 = vmatprep.subr.mxu0 0.0
    %4576 = vmatpush1.msra.mxu0 0.0
    %4577 = vmatprep.subr.mxu0 0.0
    %4578 = vmatpush1.msra.mxu0 0.0
    %4579 = vmatprep.subr.mxu0 0.0
    %4580 = vmatpush1.msra.mxu0 0.0
    %4581 = vmatprep.subr.mxu0 0.0
    %4582 = vmatpush1.msra.mxu0 0.0
    %4583 = vmatprep.subr.mxu0 0.0
    %4584 = vmatpush1.msra.mxu0 0.0
    %4585 = vmatprep.subr.mxu0 0.0
    %4586 = vmatpush1.msra.mxu0 0.0
    %4587 = vmatprep.subr.mxu0 0.0
    %4588 = vmatpush1.msra.mxu0 0.0
    %4589 = vmatprep.subr.mxu0 0.0
    %4590 = vmatpush1.msra.mxu0 0.0
    %4591 = vmatprep.subr.mxu0 0.0
    %4592 = vmatpush1.msra.mxu0 0.0
    %4593 = vmatprep.subr.mxu0 0.0
    %4594 = vmatpush1.msra.mxu0 0.0
    %4595 = vmatprep.subr.mxu0 0.0
    %4596 = vmatpush1.msra.mxu0 0.0
    %4597 = vmatprep.mubr.f32.mxu0 0.0
    %4598 = vmatmul.mubr.f32.gmra.mrb[0].mxu0 %v4531
    %v4599 = vpop.f32.mrb[0].mxu0
    %v4600 = vadd.f32 0.0, %v4599
    %v4601 = vpop.f32.mrb[0].mxu0
    %4602 = vdwg.mxu0
    %4603 = vrot.lane.b32.xlu0 %v3929, 112
    %v4604 = vpop.permute.xlu0 %4603
    %4605 = vrot.lane.b32.xlu0 %v3929, 80
    %v4606 = vpop.permute.xlu0 %4605
    %v4607 = vsel %vm476, %v4604, 0
    %v4609 = vsel %vm476, %v4606, 0
    %4611 = vmatprep.subr.mxu0 0.0
    %4612 = vmatpush1.xpose.msra.mxu0 %v4609
    %4613 = vmatprep.subr.mxu0 0.0
    %4614 = vmatpush1.xpose.msra.mxu0 0.0
    %4615 = vmatprep.subr.mxu0 0.0
    %4616 = vmatpush1.xpose.msra.mxu0 0.0
    %4617 = vmatprep.subr.mxu0 0.0
    %4618 = vmatpush1.xpose.msra.mxu0 0.0
    %4619 = vmatprep.subr.mxu0 0.0
    %4620 = vmatpush1.xpose.msra.mxu0 0.0
    %4621 = vmatprep.subr.mxu0 0.0
    %4622 = vmatpush1.xpose.msra.mxu0 0.0
    %4623 = vmatprep.subr.mxu0 0.0
    %4624 = vmatpush1.xpose.msra.mxu0 0.0
    %4625 = vmatprep.subr.mxu0 0.0
    %4626 = vmatpush1.xpose.msra.mxu0 0.0
    %4627 = vmatprep.subr.mxu0 0.0
    %4628 = vmatpush1.xpose.msra.mxu0 0.0
    %4629 = vmatprep.subr.mxu0 0.0
    %4630 = vmatpush1.xpose.msra.mxu0 0.0
    %4631 = vmatprep.subr.mxu0 0.0
    %4632 = vmatpush1.xpose.msra.mxu0 0.0
    %4633 = vmatprep.subr.mxu0 0.0
    %4634 = vmatpush1.xpose.msra.mxu0 0.0
    %4635 = vmatprep.subr.mxu0 0.0
    %4636 = vmatpush1.xpose.msra.mxu0 0.0
    %4637 = vmatprep.subr.mxu0 0.0
    %4638 = vmatpush1.xpose.msra.mxu0 0.0
    %4639 = vmatprep.subr.mxu0 0.0
    %4640 = vmatpush1.xpose.msra.mxu0 0.0
    %4641 = vmatprep.subr.mxu0 0.0
    %4642 = vmatpush1.xpose.msra.mxu0 0.0
    %4643 = vmatprep.subr.mxu0 0.0
    %4644 = vmatpush1.xpose.msra.mxu0 0.0
    %4645 = vmatprep.subr.mxu0 0.0
    %4646 = vmatpush1.xpose.msra.mxu0 0.0
    %4647 = vmatprep.subr.mxu0 0.0
    %4648 = vmatpush1.xpose.msra.mxu0 0.0
    %4649 = vmatprep.subr.mxu0 0.0
    %4650 = vmatpush1.xpose.msra.mxu0 0.0
    %4651 = vmatprep.subr.mxu0 0.0
    %4652 = vmatpush1.xpose.msra.mxu0 0.0
    %4653 = vmatprep.subr.mxu0 0.0
    %4654 = vmatpush1.xpose.msra.mxu0 0.0
    %4655 = vmatprep.subr.mxu0 0.0
    %4656 = vmatpush1.xpose.msra.mxu0 0.0
    %4657 = vmatprep.subr.mxu0 0.0
    %4658 = vmatpush1.xpose.msra.mxu0 0.0
    %4659 = vmatprep.subr.mxu0 0.0
    %4660 = vmatpush1.xpose.msra.mxu0 0.0
    %4661 = vmatprep.subr.mxu0 0.0
    %4662 = vmatpush1.xpose.msra.mxu0 0.0
    %4663 = vmatprep.subr.mxu0 0.0
    %4664 = vmatpush1.xpose.msra.mxu0 0.0
    %4665 = vmatprep.subr.mxu0 0.0
    %4666 = vmatpush1.xpose.msra.mxu0 0.0
    %4667 = vmatprep.subr.mxu0 0.0
    %4668 = vmatpush1.xpose.msra.mxu0 0.0
    %4669 = vmatprep.subr.mxu0 0.0
    %4670 = vmatpush1.xpose.msra.mxu0 0.0
    %4671 = vmatprep.subr.mxu0 0.0
    %4672 = vmatpush1.xpose.msra.mxu0 0.0
    %4673 = vmatprep.subr.mxu0 0.0
    %4674 = vmatpush1.xpose.msra.mxu0 0.0
    %4675 = vmatprep.mubr.f32.mxu0 0.0
    %4676 = vmatmul.mubr.f32.gmra.mrb[0].mxu0 %v4607
    %v4677 = vpop.f32.mrb[0].mxu0
    %v4678 = vadd.f32 0.0, %v4677
    %v4679 = vpop.f32.mrb[0].mxu0
    %4680 = vdwg.mxu0
    %4681 = vrot.lane.b32.xlu0 %v3934, 112
    %v4682 = vpop.permute.xlu0 %4681
    %4683 = vrot.lane.b32.xlu0 %v3934, 80
    %v4684 = vpop.permute.xlu0 %4683
    %v4685 = vsel %vm476, %v4682, 0
    %v4687 = vsel %vm476, %v4684, 0
    %4689 = vmatprep.subr.mxu0 0.0
    %4690 = vmatpush1.xpose.msra.mxu0 %v4687
    %4691 = vmatprep.subr.mxu0 0.0
    %4692 = vmatpush1.xpose.msra.mxu0 0.0
    %4693 = vmatprep.subr.mxu0 0.0
    %4694 = vmatpush1.xpose.msra.mxu0 0.0
    %4695 = vmatprep.subr.mxu0 0.0
    %4696 = vmatpush1.xpose.msra.mxu0 0.0
    %4697 = vmatprep.subr.mxu0 0.0
    %4698 = vmatpush1.xpose.msra.mxu0 0.0
    %4699 = vmatprep.subr.mxu0 0.0
    %4700 = vmatpush1.xpose.msra.mxu0 0.0
    %4701 = vmatprep.subr.mxu0 0.0
    %4702 = vmatpush1.xpose.msra.mxu0 0.0
    %4703 = vmatprep.subr.mxu0 0.0
    %4704 = vmatpush1.xpose.msra.mxu0 0.0
    %4705 = vmatprep.subr.mxu0 0.0
    %4706 = vmatpush1.xpose.msra.mxu0 0.0
    %4707 = vmatprep.subr.mxu0 0.0
    %4708 = vmatpush1.xpose.msra.mxu0 0.0
    %4709 = vmatprep.subr.mxu0 0.0
    %4710 = vmatpush1.xpose.msra.mxu0 0.0
    %4711 = vmatprep.subr.mxu0 0.0
    %4712 = vmatpush1.xpose.msra.mxu0 0.0
    %4713 = vmatprep.subr.mxu0 0.0
    %4714 = vmatpush1.xpose.msra.mxu0 0.0
    %4715 = vmatprep.subr.mxu0 0.0
    %4716 = vmatpush1.xpose.msra.mxu0 0.0
    %4717 = vmatprep.subr.mxu0 0.0
    %4718 = vmatpush1.xpose.msra.mxu0 0.0
    %4719 = vmatprep.subr.mxu0 0.0
    %4720 = vmatpush1.xpose.msra.mxu0 0.0
    %4721 = vmatprep.subr.mxu0 0.0
    %4722 = vmatpush1.xpose.msra.mxu0 0.0
    %4723 = vmatprep.subr.mxu0 0.0
    %4724 = vmatpush1.xpose.msra.mxu0 0.0
    %4725 = vmatprep.subr.mxu0 0.0
    %4726 = vmatpush1.xpose.msra.mxu0 0.0
    %4727 = vmatprep.subr.mxu0 0.0
    %4728 = vmatpush1.xpose.msra.mxu0 0.0
    %4729 = vmatprep.subr.mxu0 0.0
    %4730 = vmatpush1.xpose.msra.mxu0 0.0
    %4731 = vmatprep.subr.mxu0 0.0
    %4732 = vmatpush1.xpose.msra.mxu0 0.0
    %4733 = vmatprep.subr.mxu0 0.0
    %4734 = vmatpush1.xpose.msra.mxu0 0.0
    %4735 = vmatprep.subr.mxu0 0.0
    %4736 = vmatpush1.xpose.msra.mxu0 0.0
    %4737 = vmatprep.subr.mxu0 0.0
    %4738 = vmatpush1.xpose.msra.mxu0 0.0
    %4739 = vmatprep.subr.mxu0 0.0
    %4740 = vmatpush1.xpose.msra.mxu0 0.0
    %4741 = vmatprep.subr.mxu0 0.0
    %4742 = vmatpush1.xpose.msra.mxu0 0.0
    %4743 = vmatprep.subr.mxu0 0.0
    %4744 = vmatpush1.xpose.msra.mxu0 0.0
    %4745 = vmatprep.subr.mxu0 0.0
    %4746 = vmatpush1.xpose.msra.mxu0 0.0
    %4747 = vmatprep.subr.mxu0 0.0
    %4748 = vmatpush1.xpose.msra.mxu0 0.0
    %4749 = vmatprep.subr.mxu0 0.0
    %4750 = vmatpush1.xpose.msra.mxu0 0.0
    %4751 = vmatprep.subr.mxu0 0.0
    %4752 = vmatpush1.xpose.msra.mxu0 0.0
    %4753 = vmatprep.mubr.f32.mxu0 0.0
    %4754 = vmatmul.mubr.f32.gmra.mrb[0].mxu0 %v4685
    %v4755 = vpop.f32.mrb[0].mxu0
    %v4756 = vadd.f32 0.0, %v4755
    %v4757 = vpop.f32.mrb[0].mxu0
    %4758 = vdwg.mxu0
    %v4759 = vmul.f32 %v4678, 0.35355338
    %v4760 = vmul.f32 %v4756, 0.35355338
    %v4761 = vadd.f32 %v4759, %v229
    %v4762 = vadd.f32 %v4760, %v230
    %v4763 = vsel %vm476, %v4761, -inf
    %4764 = vmax.xlane.f32.xlu0 %v4763
    %v4765 = vpop.xlane.xlu0 %4764
    %v4766 = vsel %vm476, %v4762, -inf
    %4767 = vmax.xlane.f32.xlu0 %v4766
    %v4768 = vpop.xlane.xlu0 %4767
    %v4769 = vsub.f32 %v4761, %v4765
    %v4770 = vsub.f32 %v4762, %v4768
    %v4771 = vmul.f32 %v4769, 1.442695
    %v4772 = vpow.pop %v4771
    %v4773 = vmul.f32 %v4770, 1.442695
    %v4774 = vpow.pop %v4773
    %v4775 = vsel %vm476, %v4772, 0.0
    %4776 = vadd.xlane.f32.xlu0 %v4775
    %v4777 = vpop.xlane.xlu0 %4776
    %v4778 = vsel %vm476, %v4774, 0.0
    %4779 = vadd.xlane.f32.xlu0 %v4778
    %v4780 = vpop.xlane.xlu0 %4779
    %v4781 = vrcp.pop %v4777
    %v4782 = vmul.f32 %v4772, %v4781
    %v4783 = vrcp.pop %v4780
    %v4784 = vmul.f32 %v4774, %v4783
    %4785 = vrot.lane.b32.xlu0 %v3929, 48
    %v4786 = vpop.permute.xlu0 %4785
    %v4789 = vsel %vm476, %v4782, 0
    %4791 = vmatprep.subr.mxu0 0.0
    %4792 = vmatpush1.msra.mxu0 %v4786
    %4793 = vmatprep.subr.mxu0 0.0
    %4794 = vmatpush1.msra.mxu0 0.0
    %4795 = vmatprep.subr.mxu0 0.0
    %4796 = vmatpush1.msra.mxu0 0.0
    %4797 = vmatprep.subr.mxu0 0.0
    %4798 = vmatpush1.msra.mxu0 0.0
    %4799 = vmatprep.subr.mxu0 0.0
    %4800 = vmatpush1.msra.mxu0 0.0
    %4801 = vmatprep.subr.mxu0 0.0
    %4802 = vmatpush1.msra.mxu0 0.0
    %4803 = vmatprep.subr.mxu0 0.0
    %4804 = vmatpush1.msra.mxu0 0.0
    %4805 = vmatprep.subr.mxu0 0.0
    %4806 = vmatpush1.msra.mxu0 0.0
    %4807 = vmatprep.subr.mxu0 0.0
    %4808 = vmatpush1.msra.mxu0 0.0
    %4809 = vmatprep.subr.mxu0 0.0
    %4810 = vmatpush1.msra.mxu0 0.0
    %4811 = vmatprep.subr.mxu0 0.0
    %4812 = vmatpush1.msra.mxu0 0.0
    %4813 = vmatprep.subr.mxu0 0.0
    %4814 = vmatpush1.msra.mxu0 0.0
    %4815 = vmatprep.subr.mxu0 0.0
    %4816 = vmatpush1.msra.mxu0 0.0
    %4817 = vmatprep.subr.mxu0 0.0
    %4818 = vmatpush1.msra.mxu0 0.0
    %4819 = vmatprep.subr.mxu0 0.0
    %4820 = vmatpush1.msra.mxu0 0.0
    %4821 = vmatprep.subr.mxu0 0.0
    %4822 = vmatpush1.msra.mxu0 0.0
    %4823 = vmatprep.subr.mxu0 0.0
    %4824 = vmatpush1.msra.mxu0 0.0
    %4825 = vmatprep.subr.mxu0 0.0
    %4826 = vmatpush1.msra.mxu0 0.0
    %4827 = vmatprep.subr.mxu0 0.0
    %4828 = vmatpush1.msra.mxu0 0.0
    %4829 = vmatprep.subr.mxu0 0.0
    %4830 = vmatpush1.msra.mxu0 0.0
    %4831 = vmatprep.subr.mxu0 0.0
    %4832 = vmatpush1.msra.mxu0 0.0
    %4833 = vmatprep.subr.mxu0 0.0
    %4834 = vmatpush1.msra.mxu0 0.0
    %4835 = vmatprep.subr.mxu0 0.0
    %4836 = vmatpush1.msra.mxu0 0.0
    %4837 = vmatprep.subr.mxu0 0.0
    %4838 = vmatpush1.msra.mxu0 0.0
    %4839 = vmatprep.subr.mxu0 0.0
    %4840 = vmatpush1.msra.mxu0 0.0
    %4841 = vmatprep.subr.mxu0 0.0
    %4842 = vmatpush1.msra.mxu0 0.0
    %4843 = vmatprep.subr.mxu0 0.0
    %4844 = vmatpush1.msra.mxu0 0.0
    %4845 = vmatprep.subr.mxu0 0.0
    %4846 = vmatpush1.msra.mxu0 0.0
    %4847 = vmatprep.subr.mxu0 0.0
    %4848 = vmatpush1.msra.mxu0 0.0
    %4849 = vmatprep.subr.mxu0 0.0
    %4850 = vmatpush1.msra.mxu0 0.0
    %4851 = vmatprep.subr.mxu0 0.0
    %4852 = vmatpush1.msra.mxu0 0.0
    %4853 = vmatprep.subr.mxu0 0.0
    %4854 = vmatpush1.msra.mxu0 0.0
    %4855 = vmatprep.mubr.f32.mxu0 0.0
    %4856 = vmatmul.mubr.f32.gmra.mrb[0].mxu0 %v4789
    %v4857 = vpop.f32.mrb[0].mxu0
    %v4858 = vadd.f32 0.0, %v4857
    %v4859 = vpop.f32.mrb[0].mxu0
    %4860 = vdwg.mxu0
    %4861 = vrot.lane.b32.xlu0 %v3934, 48
    %v4862 = vpop.permute.xlu0 %4861
    %v4865 = vsel %vm476, %v4784, 0
    %4867 = vmatprep.subr.mxu0 0.0
    %4868 = vmatpush1.msra.mxu0 %v4862
    %4869 = vmatprep.subr.mxu0 0.0
    %4870 = vmatpush1.msra.mxu0 0.0
    %4871 = vmatprep.subr.mxu0 0.0
    %4872 = vmatpush1.msra.mxu0 0.0
    %4873 = vmatprep.subr.mxu0 0.0
    %4874 = vmatpush1.msra.mxu0 0.0
    %4875 = vmatprep.subr.mxu0 0.0
    %4876 = vmatpush1.msra.mxu0 0.0
    %4877 = vmatprep.subr.mxu0 0.0
    %4878 = vmatpush1.msra.mxu0 0.0
    %4879 = vmatprep.subr.mxu0 0.0
    %4880 = vmatpush1.msra.mxu0 0.0
    %4881 = vmatprep.subr.mxu0 0.0
    %4882 = vmatpush1.msra.mxu0 0.0
    %4883 = vmatprep.subr.mxu0 0.0
    %4884 = vmatpush1.msra.mxu0 0.0
    %4885 = vmatprep.subr.mxu0 0.0
    %4886 = vmatpush1.msra.mxu0 0.0
    %4887 = vmatprep.subr.mxu0 0.0
    %4888 = vmatpush1.msra.mxu0 0.0
    %4889 = vmatprep.subr.mxu0 0.0
    %4890 = vmatpush1.msra.mxu0 0.0
    %4891 = vmatprep.subr.mxu0 0.0
    %4892 = vmatpush1.msra.mxu0 0.0
    %4893 = vmatprep.subr.mxu0 0.0
    %4894 = vmatpush1.msra.mxu0 0.0
    %4895 = vmatprep.subr.mxu0 0.0
    %4896 = vmatpush1.msra.mxu0 0.0
    %4897 = vmatprep.subr.mxu0 0.0
    %4898 = vmatpush1.msra.mxu0 0.0
    %4899 = vmatprep.subr.mxu0 0.0
    %4900 = vmatpush1.msra.mxu0 0.0
    %4901 = vmatprep.subr.mxu0 0.0
    %4902 = vmatpush1.msra.mxu0 0.0
    %4903 = vmatprep.subr.mxu0 0.0
    %4904 = vmatpush1.msra.mxu0 0.0
    %4905 = vmatprep.subr.mxu0 0.0
    %4906 = vmatpush1.msra.mxu0 0.0
    %4907 = vmatprep.subr.mxu0 0.0
    %4908 = vmatpush1.msra.mxu0 0.0
    %4909 = vmatprep.subr.mxu0 0.0
    %4910 = vmatpush1.msra.mxu0 0.0
    %4911 = vmatprep.subr.mxu0 0.0
    %4912 = vmatpush1.msra.mxu0 0.0
    %4913 = vmatprep.subr.mxu0 0.0
    %4914 = vmatpush1.msra.mxu0 0.0
    %4915 = vmatprep.subr.mxu0 0.0
    %4916 = vmatpush1.msra.mxu0 0.0
    %4917 = vmatprep.subr.mxu0 0.0
    %4918 = vmatpush1.msra.mxu0 0.0
    %4919 = vmatprep.subr.mxu0 0.0
    %4920 = vmatpush1.msra.mxu0 0.0
    %4921 = vmatprep.subr.mxu0 0.0
    %4922 = vmatpush1.msra.mxu0 0.0
    %4923 = vmatprep.subr.mxu0 0.0
    %4924 = vmatpush1.msra.mxu0 0.0
    %4925 = vmatprep.subr.mxu0 0.0
    %4926 = vmatpush1.msra.mxu0 0.0
    %4927 = vmatprep.subr.mxu0 0.0
    %4928 = vmatpush1.msra.mxu0 0.0
    %4929 = vmatprep.subr.mxu0 0.0
    %4930 = vmatpush1.msra.mxu0 0.0
    %4931 = vmatprep.mubr.f32.mxu0 0.0
    %4932 = vmatmul.mubr.f32.gmra.mrb[0].mxu0 %v4865
    %v4933 = vpop.f32.mrb[0].mxu0
    %v4934 = vadd.f32 0.0, %v4933
    %v4935 = vpop.f32.mrb[0].mxu0
    %4936 = vdwg.mxu0
    %4937 = vrot.lane.b32.xlu0 %v3929, 104
    %v4938 = vpop.permute.xlu0 %4937
    %4939 = vrot.lane.b32.xlu0 %v3929, 72
    %v4940 = vpop.permute.xlu0 %4939
    %v4941 = vsel %vm476, %v4938, 0
    %v4943 = vsel %vm476, %v4940, 0
    %4945 = vmatprep.subr.mxu0 0.0
    %4946 = vmatpush1.xpose.msra.mxu0 %v4943
    %4947 = vmatprep.subr.mxu0 0.0
    %4948 = vmatpush1.xpose.msra.mxu0 0.0
    %4949 = vmatprep.subr.mxu0 0.0
    %4950 = vmatpush1.xpose.msra.mxu0 0.0
    %4951 = vmatprep.subr.mxu0 0.0
    %4952 = vmatpush1.xpose.msra.mxu0 0.0
    %4953 = vmatprep.subr.mxu0 0.0
    %4954 = vmatpush1.xpose.msra.mxu0 0.0
    %4955 = vmatprep.subr.mxu0 0.0
    %4956 = vmatpush1.xpose.msra.mxu0 0.0
    %4957 = vmatprep.subr.mxu0 0.0
    %4958 = vmatpush1.xpose.msra.mxu0 0.0
    %4959 = vmatprep.subr.mxu0 0.0
    %4960 = vmatpush1.xpose.msra.mxu0 0.0
    %4961 = vmatprep.subr.mxu0 0.0
    %4962 = vmatpush1.xpose.msra.mxu0 0.0
    %4963 = vmatprep.subr.mxu0 0.0
    %4964 = vmatpush1.xpose.msra.mxu0 0.0
    %4965 = vmatprep.subr.mxu0 0.0
    %4966 = vmatpush1.xpose.msra.mxu0 0.0
    %4967 = vmatprep.subr.mxu0 0.0
    %4968 = vmatpush1.xpose.msra.mxu0 0.0
    %4969 = vmatprep.subr.mxu0 0.0
    %4970 = vmatpush1.xpose.msra.mxu0 0.0
    %4971 = vmatprep.subr.mxu0 0.0
    %4972 = vmatpush1.xpose.msra.mxu0 0.0
    %4973 = vmatprep.subr.mxu0 0.0
    %4974 = vmatpush1.xpose.msra.mxu0 0.0
    %4975 = vmatprep.subr.mxu0 0.0
    %4976 = vmatpush1.xpose.msra.mxu0 0.0
    %4977 = vmatprep.subr.mxu0 0.0
    %4978 = vmatpush1.xpose.msra.mxu0 0.0
    %4979 = vmatprep.subr.mxu0 0.0
    %4980 = vmatpush1.xpose.msra.mxu0 0.0
    %4981 = vmatprep.subr.mxu0 0.0
    %4982 = vmatpush1.xpose.msra.mxu0 0.0
    %4983 = vmatprep.subr.mxu0 0.0
    %4984 = vmatpush1.xpose.msra.mxu0 0.0
    %4985 = vmatprep.subr.mxu0 0.0
    %4986 = vmatpush1.xpose.msra.mxu0 0.0
    %4987 = vmatprep.subr.mxu0 0.0
    %4988 = vmatpush1.xpose.msra.mxu0 0.0
    %4989 = vmatprep.subr.mxu0 0.0
    %4990 = vmatpush1.xpose.msra.mxu0 0.0
    %4991 = vmatprep.subr.mxu0 0.0
    %4992 = vmatpush1.xpose.msra.mxu0 0.0
    %4993 = vmatprep.subr.mxu0 0.0
    %4994 = vmatpush1.xpose.msra.mxu0 0.0
    %4995 = vmatprep.subr.mxu0 0.0
    %4996 = vmatpush1.xpose.msra.mxu0 0.0
    %4997 = vmatprep.subr.mxu0 0.0
    %4998 = vmatpush1.xpose.msra.mxu0 0.0
    %4999 = vmatprep.subr.mxu0 0.0
    %5000 = vmatpush1.xpose.msra.mxu0 0.0
    %5001 = vmatprep.subr.mxu0 0.0
    %5002 = vmatpush1.xpose.msra.mxu0 0.0
    %5003 = vmatprep.subr.mxu0 0.0
    %5004 = vmatpush1.xpose.msra.mxu0 0.0
    %5005 = vmatprep.subr.mxu0 0.0
    %5006 = vmatpush1.xpose.msra.mxu0 0.0
    %5007 = vmatprep.subr.mxu0 0.0
    %5008 = vmatpush1.xpose.msra.mxu0 0.0
    %5009 = vmatprep.mubr.f32.mxu0 0.0
    %5010 = vmatmul.mubr.f32.gmra.mrb[0].mxu0 %v4941
    %v5011 = vpop.f32.mrb[0].mxu0
    %v5012 = vadd.f32 0.0, %v5011
    %v5013 = vpop.f32.mrb[0].mxu0
    %5014 = vdwg.mxu0
    %5015 = vrot.lane.b32.xlu0 %v3934, 104
    %v5016 = vpop.permute.xlu0 %5015
    %5017 = vrot.lane.b32.xlu0 %v3934, 72
    %v5018 = vpop.permute.xlu0 %5017
    %v5019 = vsel %vm476, %v5016, 0
    %v5021 = vsel %vm476, %v5018, 0
    %5023 = vmatprep.subr.mxu0 0.0
    %5024 = vmatpush1.xpose.msra.mxu0 %v5021
    %5025 = vmatprep.subr.mxu0 0.0
    %5026 = vmatpush1.xpose.msra.mxu0 0.0
    %5027 = vmatprep.subr.mxu0 0.0
    %5028 = vmatpush1.xpose.msra.mxu0 0.0
    %5029 = vmatprep.subr.mxu0 0.0
    %5030 = vmatpush1.xpose.msra.mxu0 0.0
    %5031 = vmatprep.subr.mxu0 0.0
    %5032 = vmatpush1.xpose.msra.mxu0 0.0
    %5033 = vmatprep.subr.mxu0 0.0
    %5034 = vmatpush1.xpose.msra.mxu0 0.0
    %5035 = vmatprep.subr.mxu0 0.0
    %5036 = vmatpush1.xpose.msra.mxu0 0.0
    %5037 = vmatprep.subr.mxu0 0.0
    %5038 = vmatpush1.xpose.msra.mxu0 0.0
    %5039 = vmatprep.subr.mxu0 0.0
    %5040 = vmatpush1.xpose.msra.mxu0 0.0
    %5041 = vmatprep.subr.mxu0 0.0
    %5042 = vmatpush1.xpose.msra.mxu0 0.0
    %5043 = vmatprep.subr.mxu0 0.0
    %5044 = vmatpush1.xpose.msra.mxu0 0.0
    %5045 = vmatprep.subr.mxu0 0.0
    %5046 = vmatpush1.xpose.msra.mxu0 0.0
    %5047 = vmatprep.subr.mxu0 0.0
    %5048 = vmatpush1.xpose.msra.mxu0 0.0
    %5049 = vmatprep.subr.mxu0 0.0
    %5050 = vmatpush1.xpose.msra.mxu0 0.0
    %5051 = vmatprep.subr.mxu0 0.0
    %5052 = vmatpush1.xpose.msra.mxu0 0.0
    %5053 = vmatprep.subr.mxu0 0.0
    %5054 = vmatpush1.xpose.msra.mxu0 0.0
    %5055 = vmatprep.subr.mxu0 0.0
    %5056 = vmatpush1.xpose.msra.mxu0 0.0
    %5057 = vmatprep.subr.mxu0 0.0
    %5058 = vmatpush1.xpose.msra.mxu0 0.0
    %5059 = vmatprep.subr.mxu0 0.0
    %5060 = vmatpush1.xpose.msra.mxu0 0.0
    %5061 = vmatprep.subr.mxu0 0.0
    %5062 = vmatpush1.xpose.msra.mxu0 0.0
    %5063 = vmatprep.subr.mxu0 0.0
    %5064 = vmatpush1.xpose.msra.mxu0 0.0
    %5065 = vmatprep.subr.mxu0 0.0
    %5066 = vmatpush1.xpose.msra.mxu0 0.0
    %5067 = vmatprep.subr.mxu0 0.0
    %5068 = vmatpush1.xpose.msra.mxu0 0.0
    %5069 = vmatprep.subr.mxu0 0.0
    %5070 = vmatpush1.xpose.msra.mxu0 0.0
    %5071 = vmatprep.subr.mxu0 0.0
    %5072 = vmatpush1.xpose.msra.mxu0 0.0
    %5073 = vmatprep.subr.mxu0 0.0
    %5074 = vmatpush1.xpose.msra.mxu0 0.0
    %5075 = vmatprep.subr.mxu0 0.0
    %5076 = vmatpush1.xpose.msra.mxu0 0.0
    %5077 = vmatprep.subr.mxu0 0.0
    %5078 = vmatpush1.xpose.msra.mxu0 0.0
    %5079 = vmatprep.subr.mxu0 0.0
    %5080 = vmatpush1.xpose.msra.mxu0 0.0
    %5081 = vmatprep.subr.mxu0 0.0
    %5082 = vmatpush1.xpose.msra.mxu0 0.0
    %5083 = vmatprep.subr.mxu0 0.0
    %5084 = vmatpush1.xpose.msra.mxu0 0.0
    %5085 = vmatprep.subr.mxu0 0.0
    %5086 = vmatpush1.xpose.msra.mxu0 0.0
    %5087 = vmatprep.mubr.f32.mxu0 0.0
    %5088 = vmatmul.mubr.f32.gmra.mrb[0].mxu0 %v5019
    %v5089 = vpop.f32.mrb[0].mxu0
    %v5090 = vadd.f32 0.0, %v5089
    %v5091 = vpop.f32.mrb[0].mxu0
    %5092 = vdwg.mxu0
    %v5093 = vmul.f32 %v5012, 0.35355338
    %v5094 = vmul.f32 %v5090, 0.35355338
    %v5095 = vadd.f32 %v5093, %v229
    %v5096 = vadd.f32 %v5094, %v230
    %v5097 = vsel %vm476, %v5095, -inf
    %5098 = vmax.xlane.f32.xlu0 %v5097
    %v5099 = vpop.xlane.xlu0 %5098
    %v5100 = vsel %vm476, %v5096, -inf
    %5101 = vmax.xlane.f32.xlu0 %v5100
    %v5102 = vpop.xlane.xlu0 %5101
    %v5103 = vsub.f32 %v5095, %v5099
    %v5104 = vsub.f32 %v5096, %v5102
    %v5105 = vmul.f32 %v5103, 1.442695
    %v5106 = vpow.pop %v5105
    %v5107 = vmul.f32 %v5104, 1.442695
    %v5108 = vpow.pop %v5107
    %v5109 = vsel %vm476, %v5106, 0.0
    %5110 = vadd.xlane.f32.xlu0 %v5109
    %v5111 = vpop.xlane.xlu0 %5110
    %v5112 = vsel %vm476, %v5108, 0.0
    %5113 = vadd.xlane.f32.xlu0 %v5112
    %v5114 = vpop.xlane.xlu0 %5113
    %v5115 = vrcp.pop %v5111
    %v5116 = vmul.f32 %v5106, %v5115
    %v5117 = vrcp.pop %v5114
    %v5118 = vmul.f32 %v5108, %v5117
    %5119 = vrot.lane.b32.xlu0 %v3929, 40
    %v5120 = vpop.permute.xlu0 %5119
    %v5123 = vsel %vm476, %v5116, 0
    %5125 = vmatprep.subr.mxu0 0.0
    %5126 = vmatpush1.msra.mxu0 %v5120
    %5127 = vmatprep.subr.mxu0 0.0
    %5128 = vmatpush1.msra.mxu0 0.0
    %5129 = vmatprep.subr.mxu0 0.0
    %5130 = vmatpush1.msra.mxu0 0.0
    %5131 = vmatprep.subr.mxu0 0.0
    %5132 = vmatpush1.msra.mxu0 0.0
    %5133 = vmatprep.subr.mxu0 0.0
    %5134 = vmatpush1.msra.mxu0 0.0
    %5135 = vmatprep.subr.mxu0 0.0
    %5136 = vmatpush1.msra.mxu0 0.0
    %5137 = vmatprep.subr.mxu0 0.0
    %5138 = vmatpush1.msra.mxu0 0.0
    %5139 = vmatprep.subr.mxu0 0.0
    %5140 = vmatpush1.msra.mxu0 0.0
    %5141 = vmatprep.subr.mxu0 0.0
    %5142 = vmatpush1.msra.mxu0 0.0
    %5143 = vmatprep.subr.mxu0 0.0
    %5144 = vmatpush1.msra.mxu0 0.0
    %5145 = vmatprep.subr.mxu0 0.0
    %5146 = vmatpush1.msra.mxu0 0.0
    %5147 = vmatprep.subr.mxu0 0.0
    %5148 = vmatpush1.msra.mxu0 0.0
    %5149 = vmatprep.subr.mxu0 0.0
    %5150 = vmatpush1.msra.mxu0 0.0
    %5151 = vmatprep.subr.mxu0 0.0
    %5152 = vmatpush1.msra.mxu0 0.0
    %5153 = vmatprep.subr.mxu0 0.0
    %5154 = vmatpush1.msra.mxu0 0.0
    %5155 = vmatprep.subr.mxu0 0.0
    %5156 = vmatpush1.msra.mxu0 0.0
    %5157 = vmatprep.subr.mxu0 0.0
    %5158 = vmatpush1.msra.mxu0 0.0
    %5159 = vmatprep.subr.mxu0 0.0
    %5160 = vmatpush1.msra.mxu0 0.0
    %5161 = vmatprep.subr.mxu0 0.0
    %5162 = vmatpush1.msra.mxu0 0.0
    %5163 = vmatprep.subr.mxu0 0.0
    %5164 = vmatpush1.msra.mxu0 0.0
    %5165 = vmatprep.subr.mxu0 0.0
    %5166 = vmatpush1.msra.mxu0 0.0
    %5167 = vmatprep.subr.mxu0 0.0
    %5168 = vmatpush1.msra.mxu0 0.0
    %5169 = vmatprep.subr.mxu0 0.0
    %5170 = vmatpush1.msra.mxu0 0.0
    %5171 = vmatprep.subr.mxu0 0.0
    %5172 = vmatpush1.msra.mxu0 0.0
    %5173 = vmatprep.subr.mxu0 0.0
    %5174 = vmatpush1.msra.mxu0 0.0
    %5175 = vmatprep.subr.mxu0 0.0
    %5176 = vmatpush1.msra.mxu0 0.0
    %5177 = vmatprep.subr.mxu0 0.0
    %5178 = vmatpush1.msra.mxu0 0.0
    %5179 = vmatprep.subr.mxu0 0.0
    %5180 = vmatpush1.msra.mxu0 0.0
    %5181 = vmatprep.subr.mxu0 0.0
    %5182 = vmatpush1.msra.mxu0 0.0
    %5183 = vmatprep.subr.mxu0 0.0
    %5184 = vmatpush1.msra.mxu0 0.0
    %5185 = vmatprep.subr.mxu0 0.0
    %5186 = vmatpush1.msra.mxu0 0.0
    %5187 = vmatprep.subr.mxu0 0.0
    %5188 = vmatpush1.msra.mxu0 0.0
    %5189 = vmatprep.mubr.f32.mxu0 0.0
    %5190 = vmatmul.mubr.f32.gmra.mrb[0].mxu0 %v5123
    %v5191 = vpop.f32.mrb[0].mxu0
    %v5192 = vadd.f32 0.0, %v5191
    %v5193 = vpop.f32.mrb[0].mxu0
    %5194 = vdwg.mxu0
    %5195 = vrot.lane.b32.xlu0 %v3934, 40
    %v5196 = vpop.permute.xlu0 %5195
    %v5199 = vsel %vm476, %v5118, 0
    %5201 = vmatprep.subr.mxu0 0.0
    %5202 = vmatpush1.msra.mxu0 %v5196
    %5203 = vmatprep.subr.mxu0 0.0
    %5204 = vmatpush1.msra.mxu0 0.0
    %5205 = vmatprep.subr.mxu0 0.0
    %5206 = vmatpush1.msra.mxu0 0.0
    %5207 = vmatprep.subr.mxu0 0.0
    %5208 = vmatpush1.msra.mxu0 0.0
    %5209 = vmatprep.subr.mxu0 0.0
    %5210 = vmatpush1.msra.mxu0 0.0
    %5211 = vmatprep.subr.mxu0 0.0
    %5212 = vmatpush1.msra.mxu0 0.0
    %5213 = vmatprep.subr.mxu0 0.0
    %5214 = vmatpush1.msra.mxu0 0.0
    %5215 = vmatprep.subr.mxu0 0.0
    %5216 = vmatpush1.msra.mxu0 0.0
    %5217 = vmatprep.subr.mxu0 0.0
    %5218 = vmatpush1.msra.mxu0 0.0
    %5219 = vmatprep.subr.mxu0 0.0
    %5220 = vmatpush1.msra.mxu0 0.0
    %5221 = vmatprep.subr.mxu0 0.0
    %5222 = vmatpush1.msra.mxu0 0.0
    %5223 = vmatprep.subr.mxu0 0.0
    %5224 = vmatpush1.msra.mxu0 0.0
    %5225 = vmatprep.subr.mxu0 0.0
    %5226 = vmatpush1.msra.mxu0 0.0
    %5227 = vmatprep.subr.mxu0 0.0
    %5228 = vmatpush1.msra.mxu0 0.0
    %5229 = vmatprep.subr.mxu0 0.0
    %5230 = vmatpush1.msra.mxu0 0.0
    %5231 = vmatprep.subr.mxu0 0.0
    %5232 = vmatpush1.msra.mxu0 0.0
    %5233 = vmatprep.subr.mxu0 0.0
    %5234 = vmatpush1.msra.mxu0 0.0
    %5235 = vmatprep.subr.mxu0 0.0
    %5236 = vmatpush1.msra.mxu0 0.0
    %5237 = vmatprep.subr.mxu0 0.0
    %5238 = vmatpush1.msra.mxu0 0.0
    %5239 = vmatprep.subr.mxu0 0.0
    %5240 = vmatpush1.msra.mxu0 0.0
    %5241 = vmatprep.subr.mxu0 0.0
    %5242 = vmatpush1.msra.mxu0 0.0
    %5243 = vmatprep.subr.mxu0 0.0
    %5244 = vmatpush1.msra.mxu0 0.0
    %5245 = vmatprep.subr.mxu0 0.0
    %5246 = vmatpush1.msra.mxu0 0.0
    %5247 = vmatprep.subr.mxu0 0.0
    %5248 = vmatpush1.msra.mxu0 0.0
    %5249 = vmatprep.subr.mxu0 0.0
    %5250 = vmatpush1.msra.mxu0 0.0
    %5251 = vmatprep.subr.mxu0 0.0
    %5252 = vmatpush1.msra.mxu0 0.0
    %5253 = vmatprep.subr.mxu0 0.0
    %5254 = vmatpush1.msra.mxu0 0.0
    %5255 = vmatprep.subr.mxu0 0.0
    %5256 = vmatpush1.msra.mxu0 0.0
    %5257 = vmatprep.subr.mxu0 0.0
    %5258 = vmatpush1.msra.mxu0 0.0
    %5259 = vmatprep.subr.mxu0 0.0
    %5260 = vmatpush1.msra.mxu0 0.0
    %5261 = vmatprep.subr.mxu0 0.0
    %5262 = vmatpush1.msra.mxu0 0.0
    %5263 = vmatprep.subr.mxu0 0.0
    %5264 = vmatpush1.msra.mxu0 0.0
    %5265 = vmatprep.mubr.f32.mxu0 0.0
    %5266 = vmatmul.mubr.f32.gmra.mrb[0].mxu0 %v5199
    %v5267 = vpop.f32.mrb[0].mxu0
    %v5268 = vadd.f32 0.0, %v5267
    %v5269 = vpop.f32.mrb[0].mxu0
    %5270 = vdwg.mxu0
    %5273 = vrot.lane.b32.xlu0 %v4524, 8
    %v5274 = vpop.permute.xlu0 %5273
    %5275 = vrot.lane.b32.xlu0 %v4600, 8
    %v5276 = vpop.permute.xlu0 %5275
    %5281 = vrot.lane.b32.xlu0 %v4858, 16
    %v5282 = vpop.permute.xlu0 %5281
    %5283 = vrot.lane.b32.xlu0 %v4934, 16
    %v5284 = vpop.permute.xlu0 %5283
    %5289 = vrot.lane.b32.xlu0 %v5192, 24
    %v5290 = vpop.permute.xlu0 %5289
    %5291 = vrot.lane.b32.xlu0 %v5268, 24
    %v5292 = vpop.permute.xlu0 %5291
    %v5295 = vsel %vm476, %v4190, %v5274
    %v5296 = vsel %vm476, %v4266, %v5276
    %v5297 = vsel %vm1834, %v5295, %v5282
    %v5298 = vsel %vm1834, %v5296, %v5284
    %v5299 = vsel %vm1837, %v5297, %v5290
    %v5300 = vsel %vm1837, %v5298, %v5292
    %s5301 = scalar_lea.vmem %s8, 32
    %v5302 = vld [vmem:[%s5301] sm:$0xff]
    %v5303 = vld [vmem:[%s5301 + $0x8] sm:$0xff]
    %v5304 = vld [vmem:[%s5301 + $0x10] sm:$0xff]
    %v5305 = vld [vmem:[%s5301 + $0x18] sm:$0xff]
    %v5307 = vsel %vm244, %v5299, 0
    %v5310 = vsel %vm244, %v5300, 0
    %5312 = vmatprep.subr.mxu0 0.0
    %5313 = vmatpush1.msra.mxu0 %v5302
    %5314 = vmatprep.subr.mxu0 0.0
    %5315 = vmatpush1.msra.mxu0 %v5303
    %5316 = vmatprep.subr.mxu0 0.0
    %5317 = vmatpush1.msra.mxu0 %v5304
    %5318 = vmatprep.subr.mxu0 0.0
    %5319 = vmatpush1.msra.mxu0 %v5305
    %5320 = vmatprep.subr.mxu0 0.0
    %5321 = vmatpush1.msra.mxu0 0.0
    %5322 = vmatprep.subr.mxu0 0.0
    %5323 = vmatpush1.msra.mxu0 0.0
    %5324 = vmatprep.subr.mxu0 0.0
    %5325 = vmatpush1.msra.mxu0 0.0
    %5326 = vmatprep.subr.mxu0 0.0
    %5327 = vmatpush1.msra.mxu0 0.0
    %5328 = vmatprep.subr.mxu0 0.0
    %5329 = vmatpush1.msra.mxu0 0.0
    %5330 = vmatprep.subr.mxu0 0.0
    %5331 = vmatpush1.msra.mxu0 0.0
    %5332 = vmatprep.subr.mxu0 0.0
    %5333 = vmatpush1.msra.mxu0 0.0
    %5334 = vmatprep.subr.mxu0 0.0
    %5335 = vmatpush1.msra.mxu0 0.0
    %5336 = vmatprep.subr.mxu0 0.0
    %5337 = vmatpush1.msra.mxu0 0.0
    %5338 = vmatprep.subr.mxu0 0.0
    %5339 = vmatpush1.msra.mxu0 0.0
    %5340 = vmatprep.subr.mxu0 0.0
    %5341 = vmatpush1.msra.mxu0 0.0
    %5342 = vmatprep.subr.mxu0 0.0
    %5343 = vmatpush1.msra.mxu0 0.0
    %5344 = vmatprep.subr.mxu0 0.0
    %5345 = vmatpush1.msra.mxu0 0.0
    %5346 = vmatprep.subr.mxu0 0.0
    %5347 = vmatpush1.msra.mxu0 0.0
    %5348 = vmatprep.subr.mxu0 0.0
    %5349 = vmatpush1.msra.mxu0 0.0
    %5350 = vmatprep.subr.mxu0 0.0
    %5351 = vmatpush1.msra.mxu0 0.0
    %5352 = vmatprep.subr.mxu0 0.0
    %5353 = vmatpush1.msra.mxu0 0.0
    %5354 = vmatprep.subr.mxu0 0.0
    %5355 = vmatpush1.msra.mxu0 0.0
    %5356 = vmatprep.subr.mxu0 0.0
    %5357 = vmatpush1.msra.mxu0 0.0
    %5358 = vmatprep.subr.mxu0 0.0
    %5359 = vmatpush1.msra.mxu0 0.0
    %5360 = vmatprep.subr.mxu0 0.0
    %5361 = vmatpush1.msra.mxu0 0.0
    %5362 = vmatprep.subr.mxu0 0.0
    %5363 = vmatpush1.msra.mxu0 0.0
    %5364 = vmatprep.subr.mxu0 0.0
    %5365 = vmatpush1.msra.mxu0 0.0
    %5366 = vmatprep.subr.mxu0 0.0
    %5367 = vmatpush1.msra.mxu0 0.0
    %5368 = vmatprep.subr.mxu0 0.0
    %5369 = vmatpush1.msra.mxu0 0.0
    %5370 = vmatprep.subr.mxu0 0.0
    %5371 = vmatpush1.msra.mxu0 0.0
    %5372 = vmatprep.subr.mxu0 0.0
    %5373 = vmatpush1.msra.mxu0 0.0
    %5374 = vmatprep.subr.mxu0 0.0
    %5375 = vmatpush1.msra.mxu0 0.0
    %5376 = vmatprep.mubr.f32.mxu0 0.0
    %5377 = vmatmul.mubr.f32.gmra.mrb[0].mxu0 %v5307
    %v5378 = vpop.f32.mrb[0].mxu0
    %v5379 = vadd.f32 0.0, %v5378
    %v5380 = vpop.f32.mrb[0].mxu0
    %5381 = vmatprep.mubr.f32.mxu0 0.0
    %5382 = vmatmul.mubr.f32.gmra.mrb[0].mxu0 %v5310
    %v5383 = vpop.f32.mrb[0].mxu0
    %v5384 = vadd.f32 0.0, %v5383
    %v5385 = vpop.f32.mrb[0].mxu0
    %5386 = vdwg.mxu0
    %v5387 = vadd.f32 %v3787, %v5379
    %v5388 = vadd.f32 %v3788, %v5384
    %s5389 = scalar_lea.vmem [#allocation11], 1
    %v5390 = vld [vmem:[%s5389] sm:$0x1]
    %v5392 = vlaneseq
    %v5393 = vshrl.u32 %v5392, 7
    %v5394 = vsub.s32 0, %v5393
    %v5395 = vrot.slane %v5390, %v5394
    %v5397 = vadd.f32 %v5387, %v5395
    %v5398 = vadd.f32 %v5388, %v5395
    %v5399 = vld [vmem:[#allocation7 + $0x4] sm:$0x1]
    %v5400 = vld [vmem:[#allocation8 + $0x4] sm:$0x1]
    %v5401 = vsel %vm244, %v5397, 0.0
    %5402 = vadd.xlane.f32.xlu0 %v5401
    %v5403 = vpop.xlane.xlu0 %5402
    %v5404 = vsel %vm244, %v5398, 0.0
    %5405 = vadd.xlane.f32.xlu0 %v5404
    %v5406 = vpop.xlane.xlu0 %5405
    %v5407 = vmul.f32 %v5403, %v334
    %v5408 = vmul.f32 %v5406, %v334
    %v5409 = vsub.f32 %v5397, %v5407
    %v5410 = vsub.f32 %v5398, %v5408
    %v5411 = vmul.f32 %v5409, %v5409
    %v5412 = vmul.f32 %v5410, %v5410
    %v5413 = vsel %vm244, %v5411, 0.0
    %5414 = vadd.xlane.f32.xlu0 %v5413
    %v5415 = vpop.xlane.xlu0 %5414
    %v5416 = vsel %vm244, %v5412, 0.0
    %5417 = vadd.xlane.f32.xlu0 %v5416
    %v5418 = vpop.xlane.xlu0 %5417
    %v5419 = vmul.f32 %v5415, 0.032258064
    %v5420 = vmul.f32 %v5418, 0.032258064
    %v5421 = vlaneseq
    %v5422 = vshrl.u32 %v5421, 7
    %v5423 = vsub.s32 0, %v5422
    %v5424 = vrot.slane %v5399, %v5423
    %v5425 = vmul.f32 %v5424, %v5409
    %v5426 = vmul.f32 %v5424, %v5410
    %v5427 = vrsqrt.pop %v5419
    %v5428 = vmul.f32 %v5419, %v5427
    %vm5429 = vcmp.eq.f32.partialorder %v5419, inf
    %v5430 = vsel %vm5429, %v5419, %v5428
    %vm5431 = vcmp.eq.f32.partialorder %v5419, 0.0
    %v5432 = vand.u32 %v5419, 2147483648
    %v5433 = vsel %vm5431, %v5432, %v5430
    %v5434 = vrsqrt.pop %v5420
    %v5435 = vmul.f32 %v5420, %v5434
    %vm5436 = vcmp.eq.f32.partialorder %v5420, inf
    %v5437 = vsel %vm5436, %v5420, %v5435
    %vm5438 = vcmp.eq.f32.partialorder %v5420, 0.0
    %v5439 = vand.u32 %v5420, 2147483648
    %v5440 = vsel %vm5438, %v5439, %v5437
    %v5441 = vadd.f32 %v5433, 1e-06
    %v5442 = vadd.f32 %v5440, 1e-06
    %v5443 = vrcp.pop %v5441
    %v5444 = vmul.f32 %v5425, %v5443
    %v5445 = vrcp.pop %v5442
    %v5446 = vmul.f32 %v5426, %v5445
    %v5447 = vlaneseq
    %v5448 = vshrl.u32 %v5447, 7
    %v5449 = vsub.s32 0, %v5448
    %v5450 = vrot.slane %v5400, %v5449
    %v5451 = vadd.f32 %v5444, %v5450
    %v5452 = vadd.f32 %v5446, %v5450
    %s5453 = scalar_lea.vmem %s10, 32
    %v5454 = vld [vmem:[%s5453] sm:$0xff]
    %v5455 = vld [vmem:[%s5453 + $0x8] sm:$0xff]
    %v5456 = vld [vmem:[%s5453 + $0x10] sm:$0xff]
    %v5457 = vld [vmem:[%s5453 + $0x18] sm:$0xff]
    %s5458 = scalar_lea.vmem [#allocation13], 1
    %v5459 = vld [vmem:[%s5458] sm:$0x1]
    %v5461 = vlaneseq
    %v5462 = vshrl.u32 %v5461, 7
    %v5463 = vsub.s32 0, %v5462
    %v5464 = vrot.slane %v5459, %v5463
    %v5467 = vsel %vm244, %v5451, 0
    %v5470 = vsel %vm244, %v5452, 0
    %5472 = vmatprep.subr.mxu0 0.0
    %5473 = vmatpush1.msra.mxu0 %v5454
    %5474 = vmatprep.subr.mxu0 0.0
    %5475 = vmatpush1.msra.mxu0 %v5455
    %5476 = vmatprep.subr.mxu0 0.0
    %5477 = vmatpush1.msra.mxu0 %v5456
    %5478 = vmatprep.subr.mxu0 0.0
    %5479 = vmatpush1.msra.mxu0 %v5457
    %5480 = vmatprep.subr.mxu0 0.0
    %5481 = vmatpush1.msra.mxu0 0.0
    %5482 = vmatprep.subr.mxu0 0.0
    %5483 = vmatpush1.msra.mxu0 0.0
    %5484 = vmatprep.subr.mxu0 0.0
    %5485 = vmatpush1.msra.mxu0 0.0
    %5486 = vmatprep.subr.mxu0 0.0
    %5487 = vmatpush1.msra.mxu0 0.0
    %5488 = vmatprep.subr.mxu0 0.0
    %5489 = vmatpush1.msra.mxu0 0.0
    %5490 = vmatprep.subr.mxu0 0.0
    %5491 = vmatpush1.msra.mxu0 0.0
    %5492 = vmatprep.subr.mxu0 0.0
    %5493 = vmatpush1.msra.mxu0 0.0
    %5494 = vmatprep.subr.mxu0 0.0
    %5495 = vmatpush1.msra.mxu0 0.0
    %5496 = vmatprep.subr.mxu0 0.0
    %5497 = vmatpush1.msra.mxu0 0.0
    %5498 = vmatprep.subr.mxu0 0.0
    %5499 = vmatpush1.msra.mxu0 0.0
    %5500 = vmatprep.subr.mxu0 0.0
    %5501 = vmatpush1.msra.mxu0 0.0
    %5502 = vmatprep.subr.mxu0 0.0
    %5503 = vmatpush1.msra.mxu0 0.0
    %5504 = vmatprep.subr.mxu0 0.0
    %5505 = vmatpush1.msra.mxu0 0.0
    %5506 = vmatprep.subr.mxu0 0.0
    %5507 = vmatpush1.msra.mxu0 0.0
    %5508 = vmatprep.subr.mxu0 0.0
    %5509 = vmatpush1.msra.mxu0 0.0
    %5510 = vmatprep.subr.mxu0 0.0
    %5511 = vmatpush1.msra.mxu0 0.0
    %5512 = vmatprep.subr.mxu0 0.0
    %5513 = vmatpush1.msra.mxu0 0.0
    %5514 = vmatprep.subr.mxu0 0.0
    %5515 = vmatpush1.msra.mxu0 0.0
    %5516 = vmatprep.subr.mxu0 0.0
    %5517 = vmatpush1.msra.mxu0 0.0
    %5518 = vmatprep.subr.mxu0 0.0
    %5519 = vmatpush1.msra.mxu0 0.0
    %5520 = vmatprep.subr.mxu0 0.0
    %5521 = vmatpush1.msra.mxu0 0.0
    %5522 = vmatprep.subr.mxu0 0.0
    %5523 = vmatpush1.msra.mxu0 0.0
    %5524 = vmatprep.subr.mxu0 0.0
    %5525 = vmatpush1.msra.mxu0 0.0
    %5526 = vmatprep.subr.mxu0 0.0
    %5527 = vmatpush1.msra.mxu0 0.0
    %5528 = vmatprep.subr.mxu0 0.0
    %5529 = vmatpush1.msra.mxu0 0.0
    %5530 = vmatprep.subr.mxu0 0.0
    %5531 = vmatpush1.msra.mxu0 0.0
    %5532 = vmatprep.subr.mxu0 0.0
    %5533 = vmatpush1.msra.mxu0 0.0
    %5534 = vmatprep.subr.mxu0 0.0
    %5535 = vmatpush1.msra.mxu0 0.0
    %5536 = vmatprep.mubr.f32.mxu0 0.0
    %5537 = vmatmul.mubr.f32.gmra.mrb[0].mxu0 %v5467
    %v5538 = vpop.f32.mrb[0].mxu0
    %v5539 = vadd.f32 %v5464, %v5538
    %v5540 = vpop.f32.mrb[0].mxu0
    %5541 = vmatprep.mubr.f32.mxu0 0.0
    %5542 = vmatmul.mubr.f32.gmra.mrb[0].mxu0 %v5470
    %v5543 = vpop.f32.mrb[0].mxu0
    %v5544 = vadd.f32 %v5464, %v5543
    %v5545 = vpop.f32.mrb[0].mxu0
    %5546 = vdwg.mxu0
    %5547 = vrot.lane.b32.xlu0 %v318, 64
    %v5548 = vpop.permute.xlu0 %5547
    %v5550 = vsel %vm476, %v5539, 0
    %v5552 = vsel %vm476, %v5548, 0
    %5554 = vmatprep.subr.mxu0 0.0
    %5555 = vmatpush1.xpose.msra.mxu0 %v5552
    %5556 = vmatprep.subr.mxu0 0.0
    %5557 = vmatpush1.xpose.msra.mxu0 0.0
    %5558 = vmatprep.subr.mxu0 0.0
    %5559 = vmatpush1.xpose.msra.mxu0 0.0
    %5560 = vmatprep.subr.mxu0 0.0
    %5561 = vmatpush1.xpose.msra.mxu0 0.0
    %5562 = vmatprep.subr.mxu0 0.0
    %5563 = vmatpush1.xpose.msra.mxu0 0.0
    %5564 = vmatprep.subr.mxu0 0.0
    %5565 = vmatpush1.xpose.msra.mxu0 0.0
    %5566 = vmatprep.subr.mxu0 0.0
    %5567 = vmatpush1.xpose.msra.mxu0 0.0
    %5568 = vmatprep.subr.mxu0 0.0
    %5569 = vmatpush1.xpose.msra.mxu0 0.0
    %5570 = vmatprep.subr.mxu0 0.0
    %5571 = vmatpush1.xpose.msra.mxu0 0.0
    %5572 = vmatprep.subr.mxu0 0.0
    %5573 = vmatpush1.xpose.msra.mxu0 0.0
    %5574 = vmatprep.subr.mxu0 0.0
    %5575 = vmatpush1.xpose.msra.mxu0 0.0
    %5576 = vmatprep.subr.mxu0 0.0
    %5577 = vmatpush1.xpose.msra.mxu0 0.0
    %5578 = vmatprep.subr.mxu0 0.0
    %5579 = vmatpush1.xpose.msra.mxu0 0.0
    %5580 = vmatprep.subr.mxu0 0.0
    %5581 = vmatpush1.xpose.msra.mxu0 0.0
    %5582 = vmatprep.subr.mxu0 0.0
    %5583 = vmatpush1.xpose.msra.mxu0 0.0
    %5584 = vmatprep.subr.mxu0 0.0
    %5585 = vmatpush1.xpose.msra.mxu0 0.0
    %5586 = vmatprep.subr.mxu0 0.0
    %5587 = vmatpush1.xpose.msra.mxu0 0.0
    %5588 = vmatprep.subr.mxu0 0.0
    %5589 = vmatpush1.xpose.msra.mxu0 0.0
    %5590 = vmatprep.subr.mxu0 0.0
    %5591 = vmatpush1.xpose.msra.mxu0 0.0
    %5592 = vmatprep.subr.mxu0 0.0
    %5593 = vmatpush1.xpose.msra.mxu0 0.0
    %5594 = vmatprep.subr.mxu0 0.0
    %5595 = vmatpush1.xpose.msra.mxu0 0.0
    %5596 = vmatprep.subr.mxu0 0.0
    %5597 = vmatpush1.xpose.msra.mxu0 0.0
    %5598 = vmatprep.subr.mxu0 0.0
    %5599 = vmatpush1.xpose.msra.mxu0 0.0
    %5600 = vmatprep.subr.mxu0 0.0
    %5601 = vmatpush1.xpose.msra.mxu0 0.0
    %5602 = vmatprep.subr.mxu0 0.0
    %5603 = vmatpush1.xpose.msra.mxu0 0.0
    %5604 = vmatprep.subr.mxu0 0.0
    %5605 = vmatpush1.xpose.msra.mxu0 0.0
    %5606 = vmatprep.subr.mxu0 0.0
    %5607 = vmatpush1.xpose.msra.mxu0 0.0
    %5608 = vmatprep.subr.mxu0 0.0
    %5609 = vmatpush1.xpose.msra.mxu0 0.0
    %5610 = vmatprep.subr.mxu0 0.0
    %5611 = vmatpush1.xpose.msra.mxu0 0.0
    %5612 = vmatprep.subr.mxu0 0.0
    %5613 = vmatpush1.xpose.msra.mxu0 0.0
    %5614 = vmatprep.subr.mxu0 0.0
    %5615 = vmatpush1.xpose.msra.mxu0 0.0
    %5616 = vmatprep.subr.mxu0 0.0
    %5617 = vmatpush1.xpose.msra.mxu0 0.0
    %5618 = vmatprep.mubr.f32.mxu0 0.0
    %5619 = vmatmul.mubr.f32.gmra.mrb[0].mxu0 %v5550
    %v5620 = vpop.f32.mrb[0].mxu0
    %v5621 = vadd.f32 0.0, %v5620
    %v5622 = vpop.f32.mrb[0].mxu0
    %5623 = vdwg.mxu0
    %5624 = vrot.lane.b32.xlu0 %v323, 64
    %v5625 = vpop.permute.xlu0 %5624
    %v5627 = vsel %vm476, %v5544, 0
    %v5629 = vsel %vm476, %v5625, 0
    %5631 = vmatprep.subr.mxu0 0.0
    %5632 = vmatpush1.xpose.msra.mxu0 %v5629
    %5633 = vmatprep.subr.mxu0 0.0
    %5634 = vmatpush1.xpose.msra.mxu0 0.0
    %5635 = vmatprep.subr.mxu0 0.0
    %5636 = vmatpush1.xpose.msra.mxu0 0.0
    %5637 = vmatprep.subr.mxu0 0.0
    %5638 = vmatpush1.xpose.msra.mxu0 0.0
    %5639 = vmatprep.subr.mxu0 0.0
    %5640 = vmatpush1.xpose.msra.mxu0 0.0
    %5641 = vmatprep.subr.mxu0 0.0
    %5642 = vmatpush1.xpose.msra.mxu0 0.0
    %5643 = vmatprep.subr.mxu0 0.0
    %5644 = vmatpush1.xpose.msra.mxu0 0.0
    %5645 = vmatprep.subr.mxu0 0.0
    %5646 = vmatpush1.xpose.msra.mxu0 0.0
    %5647 = vmatprep.subr.mxu0 0.0
    %5648 = vmatpush1.xpose.msra.mxu0 0.0
    %5649 = vmatprep.subr.mxu0 0.0
    %5650 = vmatpush1.xpose.msra.mxu0 0.0
    %5651 = vmatprep.subr.mxu0 0.0
    %5652 = vmatpush1.xpose.msra.mxu0 0.0
    %5653 = vmatprep.subr.mxu0 0.0
    %5654 = vmatpush1.xpose.msra.mxu0 0.0
    %5655 = vmatprep.subr.mxu0 0.0
    %5656 = vmatpush1.xpose.msra.mxu0 0.0
    %5657 = vmatprep.subr.mxu0 0.0
    %5658 = vmatpush1.xpose.msra.mxu0 0.0
    %5659 = vmatprep.subr.mxu0 0.0
    %5660 = vmatpush1.xpose.msra.mxu0 0.0
    %5661 = vmatprep.subr.mxu0 0.0
    %5662 = vmatpush1.xpose.msra.mxu0 0.0
    %5663 = vmatprep.subr.mxu0 0.0
    %5664 = vmatpush1.xpose.msra.mxu0 0.0
    %5665 = vmatprep.subr.mxu0 0.0
    %5666 = vmatpush1.xpose.msra.mxu0 0.0
    %5667 = vmatprep.subr.mxu0 0.0
    %5668 = vmatpush1.xpose.msra.mxu0 0.0
    %5669 = vmatprep.subr.mxu0 0.0
    %5670 = vmatpush1.xpose.msra.mxu0 0.0
    %5671 = vmatprep.subr.mxu0 0.0
    %5672 = vmatpush1.xpose.msra.mxu0 0.0
    %5673 = vmatprep.subr.mxu0 0.0
    %5674 = vmatpush1.xpose.msra.mxu0 0.0
    %5675 = vmatprep.subr.mxu0 0.0
    %5676 = vmatpush1.xpose.msra.mxu0 0.0
    %5677 = vmatprep.subr.mxu0 0.0
    %5678 = vmatpush1.xpose.msra.mxu0 0.0
    %5679 = vmatprep.subr.mxu0 0.0
    %5680 = vmatpush1.xpose.msra.mxu0 0.0
    %5681 = vmatprep.subr.mxu0 0.0
    %5682 = vmatpush1.xpose.msra.mxu0 0.0
    %5683 = vmatprep.subr.mxu0 0.0
    %5684 = vmatpush1.xpose.msra.mxu0 0.0
    %5685 = vmatprep.subr.mxu0 0.0
    %5686 = vmatpush1.xpose.msra.mxu0 0.0
    %5687 = vmatprep.subr.mxu0 0.0
    %5688 = vmatpush1.xpose.msra.mxu0 0.0
    %5689 = vmatprep.subr.mxu0 0.0
    %5690 = vmatpush1.xpose.msra.mxu0 0.0
    %5691 = vmatprep.subr.mxu0 0.0
    %5692 = vmatpush1.xpose.msra.mxu0 0.0
    %5693 = vmatprep.subr.mxu0 0.0
    %5694 = vmatpush1.xpose.msra.mxu0 0.0
    %5695 = vmatprep.mubr.f32.mxu0 0.0
    %5696 = vmatmul.mubr.f32.gmra.mrb[0].mxu0 %v5627
    %v5697 = vpop.f32.mrb[0].mxu0
    %v5698 = vadd.f32 0.0, %v5697
    %v5699 = vpop.f32.mrb[0].mxu0
    %5700 = vdwg.mxu0
    %v5701 = vmul.f32 %v5621, 0.35355338
    %v5702 = vmul.f32 %v5698, 0.35355338
    %v5703 = vadd.f32 %v5701, %v231
    %v5704 = vadd.f32 %v5702, %v232
    %v5705 = vsel %vm476, %v5703, -inf
    %5706 = vmax.xlane.f32.xlu0 %v5705
    %v5707 = vpop.xlane.xlu0 %5706
    %v5708 = vsel %vm476, %v5704, -inf
    %5709 = vmax.xlane.f32.xlu0 %v5708
    %v5710 = vpop.xlane.xlu0 %5709
    %v5711 = vsub.f32 %v5703, %v5707
    %v5712 = vsub.f32 %v5704, %v5710
    %v5713 = vmul.f32 %v5711, 1.442695
    %v5714 = vpow.pop %v5713
    %v5715 = vmul.f32 %v5712, 1.442695
    %v5716 = vpow.pop %v5715
    %v5717 = vsel %vm476, %v5714, 0.0
    %5718 = vadd.xlane.f32.xlu0 %v5717
    %v5719 = vpop.xlane.xlu0 %5718
    %v5720 = vsel %vm476, %v5716, 0.0
    %5721 = vadd.xlane.f32.xlu0 %v5720
    %v5722 = vpop.xlane.xlu0 %5721
    %v5723 = vrcp.pop %v5719
    %v5724 = vmul.f32 %v5714, %v5723
    %v5725 = vrcp.pop %v5722
    %v5726 = vmul.f32 %v5716, %v5725
    %5727 = vrot.lane.b32.xlu0 %v318, 32
    %v5728 = vpop.permute.xlu0 %5727
    %v5731 = vsel %vm476, %v5724, 0
    %5733 = vmatprep.subr.mxu0 0.0
    %5734 = vmatpush1.msra.mxu0 %v5728
    %5735 = vmatprep.subr.mxu0 0.0
    %5736 = vmatpush1.msra.mxu0 0.0
    %5737 = vmatprep.subr.mxu0 0.0
    %5738 = vmatpush1.msra.mxu0 0.0
    %5739 = vmatprep.subr.mxu0 0.0
    %5740 = vmatpush1.msra.mxu0 0.0
    %5741 = vmatprep.subr.mxu0 0.0
    %5742 = vmatpush1.msra.mxu0 0.0
    %5743 = vmatprep.subr.mxu0 0.0
    %5744 = vmatpush1.msra.mxu0 0.0
    %5745 = vmatprep.subr.mxu0 0.0
    %5746 = vmatpush1.msra.mxu0 0.0
    %5747 = vmatprep.subr.mxu0 0.0
    %5748 = vmatpush1.msra.mxu0 0.0
    %5749 = vmatprep.subr.mxu0 0.0
    %5750 = vmatpush1.msra.mxu0 0.0
    %5751 = vmatprep.subr.mxu0 0.0
    %5752 = vmatpush1.msra.mxu0 0.0
    %5753 = vmatprep.subr.mxu0 0.0
    %5754 = vmatpush1.msra.mxu0 0.0
    %5755 = vmatprep.subr.mxu0 0.0
    %5756 = vmatpush1.msra.mxu0 0.0
    %5757 = vmatprep.subr.mxu0 0.0
    %5758 = vmatpush1.msra.mxu0 0.0
    %5759 = vmatprep.subr.mxu0 0.0
    %5760 = vmatpush1.msra.mxu0 0.0
    %5761 = vmatprep.subr.mxu0 0.0
    %5762 = vmatpush1.msra.mxu0 0.0
    %5763 = vmatprep.subr.mxu0 0.0
    %5764 = vmatpush1.msra.mxu0 0.0
    %5765 = vmatprep.subr.mxu0 0.0
    %5766 = vmatpush1.msra.mxu0 0.0
    %5767 = vmatprep.subr.mxu0 0.0
    %5768 = vmatpush1.msra.mxu0 0.0
    %5769 = vmatprep.subr.mxu0 0.0
    %5770 = vmatpush1.msra.mxu0 0.0
    %5771 = vmatprep.subr.mxu0 0.0
    %5772 = vmatpush1.msra.mxu0 0.0
    %5773 = vmatprep.subr.mxu0 0.0
    %5774 = vmatpush1.msra.mxu0 0.0
    %5775 = vmatprep.subr.mxu0 0.0
    %5776 = vmatpush1.msra.mxu0 0.0
    %5777 = vmatprep.subr.mxu0 0.0
    %5778 = vmatpush1.msra.mxu0 0.0
    %5779 = vmatprep.subr.mxu0 0.0
    %5780 = vmatpush1.msra.mxu0 0.0
    %5781 = vmatprep.subr.mxu0 0.0
    %5782 = vmatpush1.msra.mxu0 0.0
    %5783 = vmatprep.subr.mxu0 0.0
    %5784 = vmatpush1.msra.mxu0 0.0
    %5785 = vmatprep.subr.mxu0 0.0
    %5786 = vmatpush1.msra.mxu0 0.0
    %5787 = vmatprep.subr.mxu0 0.0
    %5788 = vmatpush1.msra.mxu0 0.0
    %5789 = vmatprep.subr.mxu0 0.0
    %5790 = vmatpush1.msra.mxu0 0.0
    %5791 = vmatprep.subr.mxu0 0.0
    %5792 = vmatpush1.msra.mxu0 0.0
    %5793 = vmatprep.subr.mxu0 0.0
    %5794 = vmatpush1.msra.mxu0 0.0
    %5795 = vmatprep.subr.mxu0 0.0
    %5796 = vmatpush1.msra.mxu0 0.0
    %5797 = vmatprep.mubr.f32.mxu0 0.0
    %5798 = vmatmul.mubr.f32.gmra.mrb[0].mxu0 %v5731
    %v5799 = vpop.f32.mrb[0].mxu0
    %v5800 = vadd.f32 0.0, %v5799
    %v5801 = vpop.f32.mrb[0].mxu0
    %5802 = vdwg.mxu0
    %5803 = vrot.lane.b32.xlu0 %v323, 32
    %v5804 = vpop.permute.xlu0 %5803
    %v5807 = vsel %vm476, %v5726, 0
    %5809 = vmatprep.subr.mxu0 0.0
    %5810 = vmatpush1.msra.mxu0 %v5804
    %5811 = vmatprep.subr.mxu0 0.0
    %5812 = vmatpush1.msra.mxu0 0.0
    %5813 = vmatprep.subr.mxu0 0.0
    %5814 = vmatpush1.msra.mxu0 0.0
    %5815 = vmatprep.subr.mxu0 0.0
    %5816 = vmatpush1.msra.mxu0 0.0
    %5817 = vmatprep.subr.mxu0 0.0
    %5818 = vmatpush1.msra.mxu0 0.0
    %5819 = vmatprep.subr.mxu0 0.0
    %5820 = vmatpush1.msra.mxu0 0.0
    %5821 = vmatprep.subr.mxu0 0.0
    %5822 = vmatpush1.msra.mxu0 0.0
    %5823 = vmatprep.subr.mxu0 0.0
    %5824 = vmatpush1.msra.mxu0 0.0
    %5825 = vmatprep.subr.mxu0 0.0
    %5826 = vmatpush1.msra.mxu0 0.0
    %5827 = vmatprep.subr.mxu0 0.0
    %5828 = vmatpush1.msra.mxu0 0.0
    %5829 = vmatprep.subr.mxu0 0.0
    %5830 = vmatpush1.msra.mxu0 0.0
    %5831 = vmatprep.subr.mxu0 0.0
    %5832 = vmatpush1.msra.mxu0 0.0
    %5833 = vmatprep.subr.mxu0 0.0
    %5834 = vmatpush1.msra.mxu0 0.0
    %5835 = vmatprep.subr.mxu0 0.0
    %5836 = vmatpush1.msra.mxu0 0.0
    %5837 = vmatprep.subr.mxu0 0.0
    %5838 = vmatpush1.msra.mxu0 0.0
    %5839 = vmatprep.subr.mxu0 0.0
    %5840 = vmatpush1.msra.mxu0 0.0
    %5841 = vmatprep.subr.mxu0 0.0
    %5842 = vmatpush1.msra.mxu0 0.0
    %5843 = vmatprep.subr.mxu0 0.0
    %5844 = vmatpush1.msra.mxu0 0.0
    %5845 = vmatprep.subr.mxu0 0.0
    %5846 = vmatpush1.msra.mxu0 0.0
    %5847 = vmatprep.subr.mxu0 0.0
    %5848 = vmatpush1.msra.mxu0 0.0
    %5849 = vmatprep.subr.mxu0 0.0
    %5850 = vmatpush1.msra.mxu0 0.0
    %5851 = vmatprep.subr.mxu0 0.0
    %5852 = vmatpush1.msra.mxu0 0.0
    %5853 = vmatprep.subr.mxu0 0.0
    %5854 = vmatpush1.msra.mxu0 0.0
    %5855 = vmatprep.subr.mxu0 0.0
    %5856 = vmatpush1.msra.mxu0 0.0
    %5857 = vmatprep.subr.mxu0 0.0
    %5858 = vmatpush1.msra.mxu0 0.0
    %5859 = vmatprep.subr.mxu0 0.0
    %5860 = vmatpush1.msra.mxu0 0.0
    %5861 = vmatprep.subr.mxu0 0.0
    %5862 = vmatpush1.msra.mxu0 0.0
    %5863 = vmatprep.subr.mxu0 0.0
    %5864 = vmatpush1.msra.mxu0 0.0
    %5865 = vmatprep.subr.mxu0 0.0
    %5866 = vmatpush1.msra.mxu0 0.0
    %5867 = vmatprep.subr.mxu0 0.0
    %5868 = vmatpush1.msra.mxu0 0.0
    %5869 = vmatprep.subr.mxu0 0.0
    %5870 = vmatpush1.msra.mxu0 0.0
    %5871 = vmatprep.subr.mxu0 0.0
    %5872 = vmatpush1.msra.mxu0 0.0
    %5873 = vmatprep.mubr.f32.mxu0 0.0
    %5874 = vmatmul.mubr.f32.gmra.mrb[0].mxu0 %v5807
    %v5875 = vpop.f32.mrb[0].mxu0
    %v5876 = vadd.f32 0.0, %v5875
    %v5877 = vpop.f32.mrb[0].mxu0
    %5878 = vdwg.mxu0
    %5879 = vrot.lane.b32.xlu0 %v5539, 120
    %v5880 = vpop.permute.xlu0 %5879
    %5881 = vrot.lane.b32.xlu0 %v318, 56
    %v5882 = vpop.permute.xlu0 %5881
    %v5883 = vsel %vm476, %v5880, 0
    %v5885 = vsel %vm476, %v5882, 0
    %5887 = vmatprep.subr.mxu0 0.0
    %5888 = vmatpush1.xpose.msra.mxu0 %v5885
    %5889 = vmatprep.subr.mxu0 0.0
    %5890 = vmatpush1.xpose.msra.mxu0 0.0
    %5891 = vmatprep.subr.mxu0 0.0
    %5892 = vmatpush1.xpose.msra.mxu0 0.0
    %5893 = vmatprep.subr.mxu0 0.0
    %5894 = vmatpush1.xpose.msra.mxu0 0.0
    %5895 = vmatprep.subr.mxu0 0.0
    %5896 = vmatpush1.xpose.msra.mxu0 0.0
    %5897 = vmatprep.subr.mxu0 0.0
    %5898 = vmatpush1.xpose.msra.mxu0 0.0
    %5899 = vmatprep.subr.mxu0 0.0
    %5900 = vmatpush1.xpose.msra.mxu0 0.0
    %5901 = vmatprep.subr.mxu0 0.0
    %5902 = vmatpush1.xpose.msra.mxu0 0.0
    %5903 = vmatprep.subr.mxu0 0.0
    %5904 = vmatpush1.xpose.msra.mxu0 0.0
    %5905 = vmatprep.subr.mxu0 0.0
    %5906 = vmatpush1.xpose.msra.mxu0 0.0
    %5907 = vmatprep.subr.mxu0 0.0
    %5908 = vmatpush1.xpose.msra.mxu0 0.0
    %5909 = vmatprep.subr.mxu0 0.0
    %5910 = vmatpush1.xpose.msra.mxu0 0.0
    %5911 = vmatprep.subr.mxu0 0.0
    %5912 = vmatpush1.xpose.msra.mxu0 0.0
    %5913 = vmatprep.subr.mxu0 0.0
    %5914 = vmatpush1.xpose.msra.mxu0 0.0
    %5915 = vmatprep.subr.mxu0 0.0
    %5916 = vmatpush1.xpose.msra.mxu0 0.0
    %5917 = vmatprep.subr.mxu0 0.0
    %5918 = vmatpush1.xpose.msra.mxu0 0.0
    %5919 = vmatprep.subr.mxu0 0.0
    %5920 = vmatpush1.xpose.msra.mxu0 0.0
    %5921 = vmatprep.subr.mxu0 0.0
    %5922 = vmatpush1.xpose.msra.mxu0 0.0
    %5923 = vmatprep.subr.mxu0 0.0
    %5924 = vmatpush1.xpose.msra.mxu0 0.0
    %5925 = vmatprep.subr.mxu0 0.0
    %5926 = vmatpush1.xpose.msra.mxu0 0.0
    %5927 = vmatprep.subr.mxu0 0.0
    %5928 = vmatpush1.xpose.msra.mxu0 0.0
    %5929 = vmatprep.subr.mxu0 0.0
    %5930 = vmatpush1.xpose.msra.mxu0 0.0
    %5931 = vmatprep.subr.mxu0 0.0
    %5932 = vmatpush1.xpose.msra.mxu0 0.0
    %5933 = vmatprep.subr.mxu0 0.0
    %5934 = vmatpush1.xpose.msra.mxu0 0.0
    %5935 = vmatprep.subr.mxu0 0.0
    %5936 = vmatpush1.xpose.msra.mxu0 0.0
    %5937 = vmatprep.subr.mxu0 0.0
    %5938 = vmatpush1.xpose.msra.mxu0 0.0
    %5939 = vmatprep.subr.mxu0 0.0
    %5940 = vmatpush1.xpose.msra.mxu0 0.0
    %5941 = vmatprep.subr.mxu0 0.0
    %5942 = vmatpush1.xpose.msra.mxu0 0.0
    %5943 = vmatprep.subr.mxu0 0.0
    %5944 = vmatpush1.xpose.msra.mxu0 0.0
    %5945 = vmatprep.subr.mxu0 0.0
    %5946 = vmatpush1.xpose.msra.mxu0 0.0
    %5947 = vmatprep.subr.mxu0 0.0
    %5948 = vmatpush1.xpose.msra.mxu0 0.0
    %5949 = vmatprep.subr.mxu0 0.0
    %5950 = vmatpush1.xpose.msra.mxu0 0.0
    %5951 = vmatprep.mubr.f32.mxu0 0.0
    %5952 = vmatmul.mubr.f32.gmra.mrb[0].mxu0 %v5883
    %v5953 = vpop.f32.mrb[0].mxu0
    %v5954 = vadd.f32 0.0, %v5953
    %v5955 = vpop.f32.mrb[0].mxu0
    %5956 = vdwg.mxu0
    %5957 = vrot.lane.b32.xlu0 %v5544, 120
    %v5958 = vpop.permute.xlu0 %5957
    %5959 = vrot.lane.b32.xlu0 %v323, 56
    %v5960 = vpop.permute.xlu0 %5959
    %v5961 = vsel %vm476, %v5958, 0
    %v5963 = vsel %vm476, %v5960, 0
    %5965 = vmatprep.subr.mxu0 0.0
    %5966 = vmatpush1.xpose.msra.mxu0 %v5963
    %5967 = vmatprep.subr.mxu0 0.0
    %5968 = vmatpush1.xpose.msra.mxu0 0.0
    %5969 = vmatprep.subr.mxu0 0.0
    %5970 = vmatpush1.xpose.msra.mxu0 0.0
    %5971 = vmatprep.subr.mxu0 0.0
    %5972 = vmatpush1.xpose.msra.mxu0 0.0
    %5973 = vmatprep.subr.mxu0 0.0
    %5974 = vmatpush1.xpose.msra.mxu0 0.0
    %5975 = vmatprep.subr.mxu0 0.0
    %5976 = vmatpush1.xpose.msra.mxu0 0.0
    %5977 = vmatprep.subr.mxu0 0.0
    %5978 = vmatpush1.xpose.msra.mxu0 0.0
    %5979 = vmatprep.subr.mxu0 0.0
    %5980 = vmatpush1.xpose.msra.mxu0 0.0
    %5981 = vmatprep.subr.mxu0 0.0
    %5982 = vmatpush1.xpose.msra.mxu0 0.0
    %5983 = vmatprep.subr.mxu0 0.0
    %5984 = vmatpush1.xpose.msra.mxu0 0.0
    %5985 = vmatprep.subr.mxu0 0.0
    %5986 = vmatpush1.xpose.msra.mxu0 0.0
    %5987 = vmatprep.subr.mxu0 0.0
    %5988 = vmatpush1.xpose.msra.mxu0 0.0
    %5989 = vmatprep.subr.mxu0 0.0
    %5990 = vmatpush1.xpose.msra.mxu0 0.0
    %5991 = vmatprep.subr.mxu0 0.0
    %5992 = vmatpush1.xpose.msra.mxu0 0.0
    %5993 = vmatprep.subr.mxu0 0.0
    %5994 = vmatpush1.xpose.msra.mxu0 0.0
    %5995 = vmatprep.subr.mxu0 0.0
    %5996 = vmatpush1.xpose.msra.mxu0 0.0
    %5997 = vmatprep.subr.mxu0 0.0
    %5998 = vmatpush1.xpose.msra.mxu0 0.0
    %5999 = vmatprep.subr.mxu0 0.0
    %6000 = vmatpush1.xpose.msra.mxu0 0.0
    %6001 = vmatprep.subr.mxu0 0.0
    %6002 = vmatpush1.xpose.msra.mxu0 0.0
    %6003 = vmatprep.subr.mxu0 0.0
    %6004 = vmatpush1.xpose.msra.mxu0 0.0
    %6005 = vmatprep.subr.mxu0 0.0
    %6006 = vmatpush1.xpose.msra.mxu0 0.0
    %6007 = vmatprep.subr.mxu0 0.0
    %6008 = vmatpush1.xpose.msra.mxu0 0.0
    %6009 = vmatprep.subr.mxu0 0.0
    %6010 = vmatpush1.xpose.msra.mxu0 0.0
    %6011 = vmatprep.subr.mxu0 0.0
    %6012 = vmatpush1.xpose.msra.mxu0 0.0
    %6013 = vmatprep.subr.mxu0 0.0
    %6014 = vmatpush1.xpose.msra.mxu0 0.0
    %6015 = vmatprep.subr.mxu0 0.0
    %6016 = vmatpush1.xpose.msra.mxu0 0.0
    %6017 = vmatprep.subr.mxu0 0.0
    %6018 = vmatpush1.xpose.msra.mxu0 0.0
    %6019 = vmatprep.subr.mxu0 0.0
    %6020 = vmatpush1.xpose.msra.mxu0 0.0
    %6021 = vmatprep.subr.mxu0 0.0
    %6022 = vmatpush1.xpose.msra.mxu0 0.0
    %6023 = vmatprep.subr.mxu0 0.0
    %6024 = vmatpush1.xpose.msra.mxu0 0.0
    %6025 = vmatprep.subr.mxu0 0.0
    %6026 = vmatpush1.xpose.msra.mxu0 0.0
    %6027 = vmatprep.subr.mxu0 0.0
    %6028 = vmatpush1.xpose.msra.mxu0 0.0
    %6029 = vmatprep.mubr.f32.mxu0 0.0
    %6030 = vmatmul.mubr.f32.gmra.mrb[0].mxu0 %v5961
    %v6031 = vpop.f32.mrb[0].mxu0
    %v6032 = vadd.f32 0.0, %v6031
    %v6033 = vpop.f32.mrb[0].mxu0
    %6034 = vdwg.mxu0
    %v6035 = vmul.f32 %v5954, 0.35355338
    %v6036 = vmul.f32 %v6032, 0.35355338
    %v6037 = vadd.f32 %v6035, %v231
    %v6038 = vadd.f32 %v6036, %v232
    %v6039 = vsel %vm476, %v6037, -inf
    %6040 = vmax.xlane.f32.xlu0 %v6039
    %v6041 = vpop.xlane.xlu0 %6040
    %v6042 = vsel %vm476, %v6038, -inf
    %6043 = vmax.xlane.f32.xlu0 %v6042
    %v6044 = vpop.xlane.xlu0 %6043
    %v6045 = vsub.f32 %v6037, %v6041
    %v6046 = vsub.f32 %v6038, %v6044
    %v6047 = vmul.f32 %v6045, 1.442695
    %v6048 = vpow.pop %v6047
    %v6049 = vmul.f32 %v6046, 1.442695
    %v6050 = vpow.pop %v6049
    %v6051 = vsel %vm476, %v6048, 0.0
    %6052 = vadd.xlane.f32.xlu0 %v6051
    %v6053 = vpop.xlane.xlu0 %6052
    %v6054 = vsel %vm476, %v6050, 0.0
    %6055 = vadd.xlane.f32.xlu0 %v6054
    %v6056 = vpop.xlane.xlu0 %6055
    %v6057 = vrcp.pop %v6053
    %v6058 = vmul.f32 %v6048, %v6057
    %v6059 = vrcp.pop %v6056
    %v6060 = vmul.f32 %v6050, %v6059
    %6061 = vrot.lane.b32.xlu0 %v318, 24
    %v6062 = vpop.permute.xlu0 %6061
    %v6065 = vsel %vm476, %v6058, 0
    %6067 = vmatprep.subr.mxu0 0.0
    %6068 = vmatpush1.msra.mxu0 %v6062
    %6069 = vmatprep.subr.mxu0 0.0
    %6070 = vmatpush1.msra.mxu0 0.0
    %6071 = vmatprep.subr.mxu0 0.0
    %6072 = vmatpush1.msra.mxu0 0.0
    %6073 = vmatprep.subr.mxu0 0.0
    %6074 = vmatpush1.msra.mxu0 0.0
    %6075 = vmatprep.subr.mxu0 0.0
    %6076 = vmatpush1.msra.mxu0 0.0
    %6077 = vmatprep.subr.mxu0 0.0
    %6078 = vmatpush1.msra.mxu0 0.0
    %6079 = vmatprep.subr.mxu0 0.0
    %6080 = vmatpush1.msra.mxu0 0.0
    %6081 = vmatprep.subr.mxu0 0.0
    %6082 = vmatpush1.msra.mxu0 0.0
    %6083 = vmatprep.subr.mxu0 0.0
    %6084 = vmatpush1.msra.mxu0 0.0
    %6085 = vmatprep.subr.mxu0 0.0
    %6086 = vmatpush1.msra.mxu0 0.0
    %6087 = vmatprep.subr.mxu0 0.0
    %6088 = vmatpush1.msra.mxu0 0.0
    %6089 = vmatprep.subr.mxu0 0.0
    %6090 = vmatpush1.msra.mxu0 0.0
    %6091 = vmatprep.subr.mxu0 0.0
    %6092 = vmatpush1.msra.mxu0 0.0
    %6093 = vmatprep.subr.mxu0 0.0
    %6094 = vmatpush1.msra.mxu0 0.0
    %6095 = vmatprep.subr.mxu0 0.0
    %6096 = vmatpush1.msra.mxu0 0.0
    %6097 = vmatprep.subr.mxu0 0.0
    %6098 = vmatpush1.msra.mxu0 0.0
    %6099 = vmatprep.subr.mxu0 0.0
    %6100 = vmatpush1.msra.mxu0 0.0
    %6101 = vmatprep.subr.mxu0 0.0
    %6102 = vmatpush1.msra.mxu0 0.0
    %6103 = vmatprep.subr.mxu0 0.0
    %6104 = vmatpush1.msra.mxu0 0.0
    %6105 = vmatprep.subr.mxu0 0.0
    %6106 = vmatpush1.msra.mxu0 0.0
    %6107 = vmatprep.subr.mxu0 0.0
    %6108 = vmatpush1.msra.mxu0 0.0
    %6109 = vmatprep.subr.mxu0 0.0
    %6110 = vmatpush1.msra.mxu0 0.0
    %6111 = vmatprep.subr.mxu0 0.0
    %6112 = vmatpush1.msra.mxu0 0.0
    %6113 = vmatprep.subr.mxu0 0.0
    %6114 = vmatpush1.msra.mxu0 0.0
    %6115 = vmatprep.subr.mxu0 0.0
    %6116 = vmatpush1.msra.mxu0 0.0
    %6117 = vmatprep.subr.mxu0 0.0
    %6118 = vmatpush1.msra.mxu0 0.0
    %6119 = vmatprep.subr.mxu0 0.0
    %6120 = vmatpush1.msra.mxu0 0.0
    %6121 = vmatprep.subr.mxu0 0.0
    %6122 = vmatpush1.msra.mxu0 0.0
    %6123 = vmatprep.subr.mxu0 0.0
    %6124 = vmatpush1.msra.mxu0 0.0
    %6125 = vmatprep.subr.mxu0 0.0
    %6126 = vmatpush1.msra.mxu0 0.0
    %6127 = vmatprep.subr.mxu0 0.0
    %6128 = vmatpush1.msra.mxu0 0.0
    %6129 = vmatprep.subr.mxu0 0.0
    %6130 = vmatpush1.msra.mxu0 0.0
    %6131 = vmatprep.mubr.f32.mxu0 0.0
    %6132 = vmatmul.mubr.f32.gmra.mrb[0].mxu0 %v6065
    %v6133 = vpop.f32.mrb[0].mxu0
    %v6134 = vadd.f32 0.0, %v6133
    %v6135 = vpop.f32.mrb[0].mxu0
    %6136 = vdwg.mxu0
    %6137 = vrot.lane.b32.xlu0 %v323, 24
    %v6138 = vpop.permute.xlu0 %6137
    %v6141 = vsel %vm476, %v6060, 0
    %6143 = vmatprep.subr.mxu0 0.0
    %6144 = vmatpush1.msra.mxu0 %v6138
    %6145 = vmatprep.subr.mxu0 0.0
    %6146 = vmatpush1.msra.mxu0 0.0
    %6147 = vmatprep.subr.mxu0 0.0
    %6148 = vmatpush1.msra.mxu0 0.0
    %6149 = vmatprep.subr.mxu0 0.0
    %6150 = vmatpush1.msra.mxu0 0.0
    %6151 = vmatprep.subr.mxu0 0.0
    %6152 = vmatpush1.msra.mxu0 0.0
    %6153 = vmatprep.subr.mxu0 0.0
    %6154 = vmatpush1.msra.mxu0 0.0
    %6155 = vmatprep.subr.mxu0 0.0
    %6156 = vmatpush1.msra.mxu0 0.0
    %6157 = vmatprep.subr.mxu0 0.0
    %6158 = vmatpush1.msra.mxu0 0.0
    %6159 = vmatprep.subr.mxu0 0.0
    %6160 = vmatpush1.msra.mxu0 0.0
    %6161 = vmatprep.subr.mxu0 0.0
    %6162 = vmatpush1.msra.mxu0 0.0
    %6163 = vmatprep.subr.mxu0 0.0
    %6164 = vmatpush1.msra.mxu0 0.0
    %6165 = vmatprep.subr.mxu0 0.0
    %6166 = vmatpush1.msra.mxu0 0.0
    %6167 = vmatprep.subr.mxu0 0.0
    %6168 = vmatpush1.msra.mxu0 0.0
    %6169 = vmatprep.subr.mxu0 0.0
    %6170 = vmatpush1.msra.mxu0 0.0
    %6171 = vmatprep.subr.mxu0 0.0
    %6172 = vmatpush1.msra.mxu0 0.0
    %6173 = vmatprep.subr.mxu0 0.0
    %6174 = vmatpush1.msra.mxu0 0.0
    %6175 = vmatprep.subr.mxu0 0.0
    %6176 = vmatpush1.msra.mxu0 0.0
    %6177 = vmatprep.subr.mxu0 0.0
    %6178 = vmatpush1.msra.mxu0 0.0
    %6179 = vmatprep.subr.mxu0 0.0
    %6180 = vmatpush1.msra.mxu0 0.0
    %6181 = vmatprep.subr.mxu0 0.0
    %6182 = vmatpush1.msra.mxu0 0.0
    %6183 = vmatprep.subr.mxu0 0.0
    %6184 = vmatpush1.msra.mxu0 0.0
    %6185 = vmatprep.subr.mxu0 0.0
    %6186 = vmatpush1.msra.mxu0 0.0
    %6187 = vmatprep.subr.mxu0 0.0
    %6188 = vmatpush1.msra.mxu0 0.0
    %6189 = vmatprep.subr.mxu0 0.0
    %6190 = vmatpush1.msra.mxu0 0.0
    %6191 = vmatprep.subr.mxu0 0.0
    %6192 = vmatpush1.msra.mxu0 0.0
    %6193 = vmatprep.subr.mxu0 0.0
    %6194 = vmatpush1.msra.mxu0 0.0
    %6195 = vmatprep.subr.mxu0 0.0
    %6196 = vmatpush1.msra.mxu0 0.0
    %6197 = vmatprep.subr.mxu0 0.0
    %6198 = vmatpush1.msra.mxu0 0.0
    %6199 = vmatprep.subr.mxu0 0.0
    %6200 = vmatpush1.msra.mxu0 0.0
    %6201 = vmatprep.subr.mxu0 0.0
    %6202 = vmatpush1.msra.mxu0 0.0
    %6203 = vmatprep.subr.mxu0 0.0
    %6204 = vmatpush1.msra.mxu0 0.0
    %6205 = vmatprep.subr.mxu0 0.0
    %6206 = vmatpush1.msra.mxu0 0.0
    %6207 = vmatprep.mubr.f32.mxu0 0.0
    %6208 = vmatmul.mubr.f32.gmra.mrb[0].mxu0 %v6141
    %v6209 = vpop.f32.mrb[0].mxu0
    %v6210 = vadd.f32 0.0, %v6209
    %v6211 = vpop.f32.mrb[0].mxu0
    %6212 = vdwg.mxu0
    %6213 = vrot.lane.b32.xlu0 %v5539, 112
    %v6214 = vpop.permute.xlu0 %6213
    %6215 = vrot.lane.b32.xlu0 %v318, 48
    %v6216 = vpop.permute.xlu0 %6215
    %v6217 = vsel %vm476, %v6214, 0
    %v6219 = vsel %vm476, %v6216, 0
    %6221 = vmatprep.subr.mxu0 0.0
    %6222 = vmatpush1.xpose.msra.mxu0 %v6219
    %6223 = vmatprep.subr.mxu0 0.0
    %6224 = vmatpush1.xpose.msra.mxu0 0.0
    %6225 = vmatprep.subr.mxu0 0.0
    %6226 = vmatpush1.xpose.msra.mxu0 0.0
    %6227 = vmatprep.subr.mxu0 0.0
    %6228 = vmatpush1.xpose.msra.mxu0 0.0
    %6229 = vmatprep.subr.mxu0 0.0
    %6230 = vmatpush1.xpose.msra.mxu0 0.0
    %6231 = vmatprep.subr.mxu0 0.0
    %6232 = vmatpush1.xpose.msra.mxu0 0.0
    %6233 = vmatprep.subr.mxu0 0.0
    %6234 = vmatpush1.xpose.msra.mxu0 0.0
    %6235 = vmatprep.subr.mxu0 0.0
    %6236 = vmatpush1.xpose.msra.mxu0 0.0
    %6237 = vmatprep.subr.mxu0 0.0
    %6238 = vmatpush1.xpose.msra.mxu0 0.0
    %6239 = vmatprep.subr.mxu0 0.0
    %6240 = vmatpush1.xpose.msra.mxu0 0.0
    %6241 = vmatprep.subr.mxu0 0.0
    %6242 = vmatpush1.xpose.msra.mxu0 0.0
    %6243 = vmatprep.subr.mxu0 0.0
    %6244 = vmatpush1.xpose.msra.mxu0 0.0
    %6245 = vmatprep.subr.mxu0 0.0
    %6246 = vmatpush1.xpose.msra.mxu0 0.0
    %6247 = vmatprep.subr.mxu0 0.0
    %6248 = vmatpush1.xpose.msra.mxu0 0.0
    %6249 = vmatprep.subr.mxu0 0.0
    %6250 = vmatpush1.xpose.msra.mxu0 0.0
    %6251 = vmatprep.subr.mxu0 0.0
    %6252 = vmatpush1.xpose.msra.mxu0 0.0
    %6253 = vmatprep.subr.mxu0 0.0
    %6254 = vmatpush1.xpose.msra.mxu0 0.0
    %6255 = vmatprep.subr.mxu0 0.0
    %6256 = vmatpush1.xpose.msra.mxu0 0.0
    %6257 = vmatprep.subr.mxu0 0.0
    %6258 = vmatpush1.xpose.msra.mxu0 0.0
    %6259 = vmatprep.subr.mxu0 0.0
    %6260 = vmatpush1.xpose.msra.mxu0 0.0
    %6261 = vmatprep.subr.mxu0 0.0
    %6262 = vmatpush1.xpose.msra.mxu0 0.0
    %6263 = vmatprep.subr.mxu0 0.0
    %6264 = vmatpush1.xpose.msra.mxu0 0.0
    %6265 = vmatprep.subr.mxu0 0.0
    %6266 = vmatpush1.xpose.msra.mxu0 0.0
    %6267 = vmatprep.subr.mxu0 0.0
    %6268 = vmatpush1.xpose.msra.mxu0 0.0
    %6269 = vmatprep.subr.mxu0 0.0
    %6270 = vmatpush1.xpose.msra.mxu0 0.0
    %6271 = vmatprep.subr.mxu0 0.0
    %6272 = vmatpush1.xpose.msra.mxu0 0.0
    %6273 = vmatprep.subr.mxu0 0.0
    %6274 = vmatpush1.xpose.msra.mxu0 0.0
    %6275 = vmatprep.subr.mxu0 0.0
    %6276 = vmatpush1.xpose.msra.mxu0 0.0
    %6277 = vmatprep.subr.mxu0 0.0
    %6278 = vmatpush1.xpose.msra.mxu0 0.0
    %6279 = vmatprep.subr.mxu0 0.0
    %6280 = vmatpush1.xpose.msra.mxu0 0.0
    %6281 = vmatprep.subr.mxu0 0.0
    %6282 = vmatpush1.xpose.msra.mxu0 0.0
    %6283 = vmatprep.subr.mxu0 0.0
    %6284 = vmatpush1.xpose.msra.mxu0 0.0
    %6285 = vmatprep.mubr.f32.mxu0 0.0
    %6286 = vmatmul.mubr.f32.gmra.mrb[0].mxu0 %v6217
    %v6287 = vpop.f32.mrb[0].mxu0
    %v6288 = vadd.f32 0.0, %v6287
    %v6289 = vpop.f32.mrb[0].mxu0
    %6290 = vdwg.mxu0
    %6291 = vrot.lane.b32.xlu0 %v5544, 112
    %v6292 = vpop.permute.xlu0 %6291
    %6293 = vrot.lane.b32.xlu0 %v323, 48
    %v6294 = vpop.permute.xlu0 %6293
    %v6295 = vsel %vm476, %v6292, 0
    %v6297 = vsel %vm476, %v6294, 0
    %6299 = vmatprep.subr.mxu0 0.0
    %6300 = vmatpush1.xpose.msra.mxu0 %v6297
    %6301 = vmatprep.subr.mxu0 0.0
    %6302 = vmatpush1.xpose.msra.mxu0 0.0
    %6303 = vmatprep.subr.mxu0 0.0
    %6304 = vmatpush1.xpose.msra.mxu0 0.0
    %6305 = vmatprep.subr.mxu0 0.0
    %6306 = vmatpush1.xpose.msra.mxu0 0.0
    %6307 = vmatprep.subr.mxu0 0.0
    %6308 = vmatpush1.xpose.msra.mxu0 0.0
    %6309 = vmatprep.subr.mxu0 0.0
    %6310 = vmatpush1.xpose.msra.mxu0 0.0
    %6311 = vmatprep.subr.mxu0 0.0
    %6312 = vmatpush1.xpose.msra.mxu0 0.0
    %6313 = vmatprep.subr.mxu0 0.0
    %6314 = vmatpush1.xpose.msra.mxu0 0.0
    %6315 = vmatprep.subr.mxu0 0.0
    %6316 = vmatpush1.xpose.msra.mxu0 0.0
    %6317 = vmatprep.subr.mxu0 0.0
    %6318 = vmatpush1.xpose.msra.mxu0 0.0
    %6319 = vmatprep.subr.mxu0 0.0
    %6320 = vmatpush1.xpose.msra.mxu0 0.0
    %6321 = vmatprep.subr.mxu0 0.0
    %6322 = vmatpush1.xpose.msra.mxu0 0.0
    %6323 = vmatprep.subr.mxu0 0.0
    %6324 = vmatpush1.xpose.msra.mxu0 0.0
    %6325 = vmatprep.subr.mxu0 0.0
    %6326 = vmatpush1.xpose.msra.mxu0 0.0
    %6327 = vmatprep.subr.mxu0 0.0
    %6328 = vmatpush1.xpose.msra.mxu0 0.0
    %6329 = vmatprep.subr.mxu0 0.0
    %6330 = vmatpush1.xpose.msra.mxu0 0.0
    %6331 = vmatprep.subr.mxu0 0.0
    %6332 = vmatpush1.xpose.msra.mxu0 0.0
    %6333 = vmatprep.subr.mxu0 0.0
    %6334 = vmatpush1.xpose.msra.mxu0 0.0
    %6335 = vmatprep.subr.mxu0 0.0
    %6336 = vmatpush1.xpose.msra.mxu0 0.0
    %6337 = vmatprep.subr.mxu0 0.0
    %6338 = vmatpush1.xpose.msra.mxu0 0.0
    %6339 = vmatprep.subr.mxu0 0.0
    %6340 = vmatpush1.xpose.msra.mxu0 0.0
    %6341 = vmatprep.subr.mxu0 0.0
    %6342 = vmatpush1.xpose.msra.mxu0 0.0
    %6343 = vmatprep.subr.mxu0 0.0
    %6344 = vmatpush1.xpose.msra.mxu0 0.0
    %6345 = vmatprep.subr.mxu0 0.0
    %6346 = vmatpush1.xpose.msra.mxu0 0.0
    %6347 = vmatprep.subr.mxu0 0.0
    %6348 = vmatpush1.xpose.msra.mxu0 0.0
    %6349 = vmatprep.subr.mxu0 0.0
    %6350 = vmatpush1.xpose.msra.mxu0 0.0
    %6351 = vmatprep.subr.mxu0 0.0
    %6352 = vmatpush1.xpose.msra.mxu0 0.0
    %6353 = vmatprep.subr.mxu0 0.0
    %6354 = vmatpush1.xpose.msra.mxu0 0.0
    %6355 = vmatprep.subr.mxu0 0.0
    %6356 = vmatpush1.xpose.msra.mxu0 0.0
    %6357 = vmatprep.subr.mxu0 0.0
    %6358 = vmatpush1.xpose.msra.mxu0 0.0
    %6359 = vmatprep.subr.mxu0 0.0
    %6360 = vmatpush1.xpose.msra.mxu0 0.0
    %6361 = vmatprep.subr.mxu0 0.0
    %6362 = vmatpush1.xpose.msra.mxu0 0.0
    %6363 = vmatprep.mubr.f32.mxu0 0.0
    %6364 = vmatmul.mubr.f32.gmra.mrb[0].mxu0 %v6295
    %v6365 = vpop.f32.mrb[0].mxu0
    %v6366 = vadd.f32 0.0, %v6365
    %v6367 = vpop.f32.mrb[0].mxu0
    %6368 = vdwg.mxu0
    %v6369 = vmul.f32 %v6288, 0.35355338
    %v6370 = vmul.f32 %v6366, 0.35355338
    %v6371 = vadd.f32 %v6369, %v231
    %v6372 = vadd.f32 %v6370, %v232
    %v6373 = vsel %vm476, %v6371, -inf
    %6374 = vmax.xlane.f32.xlu0 %v6373
    %v6375 = vpop.xlane.xlu0 %6374
    %v6376 = vsel %vm476, %v6372, -inf
    %6377 = vmax.xlane.f32.xlu0 %v6376
    %v6378 = vpop.xlane.xlu0 %6377
    %v6379 = vsub.f32 %v6371, %v6375
    %v6380 = vsub.f32 %v6372, %v6378
    %v6381 = vmul.f32 %v6379, 1.442695
    %v6382 = vpow.pop %v6381
    %v6383 = vmul.f32 %v6380, 1.442695
    %v6384 = vpow.pop %v6383
    %v6385 = vsel %vm476, %v6382, 0.0
    %6386 = vadd.xlane.f32.xlu0 %v6385
    %v6387 = vpop.xlane.xlu0 %6386
    %v6388 = vsel %vm476, %v6384, 0.0
    %6389 = vadd.xlane.f32.xlu0 %v6388
    %v6390 = vpop.xlane.xlu0 %6389
    %v6391 = vrcp.pop %v6387
    %v6392 = vmul.f32 %v6382, %v6391
    %v6393 = vrcp.pop %v6390
    %v6394 = vmul.f32 %v6384, %v6393
    %6395 = vrot.lane.b32.xlu0 %v318, 16
    %v6396 = vpop.permute.xlu0 %6395
    %v6399 = vsel %vm476, %v6392, 0
    %6401 = vmatprep.subr.mxu0 0.0
    %6402 = vmatpush1.msra.mxu0 %v6396
    %6403 = vmatprep.subr.mxu0 0.0
    %6404 = vmatpush1.msra.mxu0 0.0
    %6405 = vmatprep.subr.mxu0 0.0
    %6406 = vmatpush1.msra.mxu0 0.0
    %6407 = vmatprep.subr.mxu0 0.0
    %6408 = vmatpush1.msra.mxu0 0.0
    %6409 = vmatprep.subr.mxu0 0.0
    %6410 = vmatpush1.msra.mxu0 0.0
    %6411 = vmatprep.subr.mxu0 0.0
    %6412 = vmatpush1.msra.mxu0 0.0
    %6413 = vmatprep.subr.mxu0 0.0
    %6414 = vmatpush1.msra.mxu0 0.0
    %6415 = vmatprep.subr.mxu0 0.0
    %6416 = vmatpush1.msra.mxu0 0.0
    %6417 = vmatprep.subr.mxu0 0.0
    %6418 = vmatpush1.msra.mxu0 0.0
    %6419 = vmatprep.subr.mxu0 0.0
    %6420 = vmatpush1.msra.mxu0 0.0
    %6421 = vmatprep.subr.mxu0 0.0
    %6422 = vmatpush1.msra.mxu0 0.0
    %6423 = vmatprep.subr.mxu0 0.0
    %6424 = vmatpush1.msra.mxu0 0.0
    %6425 = vmatprep.subr.mxu0 0.0
    %6426 = vmatpush1.msra.mxu0 0.0
    %6427 = vmatprep.subr.mxu0 0.0
    %6428 = vmatpush1.msra.mxu0 0.0
    %6429 = vmatprep.subr.mxu0 0.0
    %6430 = vmatpush1.msra.mxu0 0.0
    %6431 = vmatprep.subr.mxu0 0.0
    %6432 = vmatpush1.msra.mxu0 0.0
    %6433 = vmatprep.subr.mxu0 0.0
    %6434 = vmatpush1.msra.mxu0 0.0
    %6435 = vmatprep.subr.mxu0 0.0
    %6436 = vmatpush1.msra.mxu0 0.0
    %6437 = vmatprep.subr.mxu0 0.0
    %6438 = vmatpush1.msra.mxu0 0.0
    %6439 = vmatprep.subr.mxu0 0.0
    %6440 = vmatpush1.msra.mxu0 0.0
    %6441 = vmatprep.subr.mxu0 0.0
    %6442 = vmatpush1.msra.mxu0 0.0
    %6443 = vmatprep.subr.mxu0 0.0
    %6444 = vmatpush1.msra.mxu0 0.0
    %6445 = vmatprep.subr.mxu0 0.0
    %6446 = vmatpush1.msra.mxu0 0.0
    %6447 = vmatprep.subr.mxu0 0.0
    %6448 = vmatpush1.msra.mxu0 0.0
    %6449 = vmatprep.subr.mxu0 0.0
    %6450 = vmatpush1.msra.mxu0 0.0
    %6451 = vmatprep.subr.mxu0 0.0
    %6452 = vmatpush1.msra.mxu0 0.0
    %6453 = vmatprep.subr.mxu0 0.0
    %6454 = vmatpush1.msra.mxu0 0.0
    %6455 = vmatprep.subr.mxu0 0.0
    %6456 = vmatpush1.msra.mxu0 0.0
    %6457 = vmatprep.subr.mxu0 0.0
    %6458 = vmatpush1.msra.mxu0 0.0
    %6459 = vmatprep.subr.mxu0 0.0
    %6460 = vmatpush1.msra.mxu0 0.0
    %6461 = vmatprep.subr.mxu0 0.0
    %6462 = vmatpush1.msra.mxu0 0.0
    %6463 = vmatprep.subr.mxu0 0.0
    %6464 = vmatpush1.msra.mxu0 0.0
    %6465 = vmatprep.mubr.f32.mxu0 0.0
    %6466 = vmatmul.mubr.f32.gmra.mrb[0].mxu0 %v6399
    %v6467 = vpop.f32.mrb[0].mxu0
    %v6468 = vadd.f32 0.0, %v6467
    %v6469 = vpop.f32.mrb[0].mxu0
    %6470 = vdwg.mxu0
    %6471 = vrot.lane.b32.xlu0 %v323, 16
    %v6472 = vpop.permute.xlu0 %6471
    %v6475 = vsel %vm476, %v6394, 0
    %6477 = vmatprep.subr.mxu0 0.0
    %6478 = vmatpush1.msra.mxu0 %v6472
    %6479 = vmatprep.subr.mxu0 0.0
    %6480 = vmatpush1.msra.mxu0 0.0
    %6481 = vmatprep.subr.mxu0 0.0
    %6482 = vmatpush1.msra.mxu0 0.0
    %6483 = vmatprep.subr.mxu0 0.0
    %6484 = vmatpush1.msra.mxu0 0.0
    %6485 = vmatprep.subr.mxu0 0.0
    %6486 = vmatpush1.msra.mxu0 0.0
    %6487 = vmatprep.subr.mxu0 0.0
    %6488 = vmatpush1.msra.mxu0 0.0
    %6489 = vmatprep.subr.mxu0 0.0
    %6490 = vmatpush1.msra.mxu0 0.0
    %6491 = vmatprep.subr.mxu0 0.0
    %6492 = vmatpush1.msra.mxu0 0.0
    %6493 = vmatprep.subr.mxu0 0.0
    %6494 = vmatpush1.msra.mxu0 0.0
    %6495 = vmatprep.subr.mxu0 0.0
    %6496 = vmatpush1.msra.mxu0 0.0
    %6497 = vmatprep.subr.mxu0 0.0
    %6498 = vmatpush1.msra.mxu0 0.0
    %6499 = vmatprep.subr.mxu0 0.0
    %6500 = vmatpush1.msra.mxu0 0.0
    %6501 = vmatprep.subr.mxu0 0.0
    %6502 = vmatpush1.msra.mxu0 0.0
    %6503 = vmatprep.subr.mxu0 0.0
    %6504 = vmatpush1.msra.mxu0 0.0
    %6505 = vmatprep.subr.mxu0 0.0
    %6506 = vmatpush1.msra.mxu0 0.0
    %6507 = vmatprep.subr.mxu0 0.0
    %6508 = vmatpush1.msra.mxu0 0.0
    %6509 = vmatprep.subr.mxu0 0.0
    %6510 = vmatpush1.msra.mxu0 0.0
    %6511 = vmatprep.subr.mxu0 0.0
    %6512 = vmatpush1.msra.mxu0 0.0
    %6513 = vmatprep.subr.mxu0 0.0
    %6514 = vmatpush1.msra.mxu0 0.0
    %6515 = vmatprep.subr.mxu0 0.0
    %6516 = vmatpush1.msra.mxu0 0.0
    %6517 = vmatprep.subr.mxu0 0.0
    %6518 = vmatpush1.msra.mxu0 0.0
    %6519 = vmatprep.subr.mxu0 0.0
    %6520 = vmatpush1.msra.mxu0 0.0
    %6521 = vmatprep.subr.mxu0 0.0
    %6522 = vmatpush1.msra.mxu0 0.0
    %6523 = vmatprep.subr.mxu0 0.0
    %6524 = vmatpush1.msra.mxu0 0.0
    %6525 = vmatprep.subr.mxu0 0.0
    %6526 = vmatpush1.msra.mxu0 0.0
    %6527 = vmatprep.subr.mxu0 0.0
    %6528 = vmatpush1.msra.mxu0 0.0
    %6529 = vmatprep.subr.mxu0 0.0
    %6530 = vmatpush1.msra.mxu0 0.0
    %6531 = vmatprep.subr.mxu0 0.0
    %6532 = vmatpush1.msra.mxu0 0.0
    %6533 = vmatprep.subr.mxu0 0.0
    %6534 = vmatpush1.msra.mxu0 0.0
    %6535 = vmatprep.subr.mxu0 0.0
    %6536 = vmatpush1.msra.mxu0 0.0
    %6537 = vmatprep.subr.mxu0 0.0
    %6538 = vmatpush1.msra.mxu0 0.0
    %6539 = vmatprep.subr.mxu0 0.0
    %6540 = vmatpush1.msra.mxu0 0.0
    %6541 = vmatprep.mubr.f32.mxu0 0.0
    %6542 = vmatmul.mubr.f32.gmra.mrb[0].mxu0 %v6475
    %v6543 = vpop.f32.mrb[0].mxu0
    %v6544 = vadd.f32 0.0, %v6543
    %v6545 = vpop.f32.mrb[0].mxu0
    %6546 = vdwg.mxu0
    %6547 = vrot.lane.b32.xlu0 %v5539, 104
    %v6548 = vpop.permute.xlu0 %6547
    %6549 = vrot.lane.b32.xlu0 %v318, 40
    %v6550 = vpop.permute.xlu0 %6549
    %v6551 = vsel %vm476, %v6548, 0
    %v6553 = vsel %vm476, %v6550, 0
    %6555 = vmatprep.subr.mxu0 0.0
    %6556 = vmatpush1.xpose.msra.mxu0 %v6553
    %6557 = vmatprep.subr.mxu0 0.0
    %6558 = vmatpush1.xpose.msra.mxu0 0.0
    %6559 = vmatprep.subr.mxu0 0.0
    %6560 = vmatpush1.xpose.msra.mxu0 0.0
    %6561 = vmatprep.subr.mxu0 0.0
    %6562 = vmatpush1.xpose.msra.mxu0 0.0
    %6563 = vmatprep.subr.mxu0 0.0
    %6564 = vmatpush1.xpose.msra.mxu0 0.0
    %6565 = vmatprep.subr.mxu0 0.0
    %6566 = vmatpush1.xpose.msra.mxu0 0.0
    %6567 = vmatprep.subr.mxu0 0.0
    %6568 = vmatpush1.xpose.msra.mxu0 0.0
    %6569 = vmatprep.subr.mxu0 0.0
    %6570 = vmatpush1.xpose.msra.mxu0 0.0
    %6571 = vmatprep.subr.mxu0 0.0
    %6572 = vmatpush1.xpose.msra.mxu0 0.0
    %6573 = vmatprep.subr.mxu0 0.0
    %6574 = vmatpush1.xpose.msra.mxu0 0.0
    %6575 = vmatprep.subr.mxu0 0.0
    %6576 = vmatpush1.xpose.msra.mxu0 0.0
    %6577 = vmatprep.subr.mxu0 0.0
    %6578 = vmatpush1.xpose.msra.mxu0 0.0
    %6579 = vmatprep.subr.mxu0 0.0
    %6580 = vmatpush1.xpose.msra.mxu0 0.0
    %6581 = vmatprep.subr.mxu0 0.0
    %6582 = vmatpush1.xpose.msra.mxu0 0.0
    %6583 = vmatprep.subr.mxu0 0.0
    %6584 = vmatpush1.xpose.msra.mxu0 0.0
    %6585 = vmatprep.subr.mxu0 0.0
    %6586 = vmatpush1.xpose.msra.mxu0 0.0
    %6587 = vmatprep.subr.mxu0 0.0
    %6588 = vmatpush1.xpose.msra.mxu0 0.0
    %6589 = vmatprep.subr.mxu0 0.0
    %6590 = vmatpush1.xpose.msra.mxu0 0.0
    %6591 = vmatprep.subr.mxu0 0.0
    %6592 = vmatpush1.xpose.msra.mxu0 0.0
    %6593 = vmatprep.subr.mxu0 0.0
    %6594 = vmatpush1.xpose.msra.mxu0 0.0
    %6595 = vmatprep.subr.mxu0 0.0
    %6596 = vmatpush1.xpose.msra.mxu0 0.0
    %6597 = vmatprep.subr.mxu0 0.0
    %6598 = vmatpush1.xpose.msra.mxu0 0.0
    %6599 = vmatprep.subr.mxu0 0.0
    %6600 = vmatpush1.xpose.msra.mxu0 0.0
    %6601 = vmatprep.subr.mxu0 0.0
    %6602 = vmatpush1.xpose.msra.mxu0 0.0
    %6603 = vmatprep.subr.mxu0 0.0
    %6604 = vmatpush1.xpose.msra.mxu0 0.0
    %6605 = vmatprep.subr.mxu0 0.0
    %6606 = vmatpush1.xpose.msra.mxu0 0.0
    %6607 = vmatprep.subr.mxu0 0.0
    %6608 = vmatpush1.xpose.msra.mxu0 0.0
    %6609 = vmatprep.subr.mxu0 0.0
    %6610 = vmatpush1.xpose.msra.mxu0 0.0
    %6611 = vmatprep.subr.mxu0 0.0
    %6612 = vmatpush1.xpose.msra.mxu0 0.0
    %6613 = vmatprep.subr.mxu0 0.0
    %6614 = vmatpush1.xpose.msra.mxu0 0.0
    %6615 = vmatprep.subr.mxu0 0.0
    %6616 = vmatpush1.xpose.msra.mxu0 0.0
    %6617 = vmatprep.subr.mxu0 0.0
    %6618 = vmatpush1.xpose.msra.mxu0 0.0
    %6619 = vmatprep.mubr.f32.mxu0 0.0
    %6620 = vmatmul.mubr.f32.gmra.mrb[0].mxu0 %v6551
    %v6621 = vpop.f32.mrb[0].mxu0
    %v6622 = vadd.f32 0.0, %v6621
    %v6623 = vpop.f32.mrb[0].mxu0
    %6624 = vdwg.mxu0
    %6625 = vrot.lane.b32.xlu0 %v5544, 104
    %v6626 = vpop.permute.xlu0 %6625
    %6627 = vrot.lane.b32.xlu0 %v323, 40
    %v6628 = vpop.permute.xlu0 %6627
    %v6629 = vsel %vm476, %v6626, 0
    %v6631 = vsel %vm476, %v6628, 0
    %6633 = vmatprep.subr.mxu0 0.0
    %6634 = vmatpush1.xpose.msra.mxu0 %v6631
    %6635 = vmatprep.subr.mxu0 0.0
    %6636 = vmatpush1.xpose.msra.mxu0 0.0
    %6637 = vmatprep.subr.mxu0 0.0
    %6638 = vmatpush1.xpose.msra.mxu0 0.0
    %6639 = vmatprep.subr.mxu0 0.0
    %6640 = vmatpush1.xpose.msra.mxu0 0.0
    %6641 = vmatprep.subr.mxu0 0.0
    %6642 = vmatpush1.xpose.msra.mxu0 0.0
    %6643 = vmatprep.subr.mxu0 0.0
    %6644 = vmatpush1.xpose.msra.mxu0 0.0
    %6645 = vmatprep.subr.mxu0 0.0
    %6646 = vmatpush1.xpose.msra.mxu0 0.0
    %6647 = vmatprep.subr.mxu0 0.0
    %6648 = vmatpush1.xpose.msra.mxu0 0.0
    %6649 = vmatprep.subr.mxu0 0.0
    %6650 = vmatpush1.xpose.msra.mxu0 0.0
    %6651 = vmatprep.subr.mxu0 0.0
    %6652 = vmatpush1.xpose.msra.mxu0 0.0
    %6653 = vmatprep.subr.mxu0 0.0
    %6654 = vmatpush1.xpose.msra.mxu0 0.0
    %6655 = vmatprep.subr.mxu0 0.0
    %6656 = vmatpush1.xpose.msra.mxu0 0.0
    %6657 = vmatprep.subr.mxu0 0.0
    %6658 = vmatpush1.xpose.msra.mxu0 0.0
    %6659 = vmatprep.subr.mxu0 0.0
    %6660 = vmatpush1.xpose.msra.mxu0 0.0
    %6661 = vmatprep.subr.mxu0 0.0
    %6662 = vmatpush1.xpose.msra.mxu0 0.0
    %6663 = vmatprep.subr.mxu0 0.0
    %6664 = vmatpush1.xpose.msra.mxu0 0.0
    %6665 = vmatprep.subr.mxu0 0.0
    %6666 = vmatpush1.xpose.msra.mxu0 0.0
    %6667 = vmatprep.subr.mxu0 0.0
    %6668 = vmatpush1.xpose.msra.mxu0 0.0
    %6669 = vmatprep.subr.mxu0 0.0
    %6670 = vmatpush1.xpose.msra.mxu0 0.0
    %6671 = vmatprep.subr.mxu0 0.0
    %6672 = vmatpush1.xpose.msra.mxu0 0.0
    %6673 = vmatprep.subr.mxu0 0.0
    %6674 = vmatpush1.xpose.msra.mxu0 0.0
    %6675 = vmatprep.subr.mxu0 0.0
    %6676 = vmatpush1.xpose.msra.mxu0 0.0
    %6677 = vmatprep.subr.mxu0 0.0
    %6678 = vmatpush1.xpose.msra.mxu0 0.0
    %6679 = vmatprep.subr.mxu0 0.0
    %6680 = vmatpush1.xpose.msra.mxu0 0.0
    %6681 = vmatprep.subr.mxu0 0.0
    %6682 = vmatpush1.xpose.msra.mxu0 0.0
    %6683 = vmatprep.subr.mxu0 0.0
    %6684 = vmatpush1.xpose.msra.mxu0 0.0
    %6685 = vmatprep.subr.mxu0 0.0
    %6686 = vmatpush1.xpose.msra.mxu0 0.0
    %6687 = vmatprep.subr.mxu0 0.0
    %6688 = vmatpush1.xpose.msra.mxu0 0.0
    %6689 = vmatprep.subr.mxu0 0.0
    %6690 = vmatpush1.xpose.msra.mxu0 0.0
    %6691 = vmatprep.subr.mxu0 0.0
    %6692 = vmatpush1.xpose.msra.mxu0 0.0
    %6693 = vmatprep.subr.mxu0 0.0
    %6694 = vmatpush1.xpose.msra.mxu0 0.0
    %6695 = vmatprep.subr.mxu0 0.0
    %6696 = vmatpush1.xpose.msra.mxu0 0.0
    %6697 = vmatprep.mubr.f32.mxu0 0.0
    %6698 = vmatmul.mubr.f32.gmra.mrb[0].mxu0 %v6629
    %v6699 = vpop.f32.mrb[0].mxu0
    %v6700 = vadd.f32 0.0, %v6699
    %v6701 = vpop.f32.mrb[0].mxu0
    %6702 = vdwg.mxu0
    %v6703 = vmul.f32 %v6622, 0.35355338
    %v6704 = vmul.f32 %v6700, 0.35355338
    %v6705 = vadd.f32 %v6703, %v231
    %v6706 = vadd.f32 %v6704, %v232
    %v6707 = vsel %vm476, %v6705, -inf
    %6708 = vmax.xlane.f32.xlu0 %v6707
    %v6709 = vpop.xlane.xlu0 %6708
    %v6710 = vsel %vm476, %v6706, -inf
    %6711 = vmax.xlane.f32.xlu0 %v6710
    %v6712 = vpop.xlane.xlu0 %6711
    %v6713 = vsub.f32 %v6705, %v6709
    %v6714 = vsub.f32 %v6706, %v6712
    %v6715 = vmul.f32 %v6713, 1.442695
    %v6716 = vpow.pop %v6715
    %v6717 = vmul.f32 %v6714, 1.442695
    %v6718 = vpow.pop %v6717
    %v6719 = vsel %vm476, %v6716, 0.0
    %6720 = vadd.xlane.f32.xlu0 %v6719
    %v6721 = vpop.xlane.xlu0 %6720
    %v6722 = vsel %vm476, %v6718, 0.0
    %6723 = vadd.xlane.f32.xlu0 %v6722
    %v6724 = vpop.xlane.xlu0 %6723
    %v6725 = vrcp.pop %v6721
    %v6726 = vmul.f32 %v6716, %v6725
    %v6727 = vrcp.pop %v6724
    %v6728 = vmul.f32 %v6718, %v6727
    %6729 = vrot.lane.b32.xlu0 %v318, 8
    %v6730 = vpop.permute.xlu0 %6729
    %v6733 = vsel %vm476, %v6726, 0
    %6735 = vmatprep.subr.mxu0 0.0
    %6736 = vmatpush1.msra.mxu0 %v6730
    %6737 = vmatprep.subr.mxu0 0.0
    %6738 = vmatpush1.msra.mxu0 0.0
    %6739 = vmatprep.subr.mxu0 0.0
    %6740 = vmatpush1.msra.mxu0 0.0
    %6741 = vmatprep.subr.mxu0 0.0
    %6742 = vmatpush1.msra.mxu0 0.0
    %6743 = vmatprep.subr.mxu0 0.0
    %6744 = vmatpush1.msra.mxu0 0.0
    %6745 = vmatprep.subr.mxu0 0.0
    %6746 = vmatpush1.msra.mxu0 0.0
    %6747 = vmatprep.subr.mxu0 0.0
    %6748 = vmatpush1.msra.mxu0 0.0
    %6749 = vmatprep.subr.mxu0 0.0
    %6750 = vmatpush1.msra.mxu0 0.0
    %6751 = vmatprep.subr.mxu0 0.0
    %6752 = vmatpush1.msra.mxu0 0.0
    %6753 = vmatprep.subr.mxu0 0.0
    %6754 = vmatpush1.msra.mxu0 0.0
    %6755 = vmatprep.subr.mxu0 0.0
    %6756 = vmatpush1.msra.mxu0 0.0
    %6757 = vmatprep.subr.mxu0 0.0
    %6758 = vmatpush1.msra.mxu0 0.0
    %6759 = vmatprep.subr.mxu0 0.0
    %6760 = vmatpush1.msra.mxu0 0.0
    %6761 = vmatprep.subr.mxu0 0.0
    %6762 = vmatpush1.msra.mxu0 0.0
    %6763 = vmatprep.subr.mxu0 0.0
    %6764 = vmatpush1.msra.mxu0 0.0
    %6765 = vmatprep.subr.mxu0 0.0
    %6766 = vmatpush1.msra.mxu0 0.0
    %6767 = vmatprep.subr.mxu0 0.0
    %6768 = vmatpush1.msra.mxu0 0.0
    %6769 = vmatprep.subr.mxu0 0.0
    %6770 = vmatpush1.msra.mxu0 0.0
    %6771 = vmatprep.subr.mxu0 0.0
    %6772 = vmatpush1.msra.mxu0 0.0
    %6773 = vmatprep.subr.mxu0 0.0
    %6774 = vmatpush1.msra.mxu0 0.0
    %6775 = vmatprep.subr.mxu0 0.0
    %6776 = vmatpush1.msra.mxu0 0.0
    %6777 = vmatprep.subr.mxu0 0.0
    %6778 = vmatpush1.msra.mxu0 0.0
    %6779 = vmatprep.subr.mxu0 0.0
    %6780 = vmatpush1.msra.mxu0 0.0
    %6781 = vmatprep.subr.mxu0 0.0
    %6782 = vmatpush1.msra.mxu0 0.0
    %6783 = vmatprep.subr.mxu0 0.0
    %6784 = vmatpush1.msra.mxu0 0.0
    %6785 = vmatprep.subr.mxu0 0.0
    %6786 = vmatpush1.msra.mxu0 0.0
    %6787 = vmatprep.subr.mxu0 0.0
    %6788 = vmatpush1.msra.mxu0 0.0
    %6789 = vmatprep.subr.mxu0 0.0
    %6790 = vmatpush1.msra.mxu0 0.0
    %6791 = vmatprep.subr.mxu0 0.0
    %6792 = vmatpush1.msra.mxu0 0.0
    %6793 = vmatprep.subr.mxu0 0.0
    %6794 = vmatpush1.msra.mxu0 0.0
    %6795 = vmatprep.subr.mxu0 0.0
    %6796 = vmatpush1.msra.mxu0 0.0
    %6797 = vmatprep.subr.mxu0 0.0
    %6798 = vmatpush1.msra.mxu0 0.0
    %6799 = vmatprep.mubr.f32.mxu0 0.0
    %6800 = vmatmul.mubr.f32.gmra.mrb[0].mxu0 %v6733
    %v6801 = vpop.f32.mrb[0].mxu0
    %v6802 = vadd.f32 0.0, %v6801
    %v6803 = vpop.f32.mrb[0].mxu0
    %6804 = vdwg.mxu0
    %6805 = vrot.lane.b32.xlu0 %v323, 8
    %v6806 = vpop.permute.xlu0 %6805
    %v6809 = vsel %vm476, %v6728, 0
    %6811 = vmatprep.subr.mxu0 0.0
    %6812 = vmatpush1.msra.mxu0 %v6806
    %6813 = vmatprep.subr.mxu0 0.0
    %6814 = vmatpush1.msra.mxu0 0.0
    %6815 = vmatprep.subr.mxu0 0.0
    %6816 = vmatpush1.msra.mxu0 0.0
    %6817 = vmatprep.subr.mxu0 0.0
    %6818 = vmatpush1.msra.mxu0 0.0
    %6819 = vmatprep.subr.mxu0 0.0
    %6820 = vmatpush1.msra.mxu0 0.0
    %6821 = vmatprep.subr.mxu0 0.0
    %6822 = vmatpush1.msra.mxu0 0.0
    %6823 = vmatprep.subr.mxu0 0.0
    %6824 = vmatpush1.msra.mxu0 0.0
    %6825 = vmatprep.subr.mxu0 0.0
    %6826 = vmatpush1.msra.mxu0 0.0
    %6827 = vmatprep.subr.mxu0 0.0
    %6828 = vmatpush1.msra.mxu0 0.0
    %6829 = vmatprep.subr.mxu0 0.0
    %6830 = vmatpush1.msra.mxu0 0.0
    %6831 = vmatprep.subr.mxu0 0.0
    %6832 = vmatpush1.msra.mxu0 0.0
    %6833 = vmatprep.subr.mxu0 0.0
    %6834 = vmatpush1.msra.mxu0 0.0
    %6835 = vmatprep.subr.mxu0 0.0
    %6836 = vmatpush1.msra.mxu0 0.0
    %6837 = vmatprep.subr.mxu0 0.0
    %6838 = vmatpush1.msra.mxu0 0.0
    %6839 = vmatprep.subr.mxu0 0.0
    %6840 = vmatpush1.msra.mxu0 0.0
    %6841 = vmatprep.subr.mxu0 0.0
    %6842 = vmatpush1.msra.mxu0 0.0
    %6843 = vmatprep.subr.mxu0 0.0
    %6844 = vmatpush1.msra.mxu0 0.0
    %6845 = vmatprep.subr.mxu0 0.0
    %6846 = vmatpush1.msra.mxu0 0.0
    %6847 = vmatprep.subr.mxu0 0.0
    %6848 = vmatpush1.msra.mxu0 0.0
    %6849 = vmatprep.subr.mxu0 0.0
    %6850 = vmatpush1.msra.mxu0 0.0
    %6851 = vmatprep.subr.mxu0 0.0
    %6852 = vmatpush1.msra.mxu0 0.0
    %6853 = vmatprep.subr.mxu0 0.0
    %6854 = vmatpush1.msra.mxu0 0.0
    %6855 = vmatprep.subr.mxu0 0.0
    %6856 = vmatpush1.msra.mxu0 0.0
    %6857 = vmatprep.subr.mxu0 0.0
    %6858 = vmatpush1.msra.mxu0 0.0
    %6859 = vmatprep.subr.mxu0 0.0
    %6860 = vmatpush1.msra.mxu0 0.0
    %6861 = vmatprep.subr.mxu0 0.0
    %6862 = vmatpush1.msra.mxu0 0.0
    %6863 = vmatprep.subr.mxu0 0.0
    %6864 = vmatpush1.msra.mxu0 0.0
    %6865 = vmatprep.subr.mxu0 0.0
    %6866 = vmatpush1.msra.mxu0 0.0
    %6867 = vmatprep.subr.mxu0 0.0
    %6868 = vmatpush1.msra.mxu0 0.0
    %6869 = vmatprep.subr.mxu0 0.0
    %6870 = vmatpush1.msra.mxu0 0.0
    %6871 = vmatprep.subr.mxu0 0.0
    %6872 = vmatpush1.msra.mxu0 0.0
    %6873 = vmatprep.subr.mxu0 0.0
    %6874 = vmatpush1.msra.mxu0 0.0
    %6875 = vmatprep.mubr.f32.mxu0 0.0
    %6876 = vmatmul.mubr.f32.gmra.mrb[0].mxu0 %v6809
    %v6877 = vpop.f32.mrb[0].mxu0
    %v6878 = vadd.f32 0.0, %v6877
    %v6879 = vpop.f32.mrb[0].mxu0
    %6880 = vdwg.mxu0
    %6883 = vrot.lane.b32.xlu0 %v6134, 8
    %v6884 = vpop.permute.xlu0 %6883
    %6885 = vrot.lane.b32.xlu0 %v6210, 8
    %v6886 = vpop.permute.xlu0 %6885
    %6891 = vrot.lane.b32.xlu0 %v6468, 16
    %v6892 = vpop.permute.xlu0 %6891
    %6893 = vrot.lane.b32.xlu0 %v6544, 16
    %v6894 = vpop.permute.xlu0 %6893
    %6899 = vrot.lane.b32.xlu0 %v6802, 24
    %v6900 = vpop.permute.xlu0 %6899
    %6901 = vrot.lane.b32.xlu0 %v6878, 24
    %v6902 = vpop.permute.xlu0 %6901
    %v6905 = vsel %vm476, %v5800, %v6884
    %v6906 = vsel %vm476, %v5876, %v6886
    %v6907 = vsel %vm1834, %v6905, %v6892
    %v6908 = vsel %vm1834, %v6906, %v6894
    %v6909 = vsel %vm1837, %v6907, %v6900
    %v6910 = vsel %vm1837, %v6908, %v6902
    %s6911 = scalar_lea.vmem %s14, 32
    %v6912 = vld [vmem:[%s6911] sm:$0xff]
    %v6913 = vld [vmem:[%s6911 + $0x8] sm:$0xff]
    %v6914 = vld [vmem:[%s6911 + $0x10] sm:$0xff]
    %v6915 = vld [vmem:[%s6911 + $0x18] sm:$0xff]
    %v6917 = vsel %vm244, %v6909, 0
    %v6920 = vsel %vm244, %v6910, 0
    %6922 = vmatprep.subr.mxu0 0.0
    %6923 = vmatpush1.msra.mxu0 %v6912
    %6924 = vmatprep.subr.mxu0 0.0
    %6925 = vmatpush1.msra.mxu0 %v6913
    %6926 = vmatprep.subr.mxu0 0.0
    %6927 = vmatpush1.msra.mxu0 %v6914
    %6928 = vmatprep.subr.mxu0 0.0
    %6929 = vmatpush1.msra.mxu0 %v6915
    %6930 = vmatprep.subr.mxu0 0.0
    %6931 = vmatpush1.msra.mxu0 0.0
    %6932 = vmatprep.subr.mxu0 0.0
    %6933 = vmatpush1.msra.mxu0 0.0
    %6934 = vmatprep.subr.mxu0 0.0
    %6935 = vmatpush1.msra.mxu0 0.0
    %6936 = vmatprep.subr.mxu0 0.0
    %6937 = vmatpush1.msra.mxu0 0.0
    %6938 = vmatprep.subr.mxu0 0.0
    %6939 = vmatpush1.msra.mxu0 0.0
    %6940 = vmatprep.subr.mxu0 0.0
    %6941 = vmatpush1.msra.mxu0 0.0
    %6942 = vmatprep.subr.mxu0 0.0
    %6943 = vmatpush1.msra.mxu0 0.0
    %6944 = vmatprep.subr.mxu0 0.0
    %6945 = vmatpush1.msra.mxu0 0.0
    %6946 = vmatprep.subr.mxu0 0.0
    %6947 = vmatpush1.msra.mxu0 0.0
    %6948 = vmatprep.subr.mxu0 0.0
    %6949 = vmatpush1.msra.mxu0 0.0
    %6950 = vmatprep.subr.mxu0 0.0
    %6951 = vmatpush1.msra.mxu0 0.0
    %6952 = vmatprep.subr.mxu0 0.0
    %6953 = vmatpush1.msra.mxu0 0.0
    %6954 = vmatprep.subr.mxu0 0.0
    %6955 = vmatpush1.msra.mxu0 0.0
    %6956 = vmatprep.subr.mxu0 0.0
    %6957 = vmatpush1.msra.mxu0 0.0
    %6958 = vmatprep.subr.mxu0 0.0
    %6959 = vmatpush1.msra.mxu0 0.0
    %6960 = vmatprep.subr.mxu0 0.0
    %6961 = vmatpush1.msra.mxu0 0.0
    %6962 = vmatprep.subr.mxu0 0.0
    %6963 = vmatpush1.msra.mxu0 0.0
    %6964 = vmatprep.subr.mxu0 0.0
    %6965 = vmatpush1.msra.mxu0 0.0
    %6966 = vmatprep.subr.mxu0 0.0
    %6967 = vmatpush1.msra.mxu0 0.0
    %6968 = vmatprep.subr.mxu0 0.0
    %6969 = vmatpush1.msra.mxu0 0.0
    %6970 = vmatprep.subr.mxu0 0.0
    %6971 = vmatpush1.msra.mxu0 0.0
    %6972 = vmatprep.subr.mxu0 0.0
    %6973 = vmatpush1.msra.mxu0 0.0
    %6974 = vmatprep.subr.mxu0 0.0
    %6975 = vmatpush1.msra.mxu0 0.0
    %6976 = vmatprep.subr.mxu0 0.0
    %6977 = vmatpush1.msra.mxu0 0.0
    %6978 = vmatprep.subr.mxu0 0.0
    %6979 = vmatpush1.msra.mxu0 0.0
    %6980 = vmatprep.subr.mxu0 0.0
    %6981 = vmatpush1.msra.mxu0 0.0
    %6982 = vmatprep.subr.mxu0 0.0
    %6983 = vmatpush1.msra.mxu0 0.0
    %6984 = vmatprep.subr.mxu0 0.0
    %6985 = vmatpush1.msra.mxu0 0.0
    %6986 = vmatprep.mubr.f32.mxu0 0.0
    %6987 = vmatmul.mubr.f32.gmra.mrb[0].mxu0 %v6917
    %v6988 = vpop.f32.mrb[0].mxu0
    %v6989 = vadd.f32 0.0, %v6988
    %v6990 = vpop.f32.mrb[0].mxu0
    %6991 = vmatprep.mubr.f32.mxu0 0.0
    %6992 = vmatmul.mubr.f32.gmra.mrb[0].mxu0 %v6920
    %v6993 = vpop.f32.mrb[0].mxu0
    %v6994 = vadd.f32 0.0, %v6993
    %v6995 = vpop.f32.mrb[0].mxu0
    %6996 = vdwg.mxu0
    %v6997 = vadd.f32 %v5397, %v6989
    %v6998 = vadd.f32 %v5398, %v6994
    %s6999 = scalar_lea.vmem [#allocation16], 1
    %v7000 = vld [vmem:[%s6999] sm:$0x1]
    %v7002 = vlaneseq
    %v7003 = vshrl.u32 %v7002, 7
    %v7004 = vsub.s32 0, %v7003
    %v7005 = vrot.slane %v7000, %v7004
    %v7007 = vadd.f32 %v6997, %v7005
    %v7008 = vadd.f32 %v6998, %v7005
    %v7009 = vld [vmem:[#allocation7 + $0x5] sm:$0x1]
    %v7010 = vld [vmem:[#allocation8 + $0x5] sm:$0x1]
    %v7011 = vsel %vm244, %v7007, 0.0
    %7012 = vadd.xlane.f32.xlu0 %v7011
    %v7013 = vpop.xlane.xlu0 %7012
    %v7014 = vsel %vm244, %v7008, 0.0
    %7015 = vadd.xlane.f32.xlu0 %v7014
    %v7016 = vpop.xlane.xlu0 %7015
    %v7017 = vmul.f32 %v7013, %v334
    %v7018 = vmul.f32 %v7016, %v334
    %v7019 = vsub.f32 %v7007, %v7017
    %v7020 = vsub.f32 %v7008, %v7018
    %v7021 = vmul.f32 %v7019, %v7019
    %v7022 = vmul.f32 %v7020, %v7020
    %v7023 = vsel %vm244, %v7021, 0.0
    %7024 = vadd.xlane.f32.xlu0 %v7023
    %v7025 = vpop.xlane.xlu0 %7024
    %v7026 = vsel %vm244, %v7022, 0.0
    %7027 = vadd.xlane.f32.xlu0 %v7026
    %v7028 = vpop.xlane.xlu0 %7027
    %v7029 = vmul.f32 %v7025, 0.032258064
    %v7030 = vmul.f32 %v7028, 0.032258064
    %v7031 = vlaneseq
    %v7032 = vshrl.u32 %v7031, 7
    %v7033 = vsub.s32 0, %v7032
    %v7034 = vrot.slane %v7009, %v7033
    %v7035 = vmul.f32 %v7034, %v7019
    %v7036 = vmul.f32 %v7034, %v7020
    %v7037 = vrsqrt.pop %v7029
    %v7038 = vmul.f32 %v7029, %v7037
    %vm7039 = vcmp.eq.f32.partialorder %v7029, inf
    %v7040 = vsel %vm7039, %v7029, %v7038
    %vm7041 = vcmp.eq.f32.partialorder %v7029, 0.0
    %v7042 = vand.u32 %v7029, 2147483648
    %v7043 = vsel %vm7041, %v7042, %v7040
    %v7044 = vrsqrt.pop %v7030
    %v7045 = vmul.f32 %v7030, %v7044
    %vm7046 = vcmp.eq.f32.partialorder %v7030, inf
    %v7047 = vsel %vm7046, %v7030, %v7045
    %vm7048 = vcmp.eq.f32.partialorder %v7030, 0.0
    %v7049 = vand.u32 %v7030, 2147483648
    %v7050 = vsel %vm7048, %v7049, %v7047
    %v7051 = vadd.f32 %v7043, 1e-06
    %v7052 = vadd.f32 %v7050, 1e-06
    %v7053 = vrcp.pop %v7051
    %v7054 = vmul.f32 %v7035, %v7053
    %v7055 = vrcp.pop %v7052
    %v7056 = vmul.f32 %v7036, %v7055
    %v7057 = vlaneseq
    %v7058 = vshrl.u32 %v7057, 7
    %v7059 = vsub.s32 0, %v7058
    %v7060 = vrot.slane %v7010, %v7059
    %v7061 = vadd.f32 %v7054, %v7060
    %v7062 = vadd.f32 %v7056, %v7060
    %s7063 = scalar_lea.vmem [#allocation17], 32
    %v7064 = vld [vmem:[%s7063] sm:$0xff]
    %v7065 = vld [vmem:[%s7063 + $0x8] sm:$0xff]
    %v7066 = vld [vmem:[%s7063 + $0x10] sm:$0xff]
    %v7067 = vld [vmem:[%s7063 + $0x18] sm:$0xff]
    %s7068 = scalar_lea.vmem [#allocation19], 1
    %v7069 = vld [vmem:[%s7068] sm:$0x1]
    %v7071 = vlaneseq
    %v7072 = vshrl.u32 %v7071, 7
    %v7073 = vsub.s32 0, %v7072
    %v7074 = vrot.slane %v7069, %v7073
    %v7077 = vsel %vm244, %v7061, 0
    %v7080 = vsel %vm244, %v7062, 0
    %7082 = vmatprep.subr.mxu0 0.0
    %7083 = vmatpush1.msra.mxu0 %v7064
    %7084 = vmatprep.subr.mxu0 0.0
    %7085 = vmatpush1.msra.mxu0 %v7065
    %7086 = vmatprep.subr.mxu0 0.0
    %7087 = vmatpush1.msra.mxu0 %v7066
    %7088 = vmatprep.subr.mxu0 0.0
    %7089 = vmatpush1.msra.mxu0 %v7067
    %7090 = vmatprep.subr.mxu0 0.0
    %7091 = vmatpush1.msra.mxu0 0.0
    %7092 = vmatprep.subr.mxu0 0.0
    %7093 = vmatpush1.msra.mxu0 0.0
    %7094 = vmatprep.subr.mxu0 0.0
    %7095 = vmatpush1.msra.mxu0 0.0
    %7096 = vmatprep.subr.mxu0 0.0
    %7097 = vmatpush1.msra.mxu0 0.0
    %7098 = vmatprep.subr.mxu0 0.0
    %7099 = vmatpush1.msra.mxu0 0.0
    %7100 = vmatprep.subr.mxu0 0.0
    %7101 = vmatpush1.msra.mxu0 0.0
    %7102 = vmatprep.subr.mxu0 0.0
    %7103 = vmatpush1.msra.mxu0 0.0
    %7104 = vmatprep.subr.mxu0 0.0
    %7105 = vmatpush1.msra.mxu0 0.0
    %7106 = vmatprep.subr.mxu0 0.0
    %7107 = vmatpush1.msra.mxu0 0.0
    %7108 = vmatprep.subr.mxu0 0.0
    %7109 = vmatpush1.msra.mxu0 0.0
    %7110 = vmatprep.subr.mxu0 0.0
    %7111 = vmatpush1.msra.mxu0 0.0
    %7112 = vmatprep.subr.mxu0 0.0
    %7113 = vmatpush1.msra.mxu0 0.0
    %7114 = vmatprep.subr.mxu0 0.0
    %7115 = vmatpush1.msra.mxu0 0.0
    %7116 = vmatprep.subr.mxu0 0.0
    %7117 = vmatpush1.msra.mxu0 0.0
    %7118 = vmatprep.subr.mxu0 0.0
    %7119 = vmatpush1.msra.mxu0 0.0
    %7120 = vmatprep.subr.mxu0 0.0
    %7121 = vmatpush1.msra.mxu0 0.0
    %7122 = vmatprep.subr.mxu0 0.0
    %7123 = vmatpush1.msra.mxu0 0.0
    %7124 = vmatprep.subr.mxu0 0.0
    %7125 = vmatpush1.msra.mxu0 0.0
    %7126 = vmatprep.subr.mxu0 0.0
    %7127 = vmatpush1.msra.mxu0 0.0
    %7128 = vmatprep.subr.mxu0 0.0
    %7129 = vmatpush1.msra.mxu0 0.0
    %7130 = vmatprep.subr.mxu0 0.0
    %7131 = vmatpush1.msra.mxu0 0.0
    %7132 = vmatprep.subr.mxu0 0.0
    %7133 = vmatpush1.msra.mxu0 0.0
    %7134 = vmatprep.subr.mxu0 0.0
    %7135 = vmatpush1.msra.mxu0 0.0
    %7136 = vmatprep.subr.mxu0 0.0
    %7137 = vmatpush1.msra.mxu0 0.0
    %7138 = vmatprep.subr.mxu0 0.0
    %7139 = vmatpush1.msra.mxu0 0.0
    %7140 = vmatprep.subr.mxu0 0.0
    %7141 = vmatpush1.msra.mxu0 0.0
    %7142 = vmatprep.subr.mxu0 0.0
    %7143 = vmatpush1.msra.mxu0 0.0
    %7144 = vmatprep.subr.mxu0 0.0
    %7145 = vmatpush1.msra.mxu0 0.0
    %7146 = vmatprep.mubr.f32.mxu0 0.0
    %7147 = vmatmul.mubr.f32.gmra.mrb[0].mxu0 %v7077
    %v7148 = vpop.f32.mrb[0].mxu0
    %v7149 = vadd.f32 %v7074, %v7148
    %v7150 = vpop.f32.mrb[0].mxu0
    %7151 = vmatprep.mubr.f32.mxu0 0.0
    %7152 = vmatmul.mubr.f32.gmra.mrb[0].mxu0 %v7080
    %v7153 = vpop.f32.mrb[0].mxu0
    %v7154 = vadd.f32 %v7074, %v7153
    %v7155 = vpop.f32.mrb[0].mxu0
    %7156 = vdwg.mxu0
    %v7157 = vmax.f32 %v7149, 0.0
    %v7158 = vmax.f32 %v7154, 0.0
    %s7159 = scalar_lea.vmem %s18, 64
    %v7160 = vld [vmem:[%s7159] sm:$0xff]
    %v7161 = vld [vmem:[%s7159 + $0x8] sm:$0xff]
    %v7162 = vld [vmem:[%s7159 + $0x10] sm:$0xff]
    %v7163 = vld [vmem:[%s7159 + $0x18] sm:$0xff]
    %v7164 = vld [vmem:[%s7159 + $0x20] sm:$0xff]
    %v7165 = vld [vmem:[%s7159 + $0x28] sm:$0xff]
    %v7166 = vld [vmem:[%s7159 + $0x30] sm:$0xff]
    %v7167 = vld [vmem:[%s7159 + $0x38] sm:$0xff]
    %v7169 = vsel %vm3696, %v7157, 0
    %v7172 = vsel %vm3696, %v7158, 0
    %7174 = vmatprep.subr.mxu0 0.0
    %7175 = vmatpush1.msra.mxu0 %v7160
    %7176 = vmatprep.subr.mxu0 0.0
    %7177 = vmatpush1.msra.mxu0 %v7161
    %7178 = vmatprep.subr.mxu0 0.0
    %7179 = vmatpush1.msra.mxu0 %v7162
    %7180 = vmatprep.subr.mxu0 0.0
    %7181 = vmatpush1.msra.mxu0 %v7163
    %7182 = vmatprep.subr.mxu0 0.0
    %7183 = vmatpush1.msra.mxu0 %v7164
    %7184 = vmatprep.subr.mxu0 0.0
    %7185 = vmatpush1.msra.mxu0 %v7165
    %7186 = vmatprep.subr.mxu0 0.0
    %7187 = vmatpush1.msra.mxu0 %v7166
    %7188 = vmatprep.subr.mxu0 0.0
    %7189 = vmatpush1.msra.mxu0 %v7167
    %7190 = vmatprep.subr.mxu0 0.0
    %7191 = vmatpush1.msra.mxu0 0.0
    %7192 = vmatprep.subr.mxu0 0.0
    %7193 = vmatpush1.msra.mxu0 0.0
    %7194 = vmatprep.subr.mxu0 0.0
    %7195 = vmatpush1.msra.mxu0 0.0
    %7196 = vmatprep.subr.mxu0 0.0
    %7197 = vmatpush1.msra.mxu0 0.0
    %7198 = vmatprep.subr.mxu0 0.0
    %7199 = vmatpush1.msra.mxu0 0.0
    %7200 = vmatprep.subr.mxu0 0.0
    %7201 = vmatpush1.msra.mxu0 0.0
    %7202 = vmatprep.subr.mxu0 0.0
    %7203 = vmatpush1.msra.mxu0 0.0
    %7204 = vmatprep.subr.mxu0 0.0
    %7205 = vmatpush1.msra.mxu0 0.0
    %7206 = vmatprep.subr.mxu0 0.0
    %7207 = vmatpush1.msra.mxu0 0.0
    %7208 = vmatprep.subr.mxu0 0.0
    %7209 = vmatpush1.msra.mxu0 0.0
    %7210 = vmatprep.subr.mxu0 0.0
    %7211 = vmatpush1.msra.mxu0 0.0
    %7212 = vmatprep.subr.mxu0 0.0
    %7213 = vmatpush1.msra.mxu0 0.0
    %7214 = vmatprep.subr.mxu0 0.0
    %7215 = vmatpush1.msra.mxu0 0.0
    %7216 = vmatprep.subr.mxu0 0.0
    %7217 = vmatpush1.msra.mxu0 0.0
    %7218 = vmatprep.subr.mxu0 0.0
    %7219 = vmatpush1.msra.mxu0 0.0
    %7220 = vmatprep.subr.mxu0 0.0
    %7221 = vmatpush1.msra.mxu0 0.0
    %7222 = vmatprep.subr.mxu0 0.0
    %7223 = vmatpush1.msra.mxu0 0.0
    %7224 = vmatprep.subr.mxu0 0.0
    %7225 = vmatpush1.msra.mxu0 0.0
    %7226 = vmatprep.subr.mxu0 0.0
    %7227 = vmatpush1.msra.mxu0 0.0
    %7228 = vmatprep.subr.mxu0 0.0
    %7229 = vmatpush1.msra.mxu0 0.0
    %7230 = vmatprep.subr.mxu0 0.0
    %7231 = vmatpush1.msra.mxu0 0.0
    %7232 = vmatprep.subr.mxu0 0.0
    %7233 = vmatpush1.msra.mxu0 0.0
    %7234 = vmatprep.subr.mxu0 0.0
    %7235 = vmatpush1.msra.mxu0 0.0
    %7236 = vmatprep.subr.mxu0 0.0
    %7237 = vmatpush1.msra.mxu0 0.0
    %7238 = vmatprep.mubr.f32.mxu0 0.0
    %7239 = vmatmul.mubr.f32.gmra.mrb[0].mxu0 %v7169
    %v7240 = vpop.f32.mrb[0].mxu0
    %v7241 = vadd.f32 0.0, %v7240
    %v7242 = vpop.f32.mrb[0].mxu0
    %7243 = vmatprep.mubr.f32.mxu0 0.0
    %7244 = vmatmul.mubr.f32.gmra.mrb[0].mxu0 %v7172
    %v7245 = vpop.f32.mrb[0].mxu0
    %v7246 = vadd.f32 0.0, %v7245
    %v7247 = vpop.f32.mrb[0].mxu0
    %7248 = vdwg.mxu0
    %v7249 = vadd.f32 %v7007, %v7241
    %v7250 = vadd.f32 %v7008, %v7246
    %s7251 = scalar_lea.vmem [#allocation20], 1
    %v7252 = vld [vmem:[%s7251] sm:$0x1]
    %v7254 = vlaneseq
    %v7255 = vshrl.u32 %v7254, 7
    %v7256 = vsub.s32 0, %v7255
    %v7257 = vrot.slane %v7252, %v7256
    %v7259 = vadd.f32 %v7249, %v7257
    %v7260 = vadd.f32 %v7250, %v7257
    %v7261 = vld [vmem:[#allocation7 + $0x6] sm:$0x1]
    %v7262 = vld [vmem:[#allocation8 + $0x6] sm:$0x1]
    %v7263 = vsel %vm244, %v7259, 0.0
    %7264 = vadd.xlane.f32.xlu0 %v7263
    %v7265 = vpop.xlane.xlu0 %7264
    %v7266 = vsel %vm244, %v7260, 0.0
    %7267 = vadd.xlane.f32.xlu0 %v7266
    %v7268 = vpop.xlane.xlu0 %7267
    %v7269 = vmul.f32 %v7265, %v334
    %v7270 = vmul.f32 %v7268, %v334
    %v7271 = vsub.f32 %v7259, %v7269
    %v7272 = vsub.f32 %v7260, %v7270
    %v7273 = vmul.f32 %v7271, %v7271
    %v7274 = vmul.f32 %v7272, %v7272
    %v7275 = vsel %vm244, %v7273, 0.0
    %7276 = vadd.xlane.f32.xlu0 %v7275
    %v7277 = vpop.xlane.xlu0 %7276
    %v7278 = vsel %vm244, %v7274, 0.0
    %7279 = vadd.xlane.f32.xlu0 %v7278
    %v7280 = vpop.xlane.xlu0 %7279
    %v7281 = vmul.f32 %v7277, 0.032258064
    %v7282 = vmul.f32 %v7280, 0.032258064
    %v7283 = vlaneseq
    %v7284 = vshrl.u32 %v7283, 7
    %v7285 = vsub.s32 0, %v7284
    %v7286 = vrot.slane %v7261, %v7285
    %v7287 = vmul.f32 %v7286, %v7271
    %v7288 = vmul.f32 %v7286, %v7272
    %v7289 = vrsqrt.pop %v7281
    %v7290 = vmul.f32 %v7281, %v7289
    %vm7291 = vcmp.eq.f32.partialorder %v7281, inf
    %v7292 = vsel %vm7291, %v7281, %v7290
    %vm7293 = vcmp.eq.f32.partialorder %v7281, 0.0
    %v7294 = vand.u32 %v7281, 2147483648
    %v7295 = vsel %vm7293, %v7294, %v7292
    %v7296 = vrsqrt.pop %v7282
    %v7297 = vmul.f32 %v7282, %v7296
    %vm7298 = vcmp.eq.f32.partialorder %v7282, inf
    %v7299 = vsel %vm7298, %v7282, %v7297
    %vm7300 = vcmp.eq.f32.partialorder %v7282, 0.0
    %v7301 = vand.u32 %v7282, 2147483648
    %v7302 = vsel %vm7300, %v7301, %v7299
    %v7303 = vadd.f32 %v7295, 1e-06
    %v7304 = vadd.f32 %v7302, 1e-06
    %v7305 = vrcp.pop %v7303
    %v7306 = vmul.f32 %v7287, %v7305
    %v7307 = vrcp.pop %v7304
    %v7308 = vmul.f32 %v7288, %v7307
    %v7309 = vlaneseq
    %v7310 = vshrl.u32 %v7309, 7
    %v7311 = vsub.s32 0, %v7310
    %v7312 = vrot.slane %v7262, %v7311
    %v7313 = vadd.f32 %v7306, %v7312
    %v7314 = vadd.f32 %v7308, %v7312
    %7315 = vst.msk [vmem:[#allocation22] sm:$0xff] %vm244, %v7313
    %7316 = vst.msk [vmem:[#allocation22 + $0x8] sm:$0xff] %vm244, %v7314
    // Predicated region
    $region130: #{decoder.1} parent=1 // pred_check
      _
    $region131: #{decoder.1} parent=1 // pred_check_branch
      %7318 = sbr.rel (0) target = $region133
    $region132: #{decoder.1} parent=1 // pred_region
      %s7320 = ssub.s32 256, 256
      %7321 = vsyncadd [#allocation4], %s7320
      %s7322 = sshll.u32 [#allocation22], 4
      %s7323 = int_to_ptr.vmem [resolvable:$true] %s7322
      %7328 = dma.vmem_to_hbm [thread:$0]  %s7323, 256, %s20, [#allocation4], 128, 128, 8
    $region133: #{decoder.1} parent=1 // pred_fallthru
      _
    // Predicated region
    $region134: #{decoder.1} parent=1 // pred_check
      _
    $region135: #{decoder.1} parent=1 // pred_check_branch
      %7330 = sbr.rel (0) target = $region137
    $region136: #{decoder.1} parent=1 // pred_region
      %7331 = dma.done [#allocation4], 256
    $region137: #{decoder.1} parent=1 // pred_fallthru
      _
    %7332 = vsyncpa [#allocation3], 1
    %7333 = vsyncpa [#allocation6], 1
    %7334 = vsyncpa [#allocation9], 1
    %7335 = vsyncpa [#allocation12], 1
    %7336 = vsyncpa [#allocation15], 1
    %7337 = vsyncpa [#allocation18], 1
    %7338 = vsyncpa [#allocation21], 1
    %7339 = vsyncpa [#allocation4], 1

</llo_original>
